<compile_context>
chip_gen: v7x
topology: tpu7x:2x2x1
jax: 0.10.0
libtpu: 0.0.40
codegen_flags: <defaults>
</compile_context>

<pallas_src>
import jax
import jax.numpy as jnp
import numpy as np
from jax.experimental import pallas as pl
from jax.experimental.pallas import tpu as pltpu


def _head_kernel(x_ref, w_ref, b_ref, o_ref, acc_ref):
    """One (batch-tile, channel-tile) grid step.

    x_ref : (Bn, Cc, T, HW) f32  NCTHW-derived block (no wrapper transpose)
    w_ref : (Cc, K)         f32  fc_cls.weight.T rows, pre-scaled by 1/T
    b_ref : (1, K)          f32  fc_cls.bias
    o_ref : (Bn, K)         f32  logits block (same block for every c step)
    acc_ref:(Bn, K)         f32  VMEM accumulator over the channel grid axis
    """
    c = pl.program_id(1)

    @pl.when(c == 0)
    def _init():
        acc_ref[...] = jnp.zeros_like(acc_ref)

    x = x_ref[...]                              # (Bn, Cc, T, HW)
    # Temporal pool: plain sum over T (sublane axis); the avg-pool's 1/T is
    # folded into the weight (max commutes with a positive scale).
    t_sum = jnp.sum(x, axis=2)                  # (Bn, Cc, HW)
    # Spatial max pool over H*W (lane axis -> XLU reduce).
    pooled = jnp.max(t_sum, axis=2)             # (Bn, Cc)
    # Partial fc_cls: accumulate this channel tile's contribution on the MXU.
    acc_ref[...] += jnp.dot(pooled, w_ref[...],
                            preferred_element_type=jnp.float32)

    @pl.when(c == pl.num_programs(1) - 1)
    def _finalize():
        o_ref[...] = acc_ref[...] + b_ref[...]


def _pick_channel_tile(C, Bn, T, HW, budget_bytes=4 * 1024 * 1024):
    """Largest channel tile (multiple of 8, divisor of C) whose padded input
    block stays under `budget_bytes` per pipeline buffer (~8 MiB when double
    buffered -> fits v7x's 32 MiB scoped-VMEM default with headroom)."""
    t_pad = -(-T // 8) * 8            # sublane padding of the (T, HW) tile
    hw_pad = -(-HW // 128) * 128      # lane padding
    cands = [c for c in (512, 256, 128, 64, 32, 16, 8) if C % c == 0]
    fitting = [c for c in cands if Bn * c * t_pad * hw_pad * 4 <= budget_bytes]
    if fitting:
        return max(fitting)
    return min(cands) if cands else C


def monkey_switch_head_forward(x_ncthw, weight, bias):
    """monkey_switch_Head.forward (dropout_ratio=0).

    x_ncthw: (N, C, T, H, W) float32
    weight : (C, K) float32   == fc_cls.weight.T
    bias   : (K,)   float32   == fc_cls.bias
    returns: (N, K) float32 logits
    """
    # TODO(synk): dropout (dropout_ratio > 0) is not implemented; the module
    # default (dropout_ratio=0) makes it a no-op in forward.
    N, C, T, H, W = x_ncthw.shape
    K = weight.shape[1]
    HW = H * W

    # Free reshape only -- NO transpose. The tensor is streamed from HBM
    # exactly once by the kernel.
    x = x_ncthw.reshape(N, C, T, HW).astype(jnp.float32)

    # Batch tile: >= 8 rows per step when possible (dense sublane output
    # stores, fewer grid steps, M >= 8 matmul). Small N runs as one tile.
    Bn = N if N <= 8 else 8
    n_pad = (-N) % Bn
    if n_pad:
        # Zero rows pool to 0 and produce `bias` logits; sliced off below.
        x = jnp.pad(x, ((0, n_pad), (0, 0), (0, 0), (0, 0)))
    Npad = N + n_pad

    Cc = _pick_channel_tile(C, Bn, T, HW)

    # Fold the temporal-average 1/T into the classifier weight (valid because
    # max over (H, W) commutes with the positive constant 1/T).
    w_scaled = weight.astype(jnp.float32) * jnp.float32(1.0 / T)
    bias2d = bias.reshape(1, K).astype(jnp.float32)

    out = pl.pallas_call(
        _head_kernel,
        out_shape=jax.ShapeDtypeStruct((Npad, K), jnp.float32),
        grid=(Npad // Bn, C // Cc),
        in_specs=[
            # (batch tile, channel tile, full T, full H*W): the last two block
            # dims equal the array dims, so the (8,128) rule holds for any
            # T / H*W.
            pl.BlockSpec((Bn, Cc, T, HW), lambda n, c: (n, c, 0, 0)),
            # Weight rows follow the channel tile; constant over the batch
            # axis.
            pl.BlockSpec((Cc, K), lambda n, c: (c, 0)),
            pl.BlockSpec((1, K), lambda n, c: (0, 0)),
        ],
        # Same output block for every channel step -> resident accumulator.
        out_specs=pl.BlockSpec((Bn, K), lambda n, c: (n, 0)),
        scratch_shapes=[pltpu.VMEM((Bn, K), jnp.float32)],
        compiler_params=pltpu.CompilerParams(
            # Batch tiles are independent (shard across the 2 TCs on v7x);
            # the channel axis is the fc_cls reduction -> "arbitrary".
            dimension_semantics=("parallel", "arbitrary")),
    )(x, w_scaled, bias2d)
    return out[:N]


if __name__ == "__main__":
    # Small shapes consistent with the module's forward:
    # 5-D RoI feature (N, C, T, H, W) -> (N, num_classes) logits.
    # N=10 exercises the batch-tile padding path (Bn=8 -> Npad=16);
    # C=256 exercises the channel-tiled accumulation (two Cc=128 steps).
    N, C, T, H, W = 10, 256, 4, 8, 16
    num_classes = 16

    key = jax.random.PRNGKey(0)
    kx, kw, kb = jax.random.split(key, 3)
    x = jax.random.normal(kx, (N, C, T, H, W), dtype=jnp.float32)
    # fc_cls params stored transposed (C, K) so the kernel computes
    # pooled @ W (== PyTorch's x @ fc_cls.weight.T).  init_weights() uses
    # Normal(0, 0.01) weight / zero bias; a small non-zero bias is used here
    # so the bias path is actually exercised.
    weight = 0.01 * jax.random.normal(kw, (C, num_classes), dtype=jnp.float32)
    bias = 0.01 * jax.random.normal(kb, (num_classes,), dtype=jnp.float32)

    out = jax.block_until_ready(monkey_switch_head_forward(x, weight, bias))

    # Pure-JAX reference of the same forward: mean over T, max over (H, W),
    # then fc_cls.
    ref = jnp.max(jnp.mean(x, axis=2), axis=(2, 3)) @ weight + bias
    assert out.shape == (N, num_classes)
    assert np.allclose(np.asarray(out), np.asarray(ref), atol=1e-4, rtol=1e-4)

    print("KERNEL_OK")
</pallas_src>

<mosaic_0001>
module attributes {stable_mosaic.version = 11 : i64} {
  func.func @_head_kernel(%arg0: i32, %arg1: i32, %arg2: memref<8x128x4x128xf32, #tpu.memory_space<vmem>>, %arg3: memref<128x16xf32, #tpu.memory_space<vmem>>, %arg4: memref<1x16xf32, #tpu.memory_space<vmem>>, %arg5: memref<8x16xf32, #tpu.memory_space<vmem>>, %arg6: memref<8x16xf32, #tpu.memory_space<vmem>>) attributes {dimension_semantics = [#tpu.dimension_semantics<parallel>, #tpu.dimension_semantics<arbitrary>], iteration_bounds = array<i64: 2, 2>, scalar_prefetch = 0 : i64, scratch_operands = 1 : i64, tpu.core_type = #tpu.core_type<tc>, window_params = [{transform_indices = @transform_0, window_bounds = array<i64: 8, 128, 4, 128>}, {transform_indices = @transform_1, window_bounds = array<i64: 128, 16>}, {pipeline_mode = #tpu.pipeline_mode<synchronous>, transform_indices = @transform_2, window_bounds = array<i64: 1, 16>}, {transform_indices = @transform_3, window_bounds = array<i64: 8, 16>}]} {
    %c0_i32 = arith.constant 0 : i32
    %0 = arith.cmpi eq, %arg1, %c0_i32 : i32
    %1 = arith.extui %0 : i1 to i32
    %c0_i32_0 = arith.constant 0 : i32
    %2 = arith.cmpi ne, %1, %c0_i32_0 : i32
    scf.if %2 {
      %cst_13 = arith.constant 0.000000e+00 : f32
      %14 = vector.broadcast %cst_13 : f32 to vector<8x16xf32>
      %c0_14 = arith.constant 0 : index
      %c0_15 = arith.constant 0 : index
      %15 = vector.load %arg6[%c0_14, %c0_15] : memref<8x16xf32, #tpu.memory_space<vmem>>, vector<8x16xf32>
      tpu.vector_store %arg6[%c0_14, %c0_15], %14 {strides = array<i32>} : memref<8x16xf32, #tpu.memory_space<vmem>>, vector<8x16xf32>,
    } else {
    }
    %c0 = arith.constant 0 : index
    %c0_1 = arith.constant 0 : index
    %c0_2 = arith.constant 0 : index
    %c0_3 = arith.constant 0 : index
    %3 = vector.load %arg2[%c0, %c0_1, %c0_2, %c0_3] : memref<8x128x4x128xf32, #tpu.memory_space<vmem>>, vector<8x128x4x128xf32>
    %cst = arith.constant dense<0.000000e+00> : vector<8x128x128xf32>
    %4 = vector.multi_reduction <add>, %3, %cst [2] : vector<8x128x4x128xf32> to vector<8x128x128xf32>
    %cst_4 = arith.constant dense<0xFF800000> : vector<8x128xf32>
    %5 = vector.multi_reduction <maximumf>, %4, %cst_4 [2] : vector<8x128x128xf32> to vector<8x128xf32>
    %c0_5 = arith.constant 0 : index
    %c0_6 = arith.constant 0 : index
    %6 = vector.load %arg6[%c0_5, %c0_6] : memref<8x16xf32, #tpu.memory_space<vmem>>, vector<8x16xf32>
    %c0_7 = arith.constant 0 : index
    %c0_8 = arith.constant 0 : index
    %7 = vector.load %arg3[%c0_7, %c0_8] : memref<128x16xf32, #tpu.memory_space<vmem>>, vector<128x16xf32>
    %cst_9 = arith.constant dense<0.000000e+00> : vector<8x16xf32>
    %8 = tpu.matmul %5, %7, %cst_9 {dimension_numbers = #tpu.dot_dimension_numbers<[1], [0], [0], [1], [0, 0, 1, 1], [], []>} : vector<8x128xf32>, vector<128x16xf32>, vector<8x16xf32> -> vector<8x16xf32>
    %9 = arith.addf %6, %8 : vector<8x16xf32>
    %c0_10 = arith.constant 0 : index
    %c0_11 = arith.constant 0 : index
    %10 = vector.load %arg6[%c0_10, %c0_11] : memref<8x16xf32, #tpu.memory_space<vmem>>, vector<8x16xf32>
    tpu.vector_store %arg6[%c0_10, %c0_11], %9 {strides = array<i32>} : memref<8x16xf32, #tpu.memory_space<vmem>>, vector<8x16xf32>,
    %c1_i32 = arith.constant 1 : i32
    %11 = arith.cmpi eq, %arg1, %c1_i32 : i32
    %12 = arith.extui %11 : i1 to i32
    %c0_i32_12 = arith.constant 0 : i32
    %13 = arith.cmpi ne, %12, %c0_i32_12 : i32
    scf.if %13 {
      %c0_13 = arith.constant 0 : index
      %c0_14 = arith.constant 0 : index
      %14 = vector.load %arg6[%c0_13, %c0_14] : memref<8x16xf32, #tpu.memory_space<vmem>>, vector<8x16xf32>
      %c0_15 = arith.constant 0 : index
      %c0_16 = arith.constant 0 : index
      %15 = vector.load %arg4[%c0_15, %c0_16] : memref<1x16xf32, #tpu.memory_space<vmem>>, vector<1x16xf32>
      %16 = vector.broadcast %15 : vector<1x16xf32> to vector<8x16xf32>
      %17 = arith.addf %14, %16 : vector<8x16xf32>
      %c0_17 = arith.constant 0 : index
      %c0_18 = arith.constant 0 : index
      %18 = vector.load %arg5[%c0_17, %c0_18] : memref<8x16xf32, #tpu.memory_space<vmem>>, vector<8x16xf32>
      tpu.vector_store %arg5[%c0_17, %c0_18], %17 {strides = array<i32>} : memref<8x16xf32, #tpu.memory_space<vmem>>, vector<8x16xf32>,
    } else {
    }
    return
  }
  func.func @transform_0(%arg0: i32, %arg1: i32) -> (i32, i32, i32, i32) {
    %c0_i32 = arith.constant 0 : i32
    %c0_i32_0 = arith.constant 0 : i32
    %c0_i32_1 = arith.constant 0 : i32
    return %arg0, %arg1, %c0_i32, %c0_i32_0 : i32, i32, i32, i32
  }
  func.func @transform_1(%arg0: i32, %arg1: i32) -> (i32, i32) {
    %c0_i32 = arith.constant 0 : i32
    %c0_i32_0 = arith.constant 0 : i32
    return %arg1, %c0_i32 : i32, i32
  }
  func.func @transform_2(%arg0: i32, %arg1: i32) -> (i32, i32) {
    %c0_i32 = arith.constant 0 : i32
    %c0_i32_0 = arith.constant 0 : i32
    %c0_i32_1 = arith.constant 0 : i32
    return %c0_i32, %c0_i32_0 : i32, i32
  }
  func.func @transform_3(%arg0: i32, %arg1: i32) -> (i32, i32) {
    %c0_i32 = arith.constant 0 : i32
    %c0_i32_0 = arith.constant 0 : i32
    return %arg0, %c0_i32 : i32, i32
  }
}

</mosaic_0001>

<llo_original>
// kernel: tpu_custom_call.1
$region0: #{tpu_custom_call.1}
  #allocation0 [shape = 'u32[]', space=smem, size = 0x4, offset = 0x4, fixed_abs, tag = 'smem constant byte address 0x4 - core index']
  #allocation1 [shape = 'u32[144,128]{1,0:T(1,128)}', space=vmem, size = 0x12000, scoped, tag = 'internal scratch']
  #allocation2 [shape = 'f32[8,16]{1,0:T(8,128)}', space=vmem, size = 0x1000, scoped, tag = 'scratch operand']
  #allocation9 [shape = 's32[]', space=sflag, size = 0x4, offset = 0, fixed_abs, tag = 'sflag constant byte address 0x0 - dummy sync flag']
  %s0 = inlined_call_operand.hbm [shape: f32[16,256,4,128], index: 0, kind: input, shape index: {}]
  %s1 = inlined_call_operand.vmem [shape: f32[256,16], index: 1, kind: input, shape index: {}]
  %s2 = inlined_call_operand.hbm [shape: f32[1,16], index: 2, kind: input, shape index: {}]
  %s3 = inlined_call_operand.hbm [shape: f32[16,16], index: 3, kind: output, shape index: {}]
  %s4 = sld [smem:[#allocation0]]
  $region61: #{tpu_custom_call.1} parent=0
    _
  %s6 = ssub.s32 1, %s4
  %s7 = scalar_select 0, %s6, %s4
  $region1: #{tpu_custom_call.1} parent=0
    #allocation3 [shape = 'u8[4194304]{0}', space=vmem, size = 0x400000, scoped, tag = 'input window, operand 0']
    #allocation4 [shape = 's32[2]{0}', space=sflag, size = 0x8, scoped, tag = 'scoped memory for tpu_custom_call.1']
    #allocation5 [shape = 's32[2]{0}', space=sflag, size = 0x8, scoped, tag = 'scoped memory for tpu_custom_call.1']
    #allocation6 [shape = 'u8[512]{0}', space=vmem, size = 0x400, scoped, tag = 'input window, operand 2, single buffered']
    #allocation7 [shape = 's32[1]{0}', space=sflag, size = 0x4, scoped, tag = 'scoped memory for tpu_custom_call.1']
    #allocation8 [shape = 'u8[8192]{0}', space=vmem, size = 0x2000, scoped, tag = 'output window, operand 0']
    %8 = vsyncpa [#allocation4], 0
    %s9 = scalar_lea.sflag [#allocation4], 1
    %10 = vsyncpa %s9, 0
    %11 = vsyncpa [#allocation7], 0
    %12 = vsyncpa [#allocation5], 0
    %s13 = scalar_lea.sflag [#allocation5], 1
    %14 = vsyncpa %s13, 0
    loop: start=0, step=1, limit=6
    $region2: #{tpu_custom_call.1} parent=1 // loop_pre_header
      _
    $region3: #{tpu_custom_call.1} parent=1 // loop_header
      %s16 = sphi 0, %s20
      %p17 = scmp.ge.s32.totalorder %s16, 6
      %s23 = sphi 0, %s35
      %s24 = sphi 0, %s31
      %s25 = sphi 0, %s23
      %s26 = sphi 0, %s24
      %s27 = sphi 0, %s25
      %s28 = sphi 0, %s26
      %s40 = sphi 0, %s42
      %s43 = sphi 0, %s40
      %s44 = sphi 0, %s43
      %s60 = sphi 0, %s44
      %s66 = sphi 0, %s68
      %s69 = sphi 0, %s66
      %s70 = sphi 0, %s69
      %s86 = sphi 0, %s70
      %s90 = sphi 0, %s90
      %s92 = sphi 0, %s90
      %s93 = sphi 0, %s92
      %s107 = sphi 0, %s93
      %s113 = sphi 0, %s115
      %s116 = sphi 0, %s113
      %s117 = sphi 0, %s116
      %s133 = sphi 0, %s117
    $region4: #{tpu_custom_call.1} parent=1 // loop_header_branch
      %19 = sbr.rel (%p17) target = $region8
    $region5: #{tpu_custom_call.1} parent=1 // loop_body
      %s21 = ssub.s32 %s16, 1
      %s22 = ssub.s32 %s16, 2
      %s29 = sadd.s32 1, %s24
      %p30 = scmp.ge.s32.totalorder %s29, 2
      %s31 = scalar_select %p30, 0, %s29
      %s32 = sadd.s32 1, %s23
      %s33 = scalar_select %p30, %s32, %s23
      %p34 = scmp.ge.s32.totalorder %s33, 2
      %s35 = scalar_select %p34, 0, %s33
      %s36 = ssub.s32 %s23, %s35
      %s37 = ssub.s32 %s24, %s31
      %s38 = sor.u32 %s36, %s37
      %p39 = scmp.eq.s32.totalorder %s38, 0
      %s41 = sadd.s32 %s40, 1
      %s42 = scalar_select %p39, %s40, %s41
      %p45 = pneg %p39
      %p46 = scmp.eq.s32.totalorder %s16, 3
      %p47 = por %p45, %p46
      %p48 = scmp.ne.s32.totalorder %s40, %s43
      %p49 = scmp.eq.s32.totalorder %s16, 0
      %p50 = por %p48, %p49
      %p51 = scmp.ne.s32.totalorder %s40, %s43
      %p52 = scmp.eq.s32.totalorder %s21, 3
      %p53 = por %p51, %p52
      %p54 = scmp.ne.s32.totalorder %s43, %s44
      %p55 = scmp.eq.s32.totalorder %s21, 0
      %p56 = por %p54, %p55
      %p57 = scmp.ne.s32.totalorder %s43, %s44
      %p58 = scmp.eq.s32.totalorder %s22, 3
      %p59 = por %p57, %p58
      %p61 = scmp.ne.s32.totalorder %s44, %s60
      %p62 = scmp.eq.s32.totalorder %s22, 0
      %p63 = por %p61, %p62
      %s64 = ssub.s32 %s24, %s31
      %p65 = scmp.eq.s32.totalorder %s64, 0
      %s67 = sadd.s32 %s66, 1
      %s68 = scalar_select %p65, %s66, %s67
      %p71 = pneg %p65
      %p72 = scmp.eq.s32.totalorder %s16, 3
      %p73 = por %p71, %p72
      %p74 = scmp.ne.s32.totalorder %s66, %s69
      %p75 = scmp.eq.s32.totalorder %s16, 0
      %p76 = por %p74, %p75
      %p77 = scmp.ne.s32.totalorder %s66, %s69
      %p78 = scmp.eq.s32.totalorder %s21, 3
      %p79 = por %p77, %p78
      %p80 = scmp.ne.s32.totalorder %s69, %s70
      %p81 = scmp.eq.s32.totalorder %s21, 0
      %p82 = por %p80, %p81
      %p83 = scmp.ne.s32.totalorder %s69, %s70
      %p84 = scmp.eq.s32.totalorder %s22, 3
      %p85 = por %p83, %p84
      %p87 = scmp.ne.s32.totalorder %s70, %s86
      %p88 = scmp.eq.s32.totalorder %s22, 0
      %p89 = por %p87, %p88
      %s91 = sadd.s32 %s90, 1
      %p94 = scmp.eq.s32.totalorder %s16, 3
      %p95 = scmp.ne.s32.totalorder %s90, %s92
      %p96 = scmp.eq.s32.totalorder %s16, 0
      %p97 = por %p95, %p96
      %p98 = scmp.ne.s32.totalorder %s90, %s92
      %p99 = scmp.eq.s32.totalorder %s21, 3
      %p100 = por %p98, %p99
      %p101 = scmp.ne.s32.totalorder %s92, %s93
      %p102 = scmp.eq.s32.totalorder %s21, 0
      %p103 = por %p101, %p102
      %p104 = scmp.ne.s32.totalorder %s92, %s93
      %p105 = scmp.eq.s32.totalorder %s22, 3
      %p106 = por %p104, %p105
      %p108 = scmp.ne.s32.totalorder %s93, %s107
      %p109 = scmp.eq.s32.totalorder %s22, 0
      %p110 = por %p108, %p109
      %s111 = ssub.s32 %s23, %s35
      %p112 = scmp.eq.s32.totalorder %s111, 0
      %s114 = sadd.s32 %s113, 1
      %s115 = scalar_select %p112, %s113, %s114
      %p118 = pneg %p112
      %p119 = scmp.eq.s32.totalorder %s16, 3
      %p120 = por %p118, %p119
      %p121 = scmp.ne.s32.totalorder %s113, %s116
      %p122 = scmp.eq.s32.totalorder %s16, 0
      %p123 = por %p121, %p122
      %p124 = scmp.ne.s32.totalorder %s113, %s116
      %p125 = scmp.eq.s32.totalorder %s21, 3
      %p126 = por %p124, %p125
      %p127 = scmp.ne.s32.totalorder %s116, %s117
      %p128 = scmp.eq.s32.totalorder %s21, 0
      %p129 = por %p127, %p128
      %p130 = scmp.ne.s32.totalorder %s116, %s117
      %p131 = scmp.eq.s32.totalorder %s22, 3
      %p132 = por %p130, %p131
      %p134 = scmp.ne.s32.totalorder %s117, %s133
      %p135 = scmp.eq.s32.totalorder %s22, 0
      %p136 = por %p134, %p135
      %p137 = scmp.le.s32.totalorder 1, %s16
      %p138 = scmp.lt.s32.totalorder %s16, 5
      %p139 = pnand %p137, %p138
      %p140 = pneg %p139
      // Predicated region
      $region9: #{tpu_custom_call.1} parent=5 // pred_check
        _
      $region10: #{tpu_custom_call.1} parent=5 // pred_check_branch
        %142 = sbr.rel (%p139) target = $region12
      $region11: #{tpu_custom_call.1} parent=5 // pred_region
        %s143 = ssub.s32 %s16, 1
        // Predicated region
        $region13: #{tpu_custom_call.1} parent=11 // pred_check
          %p144 = pneg %p103
        $region14: #{tpu_custom_call.1} parent=11 // pred_check_branch
          %146 = sbr.rel (%p144) target = $region16
        $region15: #{tpu_custom_call.1} parent=11 // pred_region
          %s148 = ssub.s32 16, 16
          %149 = vsyncadd [#allocation7], %s148
          %s151 = sshll.u32 [#allocation6], 4
          %s152 = int_to_ptr.vmem [resolvable:$true] %s151
          %154 = dma.hbm_to_vmem [thread:$0]  %s2, 16, %s152, [#allocation7]
        $region16: #{tpu_custom_call.1} parent=11 // pred_fallthru
          _
      $region12: #{tpu_custom_call.1} parent=5 // pred_fallthru
        _
      %p155 = scmp.lt.s32.totalorder %s16, 4
      // Predicated region
      $region17: #{tpu_custom_call.1} parent=5 // pred_check
        %p156 = pneg %p155
      $region18: #{tpu_custom_call.1} parent=5 // pred_check_branch
        %158 = sbr.rel (%p156) target = $region20
      $region19: #{tpu_custom_call.1} parent=5 // pred_region
        // Predicated region
        $region21: #{tpu_custom_call.1} parent=19 // pred_check
          %p159 = pneg %p50
        $region22: #{tpu_custom_call.1} parent=19 // pred_check_branch
          %161 = sbr.rel (%p159) target = $region24
        $region23: #{tpu_custom_call.1} parent=19 // pred_region
          #allocation10 [shape = 'u32[6]{0}', space=smem, size = 0x18, scoped, tag = 'DMA stride descriptor']
          %s162 = sand.u32 %s40, 1
          %s163 = scalar_lea.sflag [#allocation4], %s162
          %s164 = sand.u32 %s40, 1
          %s165 = smul.addr %s164, 4096
          %s166 = scalar_lea.vmem [#allocation3], %s165
          %s167 = smul.u32 8, %s23
          %s168 = smul.u32 128, %s24
          %s170 = ssub.s32 65536, 65536
          %171 = vsyncadd %s163, %s170
          %s172 = smul.addr %s167, 256
          %s173 = sadd.s32 %s168, %s172
          %s174 = smul.addr %s173, 64
          %s175 = scalar_lea.hbm %s0, %s174
          %s177 = sshll.u32 1, 14
          %s178 = sxor.u32 4294967295, %s177
          %s180 = sld [smem:[#allocation0]]
          %s181 = sadd.s32 2, %s180
          %s183 = sshll.u32 7, 26
          %s184 = sxor.u32 4294967295, %s183
          %s185 = sand.u32 0, %s184
          %s186 = sshll.u32 %s181, 26
          %s187 = sor.u32 %s185, %s186
          %s188 = sshll.u32 %s166, 4
          %s189 = int_to_ptr.vmem [resolvable:$true] %s188
          %195 = sst [smem:[#allocation10]] 16384
          %s196 = scalar_lea.smem [#allocation10], 1
          %197 = sst [smem:[%s196]] 8192
          %s198 = scalar_lea.smem [#allocation10], 2
          %199 = sst [smem:[%s198]] 128
          %s200 = scalar_lea.smem [#allocation10], 3
          %201 = sst [smem:[%s200]] 64
          %s202 = scalar_lea.smem [#allocation10], 4
          %203 = sst [smem:[%s202]] 64
          %s204 = scalar_lea.smem [#allocation10], 5
          %205 = sst [smem:[%s204]] 4
          %207 = dma.general %s175, 65536, %s189, %s163, [#allocation9], [#allocation10], %s187, 0
        $region24: #{tpu_custom_call.1} parent=19 // pred_fallthru
          _
        // Predicated region
        $region25: #{tpu_custom_call.1} parent=19 // pred_check
          %p208 = pneg %p76
        $region26: #{tpu_custom_call.1} parent=19 // pred_check_branch
          %210 = sbr.rel (%p208) target = $region28
        $region27: #{tpu_custom_call.1} parent=19 // pred_region
          %s211 = smul.u32 16, %s24
          %p212 = scmp.lt.s32.totalorder %s211, 31
          %s213 = scalar_select %p212, %s211, 31
          %s214 = smul.addr %s213, 8
          %s215 = scalar_lea.vmem %s1, %s214
          %s216 = smul.u32 16, %s24
        $region28: #{tpu_custom_call.1} parent=19 // pred_fallthru
          _
      $region20: #{tpu_custom_call.1} parent=5 // pred_fallthru
        _
      %p217 = scmp.le.s32.totalorder 1, %s16
      %p218 = scmp.lt.s32.totalorder %s16, 5
      %p219 = pnand %p217, %p218
      %p220 = pneg %p219
      // Predicated region
      $region29: #{tpu_custom_call.1} parent=5 // pred_check
        _
      $region30: #{tpu_custom_call.1} parent=5 // pred_check_branch
        %222 = sbr.rel (%p219) target = $region32
      $region31: #{tpu_custom_call.1} parent=5 // pred_region
        %s223 = ssub.s32 %s16, 1
        %s224 = sand.u32 %s43, 1
        %s225 = scalar_lea.sflag [#allocation4], %s224
        %s226 = sand.u32 %s43, 1
        %s227 = smul.addr %s226, 4096
        %s228 = scalar_lea.vmem [#allocation3], %s227
        // Predicated region
        $region33: #{tpu_custom_call.1} parent=31 // pred_check
          %p229 = pneg %p56
        $region34: #{tpu_custom_call.1} parent=31 // pred_check_branch
          %231 = sbr.rel (%p229) target = $region36
        $region35: #{tpu_custom_call.1} parent=31 // pred_region
          %232 = dma.done %s225, 65536
        $region36: #{tpu_custom_call.1} parent=31 // pred_fallthru
          _
        // Predicated region
        $region37: #{tpu_custom_call.1} parent=31 // pred_check
          %p233 = pneg %p103
        $region38: #{tpu_custom_call.1} parent=31 // pred_check_branch
          %235 = sbr.rel (%p233) target = $region40
        $region39: #{tpu_custom_call.1} parent=31 // pred_region
          %236 = dma.done [#allocation7], 16
        $region40: #{tpu_custom_call.1} parent=31 // pred_fallthru
          _
        %s237 = sand.u32 %s43, 1
        %s238 = scalar_lea.sflag [#allocation4], %s237
        %s239 = sand.u32 %s43, 1
        %s240 = smul.addr %s239, 4096
        %s241 = scalar_lea.vmem [#allocation3], %s240
        %p242 = pneg %p56
        %p243 = pneg %p53
        %s244 = smul.u32 16, %s26
        %p245 = scmp.lt.s32.totalorder %s244, 31
        %s246 = scalar_select %p245, %s244, 31
        %s247 = smul.addr %s246, 8
        %s248 = scalar_lea.vmem %s1, %s247
        %p249 = pneg %p82
        %p250 = pneg %p79
        %p251 = pneg %p103
        %p252 = pneg %p100
        %p253 = pneg %p129
        %p254 = pneg %p126
        %s255 = sand.u32 %s116, 1
        %s256 = scalar_lea.sflag [#allocation5], %s255
        %s257 = sand.u32 %s116, 1
        %s258 = smul.addr %s257, 8
        %s259 = scalar_lea.vmem [#allocation8], %s258
        %s260 = smul.u32 8, %s25
        %s261 = smul.u32 128, %s26
        %s262 = smul.u32 16, %s26
        %p263 = scmp.lt.s32.totalorder %s262, 31
        %s264 = scalar_select %p263, %s262, 31
        %s265 = smul.addr %s264, 8
        %s266 = scalar_lea.vmem %s1, %s265
        %s267 = smul.u32 16, %s26
        %p268 = scmp.eq.s32.totalorder %s26, 0
        // Predicated region
        $region41: #{tpu_custom_call.1} parent=31 // pred_check
          %p269 = pneg %p268
        $region42: #{tpu_custom_call.1} parent=31 // pred_check_branch
          %271 = sbr.rel (%p269) target = $region44
        $region43: #{tpu_custom_call.1} parent=31 // pred_region
          %vm272 = vcmask 130048
          %273 = vst.msk [vmem:[#allocation2] sm:$0xff] %vm272, 0.0
        $region44: #{tpu_custom_call.1} parent=31 // pred_fallthru
          _
        %v274 = vld [vmem:[%s228] sm:$0xf]
        %v275 = vld [vmem:[%s228 + $0x4] sm:$0xf]
        %v276 = vld [vmem:[%s228 + $0x8] sm:$0xf]
        %v277 = vld [vmem:[%s228 + $0xc] sm:$0xf]
        %v278 = vld [vmem:[%s228 + $0x10] sm:$0xf]
        %v279 = vld [vmem:[%s228 + $0x14] sm:$0xf]
        %v280 = vld [vmem:[%s228 + $0x18] sm:$0xf]
        %v281 = vld [vmem:[%s228 + $0x1c] sm:$0xf]
        %v282 = vld [vmem:[%s228 + $0x20] sm:$0xf]
        %v283 = vld [vmem:[%s228 + $0x24] sm:$0xf]
        %v284 = vld [vmem:[%s228 + $0x28] sm:$0xf]
        %v285 = vld [vmem:[%s228 + $0x2c] sm:$0xf]
        %v286 = vld [vmem:[%s228 + $0x30] sm:$0xf]
        %v287 = vld [vmem:[%s228 + $0x34] sm:$0xf]
        %v288 = vld [vmem:[%s228 + $0x38] sm:$0xf]
        %v289 = vld [vmem:[%s228 + $0x3c] sm:$0xf]
        %v290 = vld [vmem:[%s228 + $0x40] sm:$0xf]
        %v291 = vld [vmem:[%s228 + $0x44] sm:$0xf]
        %v292 = vld [vmem:[%s228 + $0x48] sm:$0xf]
        %v293 = vld [vmem:[%s228 + $0x4c] sm:$0xf]
        %v294 = vld [vmem:[%s228 + $0x50] sm:$0xf]
        %v295 = vld [vmem:[%s228 + $0x54] sm:$0xf]
        %v296 = vld [vmem:[%s228 + $0x58] sm:$0xf]
        %v297 = vld [vmem:[%s228 + $0x5c] sm:$0xf]
        %v298 = vld [vmem:[%s228 + $0x60] sm:$0xf]
        %v299 = vld [vmem:[%s228 + $0x64] sm:$0xf]
        %v300 = vld [vmem:[%s228 + $0x68] sm:$0xf]
        %v301 = vld [vmem:[%s228 + $0x6c] sm:$0xf]
        %v302 = vld [vmem:[%s228 + $0x70] sm:$0xf]
        %v303 = vld [vmem:[%s228 + $0x74] sm:$0xf]
        %v304 = vld [vmem:[%s228 + $0x78] sm:$0xf]
        %v305 = vld [vmem:[%s228 + $0x7c] sm:$0xf]
        %v306 = vld [vmem:[%s228 + $0x80] sm:$0xf]
        %v307 = vld [vmem:[%s228 + $0x84] sm:$0xf]
        %v308 = vld [vmem:[%s228 + $0x88] sm:$0xf]
        %v309 = vld [vmem:[%s228 + $0x8c] sm:$0xf]
        %v310 = vld [vmem:[%s228 + $0x90] sm:$0xf]
        %v311 = vld [vmem:[%s228 + $0x94] sm:$0xf]
        %v312 = vld [vmem:[%s228 + $0x98] sm:$0xf]
        %v313 = vld [vmem:[%s228 + $0x9c] sm:$0xf]
        %v314 = vld [vmem:[%s228 + $0xa0] sm:$0xf]
        %v315 = vld [vmem:[%s228 + $0xa4] sm:$0xf]
        %v316 = vld [vmem:[%s228 + $0xa8] sm:$0xf]
        %v317 = vld [vmem:[%s228 + $0xac] sm:$0xf]
        %v318 = vld [vmem:[%s228 + $0xb0] sm:$0xf]
        %v319 = vld [vmem:[%s228 + $0xb4] sm:$0xf]
        %v320 = vld [vmem:[%s228 + $0xb8] sm:$0xf]
        %v321 = vld [vmem:[%s228 + $0xbc] sm:$0xf]
        %v322 = vld [vmem:[%s228 + $0xc0] sm:$0xf]
        %v323 = vld [vmem:[%s228 + $0xc4] sm:$0xf]
        %v324 = vld [vmem:[%s228 + $0xc8] sm:$0xf]
        %v325 = vld [vmem:[%s228 + $0xcc] sm:$0xf]
        %v326 = vld [vmem:[%s228 + $0xd0] sm:$0xf]
        %v327 = vld [vmem:[%s228 + $0xd4] sm:$0xf]
        %v328 = vld [vmem:[%s228 + $0xd8] sm:$0xf]
        %v329 = vld [vmem:[%s228 + $0xdc] sm:$0xf]
        %v330 = vld [vmem:[%s228 + $0xe0] sm:$0xf]
        %v331 = vld [vmem:[%s228 + $0xe4] sm:$0xf]
        %v332 = vld [vmem:[%s228 + $0xe8] sm:$0xf]
        %v333 = vld [vmem:[%s228 + $0xec] sm:$0xf]
        %v334 = vld [vmem:[%s228 + $0xf0] sm:$0xf]
        %v335 = vld [vmem:[%s228 + $0xf4] sm:$0xf]
        %v336 = vld [vmem:[%s228 + $0xf8] sm:$0xf]
        %v337 = vld [vmem:[%s228 + $0xfc] sm:$0xf]
        %v338 = vld [vmem:[%s228 + $0x100] sm:$0xf]
        %v339 = vld [vmem:[%s228 + $0x104] sm:$0xf]
        %v340 = vld [vmem:[%s228 + $0x108] sm:$0xf]
        %v341 = vld [vmem:[%s228 + $0x10c] sm:$0xf]
        %v342 = vld [vmem:[%s228 + $0x110] sm:$0xf]
        %v343 = vld [vmem:[%s228 + $0x114] sm:$0xf]
        %v344 = vld [vmem:[%s228 + $0x118] sm:$0xf]
        %v345 = vld [vmem:[%s228 + $0x11c] sm:$0xf]
        %v346 = vld [vmem:[%s228 + $0x120] sm:$0xf]
        %v347 = vld [vmem:[%s228 + $0x124] sm:$0xf]
        %v348 = vld [vmem:[%s228 + $0x128] sm:$0xf]
        %v349 = vld [vmem:[%s228 + $0x12c] sm:$0xf]
        %v350 = vld [vmem:[%s228 + $0x130] sm:$0xf]
        %v351 = vld [vmem:[%s228 + $0x134] sm:$0xf]
        %v352 = vld [vmem:[%s228 + $0x138] sm:$0xf]
        %v353 = vld [vmem:[%s228 + $0x13c] sm:$0xf]
        %v354 = vld [vmem:[%s228 + $0x140] sm:$0xf]
        %v355 = vld [vmem:[%s228 + $0x144] sm:$0xf]
        %v356 = vld [vmem:[%s228 + $0x148] sm:$0xf]
        %v357 = vld [vmem:[%s228 + $0x14c] sm:$0xf]
        %v358 = vld [vmem:[%s228 + $0x150] sm:$0xf]
        %v359 = vld [vmem:[%s228 + $0x154] sm:$0xf]
        %v360 = vld [vmem:[%s228 + $0x158] sm:$0xf]
        %v361 = vld [vmem:[%s228 + $0x15c] sm:$0xf]
        %v362 = vld [vmem:[%s228 + $0x160] sm:$0xf]
        %v363 = vld [vmem:[%s228 + $0x164] sm:$0xf]
        %v364 = vld [vmem:[%s228 + $0x168] sm:$0xf]
        %v365 = vld [vmem:[%s228 + $0x16c] sm:$0xf]
        %v366 = vld [vmem:[%s228 + $0x170] sm:$0xf]
        %v367 = vld [vmem:[%s228 + $0x174] sm:$0xf]
        %v368 = vld [vmem:[%s228 + $0x178] sm:$0xf]
        %v369 = vld [vmem:[%s228 + $0x17c] sm:$0xf]
        %v370 = vld [vmem:[%s228 + $0x180] sm:$0xf]
        %v371 = vld [vmem:[%s228 + $0x184] sm:$0xf]
        %v372 = vld [vmem:[%s228 + $0x188] sm:$0xf]
        %v373 = vld [vmem:[%s228 + $0x18c] sm:$0xf]
        %v374 = vld [vmem:[%s228 + $0x190] sm:$0xf]
        %v375 = vld [vmem:[%s228 + $0x194] sm:$0xf]
        %v376 = vld [vmem:[%s228 + $0x198] sm:$0xf]
        %v377 = vld [vmem:[%s228 + $0x19c] sm:$0xf]
        %v378 = vld [vmem:[%s228 + $0x1a0] sm:$0xf]
        %v379 = vld [vmem:[%s228 + $0x1a4] sm:$0xf]
        %v380 = vld [vmem:[%s228 + $0x1a8] sm:$0xf]
        %v381 = vld [vmem:[%s228 + $0x1ac] sm:$0xf]
        %v382 = vld [vmem:[%s228 + $0x1b0] sm:$0xf]
        %v383 = vld [vmem:[%s228 + $0x1b4] sm:$0xf]
        %v384 = vld [vmem:[%s228 + $0x1b8] sm:$0xf]
        %v385 = vld [vmem:[%s228 + $0x1bc] sm:$0xf]
        %v386 = vld [vmem:[%s228 + $0x1c0] sm:$0xf]
        %v387 = vld [vmem:[%s228 + $0x1c4] sm:$0xf]
        %v388 = vld [vmem:[%s228 + $0x1c8] sm:$0xf]
        %v389 = vld [vmem:[%s228 + $0x1cc] sm:$0xf]
        %v390 = vld [vmem:[%s228 + $0x1d0] sm:$0xf]
        %v391 = vld [vmem:[%s228 + $0x1d4] sm:$0xf]
        %v392 = vld [vmem:[%s228 + $0x1d8] sm:$0xf]
        %v393 = vld [vmem:[%s228 + $0x1dc] sm:$0xf]
        %v394 = vld [vmem:[%s228 + $0x1e0] sm:$0xf]
        %v395 = vld [vmem:[%s228 + $0x1e4] sm:$0xf]
        %v396 = vld [vmem:[%s228 + $0x1e8] sm:$0xf]
        %v397 = vld [vmem:[%s228 + $0x1ec] sm:$0xf]
        %v398 = vld [vmem:[%s228 + $0x1f0] sm:$0xf]
        %v399 = vld [vmem:[%s228 + $0x1f4] sm:$0xf]
        %v400 = vld [vmem:[%s228 + $0x1f8] sm:$0xf]
        %v401 = vld [vmem:[%s228 + $0x1fc] sm:$0xf]
        %v402 = vld [vmem:[%s228 + $0x200] sm:$0xf]
        %v403 = vld [vmem:[%s228 + $0x204] sm:$0xf]
        %v404 = vld [vmem:[%s228 + $0x208] sm:$0xf]
        %v405 = vld [vmem:[%s228 + $0x20c] sm:$0xf]
        %v406 = vld [vmem:[%s228 + $0x210] sm:$0xf]
        %v407 = vld [vmem:[%s228 + $0x214] sm:$0xf]
        %v408 = vld [vmem:[%s228 + $0x218] sm:$0xf]
        %v409 = vld [vmem:[%s228 + $0x21c] sm:$0xf]
        %v410 = vld [vmem:[%s228 + $0x220] sm:$0xf]
        %v411 = vld [vmem:[%s228 + $0x224] sm:$0xf]
        %v412 = vld [vmem:[%s228 + $0x228] sm:$0xf]
        %v413 = vld [vmem:[%s228 + $0x22c] sm:$0xf]
        %v414 = vld [vmem:[%s228 + $0x230] sm:$0xf]
        %v415 = vld [vmem:[%s228 + $0x234] sm:$0xf]
        %v416 = vld [vmem:[%s228 + $0x238] sm:$0xf]
        %v417 = vld [vmem:[%s228 + $0x23c] sm:$0xf]
        %v418 = vld [vmem:[%s228 + $0x240] sm:$0xf]
        %v419 = vld [vmem:[%s228 + $0x244] sm:$0xf]
        %v420 = vld [vmem:[%s228 + $0x248] sm:$0xf]
        %v421 = vld [vmem:[%s228 + $0x24c] sm:$0xf]
        %v422 = vld [vmem:[%s228 + $0x250] sm:$0xf]
        %v423 = vld [vmem:[%s228 + $0x254] sm:$0xf]
        %v424 = vld [vmem:[%s228 + $0x258] sm:$0xf]
        %v425 = vld [vmem:[%s228 + $0x25c] sm:$0xf]
        %v426 = vld [vmem:[%s228 + $0x260] sm:$0xf]
        %v427 = vld [vmem:[%s228 + $0x264] sm:$0xf]
        %v428 = vld [vmem:[%s228 + $0x268] sm:$0xf]
        %v429 = vld [vmem:[%s228 + $0x26c] sm:$0xf]
        %v430 = vld [vmem:[%s228 + $0x270] sm:$0xf]
        %v431 = vld [vmem:[%s228 + $0x274] sm:$0xf]
        %v432 = vld [vmem:[%s228 + $0x278] sm:$0xf]
        %v433 = vld [vmem:[%s228 + $0x27c] sm:$0xf]
        %v434 = vld [vmem:[%s228 + $0x280] sm:$0xf]
        %v435 = vld [vmem:[%s228 + $0x284] sm:$0xf]
        %v436 = vld [vmem:[%s228 + $0x288] sm:$0xf]
        %v437 = vld [vmem:[%s228 + $0x28c] sm:$0xf]
        %v438 = vld [vmem:[%s228 + $0x290] sm:$0xf]
        %v439 = vld [vmem:[%s228 + $0x294] sm:$0xf]
        %v440 = vld [vmem:[%s228 + $0x298] sm:$0xf]
        %v441 = vld [vmem:[%s228 + $0x29c] sm:$0xf]
        %v442 = vld [vmem:[%s228 + $0x2a0] sm:$0xf]
        %v443 = vld [vmem:[%s228 + $0x2a4] sm:$0xf]
        %v444 = vld [vmem:[%s228 + $0x2a8] sm:$0xf]
        %v445 = vld [vmem:[%s228 + $0x2ac] sm:$0xf]
        %v446 = vld [vmem:[%s228 + $0x2b0] sm:$0xf]
        %v447 = vld [vmem:[%s228 + $0x2b4] sm:$0xf]
        %v448 = vld [vmem:[%s228 + $0x2b8] sm:$0xf]
        %v449 = vld [vmem:[%s228 + $0x2bc] sm:$0xf]
        %v450 = vld [vmem:[%s228 + $0x2c0] sm:$0xf]
        %v451 = vld [vmem:[%s228 + $0x2c4] sm:$0xf]
        %v452 = vld [vmem:[%s228 + $0x2c8] sm:$0xf]
        %v453 = vld [vmem:[%s228 + $0x2cc] sm:$0xf]
        %v454 = vld [vmem:[%s228 + $0x2d0] sm:$0xf]
        %v455 = vld [vmem:[%s228 + $0x2d4] sm:$0xf]
        %v456 = vld [vmem:[%s228 + $0x2d8] sm:$0xf]
        %v457 = vld [vmem:[%s228 + $0x2dc] sm:$0xf]
        %v458 = vld [vmem:[%s228 + $0x2e0] sm:$0xf]
        %v459 = vld [vmem:[%s228 + $0x2e4] sm:$0xf]
        %v460 = vld [vmem:[%s228 + $0x2e8] sm:$0xf]
        %v461 = vld [vmem:[%s228 + $0x2ec] sm:$0xf]
        %v462 = vld [vmem:[%s228 + $0x2f0] sm:$0xf]
        %v463 = vld [vmem:[%s228 + $0x2f4] sm:$0xf]
        %v464 = vld [vmem:[%s228 + $0x2f8] sm:$0xf]
        %v465 = vld [vmem:[%s228 + $0x2fc] sm:$0xf]
        %v466 = vld [vmem:[%s228 + $0x300] sm:$0xf]
        %v467 = vld [vmem:[%s228 + $0x304] sm:$0xf]
        %v468 = vld [vmem:[%s228 + $0x308] sm:$0xf]
        %v469 = vld [vmem:[%s228 + $0x30c] sm:$0xf]
        %v470 = vld [vmem:[%s228 + $0x310] sm:$0xf]
        %v471 = vld [vmem:[%s228 + $0x314] sm:$0xf]
        %v472 = vld [vmem:[%s228 + $0x318] sm:$0xf]
        %v473 = vld [vmem:[%s228 + $0x31c] sm:$0xf]
        %v474 = vld [vmem:[%s228 + $0x320] sm:$0xf]
        %v475 = vld [vmem:[%s228 + $0x324] sm:$0xf]
        %v476 = vld [vmem:[%s228 + $0x328] sm:$0xf]
        %v477 = vld [vmem:[%s228 + $0x32c] sm:$0xf]
        %v478 = vld [vmem:[%s228 + $0x330] sm:$0xf]
        %v479 = vld [vmem:[%s228 + $0x334] sm:$0xf]
        %v480 = vld [vmem:[%s228 + $0x338] sm:$0xf]
        %v481 = vld [vmem:[%s228 + $0x33c] sm:$0xf]
        %v482 = vld [vmem:[%s228 + $0x340] sm:$0xf]
        %v483 = vld [vmem:[%s228 + $0x344] sm:$0xf]
        %v484 = vld [vmem:[%s228 + $0x348] sm:$0xf]
        %v485 = vld [vmem:[%s228 + $0x34c] sm:$0xf]
        %v486 = vld [vmem:[%s228 + $0x350] sm:$0xf]
        %v487 = vld [vmem:[%s228 + $0x354] sm:$0xf]
        %v488 = vld [vmem:[%s228 + $0x358] sm:$0xf]
        %v489 = vld [vmem:[%s228 + $0x35c] sm:$0xf]
        %v490 = vld [vmem:[%s228 + $0x360] sm:$0xf]
        %v491 = vld [vmem:[%s228 + $0x364] sm:$0xf]
        %v492 = vld [vmem:[%s228 + $0x368] sm:$0xf]
        %v493 = vld [vmem:[%s228 + $0x36c] sm:$0xf]
        %v494 = vld [vmem:[%s228 + $0x370] sm:$0xf]
        %v495 = vld [vmem:[%s228 + $0x374] sm:$0xf]
        %v496 = vld [vmem:[%s228 + $0x378] sm:$0xf]
        %v497 = vld [vmem:[%s228 + $0x37c] sm:$0xf]
        %v498 = vld [vmem:[%s228 + $0x380] sm:$0xf]
        %v499 = vld [vmem:[%s228 + $0x384] sm:$0xf]
        %v500 = vld [vmem:[%s228 + $0x388] sm:$0xf]
        %v501 = vld [vmem:[%s228 + $0x38c] sm:$0xf]
        %v502 = vld [vmem:[%s228 + $0x390] sm:$0xf]
        %v503 = vld [vmem:[%s228 + $0x394] sm:$0xf]
        %v504 = vld [vmem:[%s228 + $0x398] sm:$0xf]
        %v505 = vld [vmem:[%s228 + $0x39c] sm:$0xf]
        %v506 = vld [vmem:[%s228 + $0x3a0] sm:$0xf]
        %v507 = vld [vmem:[%s228 + $0x3a4] sm:$0xf]
        %v508 = vld [vmem:[%s228 + $0x3a8] sm:$0xf]
        %v509 = vld [vmem:[%s228 + $0x3ac] sm:$0xf]
        %v510 = vld [vmem:[%s228 + $0x3b0] sm:$0xf]
        %v511 = vld [vmem:[%s228 + $0x3b4] sm:$0xf]
        %v512 = vld [vmem:[%s228 + $0x3b8] sm:$0xf]
        %v513 = vld [vmem:[%s228 + $0x3bc] sm:$0xf]
        %v514 = vld [vmem:[%s228 + $0x3c0] sm:$0xf]
        %v515 = vld [vmem:[%s228 + $0x3c4] sm:$0xf]
        %v516 = vld [vmem:[%s228 + $0x3c8] sm:$0xf]
        %v517 = vld [vmem:[%s228 + $0x3cc] sm:$0xf]
        %v518 = vld [vmem:[%s228 + $0x3d0] sm:$0xf]
        %v519 = vld [vmem:[%s228 + $0x3d4] sm:$0xf]
        %v520 = vld [vmem:[%s228 + $0x3d8] sm:$0xf]
        %v521 = vld [vmem:[%s228 + $0x3dc] sm:$0xf]
        %v522 = vld [vmem:[%s228 + $0x3e0] sm:$0xf]
        %v523 = vld [vmem:[%s228 + $0x3e4] sm:$0xf]
        %v524 = vld [vmem:[%s228 + $0x3e8] sm:$0xf]
        %v525 = vld [vmem:[%s228 + $0x3ec] sm:$0xf]
        %v526 = vld [vmem:[%s228 + $0x3f0] sm:$0xf]
        %v527 = vld [vmem:[%s228 + $0x3f4] sm:$0xf]
        %v528 = vld [vmem:[%s228 + $0x3f8] sm:$0xf]
        %v529 = vld [vmem:[%s228 + $0x3fc] sm:$0xf]
        %v530 = vld [vmem:[%s228 + $0x400] sm:$0xf]
        %v531 = vld [vmem:[%s228 + $0x404] sm:$0xf]
        %v532 = vld [vmem:[%s228 + $0x408] sm:$0xf]
        %v533 = vld [vmem:[%s228 + $0x40c] sm:$0xf]
        %v534 = vld [vmem:[%s228 + $0x410] sm:$0xf]
        %v535 = vld [vmem:[%s228 + $0x414] sm:$0xf]
        %v536 = vld [vmem:[%s228 + $0x418] sm:$0xf]
        %v537 = vld [vmem:[%s228 + $0x41c] sm:$0xf]
        %v538 = vld [vmem:[%s228 + $0x420] sm:$0xf]
        %v539 = vld [vmem:[%s228 + $0x424] sm:$0xf]
        %v540 = vld [vmem:[%s228 + $0x428] sm:$0xf]
        %v541 = vld [vmem:[%s228 + $0x42c] sm:$0xf]
        %v542 = vld [vmem:[%s228 + $0x430] sm:$0xf]
        %v543 = vld [vmem:[%s228 + $0x434] sm:$0xf]
        %v544 = vld [vmem:[%s228 + $0x438] sm:$0xf]
        %v545 = vld [vmem:[%s228 + $0x43c] sm:$0xf]
        %v546 = vld [vmem:[%s228 + $0x440] sm:$0xf]
        %v547 = vld [vmem:[%s228 + $0x444] sm:$0xf]
        %v548 = vld [vmem:[%s228 + $0x448] sm:$0xf]
        %v549 = vld [vmem:[%s228 + $0x44c] sm:$0xf]
        %v550 = vld [vmem:[%s228 + $0x450] sm:$0xf]
        %v551 = vld [vmem:[%s228 + $0x454] sm:$0xf]
        %v552 = vld [vmem:[%s228 + $0x458] sm:$0xf]
        %v553 = vld [vmem:[%s228 + $0x45c] sm:$0xf]
        %v554 = vld [vmem:[%s228 + $0x460] sm:$0xf]
        %v555 = vld [vmem:[%s228 + $0x464] sm:$0xf]
        %v556 = vld [vmem:[%s228 + $0x468] sm:$0xf]
        %v557 = vld [vmem:[%s228 + $0x46c] sm:$0xf]
        %v558 = vld [vmem:[%s228 + $0x470] sm:$0xf]
        %v559 = vld [vmem:[%s228 + $0x474] sm:$0xf]
        %v560 = vld [vmem:[%s228 + $0x478] sm:$0xf]
        %v561 = vld [vmem:[%s228 + $0x47c] sm:$0xf]
        %v562 = vld [vmem:[%s228 + $0x480] sm:$0xf]
        %v563 = vld [vmem:[%s228 + $0x484] sm:$0xf]
        %v564 = vld [vmem:[%s228 + $0x488] sm:$0xf]
        %v565 = vld [vmem:[%s228 + $0x48c] sm:$0xf]
        %v566 = vld [vmem:[%s228 + $0x490] sm:$0xf]
        %v567 = vld [vmem:[%s228 + $0x494] sm:$0xf]
        %v568 = vld [vmem:[%s228 + $0x498] sm:$0xf]
        %v569 = vld [vmem:[%s228 + $0x49c] sm:$0xf]
        %v570 = vld [vmem:[%s228 + $0x4a0] sm:$0xf]
        %v571 = vld [vmem:[%s228 + $0x4a4] sm:$0xf]
        %v572 = vld [vmem:[%s228 + $0x4a8] sm:$0xf]
        %v573 = vld [vmem:[%s228 + $0x4ac] sm:$0xf]
        %v574 = vld [vmem:[%s228 + $0x4b0] sm:$0xf]
        %v575 = vld [vmem:[%s228 + $0x4b4] sm:$0xf]
        %v576 = vld [vmem:[%s228 + $0x4b8] sm:$0xf]
        %v577 = vld [vmem:[%s228 + $0x4bc] sm:$0xf]
        %v578 = vld [vmem:[%s228 + $0x4c0] sm:$0xf]
        %v579 = vld [vmem:[%s228 + $0x4c4] sm:$0xf]
        %v580 = vld [vmem:[%s228 + $0x4c8] sm:$0xf]
        %v581 = vld [vmem:[%s228 + $0x4cc] sm:$0xf]
        %v582 = vld [vmem:[%s228 + $0x4d0] sm:$0xf]
        %v583 = vld [vmem:[%s228 + $0x4d4] sm:$0xf]
        %v584 = vld [vmem:[%s228 + $0x4d8] sm:$0xf]
        %v585 = vld [vmem:[%s228 + $0x4dc] sm:$0xf]
        %v586 = vld [vmem:[%s228 + $0x4e0] sm:$0xf]
        %v587 = vld [vmem:[%s228 + $0x4e4] sm:$0xf]
        %v588 = vld [vmem:[%s228 + $0x4e8] sm:$0xf]
        %v589 = vld [vmem:[%s228 + $0x4ec] sm:$0xf]
        %v590 = vld [vmem:[%s228 + $0x4f0] sm:$0xf]
        %v591 = vld [vmem:[%s228 + $0x4f4] sm:$0xf]
        %v592 = vld [vmem:[%s228 + $0x4f8] sm:$0xf]
        %v593 = vld [vmem:[%s228 + $0x4fc] sm:$0xf]
        %v594 = vld [vmem:[%s228 + $0x500] sm:$0xf]
        %v595 = vld [vmem:[%s228 + $0x504] sm:$0xf]
        %v596 = vld [vmem:[%s228 + $0x508] sm:$0xf]
        %v597 = vld [vmem:[%s228 + $0x50c] sm:$0xf]
        %v598 = vld [vmem:[%s228 + $0x510] sm:$0xf]
        %v599 = vld [vmem:[%s228 + $0x514] sm:$0xf]
        %v600 = vld [vmem:[%s228 + $0x518] sm:$0xf]
        %v601 = vld [vmem:[%s228 + $0x51c] sm:$0xf]
        %v602 = vld [vmem:[%s228 + $0x520] sm:$0xf]
        %v603 = vld [vmem:[%s228 + $0x524] sm:$0xf]
        %v604 = vld [vmem:[%s228 + $0x528] sm:$0xf]
        %v605 = vld [vmem:[%s228 + $0x52c] sm:$0xf]
        %v606 = vld [vmem:[%s228 + $0x530] sm:$0xf]
        %v607 = vld [vmem:[%s228 + $0x534] sm:$0xf]
        %v608 = vld [vmem:[%s228 + $0x538] sm:$0xf]
        %v609 = vld [vmem:[%s228 + $0x53c] sm:$0xf]
        %v610 = vld [vmem:[%s228 + $0x540] sm:$0xf]
        %v611 = vld [vmem:[%s228 + $0x544] sm:$0xf]
        %v612 = vld [vmem:[%s228 + $0x548] sm:$0xf]
        %v613 = vld [vmem:[%s228 + $0x54c] sm:$0xf]
        %v614 = vld [vmem:[%s228 + $0x550] sm:$0xf]
        %v615 = vld [vmem:[%s228 + $0x554] sm:$0xf]
        %v616 = vld [vmem:[%s228 + $0x558] sm:$0xf]
        %v617 = vld [vmem:[%s228 + $0x55c] sm:$0xf]
        %v618 = vld [vmem:[%s228 + $0x560] sm:$0xf]
        %v619 = vld [vmem:[%s228 + $0x564] sm:$0xf]
        %v620 = vld [vmem:[%s228 + $0x568] sm:$0xf]
        %v621 = vld [vmem:[%s228 + $0x56c] sm:$0xf]
        %v622 = vld [vmem:[%s228 + $0x570] sm:$0xf]
        %v623 = vld [vmem:[%s228 + $0x574] sm:$0xf]
        %v624 = vld [vmem:[%s228 + $0x578] sm:$0xf]
        %v625 = vld [vmem:[%s228 + $0x57c] sm:$0xf]
        %v626 = vld [vmem:[%s228 + $0x580] sm:$0xf]
        %v627 = vld [vmem:[%s228 + $0x584] sm:$0xf]
        %v628 = vld [vmem:[%s228 + $0x588] sm:$0xf]
        %v629 = vld [vmem:[%s228 + $0x58c] sm:$0xf]
        %v630 = vld [vmem:[%s228 + $0x590] sm:$0xf]
        %v631 = vld [vmem:[%s228 + $0x594] sm:$0xf]
        %v632 = vld [vmem:[%s228 + $0x598] sm:$0xf]
        %v633 = vld [vmem:[%s228 + $0x59c] sm:$0xf]
        %v634 = vld [vmem:[%s228 + $0x5a0] sm:$0xf]
        %v635 = vld [vmem:[%s228 + $0x5a4] sm:$0xf]
        %v636 = vld [vmem:[%s228 + $0x5a8] sm:$0xf]
        %v637 = vld [vmem:[%s228 + $0x5ac] sm:$0xf]
        %v638 = vld [vmem:[%s228 + $0x5b0] sm:$0xf]
        %v639 = vld [vmem:[%s228 + $0x5b4] sm:$0xf]
        %v640 = vld [vmem:[%s228 + $0x5b8] sm:$0xf]
        %v641 = vld [vmem:[%s228 + $0x5bc] sm:$0xf]
        %v642 = vld [vmem:[%s228 + $0x5c0] sm:$0xf]
        %v643 = vld [vmem:[%s228 + $0x5c4] sm:$0xf]
        %v644 = vld [vmem:[%s228 + $0x5c8] sm:$0xf]
        %v645 = vld [vmem:[%s228 + $0x5cc] sm:$0xf]
        %v646 = vld [vmem:[%s228 + $0x5d0] sm:$0xf]
        %v647 = vld [vmem:[%s228 + $0x5d4] sm:$0xf]
        %v648 = vld [vmem:[%s228 + $0x5d8] sm:$0xf]
        %v649 = vld [vmem:[%s228 + $0x5dc] sm:$0xf]
        %v650 = vld [vmem:[%s228 + $0x5e0] sm:$0xf]
        %v651 = vld [vmem:[%s228 + $0x5e4] sm:$0xf]
        %v652 = vld [vmem:[%s228 + $0x5e8] sm:$0xf]
        %v653 = vld [vmem:[%s228 + $0x5ec] sm:$0xf]
        %v654 = vld [vmem:[%s228 + $0x5f0] sm:$0xf]
        %v655 = vld [vmem:[%s228 + $0x5f4] sm:$0xf]
        %v656 = vld [vmem:[%s228 + $0x5f8] sm:$0xf]
        %v657 = vld [vmem:[%s228 + $0x5fc] sm:$0xf]
        %v658 = vld [vmem:[%s228 + $0x600] sm:$0xf]
        %v659 = vld [vmem:[%s228 + $0x604] sm:$0xf]
        %v660 = vld [vmem:[%s228 + $0x608] sm:$0xf]
        %v661 = vld [vmem:[%s228 + $0x60c] sm:$0xf]
        %v662 = vld [vmem:[%s228 + $0x610] sm:$0xf]
        %v663 = vld [vmem:[%s228 + $0x614] sm:$0xf]
        %v664 = vld [vmem:[%s228 + $0x618] sm:$0xf]
        %v665 = vld [vmem:[%s228 + $0x61c] sm:$0xf]
        %v666 = vld [vmem:[%s228 + $0x620] sm:$0xf]
        %v667 = vld [vmem:[%s228 + $0x624] sm:$0xf]
        %v668 = vld [vmem:[%s228 + $0x628] sm:$0xf]
        %v669 = vld [vmem:[%s228 + $0x62c] sm:$0xf]
        %v670 = vld [vmem:[%s228 + $0x630] sm:$0xf]
        %v671 = vld [vmem:[%s228 + $0x634] sm:$0xf]
        %v672 = vld [vmem:[%s228 + $0x638] sm:$0xf]
        %v673 = vld [vmem:[%s228 + $0x63c] sm:$0xf]
        %v674 = vld [vmem:[%s228 + $0x640] sm:$0xf]
        %v675 = vld [vmem:[%s228 + $0x644] sm:$0xf]
        %v676 = vld [vmem:[%s228 + $0x648] sm:$0xf]
        %v677 = vld [vmem:[%s228 + $0x64c] sm:$0xf]
        %v678 = vld [vmem:[%s228 + $0x650] sm:$0xf]
        %v679 = vld [vmem:[%s228 + $0x654] sm:$0xf]
        %v680 = vld [vmem:[%s228 + $0x658] sm:$0xf]
        %v681 = vld [vmem:[%s228 + $0x65c] sm:$0xf]
        %v682 = vld [vmem:[%s228 + $0x660] sm:$0xf]
        %v683 = vld [vmem:[%s228 + $0x664] sm:$0xf]
        %v684 = vld [vmem:[%s228 + $0x668] sm:$0xf]
        %v685 = vld [vmem:[%s228 + $0x66c] sm:$0xf]
        %v686 = vld [vmem:[%s228 + $0x670] sm:$0xf]
        %v687 = vld [vmem:[%s228 + $0x674] sm:$0xf]
        %v688 = vld [vmem:[%s228 + $0x678] sm:$0xf]
        %v689 = vld [vmem:[%s228 + $0x67c] sm:$0xf]
        %v690 = vld [vmem:[%s228 + $0x680] sm:$0xf]
        %v691 = vld [vmem:[%s228 + $0x684] sm:$0xf]
        %v692 = vld [vmem:[%s228 + $0x688] sm:$0xf]
        %v693 = vld [vmem:[%s228 + $0x68c] sm:$0xf]
        %v694 = vld [vmem:[%s228 + $0x690] sm:$0xf]
        %v695 = vld [vmem:[%s228 + $0x694] sm:$0xf]
        %v696 = vld [vmem:[%s228 + $0x698] sm:$0xf]
        %v697 = vld [vmem:[%s228 + $0x69c] sm:$0xf]
        %v698 = vld [vmem:[%s228 + $0x6a0] sm:$0xf]
        %v699 = vld [vmem:[%s228 + $0x6a4] sm:$0xf]
        %v700 = vld [vmem:[%s228 + $0x6a8] sm:$0xf]
        %v701 = vld [vmem:[%s228 + $0x6ac] sm:$0xf]
        %v702 = vld [vmem:[%s228 + $0x6b0] sm:$0xf]
        %v703 = vld [vmem:[%s228 + $0x6b4] sm:$0xf]
        %v704 = vld [vmem:[%s228 + $0x6b8] sm:$0xf]
        %v705 = vld [vmem:[%s228 + $0x6bc] sm:$0xf]
        %v706 = vld [vmem:[%s228 + $0x6c0] sm:$0xf]
        %v707 = vld [vmem:[%s228 + $0x6c4] sm:$0xf]
        %v708 = vld [vmem:[%s228 + $0x6c8] sm:$0xf]
        %v709 = vld [vmem:[%s228 + $0x6cc] sm:$0xf]
        %v710 = vld [vmem:[%s228 + $0x6d0] sm:$0xf]
        %v711 = vld [vmem:[%s228 + $0x6d4] sm:$0xf]
        %v712 = vld [vmem:[%s228 + $0x6d8] sm:$0xf]
        %v713 = vld [vmem:[%s228 + $0x6dc] sm:$0xf]
        %v714 = vld [vmem:[%s228 + $0x6e0] sm:$0xf]
        %v715 = vld [vmem:[%s228 + $0x6e4] sm:$0xf]
        %v716 = vld [vmem:[%s228 + $0x6e8] sm:$0xf]
        %v717 = vld [vmem:[%s228 + $0x6ec] sm:$0xf]
        %v718 = vld [vmem:[%s228 + $0x6f0] sm:$0xf]
        %v719 = vld [vmem:[%s228 + $0x6f4] sm:$0xf]
        %v720 = vld [vmem:[%s228 + $0x6f8] sm:$0xf]
        %v721 = vld [vmem:[%s228 + $0x6fc] sm:$0xf]
        %v722 = vld [vmem:[%s228 + $0x700] sm:$0xf]
        %v723 = vld [vmem:[%s228 + $0x704] sm:$0xf]
        %v724 = vld [vmem:[%s228 + $0x708] sm:$0xf]
        %v725 = vld [vmem:[%s228 + $0x70c] sm:$0xf]
        %v726 = vld [vmem:[%s228 + $0x710] sm:$0xf]
        %v727 = vld [vmem:[%s228 + $0x714] sm:$0xf]
        %v728 = vld [vmem:[%s228 + $0x718] sm:$0xf]
        %v729 = vld [vmem:[%s228 + $0x71c] sm:$0xf]
        %v730 = vld [vmem:[%s228 + $0x720] sm:$0xf]
        %v731 = vld [vmem:[%s228 + $0x724] sm:$0xf]
        %v732 = vld [vmem:[%s228 + $0x728] sm:$0xf]
        %v733 = vld [vmem:[%s228 + $0x72c] sm:$0xf]
        %v734 = vld [vmem:[%s228 + $0x730] sm:$0xf]
        %v735 = vld [vmem:[%s228 + $0x734] sm:$0xf]
        %v736 = vld [vmem:[%s228 + $0x738] sm:$0xf]
        %v737 = vld [vmem:[%s228 + $0x73c] sm:$0xf]
        %v738 = vld [vmem:[%s228 + $0x740] sm:$0xf]
        %v739 = vld [vmem:[%s228 + $0x744] sm:$0xf]
        %v740 = vld [vmem:[%s228 + $0x748] sm:$0xf]
        %v741 = vld [vmem:[%s228 + $0x74c] sm:$0xf]
        %v742 = vld [vmem:[%s228 + $0x750] sm:$0xf]
        %v743 = vld [vmem:[%s228 + $0x754] sm:$0xf]
        %v744 = vld [vmem:[%s228 + $0x758] sm:$0xf]
        %v745 = vld [vmem:[%s228 + $0x75c] sm:$0xf]
        %v746 = vld [vmem:[%s228 + $0x760] sm:$0xf]
        %v747 = vld [vmem:[%s228 + $0x764] sm:$0xf]
        %v748 = vld [vmem:[%s228 + $0x768] sm:$0xf]
        %v749 = vld [vmem:[%s228 + $0x76c] sm:$0xf]
        %v750 = vld [vmem:[%s228 + $0x770] sm:$0xf]
        %v751 = vld [vmem:[%s228 + $0x774] sm:$0xf]
        %v752 = vld [vmem:[%s228 + $0x778] sm:$0xf]
        %v753 = vld [vmem:[%s228 + $0x77c] sm:$0xf]
        %v754 = vld [vmem:[%s228 + $0x780] sm:$0xf]
        %v755 = vld [vmem:[%s228 + $0x784] sm:$0xf]
        %v756 = vld [vmem:[%s228 + $0x788] sm:$0xf]
        %v757 = vld [vmem:[%s228 + $0x78c] sm:$0xf]
        %v758 = vld [vmem:[%s228 + $0x790] sm:$0xf]
        %v759 = vld [vmem:[%s228 + $0x794] sm:$0xf]
        %v760 = vld [vmem:[%s228 + $0x798] sm:$0xf]
        %v761 = vld [vmem:[%s228 + $0x79c] sm:$0xf]
        %v762 = vld [vmem:[%s228 + $0x7a0] sm:$0xf]
        %v763 = vld [vmem:[%s228 + $0x7a4] sm:$0xf]
        %v764 = vld [vmem:[%s228 + $0x7a8] sm:$0xf]
        %v765 = vld [vmem:[%s228 + $0x7ac] sm:$0xf]
        %v766 = vld [vmem:[%s228 + $0x7b0] sm:$0xf]
        %v767 = vld [vmem:[%s228 + $0x7b4] sm:$0xf]
        %v768 = vld [vmem:[%s228 + $0x7b8] sm:$0xf]
        %v769 = vld [vmem:[%s228 + $0x7bc] sm:$0xf]
        %v770 = vld [vmem:[%s228 + $0x7c0] sm:$0xf]
        %v771 = vld [vmem:[%s228 + $0x7c4] sm:$0xf]
        %v772 = vld [vmem:[%s228 + $0x7c8] sm:$0xf]
        %v773 = vld [vmem:[%s228 + $0x7cc] sm:$0xf]
        %v774 = vld [vmem:[%s228 + $0x7d0] sm:$0xf]
        %v775 = vld [vmem:[%s228 + $0x7d4] sm:$0xf]
        %v776 = vld [vmem:[%s228 + $0x7d8] sm:$0xf]
        %v777 = vld [vmem:[%s228 + $0x7dc] sm:$0xf]
        %v778 = vld [vmem:[%s228 + $0x7e0] sm:$0xf]
        %v779 = vld [vmem:[%s228 + $0x7e4] sm:$0xf]
        %v780 = vld [vmem:[%s228 + $0x7e8] sm:$0xf]
        %v781 = vld [vmem:[%s228 + $0x7ec] sm:$0xf]
        %v782 = vld [vmem:[%s228 + $0x7f0] sm:$0xf]
        %v783 = vld [vmem:[%s228 + $0x7f4] sm:$0xf]
        %v784 = vld [vmem:[%s228 + $0x7f8] sm:$0xf]
        %v785 = vld [vmem:[%s228 + $0x7fc] sm:$0xf]
        %v786 = vld [vmem:[%s228 + $0x800] sm:$0xf]
        %v787 = vld [vmem:[%s228 + $0x804] sm:$0xf]
        %v788 = vld [vmem:[%s228 + $0x808] sm:$0xf]
        %v789 = vld [vmem:[%s228 + $0x80c] sm:$0xf]
        %v790 = vld [vmem:[%s228 + $0x810] sm:$0xf]
        %v791 = vld [vmem:[%s228 + $0x814] sm:$0xf]
        %v792 = vld [vmem:[%s228 + $0x818] sm:$0xf]
        %v793 = vld [vmem:[%s228 + $0x81c] sm:$0xf]
        %v794 = vld [vmem:[%s228 + $0x820] sm:$0xf]
        %v795 = vld [vmem:[%s228 + $0x824] sm:$0xf]
        %v796 = vld [vmem:[%s228 + $0x828] sm:$0xf]
        %v797 = vld [vmem:[%s228 + $0x82c] sm:$0xf]
        %v798 = vld [vmem:[%s228 + $0x830] sm:$0xf]
        %v799 = vld [vmem:[%s228 + $0x834] sm:$0xf]
        %v800 = vld [vmem:[%s228 + $0x838] sm:$0xf]
        %v801 = vld [vmem:[%s228 + $0x83c] sm:$0xf]
        %v802 = vld [vmem:[%s228 + $0x840] sm:$0xf]
        %v803 = vld [vmem:[%s228 + $0x844] sm:$0xf]
        %v804 = vld [vmem:[%s228 + $0x848] sm:$0xf]
        %v805 = vld [vmem:[%s228 + $0x84c] sm:$0xf]
        %v806 = vld [vmem:[%s228 + $0x850] sm:$0xf]
        %v807 = vld [vmem:[%s228 + $0x854] sm:$0xf]
        %v808 = vld [vmem:[%s228 + $0x858] sm:$0xf]
        %v809 = vld [vmem:[%s228 + $0x85c] sm:$0xf]
        %v810 = vld [vmem:[%s228 + $0x860] sm:$0xf]
        %v811 = vld [vmem:[%s228 + $0x864] sm:$0xf]
        %v812 = vld [vmem:[%s228 + $0x868] sm:$0xf]
        %v813 = vld [vmem:[%s228 + $0x86c] sm:$0xf]
        %v814 = vld [vmem:[%s228 + $0x870] sm:$0xf]
        %v815 = vld [vmem:[%s228 + $0x874] sm:$0xf]
        %v816 = vld [vmem:[%s228 + $0x878] sm:$0xf]
        %v817 = vld [vmem:[%s228 + $0x87c] sm:$0xf]
        %v818 = vld [vmem:[%s228 + $0x880] sm:$0xf]
        %v819 = vld [vmem:[%s228 + $0x884] sm:$0xf]
        %v820 = vld [vmem:[%s228 + $0x888] sm:$0xf]
        %v821 = vld [vmem:[%s228 + $0x88c] sm:$0xf]
        %v822 = vld [vmem:[%s228 + $0x890] sm:$0xf]
        %v823 = vld [vmem:[%s228 + $0x894] sm:$0xf]
        %v824 = vld [vmem:[%s228 + $0x898] sm:$0xf]
        %v825 = vld [vmem:[%s228 + $0x89c] sm:$0xf]
        %v826 = vld [vmem:[%s228 + $0x8a0] sm:$0xf]
        %v827 = vld [vmem:[%s228 + $0x8a4] sm:$0xf]
        %v828 = vld [vmem:[%s228 + $0x8a8] sm:$0xf]
        %v829 = vld [vmem:[%s228 + $0x8ac] sm:$0xf]
        %v830 = vld [vmem:[%s228 + $0x8b0] sm:$0xf]
        %v831 = vld [vmem:[%s228 + $0x8b4] sm:$0xf]
        %v832 = vld [vmem:[%s228 + $0x8b8] sm:$0xf]
        %v833 = vld [vmem:[%s228 + $0x8bc] sm:$0xf]
        %v834 = vld [vmem:[%s228 + $0x8c0] sm:$0xf]
        %v835 = vld [vmem:[%s228 + $0x8c4] sm:$0xf]
        %v836 = vld [vmem:[%s228 + $0x8c8] sm:$0xf]
        %v837 = vld [vmem:[%s228 + $0x8cc] sm:$0xf]
        %v838 = vld [vmem:[%s228 + $0x8d0] sm:$0xf]
        %v839 = vld [vmem:[%s228 + $0x8d4] sm:$0xf]
        %v840 = vld [vmem:[%s228 + $0x8d8] sm:$0xf]
        %v841 = vld [vmem:[%s228 + $0x8dc] sm:$0xf]
        %v842 = vld [vmem:[%s228 + $0x8e0] sm:$0xf]
        %v843 = vld [vmem:[%s228 + $0x8e4] sm:$0xf]
        %v844 = vld [vmem:[%s228 + $0x8e8] sm:$0xf]
        %v845 = vld [vmem:[%s228 + $0x8ec] sm:$0xf]
        %v846 = vld [vmem:[%s228 + $0x8f0] sm:$0xf]
        %v847 = vld [vmem:[%s228 + $0x8f4] sm:$0xf]
        %v848 = vld [vmem:[%s228 + $0x8f8] sm:$0xf]
        %v849 = vld [vmem:[%s228 + $0x8fc] sm:$0xf]
        %v850 = vld [vmem:[%s228 + $0x900] sm:$0xf]
        %v851 = vld [vmem:[%s228 + $0x904] sm:$0xf]
        %v852 = vld [vmem:[%s228 + $0x908] sm:$0xf]
        %v853 = vld [vmem:[%s228 + $0x90c] sm:$0xf]
        %v854 = vld [vmem:[%s228 + $0x910] sm:$0xf]
        %v855 = vld [vmem:[%s228 + $0x914] sm:$0xf]
        %v856 = vld [vmem:[%s228 + $0x918] sm:$0xf]
        %v857 = vld [vmem:[%s228 + $0x91c] sm:$0xf]
        %v858 = vld [vmem:[%s228 + $0x920] sm:$0xf]
        %v859 = vld [vmem:[%s228 + $0x924] sm:$0xf]
        %v860 = vld [vmem:[%s228 + $0x928] sm:$0xf]
        %v861 = vld [vmem:[%s228 + $0x92c] sm:$0xf]
        %v862 = vld [vmem:[%s228 + $0x930] sm:$0xf]
        %v863 = vld [vmem:[%s228 + $0x934] sm:$0xf]
        %v864 = vld [vmem:[%s228 + $0x938] sm:$0xf]
        %v865 = vld [vmem:[%s228 + $0x93c] sm:$0xf]
        %v866 = vld [vmem:[%s228 + $0x940] sm:$0xf]
        %v867 = vld [vmem:[%s228 + $0x944] sm:$0xf]
        %v868 = vld [vmem:[%s228 + $0x948] sm:$0xf]
        %v869 = vld [vmem:[%s228 + $0x94c] sm:$0xf]
        %v870 = vld [vmem:[%s228 + $0x950] sm:$0xf]
        %v871 = vld [vmem:[%s228 + $0x954] sm:$0xf]
        %v872 = vld [vmem:[%s228 + $0x958] sm:$0xf]
        %v873 = vld [vmem:[%s228 + $0x95c] sm:$0xf]
        %v874 = vld [vmem:[%s228 + $0x960] sm:$0xf]
        %v875 = vld [vmem:[%s228 + $0x964] sm:$0xf]
        %v876 = vld [vmem:[%s228 + $0x968] sm:$0xf]
        %v877 = vld [vmem:[%s228 + $0x96c] sm:$0xf]
        %v878 = vld [vmem:[%s228 + $0x970] sm:$0xf]
        %v879 = vld [vmem:[%s228 + $0x974] sm:$0xf]
        %v880 = vld [vmem:[%s228 + $0x978] sm:$0xf]
        %v881 = vld [vmem:[%s228 + $0x97c] sm:$0xf]
        %v882 = vld [vmem:[%s228 + $0x980] sm:$0xf]
        %v883 = vld [vmem:[%s228 + $0x984] sm:$0xf]
        %v884 = vld [vmem:[%s228 + $0x988] sm:$0xf]
        %v885 = vld [vmem:[%s228 + $0x98c] sm:$0xf]
        %v886 = vld [vmem:[%s228 + $0x990] sm:$0xf]
        %v887 = vld [vmem:[%s228 + $0x994] sm:$0xf]
        %v888 = vld [vmem:[%s228 + $0x998] sm:$0xf]
        %v889 = vld [vmem:[%s228 + $0x99c] sm:$0xf]
        %v890 = vld [vmem:[%s228 + $0x9a0] sm:$0xf]
        %v891 = vld [vmem:[%s228 + $0x9a4] sm:$0xf]
        %v892 = vld [vmem:[%s228 + $0x9a8] sm:$0xf]
        %v893 = vld [vmem:[%s228 + $0x9ac] sm:$0xf]
        %v894 = vld [vmem:[%s228 + $0x9b0] sm:$0xf]
        %v895 = vld [vmem:[%s228 + $0x9b4] sm:$0xf]
        %v896 = vld [vmem:[%s228 + $0x9b8] sm:$0xf]
        %v897 = vld [vmem:[%s228 + $0x9bc] sm:$0xf]
        %v898 = vld [vmem:[%s228 + $0x9c0] sm:$0xf]
        %v899 = vld [vmem:[%s228 + $0x9c4] sm:$0xf]
        %v900 = vld [vmem:[%s228 + $0x9c8] sm:$0xf]
        %v901 = vld [vmem:[%s228 + $0x9cc] sm:$0xf]
        %v902 = vld [vmem:[%s228 + $0x9d0] sm:$0xf]
        %v903 = vld [vmem:[%s228 + $0x9d4] sm:$0xf]
        %v904 = vld [vmem:[%s228 + $0x9d8] sm:$0xf]
        %v905 = vld [vmem:[%s228 + $0x9dc] sm:$0xf]
        %v906 = vld [vmem:[%s228 + $0x9e0] sm:$0xf]
        %v907 = vld [vmem:[%s228 + $0x9e4] sm:$0xf]
        %v908 = vld [vmem:[%s228 + $0x9e8] sm:$0xf]
        %v909 = vld [vmem:[%s228 + $0x9ec] sm:$0xf]
        %v910 = vld [vmem:[%s228 + $0x9f0] sm:$0xf]
        %v911 = vld [vmem:[%s228 + $0x9f4] sm:$0xf]
        %v912 = vld [vmem:[%s228 + $0x9f8] sm:$0xf]
        %v913 = vld [vmem:[%s228 + $0x9fc] sm:$0xf]
        %v914 = vld [vmem:[%s228 + $0xa00] sm:$0xf]
        %v915 = vld [vmem:[%s228 + $0xa04] sm:$0xf]
        %v916 = vld [vmem:[%s228 + $0xa08] sm:$0xf]
        %v917 = vld [vmem:[%s228 + $0xa0c] sm:$0xf]
        %v918 = vld [vmem:[%s228 + $0xa10] sm:$0xf]
        %v919 = vld [vmem:[%s228 + $0xa14] sm:$0xf]
        %v920 = vld [vmem:[%s228 + $0xa18] sm:$0xf]
        %v921 = vld [vmem:[%s228 + $0xa1c] sm:$0xf]
        %v922 = vld [vmem:[%s228 + $0xa20] sm:$0xf]
        %v923 = vld [vmem:[%s228 + $0xa24] sm:$0xf]
        %v924 = vld [vmem:[%s228 + $0xa28] sm:$0xf]
        %v925 = vld [vmem:[%s228 + $0xa2c] sm:$0xf]
        %v926 = vld [vmem:[%s228 + $0xa30] sm:$0xf]
        %v927 = vld [vmem:[%s228 + $0xa34] sm:$0xf]
        %v928 = vld [vmem:[%s228 + $0xa38] sm:$0xf]
        %v929 = vld [vmem:[%s228 + $0xa3c] sm:$0xf]
        %v930 = vld [vmem:[%s228 + $0xa40] sm:$0xf]
        %v931 = vld [vmem:[%s228 + $0xa44] sm:$0xf]
        %v932 = vld [vmem:[%s228 + $0xa48] sm:$0xf]
        %v933 = vld [vmem:[%s228 + $0xa4c] sm:$0xf]
        %v934 = vld [vmem:[%s228 + $0xa50] sm:$0xf]
        %v935 = vld [vmem:[%s228 + $0xa54] sm:$0xf]
        %v936 = vld [vmem:[%s228 + $0xa58] sm:$0xf]
        %v937 = vld [vmem:[%s228 + $0xa5c] sm:$0xf]
        %v938 = vld [vmem:[%s228 + $0xa60] sm:$0xf]
        %v939 = vld [vmem:[%s228 + $0xa64] sm:$0xf]
        %v940 = vld [vmem:[%s228 + $0xa68] sm:$0xf]
        %v941 = vld [vmem:[%s228 + $0xa6c] sm:$0xf]
        %v942 = vld [vmem:[%s228 + $0xa70] sm:$0xf]
        %v943 = vld [vmem:[%s228 + $0xa74] sm:$0xf]
        %v944 = vld [vmem:[%s228 + $0xa78] sm:$0xf]
        %v945 = vld [vmem:[%s228 + $0xa7c] sm:$0xf]
        %v946 = vld [vmem:[%s228 + $0xa80] sm:$0xf]
        %v947 = vld [vmem:[%s228 + $0xa84] sm:$0xf]
        %v948 = vld [vmem:[%s228 + $0xa88] sm:$0xf]
        %v949 = vld [vmem:[%s228 + $0xa8c] sm:$0xf]
        %v950 = vld [vmem:[%s228 + $0xa90] sm:$0xf]
        %v951 = vld [vmem:[%s228 + $0xa94] sm:$0xf]
        %v952 = vld [vmem:[%s228 + $0xa98] sm:$0xf]
        %v953 = vld [vmem:[%s228 + $0xa9c] sm:$0xf]
        %v954 = vld [vmem:[%s228 + $0xaa0] sm:$0xf]
        %v955 = vld [vmem:[%s228 + $0xaa4] sm:$0xf]
        %v956 = vld [vmem:[%s228 + $0xaa8] sm:$0xf]
        %v957 = vld [vmem:[%s228 + $0xaac] sm:$0xf]
        %v958 = vld [vmem:[%s228 + $0xab0] sm:$0xf]
        %v959 = vld [vmem:[%s228 + $0xab4] sm:$0xf]
        %v960 = vld [vmem:[%s228 + $0xab8] sm:$0xf]
        %v961 = vld [vmem:[%s228 + $0xabc] sm:$0xf]
        %v962 = vld [vmem:[%s228 + $0xac0] sm:$0xf]
        %v963 = vld [vmem:[%s228 + $0xac4] sm:$0xf]
        %v964 = vld [vmem:[%s228 + $0xac8] sm:$0xf]
        %v965 = vld [vmem:[%s228 + $0xacc] sm:$0xf]
        %v966 = vld [vmem:[%s228 + $0xad0] sm:$0xf]
        %v967 = vld [vmem:[%s228 + $0xad4] sm:$0xf]
        %v968 = vld [vmem:[%s228 + $0xad8] sm:$0xf]
        %v969 = vld [vmem:[%s228 + $0xadc] sm:$0xf]
        %v970 = vld [vmem:[%s228 + $0xae0] sm:$0xf]
        %v971 = vld [vmem:[%s228 + $0xae4] sm:$0xf]
        %v972 = vld [vmem:[%s228 + $0xae8] sm:$0xf]
        %v973 = vld [vmem:[%s228 + $0xaec] sm:$0xf]
        %v974 = vld [vmem:[%s228 + $0xaf0] sm:$0xf]
        %v975 = vld [vmem:[%s228 + $0xaf4] sm:$0xf]
        %v976 = vld [vmem:[%s228 + $0xaf8] sm:$0xf]
        %v977 = vld [vmem:[%s228 + $0xafc] sm:$0xf]
        %v978 = vld [vmem:[%s228 + $0xb00] sm:$0xf]
        %v979 = vld [vmem:[%s228 + $0xb04] sm:$0xf]
        %v980 = vld [vmem:[%s228 + $0xb08] sm:$0xf]
        %v981 = vld [vmem:[%s228 + $0xb0c] sm:$0xf]
        %v982 = vld [vmem:[%s228 + $0xb10] sm:$0xf]
        %v983 = vld [vmem:[%s228 + $0xb14] sm:$0xf]
        %v984 = vld [vmem:[%s228 + $0xb18] sm:$0xf]
        %v985 = vld [vmem:[%s228 + $0xb1c] sm:$0xf]
        %v986 = vld [vmem:[%s228 + $0xb20] sm:$0xf]
        %v987 = vld [vmem:[%s228 + $0xb24] sm:$0xf]
        %v988 = vld [vmem:[%s228 + $0xb28] sm:$0xf]
        %v989 = vld [vmem:[%s228 + $0xb2c] sm:$0xf]
        %v990 = vld [vmem:[%s228 + $0xb30] sm:$0xf]
        %v991 = vld [vmem:[%s228 + $0xb34] sm:$0xf]
        %v992 = vld [vmem:[%s228 + $0xb38] sm:$0xf]
        %v993 = vld [vmem:[%s228 + $0xb3c] sm:$0xf]
        %v994 = vld [vmem:[%s228 + $0xb40] sm:$0xf]
        %v995 = vld [vmem:[%s228 + $0xb44] sm:$0xf]
        %v996 = vld [vmem:[%s228 + $0xb48] sm:$0xf]
        %v997 = vld [vmem:[%s228 + $0xb4c] sm:$0xf]
        %v998 = vld [vmem:[%s228 + $0xb50] sm:$0xf]
        %v999 = vld [vmem:[%s228 + $0xb54] sm:$0xf]
        %v1000 = vld [vmem:[%s228 + $0xb58] sm:$0xf]
        %v1001 = vld [vmem:[%s228 + $0xb5c] sm:$0xf]
        %v1002 = vld [vmem:[%s228 + $0xb60] sm:$0xf]
        %v1003 = vld [vmem:[%s228 + $0xb64] sm:$0xf]
        %v1004 = vld [vmem:[%s228 + $0xb68] sm:$0xf]
        %v1005 = vld [vmem:[%s228 + $0xb6c] sm:$0xf]
        %v1006 = vld [vmem:[%s228 + $0xb70] sm:$0xf]
        %v1007 = vld [vmem:[%s228 + $0xb74] sm:$0xf]
        %v1008 = vld [vmem:[%s228 + $0xb78] sm:$0xf]
        %v1009 = vld [vmem:[%s228 + $0xb7c] sm:$0xf]
        %v1010 = vld [vmem:[%s228 + $0xb80] sm:$0xf]
        %v1011 = vld [vmem:[%s228 + $0xb84] sm:$0xf]
        %v1012 = vld [vmem:[%s228 + $0xb88] sm:$0xf]
        %v1013 = vld [vmem:[%s228 + $0xb8c] sm:$0xf]
        %v1014 = vld [vmem:[%s228 + $0xb90] sm:$0xf]
        %v1015 = vld [vmem:[%s228 + $0xb94] sm:$0xf]
        %v1016 = vld [vmem:[%s228 + $0xb98] sm:$0xf]
        %v1017 = vld [vmem:[%s228 + $0xb9c] sm:$0xf]
        %v1018 = vld [vmem:[%s228 + $0xba0] sm:$0xf]
        %v1019 = vld [vmem:[%s228 + $0xba4] sm:$0xf]
        %v1020 = vld [vmem:[%s228 + $0xba8] sm:$0xf]
        %v1021 = vld [vmem:[%s228 + $0xbac] sm:$0xf]
        %v1022 = vld [vmem:[%s228 + $0xbb0] sm:$0xf]
        %v1023 = vld [vmem:[%s228 + $0xbb4] sm:$0xf]
        %v1024 = vld [vmem:[%s228 + $0xbb8] sm:$0xf]
        %v1025 = vld [vmem:[%s228 + $0xbbc] sm:$0xf]
        %v1026 = vld [vmem:[%s228 + $0xbc0] sm:$0xf]
        %v1027 = vld [vmem:[%s228 + $0xbc4] sm:$0xf]
        %v1028 = vld [vmem:[%s228 + $0xbc8] sm:$0xf]
        %v1029 = vld [vmem:[%s228 + $0xbcc] sm:$0xf]
        %v1030 = vld [vmem:[%s228 + $0xbd0] sm:$0xf]
        %v1031 = vld [vmem:[%s228 + $0xbd4] sm:$0xf]
        %v1032 = vld [vmem:[%s228 + $0xbd8] sm:$0xf]
        %v1033 = vld [vmem:[%s228 + $0xbdc] sm:$0xf]
        %v1034 = vld [vmem:[%s228 + $0xbe0] sm:$0xf]
        %v1035 = vld [vmem:[%s228 + $0xbe4] sm:$0xf]
        %v1036 = vld [vmem:[%s228 + $0xbe8] sm:$0xf]
        %v1037 = vld [vmem:[%s228 + $0xbec] sm:$0xf]
        %v1038 = vld [vmem:[%s228 + $0xbf0] sm:$0xf]
        %v1039 = vld [vmem:[%s228 + $0xbf4] sm:$0xf]
        %v1040 = vld [vmem:[%s228 + $0xbf8] sm:$0xf]
        %v1041 = vld [vmem:[%s228 + $0xbfc] sm:$0xf]
        %v1042 = vld [vmem:[%s228 + $0xc00] sm:$0xf]
        %v1043 = vld [vmem:[%s228 + $0xc04] sm:$0xf]
        %v1044 = vld [vmem:[%s228 + $0xc08] sm:$0xf]
        %v1045 = vld [vmem:[%s228 + $0xc0c] sm:$0xf]
        %v1046 = vld [vmem:[%s228 + $0xc10] sm:$0xf]
        %v1047 = vld [vmem:[%s228 + $0xc14] sm:$0xf]
        %v1048 = vld [vmem:[%s228 + $0xc18] sm:$0xf]
        %v1049 = vld [vmem:[%s228 + $0xc1c] sm:$0xf]
        %v1050 = vld [vmem:[%s228 + $0xc20] sm:$0xf]
        %v1051 = vld [vmem:[%s228 + $0xc24] sm:$0xf]
        %v1052 = vld [vmem:[%s228 + $0xc28] sm:$0xf]
        %v1053 = vld [vmem:[%s228 + $0xc2c] sm:$0xf]
        %v1054 = vld [vmem:[%s228 + $0xc30] sm:$0xf]
        %v1055 = vld [vmem:[%s228 + $0xc34] sm:$0xf]
        %v1056 = vld [vmem:[%s228 + $0xc38] sm:$0xf]
        %v1057 = vld [vmem:[%s228 + $0xc3c] sm:$0xf]
        %v1058 = vld [vmem:[%s228 + $0xc40] sm:$0xf]
        %v1059 = vld [vmem:[%s228 + $0xc44] sm:$0xf]
        %v1060 = vld [vmem:[%s228 + $0xc48] sm:$0xf]
        %v1061 = vld [vmem:[%s228 + $0xc4c] sm:$0xf]
        %v1062 = vld [vmem:[%s228 + $0xc50] sm:$0xf]
        %v1063 = vld [vmem:[%s228 + $0xc54] sm:$0xf]
        %v1064 = vld [vmem:[%s228 + $0xc58] sm:$0xf]
        %v1065 = vld [vmem:[%s228 + $0xc5c] sm:$0xf]
        %v1066 = vld [vmem:[%s228 + $0xc60] sm:$0xf]
        %v1067 = vld [vmem:[%s228 + $0xc64] sm:$0xf]
        %v1068 = vld [vmem:[%s228 + $0xc68] sm:$0xf]
        %v1069 = vld [vmem:[%s228 + $0xc6c] sm:$0xf]
        %v1070 = vld [vmem:[%s228 + $0xc70] sm:$0xf]
        %v1071 = vld [vmem:[%s228 + $0xc74] sm:$0xf]
        %v1072 = vld [vmem:[%s228 + $0xc78] sm:$0xf]
        %v1073 = vld [vmem:[%s228 + $0xc7c] sm:$0xf]
        %v1074 = vld [vmem:[%s228 + $0xc80] sm:$0xf]
        %v1075 = vld [vmem:[%s228 + $0xc84] sm:$0xf]
        %v1076 = vld [vmem:[%s228 + $0xc88] sm:$0xf]
        %v1077 = vld [vmem:[%s228 + $0xc8c] sm:$0xf]
        %v1078 = vld [vmem:[%s228 + $0xc90] sm:$0xf]
        %v1079 = vld [vmem:[%s228 + $0xc94] sm:$0xf]
        %v1080 = vld [vmem:[%s228 + $0xc98] sm:$0xf]
        %v1081 = vld [vmem:[%s228 + $0xc9c] sm:$0xf]
        %v1082 = vld [vmem:[%s228 + $0xca0] sm:$0xf]
        %v1083 = vld [vmem:[%s228 + $0xca4] sm:$0xf]
        %v1084 = vld [vmem:[%s228 + $0xca8] sm:$0xf]
        %v1085 = vld [vmem:[%s228 + $0xcac] sm:$0xf]
        %v1086 = vld [vmem:[%s228 + $0xcb0] sm:$0xf]
        %v1087 = vld [vmem:[%s228 + $0xcb4] sm:$0xf]
        %v1088 = vld [vmem:[%s228 + $0xcb8] sm:$0xf]
        %v1089 = vld [vmem:[%s228 + $0xcbc] sm:$0xf]
        %v1090 = vld [vmem:[%s228 + $0xcc0] sm:$0xf]
        %v1091 = vld [vmem:[%s228 + $0xcc4] sm:$0xf]
        %v1092 = vld [vmem:[%s228 + $0xcc8] sm:$0xf]
        %v1093 = vld [vmem:[%s228 + $0xccc] sm:$0xf]
        %v1094 = vld [vmem:[%s228 + $0xcd0] sm:$0xf]
        %v1095 = vld [vmem:[%s228 + $0xcd4] sm:$0xf]
        %v1096 = vld [vmem:[%s228 + $0xcd8] sm:$0xf]
        %v1097 = vld [vmem:[%s228 + $0xcdc] sm:$0xf]
        %v1098 = vld [vmem:[%s228 + $0xce0] sm:$0xf]
        %v1099 = vld [vmem:[%s228 + $0xce4] sm:$0xf]
        %v1100 = vld [vmem:[%s228 + $0xce8] sm:$0xf]
        %v1101 = vld [vmem:[%s228 + $0xcec] sm:$0xf]
        %v1102 = vld [vmem:[%s228 + $0xcf0] sm:$0xf]
        %v1103 = vld [vmem:[%s228 + $0xcf4] sm:$0xf]
        %v1104 = vld [vmem:[%s228 + $0xcf8] sm:$0xf]
        %v1105 = vld [vmem:[%s228 + $0xcfc] sm:$0xf]
        %v1106 = vld [vmem:[%s228 + $0xd00] sm:$0xf]
        %v1107 = vld [vmem:[%s228 + $0xd04] sm:$0xf]
        %v1108 = vld [vmem:[%s228 + $0xd08] sm:$0xf]
        %v1109 = vld [vmem:[%s228 + $0xd0c] sm:$0xf]
        %v1110 = vld [vmem:[%s228 + $0xd10] sm:$0xf]
        %v1111 = vld [vmem:[%s228 + $0xd14] sm:$0xf]
        %v1112 = vld [vmem:[%s228 + $0xd18] sm:$0xf]
        %v1113 = vld [vmem:[%s228 + $0xd1c] sm:$0xf]
        %v1114 = vld [vmem:[%s228 + $0xd20] sm:$0xf]
        %v1115 = vld [vmem:[%s228 + $0xd24] sm:$0xf]
        %v1116 = vld [vmem:[%s228 + $0xd28] sm:$0xf]
        %v1117 = vld [vmem:[%s228 + $0xd2c] sm:$0xf]
        %v1118 = vld [vmem:[%s228 + $0xd30] sm:$0xf]
        %v1119 = vld [vmem:[%s228 + $0xd34] sm:$0xf]
        %v1120 = vld [vmem:[%s228 + $0xd38] sm:$0xf]
        %v1121 = vld [vmem:[%s228 + $0xd3c] sm:$0xf]
        %v1122 = vld [vmem:[%s228 + $0xd40] sm:$0xf]
        %v1123 = vld [vmem:[%s228 + $0xd44] sm:$0xf]
        %v1124 = vld [vmem:[%s228 + $0xd48] sm:$0xf]
        %v1125 = vld [vmem:[%s228 + $0xd4c] sm:$0xf]
        %v1126 = vld [vmem:[%s228 + $0xd50] sm:$0xf]
        %v1127 = vld [vmem:[%s228 + $0xd54] sm:$0xf]
        %v1128 = vld [vmem:[%s228 + $0xd58] sm:$0xf]
        %v1129 = vld [vmem:[%s228 + $0xd5c] sm:$0xf]
        %v1130 = vld [vmem:[%s228 + $0xd60] sm:$0xf]
        %v1131 = vld [vmem:[%s228 + $0xd64] sm:$0xf]
        %v1132 = vld [vmem:[%s228 + $0xd68] sm:$0xf]
        %v1133 = vld [vmem:[%s228 + $0xd6c] sm:$0xf]
        %v1134 = vld [vmem:[%s228 + $0xd70] sm:$0xf]
        %v1135 = vld [vmem:[%s228 + $0xd74] sm:$0xf]
        %v1136 = vld [vmem:[%s228 + $0xd78] sm:$0xf]
        %v1137 = vld [vmem:[%s228 + $0xd7c] sm:$0xf]
        %v1138 = vld [vmem:[%s228 + $0xd80] sm:$0xf]
        %v1139 = vld [vmem:[%s228 + $0xd84] sm:$0xf]
        %v1140 = vld [vmem:[%s228 + $0xd88] sm:$0xf]
        %v1141 = vld [vmem:[%s228 + $0xd8c] sm:$0xf]
        %v1142 = vld [vmem:[%s228 + $0xd90] sm:$0xf]
        %v1143 = vld [vmem:[%s228 + $0xd94] sm:$0xf]
        %v1144 = vld [vmem:[%s228 + $0xd98] sm:$0xf]
        %v1145 = vld [vmem:[%s228 + $0xd9c] sm:$0xf]
        %v1146 = vld [vmem:[%s228 + $0xda0] sm:$0xf]
        %v1147 = vld [vmem:[%s228 + $0xda4] sm:$0xf]
        %v1148 = vld [vmem:[%s228 + $0xda8] sm:$0xf]
        %v1149 = vld [vmem:[%s228 + $0xdac] sm:$0xf]
        %v1150 = vld [vmem:[%s228 + $0xdb0] sm:$0xf]
        %v1151 = vld [vmem:[%s228 + $0xdb4] sm:$0xf]
        %v1152 = vld [vmem:[%s228 + $0xdb8] sm:$0xf]
        %v1153 = vld [vmem:[%s228 + $0xdbc] sm:$0xf]
        %v1154 = vld [vmem:[%s228 + $0xdc0] sm:$0xf]
        %v1155 = vld [vmem:[%s228 + $0xdc4] sm:$0xf]
        %v1156 = vld [vmem:[%s228 + $0xdc8] sm:$0xf]
        %v1157 = vld [vmem:[%s228 + $0xdcc] sm:$0xf]
        %v1158 = vld [vmem:[%s228 + $0xdd0] sm:$0xf]
        %v1159 = vld [vmem:[%s228 + $0xdd4] sm:$0xf]
        %v1160 = vld [vmem:[%s228 + $0xdd8] sm:$0xf]
        %v1161 = vld [vmem:[%s228 + $0xddc] sm:$0xf]
        %v1162 = vld [vmem:[%s228 + $0xde0] sm:$0xf]
        %v1163 = vld [vmem:[%s228 + $0xde4] sm:$0xf]
        %v1164 = vld [vmem:[%s228 + $0xde8] sm:$0xf]
        %v1165 = vld [vmem:[%s228 + $0xdec] sm:$0xf]
        %v1166 = vld [vmem:[%s228 + $0xdf0] sm:$0xf]
        %v1167 = vld [vmem:[%s228 + $0xdf4] sm:$0xf]
        %v1168 = vld [vmem:[%s228 + $0xdf8] sm:$0xf]
        %v1169 = vld [vmem:[%s228 + $0xdfc] sm:$0xf]
        %v1170 = vld [vmem:[%s228 + $0xe00] sm:$0xf]
        %v1171 = vld [vmem:[%s228 + $0xe04] sm:$0xf]
        %v1172 = vld [vmem:[%s228 + $0xe08] sm:$0xf]
        %v1173 = vld [vmem:[%s228 + $0xe0c] sm:$0xf]
        %v1174 = vld [vmem:[%s228 + $0xe10] sm:$0xf]
        %v1175 = vld [vmem:[%s228 + $0xe14] sm:$0xf]
        %v1176 = vld [vmem:[%s228 + $0xe18] sm:$0xf]
        %v1177 = vld [vmem:[%s228 + $0xe1c] sm:$0xf]
        %v1178 = vld [vmem:[%s228 + $0xe20] sm:$0xf]
        %v1179 = vld [vmem:[%s228 + $0xe24] sm:$0xf]
        %v1180 = vld [vmem:[%s228 + $0xe28] sm:$0xf]
        %v1181 = vld [vmem:[%s228 + $0xe2c] sm:$0xf]
        %v1182 = vld [vmem:[%s228 + $0xe30] sm:$0xf]
        %v1183 = vld [vmem:[%s228 + $0xe34] sm:$0xf]
        %v1184 = vld [vmem:[%s228 + $0xe38] sm:$0xf]
        %v1185 = vld [vmem:[%s228 + $0xe3c] sm:$0xf]
        %v1186 = vld [vmem:[%s228 + $0xe40] sm:$0xf]
        %v1187 = vld [vmem:[%s228 + $0xe44] sm:$0xf]
        %v1188 = vld [vmem:[%s228 + $0xe48] sm:$0xf]
        %v1189 = vld [vmem:[%s228 + $0xe4c] sm:$0xf]
        %v1190 = vld [vmem:[%s228 + $0xe50] sm:$0xf]
        %v1191 = vld [vmem:[%s228 + $0xe54] sm:$0xf]
        %v1192 = vld [vmem:[%s228 + $0xe58] sm:$0xf]
        %v1193 = vld [vmem:[%s228 + $0xe5c] sm:$0xf]
        %v1194 = vld [vmem:[%s228 + $0xe60] sm:$0xf]
        %v1195 = vld [vmem:[%s228 + $0xe64] sm:$0xf]
        %v1196 = vld [vmem:[%s228 + $0xe68] sm:$0xf]
        %v1197 = vld [vmem:[%s228 + $0xe6c] sm:$0xf]
        %v1198 = vld [vmem:[%s228 + $0xe70] sm:$0xf]
        %v1199 = vld [vmem:[%s228 + $0xe74] sm:$0xf]
        %v1200 = vld [vmem:[%s228 + $0xe78] sm:$0xf]
        %v1201 = vld [vmem:[%s228 + $0xe7c] sm:$0xf]
        %v1202 = vld [vmem:[%s228 + $0xe80] sm:$0xf]
        %v1203 = vld [vmem:[%s228 + $0xe84] sm:$0xf]
        %v1204 = vld [vmem:[%s228 + $0xe88] sm:$0xf]
        %v1205 = vld [vmem:[%s228 + $0xe8c] sm:$0xf]
        %v1206 = vld [vmem:[%s228 + $0xe90] sm:$0xf]
        %v1207 = vld [vmem:[%s228 + $0xe94] sm:$0xf]
        %v1208 = vld [vmem:[%s228 + $0xe98] sm:$0xf]
        %v1209 = vld [vmem:[%s228 + $0xe9c] sm:$0xf]
        %v1210 = vld [vmem:[%s228 + $0xea0] sm:$0xf]
        %v1211 = vld [vmem:[%s228 + $0xea4] sm:$0xf]
        %v1212 = vld [vmem:[%s228 + $0xea8] sm:$0xf]
        %v1213 = vld [vmem:[%s228 + $0xeac] sm:$0xf]
        %v1214 = vld [vmem:[%s228 + $0xeb0] sm:$0xf]
        %v1215 = vld [vmem:[%s228 + $0xeb4] sm:$0xf]
        %v1216 = vld [vmem:[%s228 + $0xeb8] sm:$0xf]
        %v1217 = vld [vmem:[%s228 + $0xebc] sm:$0xf]
        %v1218 = vld [vmem:[%s228 + $0xec0] sm:$0xf]
        %v1219 = vld [vmem:[%s228 + $0xec4] sm:$0xf]
        %v1220 = vld [vmem:[%s228 + $0xec8] sm:$0xf]
        %v1221 = vld [vmem:[%s228 + $0xecc] sm:$0xf]
        %v1222 = vld [vmem:[%s228 + $0xed0] sm:$0xf]
        %v1223 = vld [vmem:[%s228 + $0xed4] sm:$0xf]
        %v1224 = vld [vmem:[%s228 + $0xed8] sm:$0xf]
        %v1225 = vld [vmem:[%s228 + $0xedc] sm:$0xf]
        %v1226 = vld [vmem:[%s228 + $0xee0] sm:$0xf]
        %v1227 = vld [vmem:[%s228 + $0xee4] sm:$0xf]
        %v1228 = vld [vmem:[%s228 + $0xee8] sm:$0xf]
        %v1229 = vld [vmem:[%s228 + $0xeec] sm:$0xf]
        %v1230 = vld [vmem:[%s228 + $0xef0] sm:$0xf]
        %v1231 = vld [vmem:[%s228 + $0xef4] sm:$0xf]
        %v1232 = vld [vmem:[%s228 + $0xef8] sm:$0xf]
        %v1233 = vld [vmem:[%s228 + $0xefc] sm:$0xf]
        %v1234 = vld [vmem:[%s228 + $0xf00] sm:$0xf]
        %v1235 = vld [vmem:[%s228 + $0xf04] sm:$0xf]
        %v1236 = vld [vmem:[%s228 + $0xf08] sm:$0xf]
        %v1237 = vld [vmem:[%s228 + $0xf0c] sm:$0xf]
        %v1238 = vld [vmem:[%s228 + $0xf10] sm:$0xf]
        %v1239 = vld [vmem:[%s228 + $0xf14] sm:$0xf]
        %v1240 = vld [vmem:[%s228 + $0xf18] sm:$0xf]
        %v1241 = vld [vmem:[%s228 + $0xf1c] sm:$0xf]
        %v1242 = vld [vmem:[%s228 + $0xf20] sm:$0xf]
        %v1243 = vld [vmem:[%s228 + $0xf24] sm:$0xf]
        %v1244 = vld [vmem:[%s228 + $0xf28] sm:$0xf]
        %v1245 = vld [vmem:[%s228 + $0xf2c] sm:$0xf]
        %v1246 = vld [vmem:[%s228 + $0xf30] sm:$0xf]
        %v1247 = vld [vmem:[%s228 + $0xf34] sm:$0xf]
        %v1248 = vld [vmem:[%s228 + $0xf38] sm:$0xf]
        %v1249 = vld [vmem:[%s228 + $0xf3c] sm:$0xf]
        %v1250 = vld [vmem:[%s228 + $0xf40] sm:$0xf]
        %v1251 = vld [vmem:[%s228 + $0xf44] sm:$0xf]
        %v1252 = vld [vmem:[%s228 + $0xf48] sm:$0xf]
        %v1253 = vld [vmem:[%s228 + $0xf4c] sm:$0xf]
        %v1254 = vld [vmem:[%s228 + $0xf50] sm:$0xf]
        %v1255 = vld [vmem:[%s228 + $0xf54] sm:$0xf]
        %v1256 = vld [vmem:[%s228 + $0xf58] sm:$0xf]
        %v1257 = vld [vmem:[%s228 + $0xf5c] sm:$0xf]
        %v1258 = vld [vmem:[%s228 + $0xf60] sm:$0xf]
        %v1259 = vld [vmem:[%s228 + $0xf64] sm:$0xf]
        %v1260 = vld [vmem:[%s228 + $0xf68] sm:$0xf]
        %v1261 = vld [vmem:[%s228 + $0xf6c] sm:$0xf]
        %v1262 = vld [vmem:[%s228 + $0xf70] sm:$0xf]
        %v1263 = vld [vmem:[%s228 + $0xf74] sm:$0xf]
        %v1264 = vld [vmem:[%s228 + $0xf78] sm:$0xf]
        %v1265 = vld [vmem:[%s228 + $0xf7c] sm:$0xf]
        %v1266 = vld [vmem:[%s228 + $0xf80] sm:$0xf]
        %v1267 = vld [vmem:[%s228 + $0xf84] sm:$0xf]
        %v1268 = vld [vmem:[%s228 + $0xf88] sm:$0xf]
        %v1269 = vld [vmem:[%s228 + $0xf8c] sm:$0xf]
        %v1270 = vld [vmem:[%s228 + $0xf90] sm:$0xf]
        %v1271 = vld [vmem:[%s228 + $0xf94] sm:$0xf]
        %v1272 = vld [vmem:[%s228 + $0xf98] sm:$0xf]
        %v1273 = vld [vmem:[%s228 + $0xf9c] sm:$0xf]
        %v1274 = vld [vmem:[%s228 + $0xfa0] sm:$0xf]
        %v1275 = vld [vmem:[%s228 + $0xfa4] sm:$0xf]
        %v1276 = vld [vmem:[%s228 + $0xfa8] sm:$0xf]
        %v1277 = vld [vmem:[%s228 + $0xfac] sm:$0xf]
        %v1278 = vld [vmem:[%s228 + $0xfb0] sm:$0xf]
        %v1279 = vld [vmem:[%s228 + $0xfb4] sm:$0xf]
        %v1280 = vld [vmem:[%s228 + $0xfb8] sm:$0xf]
        %v1281 = vld [vmem:[%s228 + $0xfbc] sm:$0xf]
        %v1282 = vld [vmem:[%s228 + $0xfc0] sm:$0xf]
        %v1283 = vld [vmem:[%s228 + $0xfc4] sm:$0xf]
        %v1284 = vld [vmem:[%s228 + $0xfc8] sm:$0xf]
        %v1285 = vld [vmem:[%s228 + $0xfcc] sm:$0xf]
        %v1286 = vld [vmem:[%s228 + $0xfd0] sm:$0xf]
        %v1287 = vld [vmem:[%s228 + $0xfd4] sm:$0xf]
        %v1288 = vld [vmem:[%s228 + $0xfd8] sm:$0xf]
        %v1289 = vld [vmem:[%s228 + $0xfdc] sm:$0xf]
        %v1290 = vld [vmem:[%s228 + $0xfe0] sm:$0xf]
        %v1291 = vld [vmem:[%s228 + $0xfe4] sm:$0xf]
        %v1292 = vld [vmem:[%s228 + $0xfe8] sm:$0xf]
        %v1293 = vld [vmem:[%s228 + $0xfec] sm:$0xf]
        %v1294 = vld [vmem:[%s228 + $0xff0] sm:$0xf]
        %v1295 = vld [vmem:[%s228 + $0xff4] sm:$0xf]
        %v1296 = vld [vmem:[%s228 + $0xff8] sm:$0xf]
        %v1297 = vld [vmem:[%s228 + $0xffc] sm:$0xf]
        %vm1298 = vcmask 1043456
        %v1299 = vsel %vm1298, %v274, 0.0
        %v1300 = vrot.slane %v1299, 4
        %v1301 = vadd.f32 %v1299, %v1300
        %v1302 = vrot.slane %v1301, 2
        %v1303 = vadd.f32 %v1301, %v1302
        %v1304 = vrot.slane %v1303, 1
        %v1305 = vadd.f32 %v1303, %v1304
        %v1306 = vsel %vm1298, %v275, 0.0
        %v1307 = vrot.slane %v1306, 4
        %v1308 = vadd.f32 %v1306, %v1307
        %v1309 = vrot.slane %v1308, 2
        %v1310 = vadd.f32 %v1308, %v1309
        %v1311 = vrot.slane %v1310, 1
        %v1312 = vadd.f32 %v1310, %v1311
        %v1313 = vsel %vm1298, %v276, 0.0
        %v1314 = vrot.slane %v1313, 4
        %v1315 = vadd.f32 %v1313, %v1314
        %v1316 = vrot.slane %v1315, 2
        %v1317 = vadd.f32 %v1315, %v1316
        %v1318 = vrot.slane %v1317, 1
        %v1319 = vadd.f32 %v1317, %v1318
        %v1320 = vsel %vm1298, %v277, 0.0
        %v1321 = vrot.slane %v1320, 4
        %v1322 = vadd.f32 %v1320, %v1321
        %v1323 = vrot.slane %v1322, 2
        %v1324 = vadd.f32 %v1322, %v1323
        %v1325 = vrot.slane %v1324, 1
        %v1326 = vadd.f32 %v1324, %v1325
        %v1327 = vsel %vm1298, %v278, 0.0
        %v1328 = vrot.slane %v1327, 4
        %v1329 = vadd.f32 %v1327, %v1328
        %v1330 = vrot.slane %v1329, 2
        %v1331 = vadd.f32 %v1329, %v1330
        %v1332 = vrot.slane %v1331, 1
        %v1333 = vadd.f32 %v1331, %v1332
        %v1334 = vsel %vm1298, %v279, 0.0
        %v1335 = vrot.slane %v1334, 4
        %v1336 = vadd.f32 %v1334, %v1335
        %v1337 = vrot.slane %v1336, 2
        %v1338 = vadd.f32 %v1336, %v1337
        %v1339 = vrot.slane %v1338, 1
        %v1340 = vadd.f32 %v1338, %v1339
        %v1341 = vsel %vm1298, %v280, 0.0
        %v1342 = vrot.slane %v1341, 4
        %v1343 = vadd.f32 %v1341, %v1342
        %v1344 = vrot.slane %v1343, 2
        %v1345 = vadd.f32 %v1343, %v1344
        %v1346 = vrot.slane %v1345, 1
        %v1347 = vadd.f32 %v1345, %v1346
        %v1348 = vsel %vm1298, %v281, 0.0
        %v1349 = vrot.slane %v1348, 4
        %v1350 = vadd.f32 %v1348, %v1349
        %v1351 = vrot.slane %v1350, 2
        %v1352 = vadd.f32 %v1350, %v1351
        %v1353 = vrot.slane %v1352, 1
        %v1354 = vadd.f32 %v1352, %v1353
        %v1355 = vsel %vm1298, %v282, 0.0
        %v1356 = vrot.slane %v1355, 4
        %v1357 = vadd.f32 %v1355, %v1356
        %v1358 = vrot.slane %v1357, 2
        %v1359 = vadd.f32 %v1357, %v1358
        %v1360 = vrot.slane %v1359, 1
        %v1361 = vadd.f32 %v1359, %v1360
        %v1362 = vsel %vm1298, %v283, 0.0
        %v1363 = vrot.slane %v1362, 4
        %v1364 = vadd.f32 %v1362, %v1363
        %v1365 = vrot.slane %v1364, 2
        %v1366 = vadd.f32 %v1364, %v1365
        %v1367 = vrot.slane %v1366, 1
        %v1368 = vadd.f32 %v1366, %v1367
        %v1369 = vsel %vm1298, %v284, 0.0
        %v1370 = vrot.slane %v1369, 4
        %v1371 = vadd.f32 %v1369, %v1370
        %v1372 = vrot.slane %v1371, 2
        %v1373 = vadd.f32 %v1371, %v1372
        %v1374 = vrot.slane %v1373, 1
        %v1375 = vadd.f32 %v1373, %v1374
        %v1376 = vsel %vm1298, %v285, 0.0
        %v1377 = vrot.slane %v1376, 4
        %v1378 = vadd.f32 %v1376, %v1377
        %v1379 = vrot.slane %v1378, 2
        %v1380 = vadd.f32 %v1378, %v1379
        %v1381 = vrot.slane %v1380, 1
        %v1382 = vadd.f32 %v1380, %v1381
        %v1383 = vsel %vm1298, %v286, 0.0
        %v1384 = vrot.slane %v1383, 4
        %v1385 = vadd.f32 %v1383, %v1384
        %v1386 = vrot.slane %v1385, 2
        %v1387 = vadd.f32 %v1385, %v1386
        %v1388 = vrot.slane %v1387, 1
        %v1389 = vadd.f32 %v1387, %v1388
        %v1390 = vsel %vm1298, %v287, 0.0
        %v1391 = vrot.slane %v1390, 4
        %v1392 = vadd.f32 %v1390, %v1391
        %v1393 = vrot.slane %v1392, 2
        %v1394 = vadd.f32 %v1392, %v1393
        %v1395 = vrot.slane %v1394, 1
        %v1396 = vadd.f32 %v1394, %v1395
        %v1397 = vsel %vm1298, %v288, 0.0
        %v1398 = vrot.slane %v1397, 4
        %v1399 = vadd.f32 %v1397, %v1398
        %v1400 = vrot.slane %v1399, 2
        %v1401 = vadd.f32 %v1399, %v1400
        %v1402 = vrot.slane %v1401, 1
        %v1403 = vadd.f32 %v1401, %v1402
        %v1404 = vsel %vm1298, %v289, 0.0
        %v1405 = vrot.slane %v1404, 4
        %v1406 = vadd.f32 %v1404, %v1405
        %v1407 = vrot.slane %v1406, 2
        %v1408 = vadd.f32 %v1406, %v1407
        %v1409 = vrot.slane %v1408, 1
        %v1410 = vadd.f32 %v1408, %v1409
        %v1411 = vsel %vm1298, %v290, 0.0
        %v1412 = vrot.slane %v1411, 4
        %v1413 = vadd.f32 %v1411, %v1412
        %v1414 = vrot.slane %v1413, 2
        %v1415 = vadd.f32 %v1413, %v1414
        %v1416 = vrot.slane %v1415, 1
        %v1417 = vadd.f32 %v1415, %v1416
        %v1418 = vsel %vm1298, %v291, 0.0
        %v1419 = vrot.slane %v1418, 4
        %v1420 = vadd.f32 %v1418, %v1419
        %v1421 = vrot.slane %v1420, 2
        %v1422 = vadd.f32 %v1420, %v1421
        %v1423 = vrot.slane %v1422, 1
        %v1424 = vadd.f32 %v1422, %v1423
        %v1425 = vsel %vm1298, %v292, 0.0
        %v1426 = vrot.slane %v1425, 4
        %v1427 = vadd.f32 %v1425, %v1426
        %v1428 = vrot.slane %v1427, 2
        %v1429 = vadd.f32 %v1427, %v1428
        %v1430 = vrot.slane %v1429, 1
        %v1431 = vadd.f32 %v1429, %v1430
        %v1432 = vsel %vm1298, %v293, 0.0
        %v1433 = vrot.slane %v1432, 4
        %v1434 = vadd.f32 %v1432, %v1433
        %v1435 = vrot.slane %v1434, 2
        %v1436 = vadd.f32 %v1434, %v1435
        %v1437 = vrot.slane %v1436, 1
        %v1438 = vadd.f32 %v1436, %v1437
        %v1439 = vsel %vm1298, %v294, 0.0
        %v1440 = vrot.slane %v1439, 4
        %v1441 = vadd.f32 %v1439, %v1440
        %v1442 = vrot.slane %v1441, 2
        %v1443 = vadd.f32 %v1441, %v1442
        %v1444 = vrot.slane %v1443, 1
        %v1445 = vadd.f32 %v1443, %v1444
        %v1446 = vsel %vm1298, %v295, 0.0
        %v1447 = vrot.slane %v1446, 4
        %v1448 = vadd.f32 %v1446, %v1447
        %v1449 = vrot.slane %v1448, 2
        %v1450 = vadd.f32 %v1448, %v1449
        %v1451 = vrot.slane %v1450, 1
        %v1452 = vadd.f32 %v1450, %v1451
        %v1453 = vsel %vm1298, %v296, 0.0
        %v1454 = vrot.slane %v1453, 4
        %v1455 = vadd.f32 %v1453, %v1454
        %v1456 = vrot.slane %v1455, 2
        %v1457 = vadd.f32 %v1455, %v1456
        %v1458 = vrot.slane %v1457, 1
        %v1459 = vadd.f32 %v1457, %v1458
        %v1460 = vsel %vm1298, %v297, 0.0
        %v1461 = vrot.slane %v1460, 4
        %v1462 = vadd.f32 %v1460, %v1461
        %v1463 = vrot.slane %v1462, 2
        %v1464 = vadd.f32 %v1462, %v1463
        %v1465 = vrot.slane %v1464, 1
        %v1466 = vadd.f32 %v1464, %v1465
        %v1467 = vsel %vm1298, %v298, 0.0
        %v1468 = vrot.slane %v1467, 4
        %v1469 = vadd.f32 %v1467, %v1468
        %v1470 = vrot.slane %v1469, 2
        %v1471 = vadd.f32 %v1469, %v1470
        %v1472 = vrot.slane %v1471, 1
        %v1473 = vadd.f32 %v1471, %v1472
        %v1474 = vsel %vm1298, %v299, 0.0
        %v1475 = vrot.slane %v1474, 4
        %v1476 = vadd.f32 %v1474, %v1475
        %v1477 = vrot.slane %v1476, 2
        %v1478 = vadd.f32 %v1476, %v1477
        %v1479 = vrot.slane %v1478, 1
        %v1480 = vadd.f32 %v1478, %v1479
        %v1481 = vsel %vm1298, %v300, 0.0
        %v1482 = vrot.slane %v1481, 4
        %v1483 = vadd.f32 %v1481, %v1482
        %v1484 = vrot.slane %v1483, 2
        %v1485 = vadd.f32 %v1483, %v1484
        %v1486 = vrot.slane %v1485, 1
        %v1487 = vadd.f32 %v1485, %v1486
        %v1488 = vsel %vm1298, %v301, 0.0
        %v1489 = vrot.slane %v1488, 4
        %v1490 = vadd.f32 %v1488, %v1489
        %v1491 = vrot.slane %v1490, 2
        %v1492 = vadd.f32 %v1490, %v1491
        %v1493 = vrot.slane %v1492, 1
        %v1494 = vadd.f32 %v1492, %v1493
        %v1495 = vsel %vm1298, %v302, 0.0
        %v1496 = vrot.slane %v1495, 4
        %v1497 = vadd.f32 %v1495, %v1496
        %v1498 = vrot.slane %v1497, 2
        %v1499 = vadd.f32 %v1497, %v1498
        %v1500 = vrot.slane %v1499, 1
        %v1501 = vadd.f32 %v1499, %v1500
        %v1502 = vsel %vm1298, %v303, 0.0
        %v1503 = vrot.slane %v1502, 4
        %v1504 = vadd.f32 %v1502, %v1503
        %v1505 = vrot.slane %v1504, 2
        %v1506 = vadd.f32 %v1504, %v1505
        %v1507 = vrot.slane %v1506, 1
        %v1508 = vadd.f32 %v1506, %v1507
        %v1509 = vsel %vm1298, %v304, 0.0
        %v1510 = vrot.slane %v1509, 4
        %v1511 = vadd.f32 %v1509, %v1510
        %v1512 = vrot.slane %v1511, 2
        %v1513 = vadd.f32 %v1511, %v1512
        %v1514 = vrot.slane %v1513, 1
        %v1515 = vadd.f32 %v1513, %v1514
        %v1516 = vsel %vm1298, %v305, 0.0
        %v1517 = vrot.slane %v1516, 4
        %v1518 = vadd.f32 %v1516, %v1517
        %v1519 = vrot.slane %v1518, 2
        %v1520 = vadd.f32 %v1518, %v1519
        %v1521 = vrot.slane %v1520, 1
        %v1522 = vadd.f32 %v1520, %v1521
        %v1523 = vsel %vm1298, %v306, 0.0
        %v1524 = vrot.slane %v1523, 4
        %v1525 = vadd.f32 %v1523, %v1524
        %v1526 = vrot.slane %v1525, 2
        %v1527 = vadd.f32 %v1525, %v1526
        %v1528 = vrot.slane %v1527, 1
        %v1529 = vadd.f32 %v1527, %v1528
        %v1530 = vsel %vm1298, %v307, 0.0
        %v1531 = vrot.slane %v1530, 4
        %v1532 = vadd.f32 %v1530, %v1531
        %v1533 = vrot.slane %v1532, 2
        %v1534 = vadd.f32 %v1532, %v1533
        %v1535 = vrot.slane %v1534, 1
        %v1536 = vadd.f32 %v1534, %v1535
        %v1537 = vsel %vm1298, %v308, 0.0
        %v1538 = vrot.slane %v1537, 4
        %v1539 = vadd.f32 %v1537, %v1538
        %v1540 = vrot.slane %v1539, 2
        %v1541 = vadd.f32 %v1539, %v1540
        %v1542 = vrot.slane %v1541, 1
        %v1543 = vadd.f32 %v1541, %v1542
        %v1544 = vsel %vm1298, %v309, 0.0
        %v1545 = vrot.slane %v1544, 4
        %v1546 = vadd.f32 %v1544, %v1545
        %v1547 = vrot.slane %v1546, 2
        %v1548 = vadd.f32 %v1546, %v1547
        %v1549 = vrot.slane %v1548, 1
        %v1550 = vadd.f32 %v1548, %v1549
        %v1551 = vsel %vm1298, %v310, 0.0
        %v1552 = vrot.slane %v1551, 4
        %v1553 = vadd.f32 %v1551, %v1552
        %v1554 = vrot.slane %v1553, 2
        %v1555 = vadd.f32 %v1553, %v1554
        %v1556 = vrot.slane %v1555, 1
        %v1557 = vadd.f32 %v1555, %v1556
        %v1558 = vsel %vm1298, %v311, 0.0
        %v1559 = vrot.slane %v1558, 4
        %v1560 = vadd.f32 %v1558, %v1559
        %v1561 = vrot.slane %v1560, 2
        %v1562 = vadd.f32 %v1560, %v1561
        %v1563 = vrot.slane %v1562, 1
        %v1564 = vadd.f32 %v1562, %v1563
        %v1565 = vsel %vm1298, %v312, 0.0
        %v1566 = vrot.slane %v1565, 4
        %v1567 = vadd.f32 %v1565, %v1566
        %v1568 = vrot.slane %v1567, 2
        %v1569 = vadd.f32 %v1567, %v1568
        %v1570 = vrot.slane %v1569, 1
        %v1571 = vadd.f32 %v1569, %v1570
        %v1572 = vsel %vm1298, %v313, 0.0
        %v1573 = vrot.slane %v1572, 4
        %v1574 = vadd.f32 %v1572, %v1573
        %v1575 = vrot.slane %v1574, 2
        %v1576 = vadd.f32 %v1574, %v1575
        %v1577 = vrot.slane %v1576, 1
        %v1578 = vadd.f32 %v1576, %v1577
        %v1579 = vsel %vm1298, %v314, 0.0
        %v1580 = vrot.slane %v1579, 4
        %v1581 = vadd.f32 %v1579, %v1580
        %v1582 = vrot.slane %v1581, 2
        %v1583 = vadd.f32 %v1581, %v1582
        %v1584 = vrot.slane %v1583, 1
        %v1585 = vadd.f32 %v1583, %v1584
        %v1586 = vsel %vm1298, %v315, 0.0
        %v1587 = vrot.slane %v1586, 4
        %v1588 = vadd.f32 %v1586, %v1587
        %v1589 = vrot.slane %v1588, 2
        %v1590 = vadd.f32 %v1588, %v1589
        %v1591 = vrot.slane %v1590, 1
        %v1592 = vadd.f32 %v1590, %v1591
        %v1593 = vsel %vm1298, %v316, 0.0
        %v1594 = vrot.slane %v1593, 4
        %v1595 = vadd.f32 %v1593, %v1594
        %v1596 = vrot.slane %v1595, 2
        %v1597 = vadd.f32 %v1595, %v1596
        %v1598 = vrot.slane %v1597, 1
        %v1599 = vadd.f32 %v1597, %v1598
        %v1600 = vsel %vm1298, %v317, 0.0
        %v1601 = vrot.slane %v1600, 4
        %v1602 = vadd.f32 %v1600, %v1601
        %v1603 = vrot.slane %v1602, 2
        %v1604 = vadd.f32 %v1602, %v1603
        %v1605 = vrot.slane %v1604, 1
        %v1606 = vadd.f32 %v1604, %v1605
        %v1607 = vsel %vm1298, %v318, 0.0
        %v1608 = vrot.slane %v1607, 4
        %v1609 = vadd.f32 %v1607, %v1608
        %v1610 = vrot.slane %v1609, 2
        %v1611 = vadd.f32 %v1609, %v1610
        %v1612 = vrot.slane %v1611, 1
        %v1613 = vadd.f32 %v1611, %v1612
        %v1614 = vsel %vm1298, %v319, 0.0
        %v1615 = vrot.slane %v1614, 4
        %v1616 = vadd.f32 %v1614, %v1615
        %v1617 = vrot.slane %v1616, 2
        %v1618 = vadd.f32 %v1616, %v1617
        %v1619 = vrot.slane %v1618, 1
        %v1620 = vadd.f32 %v1618, %v1619
        %v1621 = vsel %vm1298, %v320, 0.0
        %v1622 = vrot.slane %v1621, 4
        %v1623 = vadd.f32 %v1621, %v1622
        %v1624 = vrot.slane %v1623, 2
        %v1625 = vadd.f32 %v1623, %v1624
        %v1626 = vrot.slane %v1625, 1
        %v1627 = vadd.f32 %v1625, %v1626
        %v1628 = vsel %vm1298, %v321, 0.0
        %v1629 = vrot.slane %v1628, 4
        %v1630 = vadd.f32 %v1628, %v1629
        %v1631 = vrot.slane %v1630, 2
        %v1632 = vadd.f32 %v1630, %v1631
        %v1633 = vrot.slane %v1632, 1
        %v1634 = vadd.f32 %v1632, %v1633
        %v1635 = vsel %vm1298, %v322, 0.0
        %v1636 = vrot.slane %v1635, 4
        %v1637 = vadd.f32 %v1635, %v1636
        %v1638 = vrot.slane %v1637, 2
        %v1639 = vadd.f32 %v1637, %v1638
        %v1640 = vrot.slane %v1639, 1
        %v1641 = vadd.f32 %v1639, %v1640
        %v1642 = vsel %vm1298, %v323, 0.0
        %v1643 = vrot.slane %v1642, 4
        %v1644 = vadd.f32 %v1642, %v1643
        %v1645 = vrot.slane %v1644, 2
        %v1646 = vadd.f32 %v1644, %v1645
        %v1647 = vrot.slane %v1646, 1
        %v1648 = vadd.f32 %v1646, %v1647
        %v1649 = vsel %vm1298, %v324, 0.0
        %v1650 = vrot.slane %v1649, 4
        %v1651 = vadd.f32 %v1649, %v1650
        %v1652 = vrot.slane %v1651, 2
        %v1653 = vadd.f32 %v1651, %v1652
        %v1654 = vrot.slane %v1653, 1
        %v1655 = vadd.f32 %v1653, %v1654
        %v1656 = vsel %vm1298, %v325, 0.0
        %v1657 = vrot.slane %v1656, 4
        %v1658 = vadd.f32 %v1656, %v1657
        %v1659 = vrot.slane %v1658, 2
        %v1660 = vadd.f32 %v1658, %v1659
        %v1661 = vrot.slane %v1660, 1
        %v1662 = vadd.f32 %v1660, %v1661
        %v1663 = vsel %vm1298, %v326, 0.0
        %v1664 = vrot.slane %v1663, 4
        %v1665 = vadd.f32 %v1663, %v1664
        %v1666 = vrot.slane %v1665, 2
        %v1667 = vadd.f32 %v1665, %v1666
        %v1668 = vrot.slane %v1667, 1
        %v1669 = vadd.f32 %v1667, %v1668
        %v1670 = vsel %vm1298, %v327, 0.0
        %v1671 = vrot.slane %v1670, 4
        %v1672 = vadd.f32 %v1670, %v1671
        %v1673 = vrot.slane %v1672, 2
        %v1674 = vadd.f32 %v1672, %v1673
        %v1675 = vrot.slane %v1674, 1
        %v1676 = vadd.f32 %v1674, %v1675
        %v1677 = vsel %vm1298, %v328, 0.0
        %v1678 = vrot.slane %v1677, 4
        %v1679 = vadd.f32 %v1677, %v1678
        %v1680 = vrot.slane %v1679, 2
        %v1681 = vadd.f32 %v1679, %v1680
        %v1682 = vrot.slane %v1681, 1
        %v1683 = vadd.f32 %v1681, %v1682
        %v1684 = vsel %vm1298, %v329, 0.0
        %v1685 = vrot.slane %v1684, 4
        %v1686 = vadd.f32 %v1684, %v1685
        %v1687 = vrot.slane %v1686, 2
        %v1688 = vadd.f32 %v1686, %v1687
        %v1689 = vrot.slane %v1688, 1
        %v1690 = vadd.f32 %v1688, %v1689
        %v1691 = vsel %vm1298, %v330, 0.0
        %v1692 = vrot.slane %v1691, 4
        %v1693 = vadd.f32 %v1691, %v1692
        %v1694 = vrot.slane %v1693, 2
        %v1695 = vadd.f32 %v1693, %v1694
        %v1696 = vrot.slane %v1695, 1
        %v1697 = vadd.f32 %v1695, %v1696
        %v1698 = vsel %vm1298, %v331, 0.0
        %v1699 = vrot.slane %v1698, 4
        %v1700 = vadd.f32 %v1698, %v1699
        %v1701 = vrot.slane %v1700, 2
        %v1702 = vadd.f32 %v1700, %v1701
        %v1703 = vrot.slane %v1702, 1
        %v1704 = vadd.f32 %v1702, %v1703
        %v1705 = vsel %vm1298, %v332, 0.0
        %v1706 = vrot.slane %v1705, 4
        %v1707 = vadd.f32 %v1705, %v1706
        %v1708 = vrot.slane %v1707, 2
        %v1709 = vadd.f32 %v1707, %v1708
        %v1710 = vrot.slane %v1709, 1
        %v1711 = vadd.f32 %v1709, %v1710
        %v1712 = vsel %vm1298, %v333, 0.0
        %v1713 = vrot.slane %v1712, 4
        %v1714 = vadd.f32 %v1712, %v1713
        %v1715 = vrot.slane %v1714, 2
        %v1716 = vadd.f32 %v1714, %v1715
        %v1717 = vrot.slane %v1716, 1
        %v1718 = vadd.f32 %v1716, %v1717
        %v1719 = vsel %vm1298, %v334, 0.0
        %v1720 = vrot.slane %v1719, 4
        %v1721 = vadd.f32 %v1719, %v1720
        %v1722 = vrot.slane %v1721, 2
        %v1723 = vadd.f32 %v1721, %v1722
        %v1724 = vrot.slane %v1723, 1
        %v1725 = vadd.f32 %v1723, %v1724
        %v1726 = vsel %vm1298, %v335, 0.0
        %v1727 = vrot.slane %v1726, 4
        %v1728 = vadd.f32 %v1726, %v1727
        %v1729 = vrot.slane %v1728, 2
        %v1730 = vadd.f32 %v1728, %v1729
        %v1731 = vrot.slane %v1730, 1
        %v1732 = vadd.f32 %v1730, %v1731
        %v1733 = vsel %vm1298, %v336, 0.0
        %v1734 = vrot.slane %v1733, 4
        %v1735 = vadd.f32 %v1733, %v1734
        %v1736 = vrot.slane %v1735, 2
        %v1737 = vadd.f32 %v1735, %v1736
        %v1738 = vrot.slane %v1737, 1
        %v1739 = vadd.f32 %v1737, %v1738
        %v1740 = vsel %vm1298, %v337, 0.0
        %v1741 = vrot.slane %v1740, 4
        %v1742 = vadd.f32 %v1740, %v1741
        %v1743 = vrot.slane %v1742, 2
        %v1744 = vadd.f32 %v1742, %v1743
        %v1745 = vrot.slane %v1744, 1
        %v1746 = vadd.f32 %v1744, %v1745
        %v1747 = vsel %vm1298, %v338, 0.0
        %v1748 = vrot.slane %v1747, 4
        %v1749 = vadd.f32 %v1747, %v1748
        %v1750 = vrot.slane %v1749, 2
        %v1751 = vadd.f32 %v1749, %v1750
        %v1752 = vrot.slane %v1751, 1
        %v1753 = vadd.f32 %v1751, %v1752
        %v1754 = vsel %vm1298, %v339, 0.0
        %v1755 = vrot.slane %v1754, 4
        %v1756 = vadd.f32 %v1754, %v1755
        %v1757 = vrot.slane %v1756, 2
        %v1758 = vadd.f32 %v1756, %v1757
        %v1759 = vrot.slane %v1758, 1
        %v1760 = vadd.f32 %v1758, %v1759
        %v1761 = vsel %vm1298, %v340, 0.0
        %v1762 = vrot.slane %v1761, 4
        %v1763 = vadd.f32 %v1761, %v1762
        %v1764 = vrot.slane %v1763, 2
        %v1765 = vadd.f32 %v1763, %v1764
        %v1766 = vrot.slane %v1765, 1
        %v1767 = vadd.f32 %v1765, %v1766
        %v1768 = vsel %vm1298, %v341, 0.0
        %v1769 = vrot.slane %v1768, 4
        %v1770 = vadd.f32 %v1768, %v1769
        %v1771 = vrot.slane %v1770, 2
        %v1772 = vadd.f32 %v1770, %v1771
        %v1773 = vrot.slane %v1772, 1
        %v1774 = vadd.f32 %v1772, %v1773
        %v1775 = vsel %vm1298, %v342, 0.0
        %v1776 = vrot.slane %v1775, 4
        %v1777 = vadd.f32 %v1775, %v1776
        %v1778 = vrot.slane %v1777, 2
        %v1779 = vadd.f32 %v1777, %v1778
        %v1780 = vrot.slane %v1779, 1
        %v1781 = vadd.f32 %v1779, %v1780
        %v1782 = vsel %vm1298, %v343, 0.0
        %v1783 = vrot.slane %v1782, 4
        %v1784 = vadd.f32 %v1782, %v1783
        %v1785 = vrot.slane %v1784, 2
        %v1786 = vadd.f32 %v1784, %v1785
        %v1787 = vrot.slane %v1786, 1
        %v1788 = vadd.f32 %v1786, %v1787
        %v1789 = vsel %vm1298, %v344, 0.0
        %v1790 = vrot.slane %v1789, 4
        %v1791 = vadd.f32 %v1789, %v1790
        %v1792 = vrot.slane %v1791, 2
        %v1793 = vadd.f32 %v1791, %v1792
        %v1794 = vrot.slane %v1793, 1
        %v1795 = vadd.f32 %v1793, %v1794
        %v1796 = vsel %vm1298, %v345, 0.0
        %v1797 = vrot.slane %v1796, 4
        %v1798 = vadd.f32 %v1796, %v1797
        %v1799 = vrot.slane %v1798, 2
        %v1800 = vadd.f32 %v1798, %v1799
        %v1801 = vrot.slane %v1800, 1
        %v1802 = vadd.f32 %v1800, %v1801
        %v1803 = vsel %vm1298, %v346, 0.0
        %v1804 = vrot.slane %v1803, 4
        %v1805 = vadd.f32 %v1803, %v1804
        %v1806 = vrot.slane %v1805, 2
        %v1807 = vadd.f32 %v1805, %v1806
        %v1808 = vrot.slane %v1807, 1
        %v1809 = vadd.f32 %v1807, %v1808
        %v1810 = vsel %vm1298, %v347, 0.0
        %v1811 = vrot.slane %v1810, 4
        %v1812 = vadd.f32 %v1810, %v1811
        %v1813 = vrot.slane %v1812, 2
        %v1814 = vadd.f32 %v1812, %v1813
        %v1815 = vrot.slane %v1814, 1
        %v1816 = vadd.f32 %v1814, %v1815
        %v1817 = vsel %vm1298, %v348, 0.0
        %v1818 = vrot.slane %v1817, 4
        %v1819 = vadd.f32 %v1817, %v1818
        %v1820 = vrot.slane %v1819, 2
        %v1821 = vadd.f32 %v1819, %v1820
        %v1822 = vrot.slane %v1821, 1
        %v1823 = vadd.f32 %v1821, %v1822
        %v1824 = vsel %vm1298, %v349, 0.0
        %v1825 = vrot.slane %v1824, 4
        %v1826 = vadd.f32 %v1824, %v1825
        %v1827 = vrot.slane %v1826, 2
        %v1828 = vadd.f32 %v1826, %v1827
        %v1829 = vrot.slane %v1828, 1
        %v1830 = vadd.f32 %v1828, %v1829
        %v1831 = vsel %vm1298, %v350, 0.0
        %v1832 = vrot.slane %v1831, 4
        %v1833 = vadd.f32 %v1831, %v1832
        %v1834 = vrot.slane %v1833, 2
        %v1835 = vadd.f32 %v1833, %v1834
        %v1836 = vrot.slane %v1835, 1
        %v1837 = vadd.f32 %v1835, %v1836
        %v1838 = vsel %vm1298, %v351, 0.0
        %v1839 = vrot.slane %v1838, 4
        %v1840 = vadd.f32 %v1838, %v1839
        %v1841 = vrot.slane %v1840, 2
        %v1842 = vadd.f32 %v1840, %v1841
        %v1843 = vrot.slane %v1842, 1
        %v1844 = vadd.f32 %v1842, %v1843
        %v1845 = vsel %vm1298, %v352, 0.0
        %v1846 = vrot.slane %v1845, 4
        %v1847 = vadd.f32 %v1845, %v1846
        %v1848 = vrot.slane %v1847, 2
        %v1849 = vadd.f32 %v1847, %v1848
        %v1850 = vrot.slane %v1849, 1
        %v1851 = vadd.f32 %v1849, %v1850
        %v1852 = vsel %vm1298, %v353, 0.0
        %v1853 = vrot.slane %v1852, 4
        %v1854 = vadd.f32 %v1852, %v1853
        %v1855 = vrot.slane %v1854, 2
        %v1856 = vadd.f32 %v1854, %v1855
        %v1857 = vrot.slane %v1856, 1
        %v1858 = vadd.f32 %v1856, %v1857
        %v1859 = vsel %vm1298, %v354, 0.0
        %v1860 = vrot.slane %v1859, 4
        %v1861 = vadd.f32 %v1859, %v1860
        %v1862 = vrot.slane %v1861, 2
        %v1863 = vadd.f32 %v1861, %v1862
        %v1864 = vrot.slane %v1863, 1
        %v1865 = vadd.f32 %v1863, %v1864
        %v1866 = vsel %vm1298, %v355, 0.0
        %v1867 = vrot.slane %v1866, 4
        %v1868 = vadd.f32 %v1866, %v1867
        %v1869 = vrot.slane %v1868, 2
        %v1870 = vadd.f32 %v1868, %v1869
        %v1871 = vrot.slane %v1870, 1
        %v1872 = vadd.f32 %v1870, %v1871
        %v1873 = vsel %vm1298, %v356, 0.0
        %v1874 = vrot.slane %v1873, 4
        %v1875 = vadd.f32 %v1873, %v1874
        %v1876 = vrot.slane %v1875, 2
        %v1877 = vadd.f32 %v1875, %v1876
        %v1878 = vrot.slane %v1877, 1
        %v1879 = vadd.f32 %v1877, %v1878
        %v1880 = vsel %vm1298, %v357, 0.0
        %v1881 = vrot.slane %v1880, 4
        %v1882 = vadd.f32 %v1880, %v1881
        %v1883 = vrot.slane %v1882, 2
        %v1884 = vadd.f32 %v1882, %v1883
        %v1885 = vrot.slane %v1884, 1
        %v1886 = vadd.f32 %v1884, %v1885
        %v1887 = vsel %vm1298, %v358, 0.0
        %v1888 = vrot.slane %v1887, 4
        %v1889 = vadd.f32 %v1887, %v1888
        %v1890 = vrot.slane %v1889, 2
        %v1891 = vadd.f32 %v1889, %v1890
        %v1892 = vrot.slane %v1891, 1
        %v1893 = vadd.f32 %v1891, %v1892
        %v1894 = vsel %vm1298, %v359, 0.0
        %v1895 = vrot.slane %v1894, 4
        %v1896 = vadd.f32 %v1894, %v1895
        %v1897 = vrot.slane %v1896, 2
        %v1898 = vadd.f32 %v1896, %v1897
        %v1899 = vrot.slane %v1898, 1
        %v1900 = vadd.f32 %v1898, %v1899
        %v1901 = vsel %vm1298, %v360, 0.0
        %v1902 = vrot.slane %v1901, 4
        %v1903 = vadd.f32 %v1901, %v1902
        %v1904 = vrot.slane %v1903, 2
        %v1905 = vadd.f32 %v1903, %v1904
        %v1906 = vrot.slane %v1905, 1
        %v1907 = vadd.f32 %v1905, %v1906
        %v1908 = vsel %vm1298, %v361, 0.0
        %v1909 = vrot.slane %v1908, 4
        %v1910 = vadd.f32 %v1908, %v1909
        %v1911 = vrot.slane %v1910, 2
        %v1912 = vadd.f32 %v1910, %v1911
        %v1913 = vrot.slane %v1912, 1
        %v1914 = vadd.f32 %v1912, %v1913
        %v1915 = vsel %vm1298, %v362, 0.0
        %v1916 = vrot.slane %v1915, 4
        %v1917 = vadd.f32 %v1915, %v1916
        %v1918 = vrot.slane %v1917, 2
        %v1919 = vadd.f32 %v1917, %v1918
        %v1920 = vrot.slane %v1919, 1
        %v1921 = vadd.f32 %v1919, %v1920
        %v1922 = vsel %vm1298, %v363, 0.0
        %v1923 = vrot.slane %v1922, 4
        %v1924 = vadd.f32 %v1922, %v1923
        %v1925 = vrot.slane %v1924, 2
        %v1926 = vadd.f32 %v1924, %v1925
        %v1927 = vrot.slane %v1926, 1
        %v1928 = vadd.f32 %v1926, %v1927
        %v1929 = vsel %vm1298, %v364, 0.0
        %v1930 = vrot.slane %v1929, 4
        %v1931 = vadd.f32 %v1929, %v1930
        %v1932 = vrot.slane %v1931, 2
        %v1933 = vadd.f32 %v1931, %v1932
        %v1934 = vrot.slane %v1933, 1
        %v1935 = vadd.f32 %v1933, %v1934
        %v1936 = vsel %vm1298, %v365, 0.0
        %v1937 = vrot.slane %v1936, 4
        %v1938 = vadd.f32 %v1936, %v1937
        %v1939 = vrot.slane %v1938, 2
        %v1940 = vadd.f32 %v1938, %v1939
        %v1941 = vrot.slane %v1940, 1
        %v1942 = vadd.f32 %v1940, %v1941
        %v1943 = vsel %vm1298, %v366, 0.0
        %v1944 = vrot.slane %v1943, 4
        %v1945 = vadd.f32 %v1943, %v1944
        %v1946 = vrot.slane %v1945, 2
        %v1947 = vadd.f32 %v1945, %v1946
        %v1948 = vrot.slane %v1947, 1
        %v1949 = vadd.f32 %v1947, %v1948
        %v1950 = vsel %vm1298, %v367, 0.0
        %v1951 = vrot.slane %v1950, 4
        %v1952 = vadd.f32 %v1950, %v1951
        %v1953 = vrot.slane %v1952, 2
        %v1954 = vadd.f32 %v1952, %v1953
        %v1955 = vrot.slane %v1954, 1
        %v1956 = vadd.f32 %v1954, %v1955
        %v1957 = vsel %vm1298, %v368, 0.0
        %v1958 = vrot.slane %v1957, 4
        %v1959 = vadd.f32 %v1957, %v1958
        %v1960 = vrot.slane %v1959, 2
        %v1961 = vadd.f32 %v1959, %v1960
        %v1962 = vrot.slane %v1961, 1
        %v1963 = vadd.f32 %v1961, %v1962
        %v1964 = vsel %vm1298, %v369, 0.0
        %v1965 = vrot.slane %v1964, 4
        %v1966 = vadd.f32 %v1964, %v1965
        %v1967 = vrot.slane %v1966, 2
        %v1968 = vadd.f32 %v1966, %v1967
        %v1969 = vrot.slane %v1968, 1
        %v1970 = vadd.f32 %v1968, %v1969
        %v1971 = vsel %vm1298, %v370, 0.0
        %v1972 = vrot.slane %v1971, 4
        %v1973 = vadd.f32 %v1971, %v1972
        %v1974 = vrot.slane %v1973, 2
        %v1975 = vadd.f32 %v1973, %v1974
        %v1976 = vrot.slane %v1975, 1
        %v1977 = vadd.f32 %v1975, %v1976
        %v1978 = vsel %vm1298, %v371, 0.0
        %v1979 = vrot.slane %v1978, 4
        %v1980 = vadd.f32 %v1978, %v1979
        %v1981 = vrot.slane %v1980, 2
        %v1982 = vadd.f32 %v1980, %v1981
        %v1983 = vrot.slane %v1982, 1
        %v1984 = vadd.f32 %v1982, %v1983
        %v1985 = vsel %vm1298, %v372, 0.0
        %v1986 = vrot.slane %v1985, 4
        %v1987 = vadd.f32 %v1985, %v1986
        %v1988 = vrot.slane %v1987, 2
        %v1989 = vadd.f32 %v1987, %v1988
        %v1990 = vrot.slane %v1989, 1
        %v1991 = vadd.f32 %v1989, %v1990
        %v1992 = vsel %vm1298, %v373, 0.0
        %v1993 = vrot.slane %v1992, 4
        %v1994 = vadd.f32 %v1992, %v1993
        %v1995 = vrot.slane %v1994, 2
        %v1996 = vadd.f32 %v1994, %v1995
        %v1997 = vrot.slane %v1996, 1
        %v1998 = vadd.f32 %v1996, %v1997
        %v1999 = vsel %vm1298, %v374, 0.0
        %v2000 = vrot.slane %v1999, 4
        %v2001 = vadd.f32 %v1999, %v2000
        %v2002 = vrot.slane %v2001, 2
        %v2003 = vadd.f32 %v2001, %v2002
        %v2004 = vrot.slane %v2003, 1
        %v2005 = vadd.f32 %v2003, %v2004
        %v2006 = vsel %vm1298, %v375, 0.0
        %v2007 = vrot.slane %v2006, 4
        %v2008 = vadd.f32 %v2006, %v2007
        %v2009 = vrot.slane %v2008, 2
        %v2010 = vadd.f32 %v2008, %v2009
        %v2011 = vrot.slane %v2010, 1
        %v2012 = vadd.f32 %v2010, %v2011
        %v2013 = vsel %vm1298, %v376, 0.0
        %v2014 = vrot.slane %v2013, 4
        %v2015 = vadd.f32 %v2013, %v2014
        %v2016 = vrot.slane %v2015, 2
        %v2017 = vadd.f32 %v2015, %v2016
        %v2018 = vrot.slane %v2017, 1
        %v2019 = vadd.f32 %v2017, %v2018
        %v2020 = vsel %vm1298, %v377, 0.0
        %v2021 = vrot.slane %v2020, 4
        %v2022 = vadd.f32 %v2020, %v2021
        %v2023 = vrot.slane %v2022, 2
        %v2024 = vadd.f32 %v2022, %v2023
        %v2025 = vrot.slane %v2024, 1
        %v2026 = vadd.f32 %v2024, %v2025
        %v2027 = vsel %vm1298, %v378, 0.0
        %v2028 = vrot.slane %v2027, 4
        %v2029 = vadd.f32 %v2027, %v2028
        %v2030 = vrot.slane %v2029, 2
        %v2031 = vadd.f32 %v2029, %v2030
        %v2032 = vrot.slane %v2031, 1
        %v2033 = vadd.f32 %v2031, %v2032
        %v2034 = vsel %vm1298, %v379, 0.0
        %v2035 = vrot.slane %v2034, 4
        %v2036 = vadd.f32 %v2034, %v2035
        %v2037 = vrot.slane %v2036, 2
        %v2038 = vadd.f32 %v2036, %v2037
        %v2039 = vrot.slane %v2038, 1
        %v2040 = vadd.f32 %v2038, %v2039
        %v2041 = vsel %vm1298, %v380, 0.0
        %v2042 = vrot.slane %v2041, 4
        %v2043 = vadd.f32 %v2041, %v2042
        %v2044 = vrot.slane %v2043, 2
        %v2045 = vadd.f32 %v2043, %v2044
        %v2046 = vrot.slane %v2045, 1
        %v2047 = vadd.f32 %v2045, %v2046
        %v2048 = vsel %vm1298, %v381, 0.0
        %v2049 = vrot.slane %v2048, 4
        %v2050 = vadd.f32 %v2048, %v2049
        %v2051 = vrot.slane %v2050, 2
        %v2052 = vadd.f32 %v2050, %v2051
        %v2053 = vrot.slane %v2052, 1
        %v2054 = vadd.f32 %v2052, %v2053
        %v2055 = vsel %vm1298, %v382, 0.0
        %v2056 = vrot.slane %v2055, 4
        %v2057 = vadd.f32 %v2055, %v2056
        %v2058 = vrot.slane %v2057, 2
        %v2059 = vadd.f32 %v2057, %v2058
        %v2060 = vrot.slane %v2059, 1
        %v2061 = vadd.f32 %v2059, %v2060
        %v2062 = vsel %vm1298, %v383, 0.0
        %v2063 = vrot.slane %v2062, 4
        %v2064 = vadd.f32 %v2062, %v2063
        %v2065 = vrot.slane %v2064, 2
        %v2066 = vadd.f32 %v2064, %v2065
        %v2067 = vrot.slane %v2066, 1
        %v2068 = vadd.f32 %v2066, %v2067
        %v2069 = vsel %vm1298, %v384, 0.0
        %v2070 = vrot.slane %v2069, 4
        %v2071 = vadd.f32 %v2069, %v2070
        %v2072 = vrot.slane %v2071, 2
        %v2073 = vadd.f32 %v2071, %v2072
        %v2074 = vrot.slane %v2073, 1
        %v2075 = vadd.f32 %v2073, %v2074
        %v2076 = vsel %vm1298, %v385, 0.0
        %v2077 = vrot.slane %v2076, 4
        %v2078 = vadd.f32 %v2076, %v2077
        %v2079 = vrot.slane %v2078, 2
        %v2080 = vadd.f32 %v2078, %v2079
        %v2081 = vrot.slane %v2080, 1
        %v2082 = vadd.f32 %v2080, %v2081
        %v2083 = vsel %vm1298, %v386, 0.0
        %v2084 = vrot.slane %v2083, 4
        %v2085 = vadd.f32 %v2083, %v2084
        %v2086 = vrot.slane %v2085, 2
        %v2087 = vadd.f32 %v2085, %v2086
        %v2088 = vrot.slane %v2087, 1
        %v2089 = vadd.f32 %v2087, %v2088
        %v2090 = vsel %vm1298, %v387, 0.0
        %v2091 = vrot.slane %v2090, 4
        %v2092 = vadd.f32 %v2090, %v2091
        %v2093 = vrot.slane %v2092, 2
        %v2094 = vadd.f32 %v2092, %v2093
        %v2095 = vrot.slane %v2094, 1
        %v2096 = vadd.f32 %v2094, %v2095
        %v2097 = vsel %vm1298, %v388, 0.0
        %v2098 = vrot.slane %v2097, 4
        %v2099 = vadd.f32 %v2097, %v2098
        %v2100 = vrot.slane %v2099, 2
        %v2101 = vadd.f32 %v2099, %v2100
        %v2102 = vrot.slane %v2101, 1
        %v2103 = vadd.f32 %v2101, %v2102
        %v2104 = vsel %vm1298, %v389, 0.0
        %v2105 = vrot.slane %v2104, 4
        %v2106 = vadd.f32 %v2104, %v2105
        %v2107 = vrot.slane %v2106, 2
        %v2108 = vadd.f32 %v2106, %v2107
        %v2109 = vrot.slane %v2108, 1
        %v2110 = vadd.f32 %v2108, %v2109
        %v2111 = vsel %vm1298, %v390, 0.0
        %v2112 = vrot.slane %v2111, 4
        %v2113 = vadd.f32 %v2111, %v2112
        %v2114 = vrot.slane %v2113, 2
        %v2115 = vadd.f32 %v2113, %v2114
        %v2116 = vrot.slane %v2115, 1
        %v2117 = vadd.f32 %v2115, %v2116
        %v2118 = vsel %vm1298, %v391, 0.0
        %v2119 = vrot.slane %v2118, 4
        %v2120 = vadd.f32 %v2118, %v2119
        %v2121 = vrot.slane %v2120, 2
        %v2122 = vadd.f32 %v2120, %v2121
        %v2123 = vrot.slane %v2122, 1
        %v2124 = vadd.f32 %v2122, %v2123
        %v2125 = vsel %vm1298, %v392, 0.0
        %v2126 = vrot.slane %v2125, 4
        %v2127 = vadd.f32 %v2125, %v2126
        %v2128 = vrot.slane %v2127, 2
        %v2129 = vadd.f32 %v2127, %v2128
        %v2130 = vrot.slane %v2129, 1
        %v2131 = vadd.f32 %v2129, %v2130
        %v2132 = vsel %vm1298, %v393, 0.0
        %v2133 = vrot.slane %v2132, 4
        %v2134 = vadd.f32 %v2132, %v2133
        %v2135 = vrot.slane %v2134, 2
        %v2136 = vadd.f32 %v2134, %v2135
        %v2137 = vrot.slane %v2136, 1
        %v2138 = vadd.f32 %v2136, %v2137
        %v2139 = vsel %vm1298, %v394, 0.0
        %v2140 = vrot.slane %v2139, 4
        %v2141 = vadd.f32 %v2139, %v2140
        %v2142 = vrot.slane %v2141, 2
        %v2143 = vadd.f32 %v2141, %v2142
        %v2144 = vrot.slane %v2143, 1
        %v2145 = vadd.f32 %v2143, %v2144
        %v2146 = vsel %vm1298, %v395, 0.0
        %v2147 = vrot.slane %v2146, 4
        %v2148 = vadd.f32 %v2146, %v2147
        %v2149 = vrot.slane %v2148, 2
        %v2150 = vadd.f32 %v2148, %v2149
        %v2151 = vrot.slane %v2150, 1
        %v2152 = vadd.f32 %v2150, %v2151
        %v2153 = vsel %vm1298, %v396, 0.0
        %v2154 = vrot.slane %v2153, 4
        %v2155 = vadd.f32 %v2153, %v2154
        %v2156 = vrot.slane %v2155, 2
        %v2157 = vadd.f32 %v2155, %v2156
        %v2158 = vrot.slane %v2157, 1
        %v2159 = vadd.f32 %v2157, %v2158
        %v2160 = vsel %vm1298, %v397, 0.0
        %v2161 = vrot.slane %v2160, 4
        %v2162 = vadd.f32 %v2160, %v2161
        %v2163 = vrot.slane %v2162, 2
        %v2164 = vadd.f32 %v2162, %v2163
        %v2165 = vrot.slane %v2164, 1
        %v2166 = vadd.f32 %v2164, %v2165
        %v2167 = vsel %vm1298, %v398, 0.0
        %v2168 = vrot.slane %v2167, 4
        %v2169 = vadd.f32 %v2167, %v2168
        %v2170 = vrot.slane %v2169, 2
        %v2171 = vadd.f32 %v2169, %v2170
        %v2172 = vrot.slane %v2171, 1
        %v2173 = vadd.f32 %v2171, %v2172
        %v2174 = vsel %vm1298, %v399, 0.0
        %v2175 = vrot.slane %v2174, 4
        %v2176 = vadd.f32 %v2174, %v2175
        %v2177 = vrot.slane %v2176, 2
        %v2178 = vadd.f32 %v2176, %v2177
        %v2179 = vrot.slane %v2178, 1
        %v2180 = vadd.f32 %v2178, %v2179
        %v2181 = vsel %vm1298, %v400, 0.0
        %v2182 = vrot.slane %v2181, 4
        %v2183 = vadd.f32 %v2181, %v2182
        %v2184 = vrot.slane %v2183, 2
        %v2185 = vadd.f32 %v2183, %v2184
        %v2186 = vrot.slane %v2185, 1
        %v2187 = vadd.f32 %v2185, %v2186
        %v2188 = vsel %vm1298, %v401, 0.0
        %v2189 = vrot.slane %v2188, 4
        %v2190 = vadd.f32 %v2188, %v2189
        %v2191 = vrot.slane %v2190, 2
        %v2192 = vadd.f32 %v2190, %v2191
        %v2193 = vrot.slane %v2192, 1
        %v2194 = vadd.f32 %v2192, %v2193
        %v2195 = vsel %vm1298, %v402, 0.0
        %v2196 = vrot.slane %v2195, 4
        %v2197 = vadd.f32 %v2195, %v2196
        %v2198 = vrot.slane %v2197, 2
        %v2199 = vadd.f32 %v2197, %v2198
        %v2200 = vrot.slane %v2199, 1
        %v2201 = vadd.f32 %v2199, %v2200
        %v2202 = vsel %vm1298, %v403, 0.0
        %v2203 = vrot.slane %v2202, 4
        %v2204 = vadd.f32 %v2202, %v2203
        %v2205 = vrot.slane %v2204, 2
        %v2206 = vadd.f32 %v2204, %v2205
        %v2207 = vrot.slane %v2206, 1
        %v2208 = vadd.f32 %v2206, %v2207
        %v2209 = vsel %vm1298, %v404, 0.0
        %v2210 = vrot.slane %v2209, 4
        %v2211 = vadd.f32 %v2209, %v2210
        %v2212 = vrot.slane %v2211, 2
        %v2213 = vadd.f32 %v2211, %v2212
        %v2214 = vrot.slane %v2213, 1
        %v2215 = vadd.f32 %v2213, %v2214
        %v2216 = vsel %vm1298, %v405, 0.0
        %v2217 = vrot.slane %v2216, 4
        %v2218 = vadd.f32 %v2216, %v2217
        %v2219 = vrot.slane %v2218, 2
        %v2220 = vadd.f32 %v2218, %v2219
        %v2221 = vrot.slane %v2220, 1
        %v2222 = vadd.f32 %v2220, %v2221
        %v2223 = vsel %vm1298, %v406, 0.0
        %v2224 = vrot.slane %v2223, 4
        %v2225 = vadd.f32 %v2223, %v2224
        %v2226 = vrot.slane %v2225, 2
        %v2227 = vadd.f32 %v2225, %v2226
        %v2228 = vrot.slane %v2227, 1
        %v2229 = vadd.f32 %v2227, %v2228
        %v2230 = vsel %vm1298, %v407, 0.0
        %v2231 = vrot.slane %v2230, 4
        %v2232 = vadd.f32 %v2230, %v2231
        %v2233 = vrot.slane %v2232, 2
        %v2234 = vadd.f32 %v2232, %v2233
        %v2235 = vrot.slane %v2234, 1
        %v2236 = vadd.f32 %v2234, %v2235
        %v2237 = vsel %vm1298, %v408, 0.0
        %v2238 = vrot.slane %v2237, 4
        %v2239 = vadd.f32 %v2237, %v2238
        %v2240 = vrot.slane %v2239, 2
        %v2241 = vadd.f32 %v2239, %v2240
        %v2242 = vrot.slane %v2241, 1
        %v2243 = vadd.f32 %v2241, %v2242
        %v2244 = vsel %vm1298, %v409, 0.0
        %v2245 = vrot.slane %v2244, 4
        %v2246 = vadd.f32 %v2244, %v2245
        %v2247 = vrot.slane %v2246, 2
        %v2248 = vadd.f32 %v2246, %v2247
        %v2249 = vrot.slane %v2248, 1
        %v2250 = vadd.f32 %v2248, %v2249
        %v2251 = vsel %vm1298, %v410, 0.0
        %v2252 = vrot.slane %v2251, 4
        %v2253 = vadd.f32 %v2251, %v2252
        %v2254 = vrot.slane %v2253, 2
        %v2255 = vadd.f32 %v2253, %v2254
        %v2256 = vrot.slane %v2255, 1
        %v2257 = vadd.f32 %v2255, %v2256
        %v2258 = vsel %vm1298, %v411, 0.0
        %v2259 = vrot.slane %v2258, 4
        %v2260 = vadd.f32 %v2258, %v2259
        %v2261 = vrot.slane %v2260, 2
        %v2262 = vadd.f32 %v2260, %v2261
        %v2263 = vrot.slane %v2262, 1
        %v2264 = vadd.f32 %v2262, %v2263
        %v2265 = vsel %vm1298, %v412, 0.0
        %v2266 = vrot.slane %v2265, 4
        %v2267 = vadd.f32 %v2265, %v2266
        %v2268 = vrot.slane %v2267, 2
        %v2269 = vadd.f32 %v2267, %v2268
        %v2270 = vrot.slane %v2269, 1
        %v2271 = vadd.f32 %v2269, %v2270
        %v2272 = vsel %vm1298, %v413, 0.0
        %v2273 = vrot.slane %v2272, 4
        %v2274 = vadd.f32 %v2272, %v2273
        %v2275 = vrot.slane %v2274, 2
        %v2276 = vadd.f32 %v2274, %v2275
        %v2277 = vrot.slane %v2276, 1
        %v2278 = vadd.f32 %v2276, %v2277
        %v2279 = vsel %vm1298, %v414, 0.0
        %v2280 = vrot.slane %v2279, 4
        %v2281 = vadd.f32 %v2279, %v2280
        %v2282 = vrot.slane %v2281, 2
        %v2283 = vadd.f32 %v2281, %v2282
        %v2284 = vrot.slane %v2283, 1
        %v2285 = vadd.f32 %v2283, %v2284
        %v2286 = vsel %vm1298, %v415, 0.0
        %v2287 = vrot.slane %v2286, 4
        %v2288 = vadd.f32 %v2286, %v2287
        %v2289 = vrot.slane %v2288, 2
        %v2290 = vadd.f32 %v2288, %v2289
        %v2291 = vrot.slane %v2290, 1
        %v2292 = vadd.f32 %v2290, %v2291
        %v2293 = vsel %vm1298, %v416, 0.0
        %v2294 = vrot.slane %v2293, 4
        %v2295 = vadd.f32 %v2293, %v2294
        %v2296 = vrot.slane %v2295, 2
        %v2297 = vadd.f32 %v2295, %v2296
        %v2298 = vrot.slane %v2297, 1
        %v2299 = vadd.f32 %v2297, %v2298
        %v2300 = vsel %vm1298, %v417, 0.0
        %v2301 = vrot.slane %v2300, 4
        %v2302 = vadd.f32 %v2300, %v2301
        %v2303 = vrot.slane %v2302, 2
        %v2304 = vadd.f32 %v2302, %v2303
        %v2305 = vrot.slane %v2304, 1
        %v2306 = vadd.f32 %v2304, %v2305
        %v2307 = vsel %vm1298, %v418, 0.0
        %v2308 = vrot.slane %v2307, 4
        %v2309 = vadd.f32 %v2307, %v2308
        %v2310 = vrot.slane %v2309, 2
        %v2311 = vadd.f32 %v2309, %v2310
        %v2312 = vrot.slane %v2311, 1
        %v2313 = vadd.f32 %v2311, %v2312
        %v2314 = vsel %vm1298, %v419, 0.0
        %v2315 = vrot.slane %v2314, 4
        %v2316 = vadd.f32 %v2314, %v2315
        %v2317 = vrot.slane %v2316, 2
        %v2318 = vadd.f32 %v2316, %v2317
        %v2319 = vrot.slane %v2318, 1
        %v2320 = vadd.f32 %v2318, %v2319
        %v2321 = vsel %vm1298, %v420, 0.0
        %v2322 = vrot.slane %v2321, 4
        %v2323 = vadd.f32 %v2321, %v2322
        %v2324 = vrot.slane %v2323, 2
        %v2325 = vadd.f32 %v2323, %v2324
        %v2326 = vrot.slane %v2325, 1
        %v2327 = vadd.f32 %v2325, %v2326
        %v2328 = vsel %vm1298, %v421, 0.0
        %v2329 = vrot.slane %v2328, 4
        %v2330 = vadd.f32 %v2328, %v2329
        %v2331 = vrot.slane %v2330, 2
        %v2332 = vadd.f32 %v2330, %v2331
        %v2333 = vrot.slane %v2332, 1
        %v2334 = vadd.f32 %v2332, %v2333
        %v2335 = vsel %vm1298, %v422, 0.0
        %v2336 = vrot.slane %v2335, 4
        %v2337 = vadd.f32 %v2335, %v2336
        %v2338 = vrot.slane %v2337, 2
        %v2339 = vadd.f32 %v2337, %v2338
        %v2340 = vrot.slane %v2339, 1
        %v2341 = vadd.f32 %v2339, %v2340
        %v2342 = vsel %vm1298, %v423, 0.0
        %v2343 = vrot.slane %v2342, 4
        %v2344 = vadd.f32 %v2342, %v2343
        %v2345 = vrot.slane %v2344, 2
        %v2346 = vadd.f32 %v2344, %v2345
        %v2347 = vrot.slane %v2346, 1
        %v2348 = vadd.f32 %v2346, %v2347
        %v2349 = vsel %vm1298, %v424, 0.0
        %v2350 = vrot.slane %v2349, 4
        %v2351 = vadd.f32 %v2349, %v2350
        %v2352 = vrot.slane %v2351, 2
        %v2353 = vadd.f32 %v2351, %v2352
        %v2354 = vrot.slane %v2353, 1
        %v2355 = vadd.f32 %v2353, %v2354
        %v2356 = vsel %vm1298, %v425, 0.0
        %v2357 = vrot.slane %v2356, 4
        %v2358 = vadd.f32 %v2356, %v2357
        %v2359 = vrot.slane %v2358, 2
        %v2360 = vadd.f32 %v2358, %v2359
        %v2361 = vrot.slane %v2360, 1
        %v2362 = vadd.f32 %v2360, %v2361
        %v2363 = vsel %vm1298, %v426, 0.0
        %v2364 = vrot.slane %v2363, 4
        %v2365 = vadd.f32 %v2363, %v2364
        %v2366 = vrot.slane %v2365, 2
        %v2367 = vadd.f32 %v2365, %v2366
        %v2368 = vrot.slane %v2367, 1
        %v2369 = vadd.f32 %v2367, %v2368
        %v2370 = vsel %vm1298, %v427, 0.0
        %v2371 = vrot.slane %v2370, 4
        %v2372 = vadd.f32 %v2370, %v2371
        %v2373 = vrot.slane %v2372, 2
        %v2374 = vadd.f32 %v2372, %v2373
        %v2375 = vrot.slane %v2374, 1
        %v2376 = vadd.f32 %v2374, %v2375
        %v2377 = vsel %vm1298, %v428, 0.0
        %v2378 = vrot.slane %v2377, 4
        %v2379 = vadd.f32 %v2377, %v2378
        %v2380 = vrot.slane %v2379, 2
        %v2381 = vadd.f32 %v2379, %v2380
        %v2382 = vrot.slane %v2381, 1
        %v2383 = vadd.f32 %v2381, %v2382
        %v2384 = vsel %vm1298, %v429, 0.0
        %v2385 = vrot.slane %v2384, 4
        %v2386 = vadd.f32 %v2384, %v2385
        %v2387 = vrot.slane %v2386, 2
        %v2388 = vadd.f32 %v2386, %v2387
        %v2389 = vrot.slane %v2388, 1
        %v2390 = vadd.f32 %v2388, %v2389
        %v2391 = vsel %vm1298, %v430, 0.0
        %v2392 = vrot.slane %v2391, 4
        %v2393 = vadd.f32 %v2391, %v2392
        %v2394 = vrot.slane %v2393, 2
        %v2395 = vadd.f32 %v2393, %v2394
        %v2396 = vrot.slane %v2395, 1
        %v2397 = vadd.f32 %v2395, %v2396
        %v2398 = vsel %vm1298, %v431, 0.0
        %v2399 = vrot.slane %v2398, 4
        %v2400 = vadd.f32 %v2398, %v2399
        %v2401 = vrot.slane %v2400, 2
        %v2402 = vadd.f32 %v2400, %v2401
        %v2403 = vrot.slane %v2402, 1
        %v2404 = vadd.f32 %v2402, %v2403
        %v2405 = vsel %vm1298, %v432, 0.0
        %v2406 = vrot.slane %v2405, 4
        %v2407 = vadd.f32 %v2405, %v2406
        %v2408 = vrot.slane %v2407, 2
        %v2409 = vadd.f32 %v2407, %v2408
        %v2410 = vrot.slane %v2409, 1
        %v2411 = vadd.f32 %v2409, %v2410
        %v2412 = vsel %vm1298, %v433, 0.0
        %v2413 = vrot.slane %v2412, 4
        %v2414 = vadd.f32 %v2412, %v2413
        %v2415 = vrot.slane %v2414, 2
        %v2416 = vadd.f32 %v2414, %v2415
        %v2417 = vrot.slane %v2416, 1
        %v2418 = vadd.f32 %v2416, %v2417
        %v2419 = vsel %vm1298, %v434, 0.0
        %v2420 = vrot.slane %v2419, 4
        %v2421 = vadd.f32 %v2419, %v2420
        %v2422 = vrot.slane %v2421, 2
        %v2423 = vadd.f32 %v2421, %v2422
        %v2424 = vrot.slane %v2423, 1
        %v2425 = vadd.f32 %v2423, %v2424
        %v2426 = vsel %vm1298, %v435, 0.0
        %v2427 = vrot.slane %v2426, 4
        %v2428 = vadd.f32 %v2426, %v2427
        %v2429 = vrot.slane %v2428, 2
        %v2430 = vadd.f32 %v2428, %v2429
        %v2431 = vrot.slane %v2430, 1
        %v2432 = vadd.f32 %v2430, %v2431
        %v2433 = vsel %vm1298, %v436, 0.0
        %v2434 = vrot.slane %v2433, 4
        %v2435 = vadd.f32 %v2433, %v2434
        %v2436 = vrot.slane %v2435, 2
        %v2437 = vadd.f32 %v2435, %v2436
        %v2438 = vrot.slane %v2437, 1
        %v2439 = vadd.f32 %v2437, %v2438
        %v2440 = vsel %vm1298, %v437, 0.0
        %v2441 = vrot.slane %v2440, 4
        %v2442 = vadd.f32 %v2440, %v2441
        %v2443 = vrot.slane %v2442, 2
        %v2444 = vadd.f32 %v2442, %v2443
        %v2445 = vrot.slane %v2444, 1
        %v2446 = vadd.f32 %v2444, %v2445
        %v2447 = vsel %vm1298, %v438, 0.0
        %v2448 = vrot.slane %v2447, 4
        %v2449 = vadd.f32 %v2447, %v2448
        %v2450 = vrot.slane %v2449, 2
        %v2451 = vadd.f32 %v2449, %v2450
        %v2452 = vrot.slane %v2451, 1
        %v2453 = vadd.f32 %v2451, %v2452
        %v2454 = vsel %vm1298, %v439, 0.0
        %v2455 = vrot.slane %v2454, 4
        %v2456 = vadd.f32 %v2454, %v2455
        %v2457 = vrot.slane %v2456, 2
        %v2458 = vadd.f32 %v2456, %v2457
        %v2459 = vrot.slane %v2458, 1
        %v2460 = vadd.f32 %v2458, %v2459
        %v2461 = vsel %vm1298, %v440, 0.0
        %v2462 = vrot.slane %v2461, 4
        %v2463 = vadd.f32 %v2461, %v2462
        %v2464 = vrot.slane %v2463, 2
        %v2465 = vadd.f32 %v2463, %v2464
        %v2466 = vrot.slane %v2465, 1
        %v2467 = vadd.f32 %v2465, %v2466
        %v2468 = vsel %vm1298, %v441, 0.0
        %v2469 = vrot.slane %v2468, 4
        %v2470 = vadd.f32 %v2468, %v2469
        %v2471 = vrot.slane %v2470, 2
        %v2472 = vadd.f32 %v2470, %v2471
        %v2473 = vrot.slane %v2472, 1
        %v2474 = vadd.f32 %v2472, %v2473
        %v2475 = vsel %vm1298, %v442, 0.0
        %v2476 = vrot.slane %v2475, 4
        %v2477 = vadd.f32 %v2475, %v2476
        %v2478 = vrot.slane %v2477, 2
        %v2479 = vadd.f32 %v2477, %v2478
        %v2480 = vrot.slane %v2479, 1
        %v2481 = vadd.f32 %v2479, %v2480
        %v2482 = vsel %vm1298, %v443, 0.0
        %v2483 = vrot.slane %v2482, 4
        %v2484 = vadd.f32 %v2482, %v2483
        %v2485 = vrot.slane %v2484, 2
        %v2486 = vadd.f32 %v2484, %v2485
        %v2487 = vrot.slane %v2486, 1
        %v2488 = vadd.f32 %v2486, %v2487
        %v2489 = vsel %vm1298, %v444, 0.0
        %v2490 = vrot.slane %v2489, 4
        %v2491 = vadd.f32 %v2489, %v2490
        %v2492 = vrot.slane %v2491, 2
        %v2493 = vadd.f32 %v2491, %v2492
        %v2494 = vrot.slane %v2493, 1
        %v2495 = vadd.f32 %v2493, %v2494
        %v2496 = vsel %vm1298, %v445, 0.0
        %v2497 = vrot.slane %v2496, 4
        %v2498 = vadd.f32 %v2496, %v2497
        %v2499 = vrot.slane %v2498, 2
        %v2500 = vadd.f32 %v2498, %v2499
        %v2501 = vrot.slane %v2500, 1
        %v2502 = vadd.f32 %v2500, %v2501
        %v2503 = vsel %vm1298, %v446, 0.0
        %v2504 = vrot.slane %v2503, 4
        %v2505 = vadd.f32 %v2503, %v2504
        %v2506 = vrot.slane %v2505, 2
        %v2507 = vadd.f32 %v2505, %v2506
        %v2508 = vrot.slane %v2507, 1
        %v2509 = vadd.f32 %v2507, %v2508
        %v2510 = vsel %vm1298, %v447, 0.0
        %v2511 = vrot.slane %v2510, 4
        %v2512 = vadd.f32 %v2510, %v2511
        %v2513 = vrot.slane %v2512, 2
        %v2514 = vadd.f32 %v2512, %v2513
        %v2515 = vrot.slane %v2514, 1
        %v2516 = vadd.f32 %v2514, %v2515
        %v2517 = vsel %vm1298, %v448, 0.0
        %v2518 = vrot.slane %v2517, 4
        %v2519 = vadd.f32 %v2517, %v2518
        %v2520 = vrot.slane %v2519, 2
        %v2521 = vadd.f32 %v2519, %v2520
        %v2522 = vrot.slane %v2521, 1
        %v2523 = vadd.f32 %v2521, %v2522
        %v2524 = vsel %vm1298, %v449, 0.0
        %v2525 = vrot.slane %v2524, 4
        %v2526 = vadd.f32 %v2524, %v2525
        %v2527 = vrot.slane %v2526, 2
        %v2528 = vadd.f32 %v2526, %v2527
        %v2529 = vrot.slane %v2528, 1
        %v2530 = vadd.f32 %v2528, %v2529
        %v2531 = vsel %vm1298, %v450, 0.0
        %v2532 = vrot.slane %v2531, 4
        %v2533 = vadd.f32 %v2531, %v2532
        %v2534 = vrot.slane %v2533, 2
        %v2535 = vadd.f32 %v2533, %v2534
        %v2536 = vrot.slane %v2535, 1
        %v2537 = vadd.f32 %v2535, %v2536
        %v2538 = vsel %vm1298, %v451, 0.0
        %v2539 = vrot.slane %v2538, 4
        %v2540 = vadd.f32 %v2538, %v2539
        %v2541 = vrot.slane %v2540, 2
        %v2542 = vadd.f32 %v2540, %v2541
        %v2543 = vrot.slane %v2542, 1
        %v2544 = vadd.f32 %v2542, %v2543
        %v2545 = vsel %vm1298, %v452, 0.0
        %v2546 = vrot.slane %v2545, 4
        %v2547 = vadd.f32 %v2545, %v2546
        %v2548 = vrot.slane %v2547, 2
        %v2549 = vadd.f32 %v2547, %v2548
        %v2550 = vrot.slane %v2549, 1
        %v2551 = vadd.f32 %v2549, %v2550
        %v2552 = vsel %vm1298, %v453, 0.0
        %v2553 = vrot.slane %v2552, 4
        %v2554 = vadd.f32 %v2552, %v2553
        %v2555 = vrot.slane %v2554, 2
        %v2556 = vadd.f32 %v2554, %v2555
        %v2557 = vrot.slane %v2556, 1
        %v2558 = vadd.f32 %v2556, %v2557
        %v2559 = vsel %vm1298, %v454, 0.0
        %v2560 = vrot.slane %v2559, 4
        %v2561 = vadd.f32 %v2559, %v2560
        %v2562 = vrot.slane %v2561, 2
        %v2563 = vadd.f32 %v2561, %v2562
        %v2564 = vrot.slane %v2563, 1
        %v2565 = vadd.f32 %v2563, %v2564
        %v2566 = vsel %vm1298, %v455, 0.0
        %v2567 = vrot.slane %v2566, 4
        %v2568 = vadd.f32 %v2566, %v2567
        %v2569 = vrot.slane %v2568, 2
        %v2570 = vadd.f32 %v2568, %v2569
        %v2571 = vrot.slane %v2570, 1
        %v2572 = vadd.f32 %v2570, %v2571
        %v2573 = vsel %vm1298, %v456, 0.0
        %v2574 = vrot.slane %v2573, 4
        %v2575 = vadd.f32 %v2573, %v2574
        %v2576 = vrot.slane %v2575, 2
        %v2577 = vadd.f32 %v2575, %v2576
        %v2578 = vrot.slane %v2577, 1
        %v2579 = vadd.f32 %v2577, %v2578
        %v2580 = vsel %vm1298, %v457, 0.0
        %v2581 = vrot.slane %v2580, 4
        %v2582 = vadd.f32 %v2580, %v2581
        %v2583 = vrot.slane %v2582, 2
        %v2584 = vadd.f32 %v2582, %v2583
        %v2585 = vrot.slane %v2584, 1
        %v2586 = vadd.f32 %v2584, %v2585
        %v2587 = vsel %vm1298, %v458, 0.0
        %v2588 = vrot.slane %v2587, 4
        %v2589 = vadd.f32 %v2587, %v2588
        %v2590 = vrot.slane %v2589, 2
        %v2591 = vadd.f32 %v2589, %v2590
        %v2592 = vrot.slane %v2591, 1
        %v2593 = vadd.f32 %v2591, %v2592
        %v2594 = vsel %vm1298, %v459, 0.0
        %v2595 = vrot.slane %v2594, 4
        %v2596 = vadd.f32 %v2594, %v2595
        %v2597 = vrot.slane %v2596, 2
        %v2598 = vadd.f32 %v2596, %v2597
        %v2599 = vrot.slane %v2598, 1
        %v2600 = vadd.f32 %v2598, %v2599
        %v2601 = vsel %vm1298, %v460, 0.0
        %v2602 = vrot.slane %v2601, 4
        %v2603 = vadd.f32 %v2601, %v2602
        %v2604 = vrot.slane %v2603, 2
        %v2605 = vadd.f32 %v2603, %v2604
        %v2606 = vrot.slane %v2605, 1
        %v2607 = vadd.f32 %v2605, %v2606
        %v2608 = vsel %vm1298, %v461, 0.0
        %v2609 = vrot.slane %v2608, 4
        %v2610 = vadd.f32 %v2608, %v2609
        %v2611 = vrot.slane %v2610, 2
        %v2612 = vadd.f32 %v2610, %v2611
        %v2613 = vrot.slane %v2612, 1
        %v2614 = vadd.f32 %v2612, %v2613
        %v2615 = vsel %vm1298, %v462, 0.0
        %v2616 = vrot.slane %v2615, 4
        %v2617 = vadd.f32 %v2615, %v2616
        %v2618 = vrot.slane %v2617, 2
        %v2619 = vadd.f32 %v2617, %v2618
        %v2620 = vrot.slane %v2619, 1
        %v2621 = vadd.f32 %v2619, %v2620
        %v2622 = vsel %vm1298, %v463, 0.0
        %v2623 = vrot.slane %v2622, 4
        %v2624 = vadd.f32 %v2622, %v2623
        %v2625 = vrot.slane %v2624, 2
        %v2626 = vadd.f32 %v2624, %v2625
        %v2627 = vrot.slane %v2626, 1
        %v2628 = vadd.f32 %v2626, %v2627
        %v2629 = vsel %vm1298, %v464, 0.0
        %v2630 = vrot.slane %v2629, 4
        %v2631 = vadd.f32 %v2629, %v2630
        %v2632 = vrot.slane %v2631, 2
        %v2633 = vadd.f32 %v2631, %v2632
        %v2634 = vrot.slane %v2633, 1
        %v2635 = vadd.f32 %v2633, %v2634
        %v2636 = vsel %vm1298, %v465, 0.0
        %v2637 = vrot.slane %v2636, 4
        %v2638 = vadd.f32 %v2636, %v2637
        %v2639 = vrot.slane %v2638, 2
        %v2640 = vadd.f32 %v2638, %v2639
        %v2641 = vrot.slane %v2640, 1
        %v2642 = vadd.f32 %v2640, %v2641
        %v2643 = vsel %vm1298, %v466, 0.0
        %v2644 = vrot.slane %v2643, 4
        %v2645 = vadd.f32 %v2643, %v2644
        %v2646 = vrot.slane %v2645, 2
        %v2647 = vadd.f32 %v2645, %v2646
        %v2648 = vrot.slane %v2647, 1
        %v2649 = vadd.f32 %v2647, %v2648
        %v2650 = vsel %vm1298, %v467, 0.0
        %v2651 = vrot.slane %v2650, 4
        %v2652 = vadd.f32 %v2650, %v2651
        %v2653 = vrot.slane %v2652, 2
        %v2654 = vadd.f32 %v2652, %v2653
        %v2655 = vrot.slane %v2654, 1
        %v2656 = vadd.f32 %v2654, %v2655
        %v2657 = vsel %vm1298, %v468, 0.0
        %v2658 = vrot.slane %v2657, 4
        %v2659 = vadd.f32 %v2657, %v2658
        %v2660 = vrot.slane %v2659, 2
        %v2661 = vadd.f32 %v2659, %v2660
        %v2662 = vrot.slane %v2661, 1
        %v2663 = vadd.f32 %v2661, %v2662
        %v2664 = vsel %vm1298, %v469, 0.0
        %v2665 = vrot.slane %v2664, 4
        %v2666 = vadd.f32 %v2664, %v2665
        %v2667 = vrot.slane %v2666, 2
        %v2668 = vadd.f32 %v2666, %v2667
        %v2669 = vrot.slane %v2668, 1
        %v2670 = vadd.f32 %v2668, %v2669
        %v2671 = vsel %vm1298, %v470, 0.0
        %v2672 = vrot.slane %v2671, 4
        %v2673 = vadd.f32 %v2671, %v2672
        %v2674 = vrot.slane %v2673, 2
        %v2675 = vadd.f32 %v2673, %v2674
        %v2676 = vrot.slane %v2675, 1
        %v2677 = vadd.f32 %v2675, %v2676
        %v2678 = vsel %vm1298, %v471, 0.0
        %v2679 = vrot.slane %v2678, 4
        %v2680 = vadd.f32 %v2678, %v2679
        %v2681 = vrot.slane %v2680, 2
        %v2682 = vadd.f32 %v2680, %v2681
        %v2683 = vrot.slane %v2682, 1
        %v2684 = vadd.f32 %v2682, %v2683
        %v2685 = vsel %vm1298, %v472, 0.0
        %v2686 = vrot.slane %v2685, 4
        %v2687 = vadd.f32 %v2685, %v2686
        %v2688 = vrot.slane %v2687, 2
        %v2689 = vadd.f32 %v2687, %v2688
        %v2690 = vrot.slane %v2689, 1
        %v2691 = vadd.f32 %v2689, %v2690
        %v2692 = vsel %vm1298, %v473, 0.0
        %v2693 = vrot.slane %v2692, 4
        %v2694 = vadd.f32 %v2692, %v2693
        %v2695 = vrot.slane %v2694, 2
        %v2696 = vadd.f32 %v2694, %v2695
        %v2697 = vrot.slane %v2696, 1
        %v2698 = vadd.f32 %v2696, %v2697
        %v2699 = vsel %vm1298, %v474, 0.0
        %v2700 = vrot.slane %v2699, 4
        %v2701 = vadd.f32 %v2699, %v2700
        %v2702 = vrot.slane %v2701, 2
        %v2703 = vadd.f32 %v2701, %v2702
        %v2704 = vrot.slane %v2703, 1
        %v2705 = vadd.f32 %v2703, %v2704
        %v2706 = vsel %vm1298, %v475, 0.0
        %v2707 = vrot.slane %v2706, 4
        %v2708 = vadd.f32 %v2706, %v2707
        %v2709 = vrot.slane %v2708, 2
        %v2710 = vadd.f32 %v2708, %v2709
        %v2711 = vrot.slane %v2710, 1
        %v2712 = vadd.f32 %v2710, %v2711
        %v2713 = vsel %vm1298, %v476, 0.0
        %v2714 = vrot.slane %v2713, 4
        %v2715 = vadd.f32 %v2713, %v2714
        %v2716 = vrot.slane %v2715, 2
        %v2717 = vadd.f32 %v2715, %v2716
        %v2718 = vrot.slane %v2717, 1
        %v2719 = vadd.f32 %v2717, %v2718
        %v2720 = vsel %vm1298, %v477, 0.0
        %v2721 = vrot.slane %v2720, 4
        %v2722 = vadd.f32 %v2720, %v2721
        %v2723 = vrot.slane %v2722, 2
        %v2724 = vadd.f32 %v2722, %v2723
        %v2725 = vrot.slane %v2724, 1
        %v2726 = vadd.f32 %v2724, %v2725
        %v2727 = vsel %vm1298, %v478, 0.0
        %v2728 = vrot.slane %v2727, 4
        %v2729 = vadd.f32 %v2727, %v2728
        %v2730 = vrot.slane %v2729, 2
        %v2731 = vadd.f32 %v2729, %v2730
        %v2732 = vrot.slane %v2731, 1
        %v2733 = vadd.f32 %v2731, %v2732
        %v2734 = vsel %vm1298, %v479, 0.0
        %v2735 = vrot.slane %v2734, 4
        %v2736 = vadd.f32 %v2734, %v2735
        %v2737 = vrot.slane %v2736, 2
        %v2738 = vadd.f32 %v2736, %v2737
        %v2739 = vrot.slane %v2738, 1
        %v2740 = vadd.f32 %v2738, %v2739
        %v2741 = vsel %vm1298, %v480, 0.0
        %v2742 = vrot.slane %v2741, 4
        %v2743 = vadd.f32 %v2741, %v2742
        %v2744 = vrot.slane %v2743, 2
        %v2745 = vadd.f32 %v2743, %v2744
        %v2746 = vrot.slane %v2745, 1
        %v2747 = vadd.f32 %v2745, %v2746
        %v2748 = vsel %vm1298, %v481, 0.0
        %v2749 = vrot.slane %v2748, 4
        %v2750 = vadd.f32 %v2748, %v2749
        %v2751 = vrot.slane %v2750, 2
        %v2752 = vadd.f32 %v2750, %v2751
        %v2753 = vrot.slane %v2752, 1
        %v2754 = vadd.f32 %v2752, %v2753
        %v2755 = vsel %vm1298, %v482, 0.0
        %v2756 = vrot.slane %v2755, 4
        %v2757 = vadd.f32 %v2755, %v2756
        %v2758 = vrot.slane %v2757, 2
        %v2759 = vadd.f32 %v2757, %v2758
        %v2760 = vrot.slane %v2759, 1
        %v2761 = vadd.f32 %v2759, %v2760
        %v2762 = vsel %vm1298, %v483, 0.0
        %v2763 = vrot.slane %v2762, 4
        %v2764 = vadd.f32 %v2762, %v2763
        %v2765 = vrot.slane %v2764, 2
        %v2766 = vadd.f32 %v2764, %v2765
        %v2767 = vrot.slane %v2766, 1
        %v2768 = vadd.f32 %v2766, %v2767
        %v2769 = vsel %vm1298, %v484, 0.0
        %v2770 = vrot.slane %v2769, 4
        %v2771 = vadd.f32 %v2769, %v2770
        %v2772 = vrot.slane %v2771, 2
        %v2773 = vadd.f32 %v2771, %v2772
        %v2774 = vrot.slane %v2773, 1
        %v2775 = vadd.f32 %v2773, %v2774
        %v2776 = vsel %vm1298, %v485, 0.0
        %v2777 = vrot.slane %v2776, 4
        %v2778 = vadd.f32 %v2776, %v2777
        %v2779 = vrot.slane %v2778, 2
        %v2780 = vadd.f32 %v2778, %v2779
        %v2781 = vrot.slane %v2780, 1
        %v2782 = vadd.f32 %v2780, %v2781
        %v2783 = vsel %vm1298, %v486, 0.0
        %v2784 = vrot.slane %v2783, 4
        %v2785 = vadd.f32 %v2783, %v2784
        %v2786 = vrot.slane %v2785, 2
        %v2787 = vadd.f32 %v2785, %v2786
        %v2788 = vrot.slane %v2787, 1
        %v2789 = vadd.f32 %v2787, %v2788
        %v2790 = vsel %vm1298, %v487, 0.0
        %v2791 = vrot.slane %v2790, 4
        %v2792 = vadd.f32 %v2790, %v2791
        %v2793 = vrot.slane %v2792, 2
        %v2794 = vadd.f32 %v2792, %v2793
        %v2795 = vrot.slane %v2794, 1
        %v2796 = vadd.f32 %v2794, %v2795
        %v2797 = vsel %vm1298, %v488, 0.0
        %v2798 = vrot.slane %v2797, 4
        %v2799 = vadd.f32 %v2797, %v2798
        %v2800 = vrot.slane %v2799, 2
        %v2801 = vadd.f32 %v2799, %v2800
        %v2802 = vrot.slane %v2801, 1
        %v2803 = vadd.f32 %v2801, %v2802
        %v2804 = vsel %vm1298, %v489, 0.0
        %v2805 = vrot.slane %v2804, 4
        %v2806 = vadd.f32 %v2804, %v2805
        %v2807 = vrot.slane %v2806, 2
        %v2808 = vadd.f32 %v2806, %v2807
        %v2809 = vrot.slane %v2808, 1
        %v2810 = vadd.f32 %v2808, %v2809
        %v2811 = vsel %vm1298, %v490, 0.0
        %v2812 = vrot.slane %v2811, 4
        %v2813 = vadd.f32 %v2811, %v2812
        %v2814 = vrot.slane %v2813, 2
        %v2815 = vadd.f32 %v2813, %v2814
        %v2816 = vrot.slane %v2815, 1
        %v2817 = vadd.f32 %v2815, %v2816
        %v2818 = vsel %vm1298, %v491, 0.0
        %v2819 = vrot.slane %v2818, 4
        %v2820 = vadd.f32 %v2818, %v2819
        %v2821 = vrot.slane %v2820, 2
        %v2822 = vadd.f32 %v2820, %v2821
        %v2823 = vrot.slane %v2822, 1
        %v2824 = vadd.f32 %v2822, %v2823
        %v2825 = vsel %vm1298, %v492, 0.0
        %v2826 = vrot.slane %v2825, 4
        %v2827 = vadd.f32 %v2825, %v2826
        %v2828 = vrot.slane %v2827, 2
        %v2829 = vadd.f32 %v2827, %v2828
        %v2830 = vrot.slane %v2829, 1
        %v2831 = vadd.f32 %v2829, %v2830
        %v2832 = vsel %vm1298, %v493, 0.0
        %v2833 = vrot.slane %v2832, 4
        %v2834 = vadd.f32 %v2832, %v2833
        %v2835 = vrot.slane %v2834, 2
        %v2836 = vadd.f32 %v2834, %v2835
        %v2837 = vrot.slane %v2836, 1
        %v2838 = vadd.f32 %v2836, %v2837
        %v2839 = vsel %vm1298, %v494, 0.0
        %v2840 = vrot.slane %v2839, 4
        %v2841 = vadd.f32 %v2839, %v2840
        %v2842 = vrot.slane %v2841, 2
        %v2843 = vadd.f32 %v2841, %v2842
        %v2844 = vrot.slane %v2843, 1
        %v2845 = vadd.f32 %v2843, %v2844
        %v2846 = vsel %vm1298, %v495, 0.0
        %v2847 = vrot.slane %v2846, 4
        %v2848 = vadd.f32 %v2846, %v2847
        %v2849 = vrot.slane %v2848, 2
        %v2850 = vadd.f32 %v2848, %v2849
        %v2851 = vrot.slane %v2850, 1
        %v2852 = vadd.f32 %v2850, %v2851
        %v2853 = vsel %vm1298, %v496, 0.0
        %v2854 = vrot.slane %v2853, 4
        %v2855 = vadd.f32 %v2853, %v2854
        %v2856 = vrot.slane %v2855, 2
        %v2857 = vadd.f32 %v2855, %v2856
        %v2858 = vrot.slane %v2857, 1
        %v2859 = vadd.f32 %v2857, %v2858
        %v2860 = vsel %vm1298, %v497, 0.0
        %v2861 = vrot.slane %v2860, 4
        %v2862 = vadd.f32 %v2860, %v2861
        %v2863 = vrot.slane %v2862, 2
        %v2864 = vadd.f32 %v2862, %v2863
        %v2865 = vrot.slane %v2864, 1
        %v2866 = vadd.f32 %v2864, %v2865
        %v2867 = vsel %vm1298, %v498, 0.0
        %v2868 = vrot.slane %v2867, 4
        %v2869 = vadd.f32 %v2867, %v2868
        %v2870 = vrot.slane %v2869, 2
        %v2871 = vadd.f32 %v2869, %v2870
        %v2872 = vrot.slane %v2871, 1
        %v2873 = vadd.f32 %v2871, %v2872
        %v2874 = vsel %vm1298, %v499, 0.0
        %v2875 = vrot.slane %v2874, 4
        %v2876 = vadd.f32 %v2874, %v2875
        %v2877 = vrot.slane %v2876, 2
        %v2878 = vadd.f32 %v2876, %v2877
        %v2879 = vrot.slane %v2878, 1
        %v2880 = vadd.f32 %v2878, %v2879
        %v2881 = vsel %vm1298, %v500, 0.0
        %v2882 = vrot.slane %v2881, 4
        %v2883 = vadd.f32 %v2881, %v2882
        %v2884 = vrot.slane %v2883, 2
        %v2885 = vadd.f32 %v2883, %v2884
        %v2886 = vrot.slane %v2885, 1
        %v2887 = vadd.f32 %v2885, %v2886
        %v2888 = vsel %vm1298, %v501, 0.0
        %v2889 = vrot.slane %v2888, 4
        %v2890 = vadd.f32 %v2888, %v2889
        %v2891 = vrot.slane %v2890, 2
        %v2892 = vadd.f32 %v2890, %v2891
        %v2893 = vrot.slane %v2892, 1
        %v2894 = vadd.f32 %v2892, %v2893
        %v2895 = vsel %vm1298, %v502, 0.0
        %v2896 = vrot.slane %v2895, 4
        %v2897 = vadd.f32 %v2895, %v2896
        %v2898 = vrot.slane %v2897, 2
        %v2899 = vadd.f32 %v2897, %v2898
        %v2900 = vrot.slane %v2899, 1
        %v2901 = vadd.f32 %v2899, %v2900
        %v2902 = vsel %vm1298, %v503, 0.0
        %v2903 = vrot.slane %v2902, 4
        %v2904 = vadd.f32 %v2902, %v2903
        %v2905 = vrot.slane %v2904, 2
        %v2906 = vadd.f32 %v2904, %v2905
        %v2907 = vrot.slane %v2906, 1
        %v2908 = vadd.f32 %v2906, %v2907
        %v2909 = vsel %vm1298, %v504, 0.0
        %v2910 = vrot.slane %v2909, 4
        %v2911 = vadd.f32 %v2909, %v2910
        %v2912 = vrot.slane %v2911, 2
        %v2913 = vadd.f32 %v2911, %v2912
        %v2914 = vrot.slane %v2913, 1
        %v2915 = vadd.f32 %v2913, %v2914
        %v2916 = vsel %vm1298, %v505, 0.0
        %v2917 = vrot.slane %v2916, 4
        %v2918 = vadd.f32 %v2916, %v2917
        %v2919 = vrot.slane %v2918, 2
        %v2920 = vadd.f32 %v2918, %v2919
        %v2921 = vrot.slane %v2920, 1
        %v2922 = vadd.f32 %v2920, %v2921
        %v2923 = vsel %vm1298, %v506, 0.0
        %v2924 = vrot.slane %v2923, 4
        %v2925 = vadd.f32 %v2923, %v2924
        %v2926 = vrot.slane %v2925, 2
        %v2927 = vadd.f32 %v2925, %v2926
        %v2928 = vrot.slane %v2927, 1
        %v2929 = vadd.f32 %v2927, %v2928
        %v2930 = vsel %vm1298, %v507, 0.0
        %v2931 = vrot.slane %v2930, 4
        %v2932 = vadd.f32 %v2930, %v2931
        %v2933 = vrot.slane %v2932, 2
        %v2934 = vadd.f32 %v2932, %v2933
        %v2935 = vrot.slane %v2934, 1
        %v2936 = vadd.f32 %v2934, %v2935
        %v2937 = vsel %vm1298, %v508, 0.0
        %v2938 = vrot.slane %v2937, 4
        %v2939 = vadd.f32 %v2937, %v2938
        %v2940 = vrot.slane %v2939, 2
        %v2941 = vadd.f32 %v2939, %v2940
        %v2942 = vrot.slane %v2941, 1
        %v2943 = vadd.f32 %v2941, %v2942
        %v2944 = vsel %vm1298, %v509, 0.0
        %v2945 = vrot.slane %v2944, 4
        %v2946 = vadd.f32 %v2944, %v2945
        %v2947 = vrot.slane %v2946, 2
        %v2948 = vadd.f32 %v2946, %v2947
        %v2949 = vrot.slane %v2948, 1
        %v2950 = vadd.f32 %v2948, %v2949
        %v2951 = vsel %vm1298, %v510, 0.0
        %v2952 = vrot.slane %v2951, 4
        %v2953 = vadd.f32 %v2951, %v2952
        %v2954 = vrot.slane %v2953, 2
        %v2955 = vadd.f32 %v2953, %v2954
        %v2956 = vrot.slane %v2955, 1
        %v2957 = vadd.f32 %v2955, %v2956
        %v2958 = vsel %vm1298, %v511, 0.0
        %v2959 = vrot.slane %v2958, 4
        %v2960 = vadd.f32 %v2958, %v2959
        %v2961 = vrot.slane %v2960, 2
        %v2962 = vadd.f32 %v2960, %v2961
        %v2963 = vrot.slane %v2962, 1
        %v2964 = vadd.f32 %v2962, %v2963
        %v2965 = vsel %vm1298, %v512, 0.0
        %v2966 = vrot.slane %v2965, 4
        %v2967 = vadd.f32 %v2965, %v2966
        %v2968 = vrot.slane %v2967, 2
        %v2969 = vadd.f32 %v2967, %v2968
        %v2970 = vrot.slane %v2969, 1
        %v2971 = vadd.f32 %v2969, %v2970
        %v2972 = vsel %vm1298, %v513, 0.0
        %v2973 = vrot.slane %v2972, 4
        %v2974 = vadd.f32 %v2972, %v2973
        %v2975 = vrot.slane %v2974, 2
        %v2976 = vadd.f32 %v2974, %v2975
        %v2977 = vrot.slane %v2976, 1
        %v2978 = vadd.f32 %v2976, %v2977
        %v2979 = vsel %vm1298, %v514, 0.0
        %v2980 = vrot.slane %v2979, 4
        %v2981 = vadd.f32 %v2979, %v2980
        %v2982 = vrot.slane %v2981, 2
        %v2983 = vadd.f32 %v2981, %v2982
        %v2984 = vrot.slane %v2983, 1
        %v2985 = vadd.f32 %v2983, %v2984
        %v2986 = vsel %vm1298, %v515, 0.0
        %v2987 = vrot.slane %v2986, 4
        %v2988 = vadd.f32 %v2986, %v2987
        %v2989 = vrot.slane %v2988, 2
        %v2990 = vadd.f32 %v2988, %v2989
        %v2991 = vrot.slane %v2990, 1
        %v2992 = vadd.f32 %v2990, %v2991
        %v2993 = vsel %vm1298, %v516, 0.0
        %v2994 = vrot.slane %v2993, 4
        %v2995 = vadd.f32 %v2993, %v2994
        %v2996 = vrot.slane %v2995, 2
        %v2997 = vadd.f32 %v2995, %v2996
        %v2998 = vrot.slane %v2997, 1
        %v2999 = vadd.f32 %v2997, %v2998
        %v3000 = vsel %vm1298, %v517, 0.0
        %v3001 = vrot.slane %v3000, 4
        %v3002 = vadd.f32 %v3000, %v3001
        %v3003 = vrot.slane %v3002, 2
        %v3004 = vadd.f32 %v3002, %v3003
        %v3005 = vrot.slane %v3004, 1
        %v3006 = vadd.f32 %v3004, %v3005
        %v3007 = vsel %vm1298, %v518, 0.0
        %v3008 = vrot.slane %v3007, 4
        %v3009 = vadd.f32 %v3007, %v3008
        %v3010 = vrot.slane %v3009, 2
        %v3011 = vadd.f32 %v3009, %v3010
        %v3012 = vrot.slane %v3011, 1
        %v3013 = vadd.f32 %v3011, %v3012
        %v3014 = vsel %vm1298, %v519, 0.0
        %v3015 = vrot.slane %v3014, 4
        %v3016 = vadd.f32 %v3014, %v3015
        %v3017 = vrot.slane %v3016, 2
        %v3018 = vadd.f32 %v3016, %v3017
        %v3019 = vrot.slane %v3018, 1
        %v3020 = vadd.f32 %v3018, %v3019
        %v3021 = vsel %vm1298, %v520, 0.0
        %v3022 = vrot.slane %v3021, 4
        %v3023 = vadd.f32 %v3021, %v3022
        %v3024 = vrot.slane %v3023, 2
        %v3025 = vadd.f32 %v3023, %v3024
        %v3026 = vrot.slane %v3025, 1
        %v3027 = vadd.f32 %v3025, %v3026
        %v3028 = vsel %vm1298, %v521, 0.0
        %v3029 = vrot.slane %v3028, 4
        %v3030 = vadd.f32 %v3028, %v3029
        %v3031 = vrot.slane %v3030, 2
        %v3032 = vadd.f32 %v3030, %v3031
        %v3033 = vrot.slane %v3032, 1
        %v3034 = vadd.f32 %v3032, %v3033
        %v3035 = vsel %vm1298, %v522, 0.0
        %v3036 = vrot.slane %v3035, 4
        %v3037 = vadd.f32 %v3035, %v3036
        %v3038 = vrot.slane %v3037, 2
        %v3039 = vadd.f32 %v3037, %v3038
        %v3040 = vrot.slane %v3039, 1
        %v3041 = vadd.f32 %v3039, %v3040
        %v3042 = vsel %vm1298, %v523, 0.0
        %v3043 = vrot.slane %v3042, 4
        %v3044 = vadd.f32 %v3042, %v3043
        %v3045 = vrot.slane %v3044, 2
        %v3046 = vadd.f32 %v3044, %v3045
        %v3047 = vrot.slane %v3046, 1
        %v3048 = vadd.f32 %v3046, %v3047
        %v3049 = vsel %vm1298, %v524, 0.0
        %v3050 = vrot.slane %v3049, 4
        %v3051 = vadd.f32 %v3049, %v3050
        %v3052 = vrot.slane %v3051, 2
        %v3053 = vadd.f32 %v3051, %v3052
        %v3054 = vrot.slane %v3053, 1
        %v3055 = vadd.f32 %v3053, %v3054
        %v3056 = vsel %vm1298, %v525, 0.0
        %v3057 = vrot.slane %v3056, 4
        %v3058 = vadd.f32 %v3056, %v3057
        %v3059 = vrot.slane %v3058, 2
        %v3060 = vadd.f32 %v3058, %v3059
        %v3061 = vrot.slane %v3060, 1
        %v3062 = vadd.f32 %v3060, %v3061
        %v3063 = vsel %vm1298, %v526, 0.0
        %v3064 = vrot.slane %v3063, 4
        %v3065 = vadd.f32 %v3063, %v3064
        %v3066 = vrot.slane %v3065, 2
        %v3067 = vadd.f32 %v3065, %v3066
        %v3068 = vrot.slane %v3067, 1
        %v3069 = vadd.f32 %v3067, %v3068
        %v3070 = vsel %vm1298, %v527, 0.0
        %v3071 = vrot.slane %v3070, 4
        %v3072 = vadd.f32 %v3070, %v3071
        %v3073 = vrot.slane %v3072, 2
        %v3074 = vadd.f32 %v3072, %v3073
        %v3075 = vrot.slane %v3074, 1
        %v3076 = vadd.f32 %v3074, %v3075
        %v3077 = vsel %vm1298, %v528, 0.0
        %v3078 = vrot.slane %v3077, 4
        %v3079 = vadd.f32 %v3077, %v3078
        %v3080 = vrot.slane %v3079, 2
        %v3081 = vadd.f32 %v3079, %v3080
        %v3082 = vrot.slane %v3081, 1
        %v3083 = vadd.f32 %v3081, %v3082
        %v3084 = vsel %vm1298, %v529, 0.0
        %v3085 = vrot.slane %v3084, 4
        %v3086 = vadd.f32 %v3084, %v3085
        %v3087 = vrot.slane %v3086, 2
        %v3088 = vadd.f32 %v3086, %v3087
        %v3089 = vrot.slane %v3088, 1
        %v3090 = vadd.f32 %v3088, %v3089
        %v3091 = vsel %vm1298, %v530, 0.0
        %v3092 = vrot.slane %v3091, 4
        %v3093 = vadd.f32 %v3091, %v3092
        %v3094 = vrot.slane %v3093, 2
        %v3095 = vadd.f32 %v3093, %v3094
        %v3096 = vrot.slane %v3095, 1
        %v3097 = vadd.f32 %v3095, %v3096
        %v3098 = vsel %vm1298, %v531, 0.0
        %v3099 = vrot.slane %v3098, 4
        %v3100 = vadd.f32 %v3098, %v3099
        %v3101 = vrot.slane %v3100, 2
        %v3102 = vadd.f32 %v3100, %v3101
        %v3103 = vrot.slane %v3102, 1
        %v3104 = vadd.f32 %v3102, %v3103
        %v3105 = vsel %vm1298, %v532, 0.0
        %v3106 = vrot.slane %v3105, 4
        %v3107 = vadd.f32 %v3105, %v3106
        %v3108 = vrot.slane %v3107, 2
        %v3109 = vadd.f32 %v3107, %v3108
        %v3110 = vrot.slane %v3109, 1
        %v3111 = vadd.f32 %v3109, %v3110
        %v3112 = vsel %vm1298, %v533, 0.0
        %v3113 = vrot.slane %v3112, 4
        %v3114 = vadd.f32 %v3112, %v3113
        %v3115 = vrot.slane %v3114, 2
        %v3116 = vadd.f32 %v3114, %v3115
        %v3117 = vrot.slane %v3116, 1
        %v3118 = vadd.f32 %v3116, %v3117
        %v3119 = vsel %vm1298, %v534, 0.0
        %v3120 = vrot.slane %v3119, 4
        %v3121 = vadd.f32 %v3119, %v3120
        %v3122 = vrot.slane %v3121, 2
        %v3123 = vadd.f32 %v3121, %v3122
        %v3124 = vrot.slane %v3123, 1
        %v3125 = vadd.f32 %v3123, %v3124
        %v3126 = vsel %vm1298, %v535, 0.0
        %v3127 = vrot.slane %v3126, 4
        %v3128 = vadd.f32 %v3126, %v3127
        %v3129 = vrot.slane %v3128, 2
        %v3130 = vadd.f32 %v3128, %v3129
        %v3131 = vrot.slane %v3130, 1
        %v3132 = vadd.f32 %v3130, %v3131
        %v3133 = vsel %vm1298, %v536, 0.0
        %v3134 = vrot.slane %v3133, 4
        %v3135 = vadd.f32 %v3133, %v3134
        %v3136 = vrot.slane %v3135, 2
        %v3137 = vadd.f32 %v3135, %v3136
        %v3138 = vrot.slane %v3137, 1
        %v3139 = vadd.f32 %v3137, %v3138
        %v3140 = vsel %vm1298, %v537, 0.0
        %v3141 = vrot.slane %v3140, 4
        %v3142 = vadd.f32 %v3140, %v3141
        %v3143 = vrot.slane %v3142, 2
        %v3144 = vadd.f32 %v3142, %v3143
        %v3145 = vrot.slane %v3144, 1
        %v3146 = vadd.f32 %v3144, %v3145
        %v3147 = vsel %vm1298, %v538, 0.0
        %v3148 = vrot.slane %v3147, 4
        %v3149 = vadd.f32 %v3147, %v3148
        %v3150 = vrot.slane %v3149, 2
        %v3151 = vadd.f32 %v3149, %v3150
        %v3152 = vrot.slane %v3151, 1
        %v3153 = vadd.f32 %v3151, %v3152
        %v3154 = vsel %vm1298, %v539, 0.0
        %v3155 = vrot.slane %v3154, 4
        %v3156 = vadd.f32 %v3154, %v3155
        %v3157 = vrot.slane %v3156, 2
        %v3158 = vadd.f32 %v3156, %v3157
        %v3159 = vrot.slane %v3158, 1
        %v3160 = vadd.f32 %v3158, %v3159
        %v3161 = vsel %vm1298, %v540, 0.0
        %v3162 = vrot.slane %v3161, 4
        %v3163 = vadd.f32 %v3161, %v3162
        %v3164 = vrot.slane %v3163, 2
        %v3165 = vadd.f32 %v3163, %v3164
        %v3166 = vrot.slane %v3165, 1
        %v3167 = vadd.f32 %v3165, %v3166
        %v3168 = vsel %vm1298, %v541, 0.0
        %v3169 = vrot.slane %v3168, 4
        %v3170 = vadd.f32 %v3168, %v3169
        %v3171 = vrot.slane %v3170, 2
        %v3172 = vadd.f32 %v3170, %v3171
        %v3173 = vrot.slane %v3172, 1
        %v3174 = vadd.f32 %v3172, %v3173
        %v3175 = vsel %vm1298, %v542, 0.0
        %v3176 = vrot.slane %v3175, 4
        %v3177 = vadd.f32 %v3175, %v3176
        %v3178 = vrot.slane %v3177, 2
        %v3179 = vadd.f32 %v3177, %v3178
        %v3180 = vrot.slane %v3179, 1
        %v3181 = vadd.f32 %v3179, %v3180
        %v3182 = vsel %vm1298, %v543, 0.0
        %v3183 = vrot.slane %v3182, 4
        %v3184 = vadd.f32 %v3182, %v3183
        %v3185 = vrot.slane %v3184, 2
        %v3186 = vadd.f32 %v3184, %v3185
        %v3187 = vrot.slane %v3186, 1
        %v3188 = vadd.f32 %v3186, %v3187
        %v3189 = vsel %vm1298, %v544, 0.0
        %v3190 = vrot.slane %v3189, 4
        %v3191 = vadd.f32 %v3189, %v3190
        %v3192 = vrot.slane %v3191, 2
        %v3193 = vadd.f32 %v3191, %v3192
        %v3194 = vrot.slane %v3193, 1
        %v3195 = vadd.f32 %v3193, %v3194
        %v3196 = vsel %vm1298, %v545, 0.0
        %v3197 = vrot.slane %v3196, 4
        %v3198 = vadd.f32 %v3196, %v3197
        %v3199 = vrot.slane %v3198, 2
        %v3200 = vadd.f32 %v3198, %v3199
        %v3201 = vrot.slane %v3200, 1
        %v3202 = vadd.f32 %v3200, %v3201
        %v3203 = vsel %vm1298, %v546, 0.0
        %v3204 = vrot.slane %v3203, 4
        %v3205 = vadd.f32 %v3203, %v3204
        %v3206 = vrot.slane %v3205, 2
        %v3207 = vadd.f32 %v3205, %v3206
        %v3208 = vrot.slane %v3207, 1
        %v3209 = vadd.f32 %v3207, %v3208
        %v3210 = vsel %vm1298, %v547, 0.0
        %v3211 = vrot.slane %v3210, 4
        %v3212 = vadd.f32 %v3210, %v3211
        %v3213 = vrot.slane %v3212, 2
        %v3214 = vadd.f32 %v3212, %v3213
        %v3215 = vrot.slane %v3214, 1
        %v3216 = vadd.f32 %v3214, %v3215
        %v3217 = vsel %vm1298, %v548, 0.0
        %v3218 = vrot.slane %v3217, 4
        %v3219 = vadd.f32 %v3217, %v3218
        %v3220 = vrot.slane %v3219, 2
        %v3221 = vadd.f32 %v3219, %v3220
        %v3222 = vrot.slane %v3221, 1
        %v3223 = vadd.f32 %v3221, %v3222
        %v3224 = vsel %vm1298, %v549, 0.0
        %v3225 = vrot.slane %v3224, 4
        %v3226 = vadd.f32 %v3224, %v3225
        %v3227 = vrot.slane %v3226, 2
        %v3228 = vadd.f32 %v3226, %v3227
        %v3229 = vrot.slane %v3228, 1
        %v3230 = vadd.f32 %v3228, %v3229
        %v3231 = vsel %vm1298, %v550, 0.0
        %v3232 = vrot.slane %v3231, 4
        %v3233 = vadd.f32 %v3231, %v3232
        %v3234 = vrot.slane %v3233, 2
        %v3235 = vadd.f32 %v3233, %v3234
        %v3236 = vrot.slane %v3235, 1
        %v3237 = vadd.f32 %v3235, %v3236
        %v3238 = vsel %vm1298, %v551, 0.0
        %v3239 = vrot.slane %v3238, 4
        %v3240 = vadd.f32 %v3238, %v3239
        %v3241 = vrot.slane %v3240, 2
        %v3242 = vadd.f32 %v3240, %v3241
        %v3243 = vrot.slane %v3242, 1
        %v3244 = vadd.f32 %v3242, %v3243
        %v3245 = vsel %vm1298, %v552, 0.0
        %v3246 = vrot.slane %v3245, 4
        %v3247 = vadd.f32 %v3245, %v3246
        %v3248 = vrot.slane %v3247, 2
        %v3249 = vadd.f32 %v3247, %v3248
        %v3250 = vrot.slane %v3249, 1
        %v3251 = vadd.f32 %v3249, %v3250
        %v3252 = vsel %vm1298, %v553, 0.0
        %v3253 = vrot.slane %v3252, 4
        %v3254 = vadd.f32 %v3252, %v3253
        %v3255 = vrot.slane %v3254, 2
        %v3256 = vadd.f32 %v3254, %v3255
        %v3257 = vrot.slane %v3256, 1
        %v3258 = vadd.f32 %v3256, %v3257
        %v3259 = vsel %vm1298, %v554, 0.0
        %v3260 = vrot.slane %v3259, 4
        %v3261 = vadd.f32 %v3259, %v3260
        %v3262 = vrot.slane %v3261, 2
        %v3263 = vadd.f32 %v3261, %v3262
        %v3264 = vrot.slane %v3263, 1
        %v3265 = vadd.f32 %v3263, %v3264
        %v3266 = vsel %vm1298, %v555, 0.0
        %v3267 = vrot.slane %v3266, 4
        %v3268 = vadd.f32 %v3266, %v3267
        %v3269 = vrot.slane %v3268, 2
        %v3270 = vadd.f32 %v3268, %v3269
        %v3271 = vrot.slane %v3270, 1
        %v3272 = vadd.f32 %v3270, %v3271
        %v3273 = vsel %vm1298, %v556, 0.0
        %v3274 = vrot.slane %v3273, 4
        %v3275 = vadd.f32 %v3273, %v3274
        %v3276 = vrot.slane %v3275, 2
        %v3277 = vadd.f32 %v3275, %v3276
        %v3278 = vrot.slane %v3277, 1
        %v3279 = vadd.f32 %v3277, %v3278
        %v3280 = vsel %vm1298, %v557, 0.0
        %v3281 = vrot.slane %v3280, 4
        %v3282 = vadd.f32 %v3280, %v3281
        %v3283 = vrot.slane %v3282, 2
        %v3284 = vadd.f32 %v3282, %v3283
        %v3285 = vrot.slane %v3284, 1
        %v3286 = vadd.f32 %v3284, %v3285
        %v3287 = vsel %vm1298, %v558, 0.0
        %v3288 = vrot.slane %v3287, 4
        %v3289 = vadd.f32 %v3287, %v3288
        %v3290 = vrot.slane %v3289, 2
        %v3291 = vadd.f32 %v3289, %v3290
        %v3292 = vrot.slane %v3291, 1
        %v3293 = vadd.f32 %v3291, %v3292
        %v3294 = vsel %vm1298, %v559, 0.0
        %v3295 = vrot.slane %v3294, 4
        %v3296 = vadd.f32 %v3294, %v3295
        %v3297 = vrot.slane %v3296, 2
        %v3298 = vadd.f32 %v3296, %v3297
        %v3299 = vrot.slane %v3298, 1
        %v3300 = vadd.f32 %v3298, %v3299
        %v3301 = vsel %vm1298, %v560, 0.0
        %v3302 = vrot.slane %v3301, 4
        %v3303 = vadd.f32 %v3301, %v3302
        %v3304 = vrot.slane %v3303, 2
        %v3305 = vadd.f32 %v3303, %v3304
        %v3306 = vrot.slane %v3305, 1
        %v3307 = vadd.f32 %v3305, %v3306
        %v3308 = vsel %vm1298, %v561, 0.0
        %v3309 = vrot.slane %v3308, 4
        %v3310 = vadd.f32 %v3308, %v3309
        %v3311 = vrot.slane %v3310, 2
        %v3312 = vadd.f32 %v3310, %v3311
        %v3313 = vrot.slane %v3312, 1
        %v3314 = vadd.f32 %v3312, %v3313
        %v3315 = vsel %vm1298, %v562, 0.0
        %v3316 = vrot.slane %v3315, 4
        %v3317 = vadd.f32 %v3315, %v3316
        %v3318 = vrot.slane %v3317, 2
        %v3319 = vadd.f32 %v3317, %v3318
        %v3320 = vrot.slane %v3319, 1
        %v3321 = vadd.f32 %v3319, %v3320
        %v3322 = vsel %vm1298, %v563, 0.0
        %v3323 = vrot.slane %v3322, 4
        %v3324 = vadd.f32 %v3322, %v3323
        %v3325 = vrot.slane %v3324, 2
        %v3326 = vadd.f32 %v3324, %v3325
        %v3327 = vrot.slane %v3326, 1
        %v3328 = vadd.f32 %v3326, %v3327
        %v3329 = vsel %vm1298, %v564, 0.0
        %v3330 = vrot.slane %v3329, 4
        %v3331 = vadd.f32 %v3329, %v3330
        %v3332 = vrot.slane %v3331, 2
        %v3333 = vadd.f32 %v3331, %v3332
        %v3334 = vrot.slane %v3333, 1
        %v3335 = vadd.f32 %v3333, %v3334
        %v3336 = vsel %vm1298, %v565, 0.0
        %v3337 = vrot.slane %v3336, 4
        %v3338 = vadd.f32 %v3336, %v3337
        %v3339 = vrot.slane %v3338, 2
        %v3340 = vadd.f32 %v3338, %v3339
        %v3341 = vrot.slane %v3340, 1
        %v3342 = vadd.f32 %v3340, %v3341
        %v3343 = vsel %vm1298, %v566, 0.0
        %v3344 = vrot.slane %v3343, 4
        %v3345 = vadd.f32 %v3343, %v3344
        %v3346 = vrot.slane %v3345, 2
        %v3347 = vadd.f32 %v3345, %v3346
        %v3348 = vrot.slane %v3347, 1
        %v3349 = vadd.f32 %v3347, %v3348
        %v3350 = vsel %vm1298, %v567, 0.0
        %v3351 = vrot.slane %v3350, 4
        %v3352 = vadd.f32 %v3350, %v3351
        %v3353 = vrot.slane %v3352, 2
        %v3354 = vadd.f32 %v3352, %v3353
        %v3355 = vrot.slane %v3354, 1
        %v3356 = vadd.f32 %v3354, %v3355
        %v3357 = vsel %vm1298, %v568, 0.0
        %v3358 = vrot.slane %v3357, 4
        %v3359 = vadd.f32 %v3357, %v3358
        %v3360 = vrot.slane %v3359, 2
        %v3361 = vadd.f32 %v3359, %v3360
        %v3362 = vrot.slane %v3361, 1
        %v3363 = vadd.f32 %v3361, %v3362
        %v3364 = vsel %vm1298, %v569, 0.0
        %v3365 = vrot.slane %v3364, 4
        %v3366 = vadd.f32 %v3364, %v3365
        %v3367 = vrot.slane %v3366, 2
        %v3368 = vadd.f32 %v3366, %v3367
        %v3369 = vrot.slane %v3368, 1
        %v3370 = vadd.f32 %v3368, %v3369
        %v3371 = vsel %vm1298, %v570, 0.0
        %v3372 = vrot.slane %v3371, 4
        %v3373 = vadd.f32 %v3371, %v3372
        %v3374 = vrot.slane %v3373, 2
        %v3375 = vadd.f32 %v3373, %v3374
        %v3376 = vrot.slane %v3375, 1
        %v3377 = vadd.f32 %v3375, %v3376
        %v3378 = vsel %vm1298, %v571, 0.0
        %v3379 = vrot.slane %v3378, 4
        %v3380 = vadd.f32 %v3378, %v3379
        %v3381 = vrot.slane %v3380, 2
        %v3382 = vadd.f32 %v3380, %v3381
        %v3383 = vrot.slane %v3382, 1
        %v3384 = vadd.f32 %v3382, %v3383
        %v3385 = vsel %vm1298, %v572, 0.0
        %v3386 = vrot.slane %v3385, 4
        %v3387 = vadd.f32 %v3385, %v3386
        %v3388 = vrot.slane %v3387, 2
        %v3389 = vadd.f32 %v3387, %v3388
        %v3390 = vrot.slane %v3389, 1
        %v3391 = vadd.f32 %v3389, %v3390
        %v3392 = vsel %vm1298, %v573, 0.0
        %v3393 = vrot.slane %v3392, 4
        %v3394 = vadd.f32 %v3392, %v3393
        %v3395 = vrot.slane %v3394, 2
        %v3396 = vadd.f32 %v3394, %v3395
        %v3397 = vrot.slane %v3396, 1
        %v3398 = vadd.f32 %v3396, %v3397
        %v3399 = vsel %vm1298, %v574, 0.0
        %v3400 = vrot.slane %v3399, 4
        %v3401 = vadd.f32 %v3399, %v3400
        %v3402 = vrot.slane %v3401, 2
        %v3403 = vadd.f32 %v3401, %v3402
        %v3404 = vrot.slane %v3403, 1
        %v3405 = vadd.f32 %v3403, %v3404
        %v3406 = vsel %vm1298, %v575, 0.0
        %v3407 = vrot.slane %v3406, 4
        %v3408 = vadd.f32 %v3406, %v3407
        %v3409 = vrot.slane %v3408, 2
        %v3410 = vadd.f32 %v3408, %v3409
        %v3411 = vrot.slane %v3410, 1
        %v3412 = vadd.f32 %v3410, %v3411
        %v3413 = vsel %vm1298, %v576, 0.0
        %v3414 = vrot.slane %v3413, 4
        %v3415 = vadd.f32 %v3413, %v3414
        %v3416 = vrot.slane %v3415, 2
        %v3417 = vadd.f32 %v3415, %v3416
        %v3418 = vrot.slane %v3417, 1
        %v3419 = vadd.f32 %v3417, %v3418
        %v3420 = vsel %vm1298, %v577, 0.0
        %v3421 = vrot.slane %v3420, 4
        %v3422 = vadd.f32 %v3420, %v3421
        %v3423 = vrot.slane %v3422, 2
        %v3424 = vadd.f32 %v3422, %v3423
        %v3425 = vrot.slane %v3424, 1
        %v3426 = vadd.f32 %v3424, %v3425
        %v3427 = vsel %vm1298, %v578, 0.0
        %v3428 = vrot.slane %v3427, 4
        %v3429 = vadd.f32 %v3427, %v3428
        %v3430 = vrot.slane %v3429, 2
        %v3431 = vadd.f32 %v3429, %v3430
        %v3432 = vrot.slane %v3431, 1
        %v3433 = vadd.f32 %v3431, %v3432
        %v3434 = vsel %vm1298, %v579, 0.0
        %v3435 = vrot.slane %v3434, 4
        %v3436 = vadd.f32 %v3434, %v3435
        %v3437 = vrot.slane %v3436, 2
        %v3438 = vadd.f32 %v3436, %v3437
        %v3439 = vrot.slane %v3438, 1
        %v3440 = vadd.f32 %v3438, %v3439
        %v3441 = vsel %vm1298, %v580, 0.0
        %v3442 = vrot.slane %v3441, 4
        %v3443 = vadd.f32 %v3441, %v3442
        %v3444 = vrot.slane %v3443, 2
        %v3445 = vadd.f32 %v3443, %v3444
        %v3446 = vrot.slane %v3445, 1
        %v3447 = vadd.f32 %v3445, %v3446
        %v3448 = vsel %vm1298, %v581, 0.0
        %v3449 = vrot.slane %v3448, 4
        %v3450 = vadd.f32 %v3448, %v3449
        %v3451 = vrot.slane %v3450, 2
        %v3452 = vadd.f32 %v3450, %v3451
        %v3453 = vrot.slane %v3452, 1
        %v3454 = vadd.f32 %v3452, %v3453
        %v3455 = vsel %vm1298, %v582, 0.0
        %v3456 = vrot.slane %v3455, 4
        %v3457 = vadd.f32 %v3455, %v3456
        %v3458 = vrot.slane %v3457, 2
        %v3459 = vadd.f32 %v3457, %v3458
        %v3460 = vrot.slane %v3459, 1
        %v3461 = vadd.f32 %v3459, %v3460
        %v3462 = vsel %vm1298, %v583, 0.0
        %v3463 = vrot.slane %v3462, 4
        %v3464 = vadd.f32 %v3462, %v3463
        %v3465 = vrot.slane %v3464, 2
        %v3466 = vadd.f32 %v3464, %v3465
        %v3467 = vrot.slane %v3466, 1
        %v3468 = vadd.f32 %v3466, %v3467
        %v3469 = vsel %vm1298, %v584, 0.0
        %v3470 = vrot.slane %v3469, 4
        %v3471 = vadd.f32 %v3469, %v3470
        %v3472 = vrot.slane %v3471, 2
        %v3473 = vadd.f32 %v3471, %v3472
        %v3474 = vrot.slane %v3473, 1
        %v3475 = vadd.f32 %v3473, %v3474
        %v3476 = vsel %vm1298, %v585, 0.0
        %v3477 = vrot.slane %v3476, 4
        %v3478 = vadd.f32 %v3476, %v3477
        %v3479 = vrot.slane %v3478, 2
        %v3480 = vadd.f32 %v3478, %v3479
        %v3481 = vrot.slane %v3480, 1
        %v3482 = vadd.f32 %v3480, %v3481
        %v3483 = vsel %vm1298, %v586, 0.0
        %v3484 = vrot.slane %v3483, 4
        %v3485 = vadd.f32 %v3483, %v3484
        %v3486 = vrot.slane %v3485, 2
        %v3487 = vadd.f32 %v3485, %v3486
        %v3488 = vrot.slane %v3487, 1
        %v3489 = vadd.f32 %v3487, %v3488
        %v3490 = vsel %vm1298, %v587, 0.0
        %v3491 = vrot.slane %v3490, 4
        %v3492 = vadd.f32 %v3490, %v3491
        %v3493 = vrot.slane %v3492, 2
        %v3494 = vadd.f32 %v3492, %v3493
        %v3495 = vrot.slane %v3494, 1
        %v3496 = vadd.f32 %v3494, %v3495
        %v3497 = vsel %vm1298, %v588, 0.0
        %v3498 = vrot.slane %v3497, 4
        %v3499 = vadd.f32 %v3497, %v3498
        %v3500 = vrot.slane %v3499, 2
        %v3501 = vadd.f32 %v3499, %v3500
        %v3502 = vrot.slane %v3501, 1
        %v3503 = vadd.f32 %v3501, %v3502
        %v3504 = vsel %vm1298, %v589, 0.0
        %v3505 = vrot.slane %v3504, 4
        %v3506 = vadd.f32 %v3504, %v3505
        %v3507 = vrot.slane %v3506, 2
        %v3508 = vadd.f32 %v3506, %v3507
        %v3509 = vrot.slane %v3508, 1
        %v3510 = vadd.f32 %v3508, %v3509
        %v3511 = vsel %vm1298, %v590, 0.0
        %v3512 = vrot.slane %v3511, 4
        %v3513 = vadd.f32 %v3511, %v3512
        %v3514 = vrot.slane %v3513, 2
        %v3515 = vadd.f32 %v3513, %v3514
        %v3516 = vrot.slane %v3515, 1
        %v3517 = vadd.f32 %v3515, %v3516
        %v3518 = vsel %vm1298, %v591, 0.0
        %v3519 = vrot.slane %v3518, 4
        %v3520 = vadd.f32 %v3518, %v3519
        %v3521 = vrot.slane %v3520, 2
        %v3522 = vadd.f32 %v3520, %v3521
        %v3523 = vrot.slane %v3522, 1
        %v3524 = vadd.f32 %v3522, %v3523
        %v3525 = vsel %vm1298, %v592, 0.0
        %v3526 = vrot.slane %v3525, 4
        %v3527 = vadd.f32 %v3525, %v3526
        %v3528 = vrot.slane %v3527, 2
        %v3529 = vadd.f32 %v3527, %v3528
        %v3530 = vrot.slane %v3529, 1
        %v3531 = vadd.f32 %v3529, %v3530
        %v3532 = vsel %vm1298, %v593, 0.0
        %v3533 = vrot.slane %v3532, 4
        %v3534 = vadd.f32 %v3532, %v3533
        %v3535 = vrot.slane %v3534, 2
        %v3536 = vadd.f32 %v3534, %v3535
        %v3537 = vrot.slane %v3536, 1
        %v3538 = vadd.f32 %v3536, %v3537
        %v3539 = vsel %vm1298, %v594, 0.0
        %v3540 = vrot.slane %v3539, 4
        %v3541 = vadd.f32 %v3539, %v3540
        %v3542 = vrot.slane %v3541, 2
        %v3543 = vadd.f32 %v3541, %v3542
        %v3544 = vrot.slane %v3543, 1
        %v3545 = vadd.f32 %v3543, %v3544
        %v3546 = vsel %vm1298, %v595, 0.0
        %v3547 = vrot.slane %v3546, 4
        %v3548 = vadd.f32 %v3546, %v3547
        %v3549 = vrot.slane %v3548, 2
        %v3550 = vadd.f32 %v3548, %v3549
        %v3551 = vrot.slane %v3550, 1
        %v3552 = vadd.f32 %v3550, %v3551
        %v3553 = vsel %vm1298, %v596, 0.0
        %v3554 = vrot.slane %v3553, 4
        %v3555 = vadd.f32 %v3553, %v3554
        %v3556 = vrot.slane %v3555, 2
        %v3557 = vadd.f32 %v3555, %v3556
        %v3558 = vrot.slane %v3557, 1
        %v3559 = vadd.f32 %v3557, %v3558
        %v3560 = vsel %vm1298, %v597, 0.0
        %v3561 = vrot.slane %v3560, 4
        %v3562 = vadd.f32 %v3560, %v3561
        %v3563 = vrot.slane %v3562, 2
        %v3564 = vadd.f32 %v3562, %v3563
        %v3565 = vrot.slane %v3564, 1
        %v3566 = vadd.f32 %v3564, %v3565
        %v3567 = vsel %vm1298, %v598, 0.0
        %v3568 = vrot.slane %v3567, 4
        %v3569 = vadd.f32 %v3567, %v3568
        %v3570 = vrot.slane %v3569, 2
        %v3571 = vadd.f32 %v3569, %v3570
        %v3572 = vrot.slane %v3571, 1
        %v3573 = vadd.f32 %v3571, %v3572
        %v3574 = vsel %vm1298, %v599, 0.0
        %v3575 = vrot.slane %v3574, 4
        %v3576 = vadd.f32 %v3574, %v3575
        %v3577 = vrot.slane %v3576, 2
        %v3578 = vadd.f32 %v3576, %v3577
        %v3579 = vrot.slane %v3578, 1
        %v3580 = vadd.f32 %v3578, %v3579
        %v3581 = vsel %vm1298, %v600, 0.0
        %v3582 = vrot.slane %v3581, 4
        %v3583 = vadd.f32 %v3581, %v3582
        %v3584 = vrot.slane %v3583, 2
        %v3585 = vadd.f32 %v3583, %v3584
        %v3586 = vrot.slane %v3585, 1
        %v3587 = vadd.f32 %v3585, %v3586
        %v3588 = vsel %vm1298, %v601, 0.0
        %v3589 = vrot.slane %v3588, 4
        %v3590 = vadd.f32 %v3588, %v3589
        %v3591 = vrot.slane %v3590, 2
        %v3592 = vadd.f32 %v3590, %v3591
        %v3593 = vrot.slane %v3592, 1
        %v3594 = vadd.f32 %v3592, %v3593
        %v3595 = vsel %vm1298, %v602, 0.0
        %v3596 = vrot.slane %v3595, 4
        %v3597 = vadd.f32 %v3595, %v3596
        %v3598 = vrot.slane %v3597, 2
        %v3599 = vadd.f32 %v3597, %v3598
        %v3600 = vrot.slane %v3599, 1
        %v3601 = vadd.f32 %v3599, %v3600
        %v3602 = vsel %vm1298, %v603, 0.0
        %v3603 = vrot.slane %v3602, 4
        %v3604 = vadd.f32 %v3602, %v3603
        %v3605 = vrot.slane %v3604, 2
        %v3606 = vadd.f32 %v3604, %v3605
        %v3607 = vrot.slane %v3606, 1
        %v3608 = vadd.f32 %v3606, %v3607
        %v3609 = vsel %vm1298, %v604, 0.0
        %v3610 = vrot.slane %v3609, 4
        %v3611 = vadd.f32 %v3609, %v3610
        %v3612 = vrot.slane %v3611, 2
        %v3613 = vadd.f32 %v3611, %v3612
        %v3614 = vrot.slane %v3613, 1
        %v3615 = vadd.f32 %v3613, %v3614
        %v3616 = vsel %vm1298, %v605, 0.0
        %v3617 = vrot.slane %v3616, 4
        %v3618 = vadd.f32 %v3616, %v3617
        %v3619 = vrot.slane %v3618, 2
        %v3620 = vadd.f32 %v3618, %v3619
        %v3621 = vrot.slane %v3620, 1
        %v3622 = vadd.f32 %v3620, %v3621
        %v3623 = vsel %vm1298, %v606, 0.0
        %v3624 = vrot.slane %v3623, 4
        %v3625 = vadd.f32 %v3623, %v3624
        %v3626 = vrot.slane %v3625, 2
        %v3627 = vadd.f32 %v3625, %v3626
        %v3628 = vrot.slane %v3627, 1
        %v3629 = vadd.f32 %v3627, %v3628
        %v3630 = vsel %vm1298, %v607, 0.0
        %v3631 = vrot.slane %v3630, 4
        %v3632 = vadd.f32 %v3630, %v3631
        %v3633 = vrot.slane %v3632, 2
        %v3634 = vadd.f32 %v3632, %v3633
        %v3635 = vrot.slane %v3634, 1
        %v3636 = vadd.f32 %v3634, %v3635
        %v3637 = vsel %vm1298, %v608, 0.0
        %v3638 = vrot.slane %v3637, 4
        %v3639 = vadd.f32 %v3637, %v3638
        %v3640 = vrot.slane %v3639, 2
        %v3641 = vadd.f32 %v3639, %v3640
        %v3642 = vrot.slane %v3641, 1
        %v3643 = vadd.f32 %v3641, %v3642
        %v3644 = vsel %vm1298, %v609, 0.0
        %v3645 = vrot.slane %v3644, 4
        %v3646 = vadd.f32 %v3644, %v3645
        %v3647 = vrot.slane %v3646, 2
        %v3648 = vadd.f32 %v3646, %v3647
        %v3649 = vrot.slane %v3648, 1
        %v3650 = vadd.f32 %v3648, %v3649
        %v3651 = vsel %vm1298, %v610, 0.0
        %v3652 = vrot.slane %v3651, 4
        %v3653 = vadd.f32 %v3651, %v3652
        %v3654 = vrot.slane %v3653, 2
        %v3655 = vadd.f32 %v3653, %v3654
        %v3656 = vrot.slane %v3655, 1
        %v3657 = vadd.f32 %v3655, %v3656
        %v3658 = vsel %vm1298, %v611, 0.0
        %v3659 = vrot.slane %v3658, 4
        %v3660 = vadd.f32 %v3658, %v3659
        %v3661 = vrot.slane %v3660, 2
        %v3662 = vadd.f32 %v3660, %v3661
        %v3663 = vrot.slane %v3662, 1
        %v3664 = vadd.f32 %v3662, %v3663
        %v3665 = vsel %vm1298, %v612, 0.0
        %v3666 = vrot.slane %v3665, 4
        %v3667 = vadd.f32 %v3665, %v3666
        %v3668 = vrot.slane %v3667, 2
        %v3669 = vadd.f32 %v3667, %v3668
        %v3670 = vrot.slane %v3669, 1
        %v3671 = vadd.f32 %v3669, %v3670
        %v3672 = vsel %vm1298, %v613, 0.0
        %v3673 = vrot.slane %v3672, 4
        %v3674 = vadd.f32 %v3672, %v3673
        %v3675 = vrot.slane %v3674, 2
        %v3676 = vadd.f32 %v3674, %v3675
        %v3677 = vrot.slane %v3676, 1
        %v3678 = vadd.f32 %v3676, %v3677
        %v3679 = vsel %vm1298, %v614, 0.0
        %v3680 = vrot.slane %v3679, 4
        %v3681 = vadd.f32 %v3679, %v3680
        %v3682 = vrot.slane %v3681, 2
        %v3683 = vadd.f32 %v3681, %v3682
        %v3684 = vrot.slane %v3683, 1
        %v3685 = vadd.f32 %v3683, %v3684
        %v3686 = vsel %vm1298, %v615, 0.0
        %v3687 = vrot.slane %v3686, 4
        %v3688 = vadd.f32 %v3686, %v3687
        %v3689 = vrot.slane %v3688, 2
        %v3690 = vadd.f32 %v3688, %v3689
        %v3691 = vrot.slane %v3690, 1
        %v3692 = vadd.f32 %v3690, %v3691
        %v3693 = vsel %vm1298, %v616, 0.0
        %v3694 = vrot.slane %v3693, 4
        %v3695 = vadd.f32 %v3693, %v3694
        %v3696 = vrot.slane %v3695, 2
        %v3697 = vadd.f32 %v3695, %v3696
        %v3698 = vrot.slane %v3697, 1
        %v3699 = vadd.f32 %v3697, %v3698
        %v3700 = vsel %vm1298, %v617, 0.0
        %v3701 = vrot.slane %v3700, 4
        %v3702 = vadd.f32 %v3700, %v3701
        %v3703 = vrot.slane %v3702, 2
        %v3704 = vadd.f32 %v3702, %v3703
        %v3705 = vrot.slane %v3704, 1
        %v3706 = vadd.f32 %v3704, %v3705
        %v3707 = vsel %vm1298, %v618, 0.0
        %v3708 = vrot.slane %v3707, 4
        %v3709 = vadd.f32 %v3707, %v3708
        %v3710 = vrot.slane %v3709, 2
        %v3711 = vadd.f32 %v3709, %v3710
        %v3712 = vrot.slane %v3711, 1
        %v3713 = vadd.f32 %v3711, %v3712
        %v3714 = vsel %vm1298, %v619, 0.0
        %v3715 = vrot.slane %v3714, 4
        %v3716 = vadd.f32 %v3714, %v3715
        %v3717 = vrot.slane %v3716, 2
        %v3718 = vadd.f32 %v3716, %v3717
        %v3719 = vrot.slane %v3718, 1
        %v3720 = vadd.f32 %v3718, %v3719
        %v3721 = vsel %vm1298, %v620, 0.0
        %v3722 = vrot.slane %v3721, 4
        %v3723 = vadd.f32 %v3721, %v3722
        %v3724 = vrot.slane %v3723, 2
        %v3725 = vadd.f32 %v3723, %v3724
        %v3726 = vrot.slane %v3725, 1
        %v3727 = vadd.f32 %v3725, %v3726
        %v3728 = vsel %vm1298, %v621, 0.0
        %v3729 = vrot.slane %v3728, 4
        %v3730 = vadd.f32 %v3728, %v3729
        %v3731 = vrot.slane %v3730, 2
        %v3732 = vadd.f32 %v3730, %v3731
        %v3733 = vrot.slane %v3732, 1
        %v3734 = vadd.f32 %v3732, %v3733
        %v3735 = vsel %vm1298, %v622, 0.0
        %v3736 = vrot.slane %v3735, 4
        %v3737 = vadd.f32 %v3735, %v3736
        %v3738 = vrot.slane %v3737, 2
        %v3739 = vadd.f32 %v3737, %v3738
        %v3740 = vrot.slane %v3739, 1
        %v3741 = vadd.f32 %v3739, %v3740
        %v3742 = vsel %vm1298, %v623, 0.0
        %v3743 = vrot.slane %v3742, 4
        %v3744 = vadd.f32 %v3742, %v3743
        %v3745 = vrot.slane %v3744, 2
        %v3746 = vadd.f32 %v3744, %v3745
        %v3747 = vrot.slane %v3746, 1
        %v3748 = vadd.f32 %v3746, %v3747
        %v3749 = vsel %vm1298, %v624, 0.0
        %v3750 = vrot.slane %v3749, 4
        %v3751 = vadd.f32 %v3749, %v3750
        %v3752 = vrot.slane %v3751, 2
        %v3753 = vadd.f32 %v3751, %v3752
        %v3754 = vrot.slane %v3753, 1
        %v3755 = vadd.f32 %v3753, %v3754
        %v3756 = vsel %vm1298, %v625, 0.0
        %v3757 = vrot.slane %v3756, 4
        %v3758 = vadd.f32 %v3756, %v3757
        %v3759 = vrot.slane %v3758, 2
        %v3760 = vadd.f32 %v3758, %v3759
        %v3761 = vrot.slane %v3760, 1
        %v3762 = vadd.f32 %v3760, %v3761
        %v3763 = vsel %vm1298, %v626, 0.0
        %v3764 = vrot.slane %v3763, 4
        %v3765 = vadd.f32 %v3763, %v3764
        %v3766 = vrot.slane %v3765, 2
        %v3767 = vadd.f32 %v3765, %v3766
        %v3768 = vrot.slane %v3767, 1
        %v3769 = vadd.f32 %v3767, %v3768
        %v3770 = vsel %vm1298, %v627, 0.0
        %v3771 = vrot.slane %v3770, 4
        %v3772 = vadd.f32 %v3770, %v3771
        %v3773 = vrot.slane %v3772, 2
        %v3774 = vadd.f32 %v3772, %v3773
        %v3775 = vrot.slane %v3774, 1
        %v3776 = vadd.f32 %v3774, %v3775
        %v3777 = vsel %vm1298, %v628, 0.0
        %v3778 = vrot.slane %v3777, 4
        %v3779 = vadd.f32 %v3777, %v3778
        %v3780 = vrot.slane %v3779, 2
        %v3781 = vadd.f32 %v3779, %v3780
        %v3782 = vrot.slane %v3781, 1
        %v3783 = vadd.f32 %v3781, %v3782
        %v3784 = vsel %vm1298, %v629, 0.0
        %v3785 = vrot.slane %v3784, 4
        %v3786 = vadd.f32 %v3784, %v3785
        %v3787 = vrot.slane %v3786, 2
        %v3788 = vadd.f32 %v3786, %v3787
        %v3789 = vrot.slane %v3788, 1
        %v3790 = vadd.f32 %v3788, %v3789
        %v3791 = vsel %vm1298, %v630, 0.0
        %v3792 = vrot.slane %v3791, 4
        %v3793 = vadd.f32 %v3791, %v3792
        %v3794 = vrot.slane %v3793, 2
        %v3795 = vadd.f32 %v3793, %v3794
        %v3796 = vrot.slane %v3795, 1
        %v3797 = vadd.f32 %v3795, %v3796
        %v3798 = vsel %vm1298, %v631, 0.0
        %v3799 = vrot.slane %v3798, 4
        %v3800 = vadd.f32 %v3798, %v3799
        %v3801 = vrot.slane %v3800, 2
        %v3802 = vadd.f32 %v3800, %v3801
        %v3803 = vrot.slane %v3802, 1
        %v3804 = vadd.f32 %v3802, %v3803
        %v3805 = vsel %vm1298, %v632, 0.0
        %v3806 = vrot.slane %v3805, 4
        %v3807 = vadd.f32 %v3805, %v3806
        %v3808 = vrot.slane %v3807, 2
        %v3809 = vadd.f32 %v3807, %v3808
        %v3810 = vrot.slane %v3809, 1
        %v3811 = vadd.f32 %v3809, %v3810
        %v3812 = vsel %vm1298, %v633, 0.0
        %v3813 = vrot.slane %v3812, 4
        %v3814 = vadd.f32 %v3812, %v3813
        %v3815 = vrot.slane %v3814, 2
        %v3816 = vadd.f32 %v3814, %v3815
        %v3817 = vrot.slane %v3816, 1
        %v3818 = vadd.f32 %v3816, %v3817
        %v3819 = vsel %vm1298, %v634, 0.0
        %v3820 = vrot.slane %v3819, 4
        %v3821 = vadd.f32 %v3819, %v3820
        %v3822 = vrot.slane %v3821, 2
        %v3823 = vadd.f32 %v3821, %v3822
        %v3824 = vrot.slane %v3823, 1
        %v3825 = vadd.f32 %v3823, %v3824
        %v3826 = vsel %vm1298, %v635, 0.0
        %v3827 = vrot.slane %v3826, 4
        %v3828 = vadd.f32 %v3826, %v3827
        %v3829 = vrot.slane %v3828, 2
        %v3830 = vadd.f32 %v3828, %v3829
        %v3831 = vrot.slane %v3830, 1
        %v3832 = vadd.f32 %v3830, %v3831
        %v3833 = vsel %vm1298, %v636, 0.0
        %v3834 = vrot.slane %v3833, 4
        %v3835 = vadd.f32 %v3833, %v3834
        %v3836 = vrot.slane %v3835, 2
        %v3837 = vadd.f32 %v3835, %v3836
        %v3838 = vrot.slane %v3837, 1
        %v3839 = vadd.f32 %v3837, %v3838
        %v3840 = vsel %vm1298, %v637, 0.0
        %v3841 = vrot.slane %v3840, 4
        %v3842 = vadd.f32 %v3840, %v3841
        %v3843 = vrot.slane %v3842, 2
        %v3844 = vadd.f32 %v3842, %v3843
        %v3845 = vrot.slane %v3844, 1
        %v3846 = vadd.f32 %v3844, %v3845
        %v3847 = vsel %vm1298, %v638, 0.0
        %v3848 = vrot.slane %v3847, 4
        %v3849 = vadd.f32 %v3847, %v3848
        %v3850 = vrot.slane %v3849, 2
        %v3851 = vadd.f32 %v3849, %v3850
        %v3852 = vrot.slane %v3851, 1
        %v3853 = vadd.f32 %v3851, %v3852
        %v3854 = vsel %vm1298, %v639, 0.0
        %v3855 = vrot.slane %v3854, 4
        %v3856 = vadd.f32 %v3854, %v3855
        %v3857 = vrot.slane %v3856, 2
        %v3858 = vadd.f32 %v3856, %v3857
        %v3859 = vrot.slane %v3858, 1
        %v3860 = vadd.f32 %v3858, %v3859
        %v3861 = vsel %vm1298, %v640, 0.0
        %v3862 = vrot.slane %v3861, 4
        %v3863 = vadd.f32 %v3861, %v3862
        %v3864 = vrot.slane %v3863, 2
        %v3865 = vadd.f32 %v3863, %v3864
        %v3866 = vrot.slane %v3865, 1
        %v3867 = vadd.f32 %v3865, %v3866
        %v3868 = vsel %vm1298, %v641, 0.0
        %v3869 = vrot.slane %v3868, 4
        %v3870 = vadd.f32 %v3868, %v3869
        %v3871 = vrot.slane %v3870, 2
        %v3872 = vadd.f32 %v3870, %v3871
        %v3873 = vrot.slane %v3872, 1
        %v3874 = vadd.f32 %v3872, %v3873
        %v3875 = vsel %vm1298, %v642, 0.0
        %v3876 = vrot.slane %v3875, 4
        %v3877 = vadd.f32 %v3875, %v3876
        %v3878 = vrot.slane %v3877, 2
        %v3879 = vadd.f32 %v3877, %v3878
        %v3880 = vrot.slane %v3879, 1
        %v3881 = vadd.f32 %v3879, %v3880
        %v3882 = vsel %vm1298, %v643, 0.0
        %v3883 = vrot.slane %v3882, 4
        %v3884 = vadd.f32 %v3882, %v3883
        %v3885 = vrot.slane %v3884, 2
        %v3886 = vadd.f32 %v3884, %v3885
        %v3887 = vrot.slane %v3886, 1
        %v3888 = vadd.f32 %v3886, %v3887
        %v3889 = vsel %vm1298, %v644, 0.0
        %v3890 = vrot.slane %v3889, 4
        %v3891 = vadd.f32 %v3889, %v3890
        %v3892 = vrot.slane %v3891, 2
        %v3893 = vadd.f32 %v3891, %v3892
        %v3894 = vrot.slane %v3893, 1
        %v3895 = vadd.f32 %v3893, %v3894
        %v3896 = vsel %vm1298, %v645, 0.0
        %v3897 = vrot.slane %v3896, 4
        %v3898 = vadd.f32 %v3896, %v3897
        %v3899 = vrot.slane %v3898, 2
        %v3900 = vadd.f32 %v3898, %v3899
        %v3901 = vrot.slane %v3900, 1
        %v3902 = vadd.f32 %v3900, %v3901
        %v3903 = vsel %vm1298, %v646, 0.0
        %v3904 = vrot.slane %v3903, 4
        %v3905 = vadd.f32 %v3903, %v3904
        %v3906 = vrot.slane %v3905, 2
        %v3907 = vadd.f32 %v3905, %v3906
        %v3908 = vrot.slane %v3907, 1
        %v3909 = vadd.f32 %v3907, %v3908
        %v3910 = vsel %vm1298, %v647, 0.0
        %v3911 = vrot.slane %v3910, 4
        %v3912 = vadd.f32 %v3910, %v3911
        %v3913 = vrot.slane %v3912, 2
        %v3914 = vadd.f32 %v3912, %v3913
        %v3915 = vrot.slane %v3914, 1
        %v3916 = vadd.f32 %v3914, %v3915
        %v3917 = vsel %vm1298, %v648, 0.0
        %v3918 = vrot.slane %v3917, 4
        %v3919 = vadd.f32 %v3917, %v3918
        %v3920 = vrot.slane %v3919, 2
        %v3921 = vadd.f32 %v3919, %v3920
        %v3922 = vrot.slane %v3921, 1
        %v3923 = vadd.f32 %v3921, %v3922
        %v3924 = vsel %vm1298, %v649, 0.0
        %v3925 = vrot.slane %v3924, 4
        %v3926 = vadd.f32 %v3924, %v3925
        %v3927 = vrot.slane %v3926, 2
        %v3928 = vadd.f32 %v3926, %v3927
        %v3929 = vrot.slane %v3928, 1
        %v3930 = vadd.f32 %v3928, %v3929
        %v3931 = vsel %vm1298, %v650, 0.0
        %v3932 = vrot.slane %v3931, 4
        %v3933 = vadd.f32 %v3931, %v3932
        %v3934 = vrot.slane %v3933, 2
        %v3935 = vadd.f32 %v3933, %v3934
        %v3936 = vrot.slane %v3935, 1
        %v3937 = vadd.f32 %v3935, %v3936
        %v3938 = vsel %vm1298, %v651, 0.0
        %v3939 = vrot.slane %v3938, 4
        %v3940 = vadd.f32 %v3938, %v3939
        %v3941 = vrot.slane %v3940, 2
        %v3942 = vadd.f32 %v3940, %v3941
        %v3943 = vrot.slane %v3942, 1
        %v3944 = vadd.f32 %v3942, %v3943
        %v3945 = vsel %vm1298, %v652, 0.0
        %v3946 = vrot.slane %v3945, 4
        %v3947 = vadd.f32 %v3945, %v3946
        %v3948 = vrot.slane %v3947, 2
        %v3949 = vadd.f32 %v3947, %v3948
        %v3950 = vrot.slane %v3949, 1
        %v3951 = vadd.f32 %v3949, %v3950
        %v3952 = vsel %vm1298, %v653, 0.0
        %v3953 = vrot.slane %v3952, 4
        %v3954 = vadd.f32 %v3952, %v3953
        %v3955 = vrot.slane %v3954, 2
        %v3956 = vadd.f32 %v3954, %v3955
        %v3957 = vrot.slane %v3956, 1
        %v3958 = vadd.f32 %v3956, %v3957
        %v3959 = vsel %vm1298, %v654, 0.0
        %v3960 = vrot.slane %v3959, 4
        %v3961 = vadd.f32 %v3959, %v3960
        %v3962 = vrot.slane %v3961, 2
        %v3963 = vadd.f32 %v3961, %v3962
        %v3964 = vrot.slane %v3963, 1
        %v3965 = vadd.f32 %v3963, %v3964
        %v3966 = vsel %vm1298, %v655, 0.0
        %v3967 = vrot.slane %v3966, 4
        %v3968 = vadd.f32 %v3966, %v3967
        %v3969 = vrot.slane %v3968, 2
        %v3970 = vadd.f32 %v3968, %v3969
        %v3971 = vrot.slane %v3970, 1
        %v3972 = vadd.f32 %v3970, %v3971
        %v3973 = vsel %vm1298, %v656, 0.0
        %v3974 = vrot.slane %v3973, 4
        %v3975 = vadd.f32 %v3973, %v3974
        %v3976 = vrot.slane %v3975, 2
        %v3977 = vadd.f32 %v3975, %v3976
        %v3978 = vrot.slane %v3977, 1
        %v3979 = vadd.f32 %v3977, %v3978
        %v3980 = vsel %vm1298, %v657, 0.0
        %v3981 = vrot.slane %v3980, 4
        %v3982 = vadd.f32 %v3980, %v3981
        %v3983 = vrot.slane %v3982, 2
        %v3984 = vadd.f32 %v3982, %v3983
        %v3985 = vrot.slane %v3984, 1
        %v3986 = vadd.f32 %v3984, %v3985
        %v3987 = vsel %vm1298, %v658, 0.0
        %v3988 = vrot.slane %v3987, 4
        %v3989 = vadd.f32 %v3987, %v3988
        %v3990 = vrot.slane %v3989, 2
        %v3991 = vadd.f32 %v3989, %v3990
        %v3992 = vrot.slane %v3991, 1
        %v3993 = vadd.f32 %v3991, %v3992
        %v3994 = vsel %vm1298, %v659, 0.0
        %v3995 = vrot.slane %v3994, 4
        %v3996 = vadd.f32 %v3994, %v3995
        %v3997 = vrot.slane %v3996, 2
        %v3998 = vadd.f32 %v3996, %v3997
        %v3999 = vrot.slane %v3998, 1
        %v4000 = vadd.f32 %v3998, %v3999
        %v4001 = vsel %vm1298, %v660, 0.0
        %v4002 = vrot.slane %v4001, 4
        %v4003 = vadd.f32 %v4001, %v4002
        %v4004 = vrot.slane %v4003, 2
        %v4005 = vadd.f32 %v4003, %v4004
        %v4006 = vrot.slane %v4005, 1
        %v4007 = vadd.f32 %v4005, %v4006
        %v4008 = vsel %vm1298, %v661, 0.0
        %v4009 = vrot.slane %v4008, 4
        %v4010 = vadd.f32 %v4008, %v4009
        %v4011 = vrot.slane %v4010, 2
        %v4012 = vadd.f32 %v4010, %v4011
        %v4013 = vrot.slane %v4012, 1
        %v4014 = vadd.f32 %v4012, %v4013
        %v4015 = vsel %vm1298, %v662, 0.0
        %v4016 = vrot.slane %v4015, 4
        %v4017 = vadd.f32 %v4015, %v4016
        %v4018 = vrot.slane %v4017, 2
        %v4019 = vadd.f32 %v4017, %v4018
        %v4020 = vrot.slane %v4019, 1
        %v4021 = vadd.f32 %v4019, %v4020
        %v4022 = vsel %vm1298, %v663, 0.0
        %v4023 = vrot.slane %v4022, 4
        %v4024 = vadd.f32 %v4022, %v4023
        %v4025 = vrot.slane %v4024, 2
        %v4026 = vadd.f32 %v4024, %v4025
        %v4027 = vrot.slane %v4026, 1
        %v4028 = vadd.f32 %v4026, %v4027
        %v4029 = vsel %vm1298, %v664, 0.0
        %v4030 = vrot.slane %v4029, 4
        %v4031 = vadd.f32 %v4029, %v4030
        %v4032 = vrot.slane %v4031, 2
        %v4033 = vadd.f32 %v4031, %v4032
        %v4034 = vrot.slane %v4033, 1
        %v4035 = vadd.f32 %v4033, %v4034
        %v4036 = vsel %vm1298, %v665, 0.0
        %v4037 = vrot.slane %v4036, 4
        %v4038 = vadd.f32 %v4036, %v4037
        %v4039 = vrot.slane %v4038, 2
        %v4040 = vadd.f32 %v4038, %v4039
        %v4041 = vrot.slane %v4040, 1
        %v4042 = vadd.f32 %v4040, %v4041
        %v4043 = vsel %vm1298, %v666, 0.0
        %v4044 = vrot.slane %v4043, 4
        %v4045 = vadd.f32 %v4043, %v4044
        %v4046 = vrot.slane %v4045, 2
        %v4047 = vadd.f32 %v4045, %v4046
        %v4048 = vrot.slane %v4047, 1
        %v4049 = vadd.f32 %v4047, %v4048
        %v4050 = vsel %vm1298, %v667, 0.0
        %v4051 = vrot.slane %v4050, 4
        %v4052 = vadd.f32 %v4050, %v4051
        %v4053 = vrot.slane %v4052, 2
        %v4054 = vadd.f32 %v4052, %v4053
        %v4055 = vrot.slane %v4054, 1
        %v4056 = vadd.f32 %v4054, %v4055
        %v4057 = vsel %vm1298, %v668, 0.0
        %v4058 = vrot.slane %v4057, 4
        %v4059 = vadd.f32 %v4057, %v4058
        %v4060 = vrot.slane %v4059, 2
        %v4061 = vadd.f32 %v4059, %v4060
        %v4062 = vrot.slane %v4061, 1
        %v4063 = vadd.f32 %v4061, %v4062
        %v4064 = vsel %vm1298, %v669, 0.0
        %v4065 = vrot.slane %v4064, 4
        %v4066 = vadd.f32 %v4064, %v4065
        %v4067 = vrot.slane %v4066, 2
        %v4068 = vadd.f32 %v4066, %v4067
        %v4069 = vrot.slane %v4068, 1
        %v4070 = vadd.f32 %v4068, %v4069
        %v4071 = vsel %vm1298, %v670, 0.0
        %v4072 = vrot.slane %v4071, 4
        %v4073 = vadd.f32 %v4071, %v4072
        %v4074 = vrot.slane %v4073, 2
        %v4075 = vadd.f32 %v4073, %v4074
        %v4076 = vrot.slane %v4075, 1
        %v4077 = vadd.f32 %v4075, %v4076
        %v4078 = vsel %vm1298, %v671, 0.0
        %v4079 = vrot.slane %v4078, 4
        %v4080 = vadd.f32 %v4078, %v4079
        %v4081 = vrot.slane %v4080, 2
        %v4082 = vadd.f32 %v4080, %v4081
        %v4083 = vrot.slane %v4082, 1
        %v4084 = vadd.f32 %v4082, %v4083
        %v4085 = vsel %vm1298, %v672, 0.0
        %v4086 = vrot.slane %v4085, 4
        %v4087 = vadd.f32 %v4085, %v4086
        %v4088 = vrot.slane %v4087, 2
        %v4089 = vadd.f32 %v4087, %v4088
        %v4090 = vrot.slane %v4089, 1
        %v4091 = vadd.f32 %v4089, %v4090
        %v4092 = vsel %vm1298, %v673, 0.0
        %v4093 = vrot.slane %v4092, 4
        %v4094 = vadd.f32 %v4092, %v4093
        %v4095 = vrot.slane %v4094, 2
        %v4096 = vadd.f32 %v4094, %v4095
        %v4097 = vrot.slane %v4096, 1
        %v4098 = vadd.f32 %v4096, %v4097
        %v4099 = vsel %vm1298, %v674, 0.0
        %v4100 = vrot.slane %v4099, 4
        %v4101 = vadd.f32 %v4099, %v4100
        %v4102 = vrot.slane %v4101, 2
        %v4103 = vadd.f32 %v4101, %v4102
        %v4104 = vrot.slane %v4103, 1
        %v4105 = vadd.f32 %v4103, %v4104
        %v4106 = vsel %vm1298, %v675, 0.0
        %v4107 = vrot.slane %v4106, 4
        %v4108 = vadd.f32 %v4106, %v4107
        %v4109 = vrot.slane %v4108, 2
        %v4110 = vadd.f32 %v4108, %v4109
        %v4111 = vrot.slane %v4110, 1
        %v4112 = vadd.f32 %v4110, %v4111
        %v4113 = vsel %vm1298, %v676, 0.0
        %v4114 = vrot.slane %v4113, 4
        %v4115 = vadd.f32 %v4113, %v4114
        %v4116 = vrot.slane %v4115, 2
        %v4117 = vadd.f32 %v4115, %v4116
        %v4118 = vrot.slane %v4117, 1
        %v4119 = vadd.f32 %v4117, %v4118
        %v4120 = vsel %vm1298, %v677, 0.0
        %v4121 = vrot.slane %v4120, 4
        %v4122 = vadd.f32 %v4120, %v4121
        %v4123 = vrot.slane %v4122, 2
        %v4124 = vadd.f32 %v4122, %v4123
        %v4125 = vrot.slane %v4124, 1
        %v4126 = vadd.f32 %v4124, %v4125
        %v4127 = vsel %vm1298, %v678, 0.0
        %v4128 = vrot.slane %v4127, 4
        %v4129 = vadd.f32 %v4127, %v4128
        %v4130 = vrot.slane %v4129, 2
        %v4131 = vadd.f32 %v4129, %v4130
        %v4132 = vrot.slane %v4131, 1
        %v4133 = vadd.f32 %v4131, %v4132
        %v4134 = vsel %vm1298, %v679, 0.0
        %v4135 = vrot.slane %v4134, 4
        %v4136 = vadd.f32 %v4134, %v4135
        %v4137 = vrot.slane %v4136, 2
        %v4138 = vadd.f32 %v4136, %v4137
        %v4139 = vrot.slane %v4138, 1
        %v4140 = vadd.f32 %v4138, %v4139
        %v4141 = vsel %vm1298, %v680, 0.0
        %v4142 = vrot.slane %v4141, 4
        %v4143 = vadd.f32 %v4141, %v4142
        %v4144 = vrot.slane %v4143, 2
        %v4145 = vadd.f32 %v4143, %v4144
        %v4146 = vrot.slane %v4145, 1
        %v4147 = vadd.f32 %v4145, %v4146
        %v4148 = vsel %vm1298, %v681, 0.0
        %v4149 = vrot.slane %v4148, 4
        %v4150 = vadd.f32 %v4148, %v4149
        %v4151 = vrot.slane %v4150, 2
        %v4152 = vadd.f32 %v4150, %v4151
        %v4153 = vrot.slane %v4152, 1
        %v4154 = vadd.f32 %v4152, %v4153
        %v4155 = vsel %vm1298, %v682, 0.0
        %v4156 = vrot.slane %v4155, 4
        %v4157 = vadd.f32 %v4155, %v4156
        %v4158 = vrot.slane %v4157, 2
        %v4159 = vadd.f32 %v4157, %v4158
        %v4160 = vrot.slane %v4159, 1
        %v4161 = vadd.f32 %v4159, %v4160
        %v4162 = vsel %vm1298, %v683, 0.0
        %v4163 = vrot.slane %v4162, 4
        %v4164 = vadd.f32 %v4162, %v4163
        %v4165 = vrot.slane %v4164, 2
        %v4166 = vadd.f32 %v4164, %v4165
        %v4167 = vrot.slane %v4166, 1
        %v4168 = vadd.f32 %v4166, %v4167
        %v4169 = vsel %vm1298, %v684, 0.0
        %v4170 = vrot.slane %v4169, 4
        %v4171 = vadd.f32 %v4169, %v4170
        %v4172 = vrot.slane %v4171, 2
        %v4173 = vadd.f32 %v4171, %v4172
        %v4174 = vrot.slane %v4173, 1
        %v4175 = vadd.f32 %v4173, %v4174
        %v4176 = vsel %vm1298, %v685, 0.0
        %v4177 = vrot.slane %v4176, 4
        %v4178 = vadd.f32 %v4176, %v4177
        %v4179 = vrot.slane %v4178, 2
        %v4180 = vadd.f32 %v4178, %v4179
        %v4181 = vrot.slane %v4180, 1
        %v4182 = vadd.f32 %v4180, %v4181
        %v4183 = vsel %vm1298, %v686, 0.0
        %v4184 = vrot.slane %v4183, 4
        %v4185 = vadd.f32 %v4183, %v4184
        %v4186 = vrot.slane %v4185, 2
        %v4187 = vadd.f32 %v4185, %v4186
        %v4188 = vrot.slane %v4187, 1
        %v4189 = vadd.f32 %v4187, %v4188
        %v4190 = vsel %vm1298, %v687, 0.0
        %v4191 = vrot.slane %v4190, 4
        %v4192 = vadd.f32 %v4190, %v4191
        %v4193 = vrot.slane %v4192, 2
        %v4194 = vadd.f32 %v4192, %v4193
        %v4195 = vrot.slane %v4194, 1
        %v4196 = vadd.f32 %v4194, %v4195
        %v4197 = vsel %vm1298, %v688, 0.0
        %v4198 = vrot.slane %v4197, 4
        %v4199 = vadd.f32 %v4197, %v4198
        %v4200 = vrot.slane %v4199, 2
        %v4201 = vadd.f32 %v4199, %v4200
        %v4202 = vrot.slane %v4201, 1
        %v4203 = vadd.f32 %v4201, %v4202
        %v4204 = vsel %vm1298, %v689, 0.0
        %v4205 = vrot.slane %v4204, 4
        %v4206 = vadd.f32 %v4204, %v4205
        %v4207 = vrot.slane %v4206, 2
        %v4208 = vadd.f32 %v4206, %v4207
        %v4209 = vrot.slane %v4208, 1
        %v4210 = vadd.f32 %v4208, %v4209
        %v4211 = vsel %vm1298, %v690, 0.0
        %v4212 = vrot.slane %v4211, 4
        %v4213 = vadd.f32 %v4211, %v4212
        %v4214 = vrot.slane %v4213, 2
        %v4215 = vadd.f32 %v4213, %v4214
        %v4216 = vrot.slane %v4215, 1
        %v4217 = vadd.f32 %v4215, %v4216
        %v4218 = vsel %vm1298, %v691, 0.0
        %v4219 = vrot.slane %v4218, 4
        %v4220 = vadd.f32 %v4218, %v4219
        %v4221 = vrot.slane %v4220, 2
        %v4222 = vadd.f32 %v4220, %v4221
        %v4223 = vrot.slane %v4222, 1
        %v4224 = vadd.f32 %v4222, %v4223
        %v4225 = vsel %vm1298, %v692, 0.0
        %v4226 = vrot.slane %v4225, 4
        %v4227 = vadd.f32 %v4225, %v4226
        %v4228 = vrot.slane %v4227, 2
        %v4229 = vadd.f32 %v4227, %v4228
        %v4230 = vrot.slane %v4229, 1
        %v4231 = vadd.f32 %v4229, %v4230
        %v4232 = vsel %vm1298, %v693, 0.0
        %v4233 = vrot.slane %v4232, 4
        %v4234 = vadd.f32 %v4232, %v4233
        %v4235 = vrot.slane %v4234, 2
        %v4236 = vadd.f32 %v4234, %v4235
        %v4237 = vrot.slane %v4236, 1
        %v4238 = vadd.f32 %v4236, %v4237
        %v4239 = vsel %vm1298, %v694, 0.0
        %v4240 = vrot.slane %v4239, 4
        %v4241 = vadd.f32 %v4239, %v4240
        %v4242 = vrot.slane %v4241, 2
        %v4243 = vadd.f32 %v4241, %v4242
        %v4244 = vrot.slane %v4243, 1
        %v4245 = vadd.f32 %v4243, %v4244
        %v4246 = vsel %vm1298, %v695, 0.0
        %v4247 = vrot.slane %v4246, 4
        %v4248 = vadd.f32 %v4246, %v4247
        %v4249 = vrot.slane %v4248, 2
        %v4250 = vadd.f32 %v4248, %v4249
        %v4251 = vrot.slane %v4250, 1
        %v4252 = vadd.f32 %v4250, %v4251
        %v4253 = vsel %vm1298, %v696, 0.0
        %v4254 = vrot.slane %v4253, 4
        %v4255 = vadd.f32 %v4253, %v4254
        %v4256 = vrot.slane %v4255, 2
        %v4257 = vadd.f32 %v4255, %v4256
        %v4258 = vrot.slane %v4257, 1
        %v4259 = vadd.f32 %v4257, %v4258
        %v4260 = vsel %vm1298, %v697, 0.0
        %v4261 = vrot.slane %v4260, 4
        %v4262 = vadd.f32 %v4260, %v4261
        %v4263 = vrot.slane %v4262, 2
        %v4264 = vadd.f32 %v4262, %v4263
        %v4265 = vrot.slane %v4264, 1
        %v4266 = vadd.f32 %v4264, %v4265
        %v4267 = vsel %vm1298, %v698, 0.0
        %v4268 = vrot.slane %v4267, 4
        %v4269 = vadd.f32 %v4267, %v4268
        %v4270 = vrot.slane %v4269, 2
        %v4271 = vadd.f32 %v4269, %v4270
        %v4272 = vrot.slane %v4271, 1
        %v4273 = vadd.f32 %v4271, %v4272
        %v4274 = vsel %vm1298, %v699, 0.0
        %v4275 = vrot.slane %v4274, 4
        %v4276 = vadd.f32 %v4274, %v4275
        %v4277 = vrot.slane %v4276, 2
        %v4278 = vadd.f32 %v4276, %v4277
        %v4279 = vrot.slane %v4278, 1
        %v4280 = vadd.f32 %v4278, %v4279
        %v4281 = vsel %vm1298, %v700, 0.0
        %v4282 = vrot.slane %v4281, 4
        %v4283 = vadd.f32 %v4281, %v4282
        %v4284 = vrot.slane %v4283, 2
        %v4285 = vadd.f32 %v4283, %v4284
        %v4286 = vrot.slane %v4285, 1
        %v4287 = vadd.f32 %v4285, %v4286
        %v4288 = vsel %vm1298, %v701, 0.0
        %v4289 = vrot.slane %v4288, 4
        %v4290 = vadd.f32 %v4288, %v4289
        %v4291 = vrot.slane %v4290, 2
        %v4292 = vadd.f32 %v4290, %v4291
        %v4293 = vrot.slane %v4292, 1
        %v4294 = vadd.f32 %v4292, %v4293
        %v4295 = vsel %vm1298, %v702, 0.0
        %v4296 = vrot.slane %v4295, 4
        %v4297 = vadd.f32 %v4295, %v4296
        %v4298 = vrot.slane %v4297, 2
        %v4299 = vadd.f32 %v4297, %v4298
        %v4300 = vrot.slane %v4299, 1
        %v4301 = vadd.f32 %v4299, %v4300
        %v4302 = vsel %vm1298, %v703, 0.0
        %v4303 = vrot.slane %v4302, 4
        %v4304 = vadd.f32 %v4302, %v4303
        %v4305 = vrot.slane %v4304, 2
        %v4306 = vadd.f32 %v4304, %v4305
        %v4307 = vrot.slane %v4306, 1
        %v4308 = vadd.f32 %v4306, %v4307
        %v4309 = vsel %vm1298, %v704, 0.0
        %v4310 = vrot.slane %v4309, 4
        %v4311 = vadd.f32 %v4309, %v4310
        %v4312 = vrot.slane %v4311, 2
        %v4313 = vadd.f32 %v4311, %v4312
        %v4314 = vrot.slane %v4313, 1
        %v4315 = vadd.f32 %v4313, %v4314
        %v4316 = vsel %vm1298, %v705, 0.0
        %v4317 = vrot.slane %v4316, 4
        %v4318 = vadd.f32 %v4316, %v4317
        %v4319 = vrot.slane %v4318, 2
        %v4320 = vadd.f32 %v4318, %v4319
        %v4321 = vrot.slane %v4320, 1
        %v4322 = vadd.f32 %v4320, %v4321
        %v4323 = vsel %vm1298, %v706, 0.0
        %v4324 = vrot.slane %v4323, 4
        %v4325 = vadd.f32 %v4323, %v4324
        %v4326 = vrot.slane %v4325, 2
        %v4327 = vadd.f32 %v4325, %v4326
        %v4328 = vrot.slane %v4327, 1
        %v4329 = vadd.f32 %v4327, %v4328
        %v4330 = vsel %vm1298, %v707, 0.0
        %v4331 = vrot.slane %v4330, 4
        %v4332 = vadd.f32 %v4330, %v4331
        %v4333 = vrot.slane %v4332, 2
        %v4334 = vadd.f32 %v4332, %v4333
        %v4335 = vrot.slane %v4334, 1
        %v4336 = vadd.f32 %v4334, %v4335
        %v4337 = vsel %vm1298, %v708, 0.0
        %v4338 = vrot.slane %v4337, 4
        %v4339 = vadd.f32 %v4337, %v4338
        %v4340 = vrot.slane %v4339, 2
        %v4341 = vadd.f32 %v4339, %v4340
        %v4342 = vrot.slane %v4341, 1
        %v4343 = vadd.f32 %v4341, %v4342
        %v4344 = vsel %vm1298, %v709, 0.0
        %v4345 = vrot.slane %v4344, 4
        %v4346 = vadd.f32 %v4344, %v4345
        %v4347 = vrot.slane %v4346, 2
        %v4348 = vadd.f32 %v4346, %v4347
        %v4349 = vrot.slane %v4348, 1
        %v4350 = vadd.f32 %v4348, %v4349
        %v4351 = vsel %vm1298, %v710, 0.0
        %v4352 = vrot.slane %v4351, 4
        %v4353 = vadd.f32 %v4351, %v4352
        %v4354 = vrot.slane %v4353, 2
        %v4355 = vadd.f32 %v4353, %v4354
        %v4356 = vrot.slane %v4355, 1
        %v4357 = vadd.f32 %v4355, %v4356
        %v4358 = vsel %vm1298, %v711, 0.0
        %v4359 = vrot.slane %v4358, 4
        %v4360 = vadd.f32 %v4358, %v4359
        %v4361 = vrot.slane %v4360, 2
        %v4362 = vadd.f32 %v4360, %v4361
        %v4363 = vrot.slane %v4362, 1
        %v4364 = vadd.f32 %v4362, %v4363
        %v4365 = vsel %vm1298, %v712, 0.0
        %v4366 = vrot.slane %v4365, 4
        %v4367 = vadd.f32 %v4365, %v4366
        %v4368 = vrot.slane %v4367, 2
        %v4369 = vadd.f32 %v4367, %v4368
        %v4370 = vrot.slane %v4369, 1
        %v4371 = vadd.f32 %v4369, %v4370
        %v4372 = vsel %vm1298, %v713, 0.0
        %v4373 = vrot.slane %v4372, 4
        %v4374 = vadd.f32 %v4372, %v4373
        %v4375 = vrot.slane %v4374, 2
        %v4376 = vadd.f32 %v4374, %v4375
        %v4377 = vrot.slane %v4376, 1
        %v4378 = vadd.f32 %v4376, %v4377
        %v4379 = vsel %vm1298, %v714, 0.0
        %v4380 = vrot.slane %v4379, 4
        %v4381 = vadd.f32 %v4379, %v4380
        %v4382 = vrot.slane %v4381, 2
        %v4383 = vadd.f32 %v4381, %v4382
        %v4384 = vrot.slane %v4383, 1
        %v4385 = vadd.f32 %v4383, %v4384
        %v4386 = vsel %vm1298, %v715, 0.0
        %v4387 = vrot.slane %v4386, 4
        %v4388 = vadd.f32 %v4386, %v4387
        %v4389 = vrot.slane %v4388, 2
        %v4390 = vadd.f32 %v4388, %v4389
        %v4391 = vrot.slane %v4390, 1
        %v4392 = vadd.f32 %v4390, %v4391
        %v4393 = vsel %vm1298, %v716, 0.0
        %v4394 = vrot.slane %v4393, 4
        %v4395 = vadd.f32 %v4393, %v4394
        %v4396 = vrot.slane %v4395, 2
        %v4397 = vadd.f32 %v4395, %v4396
        %v4398 = vrot.slane %v4397, 1
        %v4399 = vadd.f32 %v4397, %v4398
        %v4400 = vsel %vm1298, %v717, 0.0
        %v4401 = vrot.slane %v4400, 4
        %v4402 = vadd.f32 %v4400, %v4401
        %v4403 = vrot.slane %v4402, 2
        %v4404 = vadd.f32 %v4402, %v4403
        %v4405 = vrot.slane %v4404, 1
        %v4406 = vadd.f32 %v4404, %v4405
        %v4407 = vsel %vm1298, %v718, 0.0
        %v4408 = vrot.slane %v4407, 4
        %v4409 = vadd.f32 %v4407, %v4408
        %v4410 = vrot.slane %v4409, 2
        %v4411 = vadd.f32 %v4409, %v4410
        %v4412 = vrot.slane %v4411, 1
        %v4413 = vadd.f32 %v4411, %v4412
        %v4414 = vsel %vm1298, %v719, 0.0
        %v4415 = vrot.slane %v4414, 4
        %v4416 = vadd.f32 %v4414, %v4415
        %v4417 = vrot.slane %v4416, 2
        %v4418 = vadd.f32 %v4416, %v4417
        %v4419 = vrot.slane %v4418, 1
        %v4420 = vadd.f32 %v4418, %v4419
        %v4421 = vsel %vm1298, %v720, 0.0
        %v4422 = vrot.slane %v4421, 4
        %v4423 = vadd.f32 %v4421, %v4422
        %v4424 = vrot.slane %v4423, 2
        %v4425 = vadd.f32 %v4423, %v4424
        %v4426 = vrot.slane %v4425, 1
        %v4427 = vadd.f32 %v4425, %v4426
        %v4428 = vsel %vm1298, %v721, 0.0
        %v4429 = vrot.slane %v4428, 4
        %v4430 = vadd.f32 %v4428, %v4429
        %v4431 = vrot.slane %v4430, 2
        %v4432 = vadd.f32 %v4430, %v4431
        %v4433 = vrot.slane %v4432, 1
        %v4434 = vadd.f32 %v4432, %v4433
        %v4435 = vsel %vm1298, %v722, 0.0
        %v4436 = vrot.slane %v4435, 4
        %v4437 = vadd.f32 %v4435, %v4436
        %v4438 = vrot.slane %v4437, 2
        %v4439 = vadd.f32 %v4437, %v4438
        %v4440 = vrot.slane %v4439, 1
        %v4441 = vadd.f32 %v4439, %v4440
        %v4442 = vsel %vm1298, %v723, 0.0
        %v4443 = vrot.slane %v4442, 4
        %v4444 = vadd.f32 %v4442, %v4443
        %v4445 = vrot.slane %v4444, 2
        %v4446 = vadd.f32 %v4444, %v4445
        %v4447 = vrot.slane %v4446, 1
        %v4448 = vadd.f32 %v4446, %v4447
        %v4449 = vsel %vm1298, %v724, 0.0
        %v4450 = vrot.slane %v4449, 4
        %v4451 = vadd.f32 %v4449, %v4450
        %v4452 = vrot.slane %v4451, 2
        %v4453 = vadd.f32 %v4451, %v4452
        %v4454 = vrot.slane %v4453, 1
        %v4455 = vadd.f32 %v4453, %v4454
        %v4456 = vsel %vm1298, %v725, 0.0
        %v4457 = vrot.slane %v4456, 4
        %v4458 = vadd.f32 %v4456, %v4457
        %v4459 = vrot.slane %v4458, 2
        %v4460 = vadd.f32 %v4458, %v4459
        %v4461 = vrot.slane %v4460, 1
        %v4462 = vadd.f32 %v4460, %v4461
        %v4463 = vsel %vm1298, %v726, 0.0
        %v4464 = vrot.slane %v4463, 4
        %v4465 = vadd.f32 %v4463, %v4464
        %v4466 = vrot.slane %v4465, 2
        %v4467 = vadd.f32 %v4465, %v4466
        %v4468 = vrot.slane %v4467, 1
        %v4469 = vadd.f32 %v4467, %v4468
        %v4470 = vsel %vm1298, %v727, 0.0
        %v4471 = vrot.slane %v4470, 4
        %v4472 = vadd.f32 %v4470, %v4471
        %v4473 = vrot.slane %v4472, 2
        %v4474 = vadd.f32 %v4472, %v4473
        %v4475 = vrot.slane %v4474, 1
        %v4476 = vadd.f32 %v4474, %v4475
        %v4477 = vsel %vm1298, %v728, 0.0
        %v4478 = vrot.slane %v4477, 4
        %v4479 = vadd.f32 %v4477, %v4478
        %v4480 = vrot.slane %v4479, 2
        %v4481 = vadd.f32 %v4479, %v4480
        %v4482 = vrot.slane %v4481, 1
        %v4483 = vadd.f32 %v4481, %v4482
        %v4484 = vsel %vm1298, %v729, 0.0
        %v4485 = vrot.slane %v4484, 4
        %v4486 = vadd.f32 %v4484, %v4485
        %v4487 = vrot.slane %v4486, 2
        %v4488 = vadd.f32 %v4486, %v4487
        %v4489 = vrot.slane %v4488, 1
        %v4490 = vadd.f32 %v4488, %v4489
        %v4491 = vsel %vm1298, %v730, 0.0
        %v4492 = vrot.slane %v4491, 4
        %v4493 = vadd.f32 %v4491, %v4492
        %v4494 = vrot.slane %v4493, 2
        %v4495 = vadd.f32 %v4493, %v4494
        %v4496 = vrot.slane %v4495, 1
        %v4497 = vadd.f32 %v4495, %v4496
        %v4498 = vsel %vm1298, %v731, 0.0
        %v4499 = vrot.slane %v4498, 4
        %v4500 = vadd.f32 %v4498, %v4499
        %v4501 = vrot.slane %v4500, 2
        %v4502 = vadd.f32 %v4500, %v4501
        %v4503 = vrot.slane %v4502, 1
        %v4504 = vadd.f32 %v4502, %v4503
        %v4505 = vsel %vm1298, %v732, 0.0
        %v4506 = vrot.slane %v4505, 4
        %v4507 = vadd.f32 %v4505, %v4506
        %v4508 = vrot.slane %v4507, 2
        %v4509 = vadd.f32 %v4507, %v4508
        %v4510 = vrot.slane %v4509, 1
        %v4511 = vadd.f32 %v4509, %v4510
        %v4512 = vsel %vm1298, %v733, 0.0
        %v4513 = vrot.slane %v4512, 4
        %v4514 = vadd.f32 %v4512, %v4513
        %v4515 = vrot.slane %v4514, 2
        %v4516 = vadd.f32 %v4514, %v4515
        %v4517 = vrot.slane %v4516, 1
        %v4518 = vadd.f32 %v4516, %v4517
        %v4519 = vsel %vm1298, %v734, 0.0
        %v4520 = vrot.slane %v4519, 4
        %v4521 = vadd.f32 %v4519, %v4520
        %v4522 = vrot.slane %v4521, 2
        %v4523 = vadd.f32 %v4521, %v4522
        %v4524 = vrot.slane %v4523, 1
        %v4525 = vadd.f32 %v4523, %v4524
        %v4526 = vsel %vm1298, %v735, 0.0
        %v4527 = vrot.slane %v4526, 4
        %v4528 = vadd.f32 %v4526, %v4527
        %v4529 = vrot.slane %v4528, 2
        %v4530 = vadd.f32 %v4528, %v4529
        %v4531 = vrot.slane %v4530, 1
        %v4532 = vadd.f32 %v4530, %v4531
        %v4533 = vsel %vm1298, %v736, 0.0
        %v4534 = vrot.slane %v4533, 4
        %v4535 = vadd.f32 %v4533, %v4534
        %v4536 = vrot.slane %v4535, 2
        %v4537 = vadd.f32 %v4535, %v4536
        %v4538 = vrot.slane %v4537, 1
        %v4539 = vadd.f32 %v4537, %v4538
        %v4540 = vsel %vm1298, %v737, 0.0
        %v4541 = vrot.slane %v4540, 4
        %v4542 = vadd.f32 %v4540, %v4541
        %v4543 = vrot.slane %v4542, 2
        %v4544 = vadd.f32 %v4542, %v4543
        %v4545 = vrot.slane %v4544, 1
        %v4546 = vadd.f32 %v4544, %v4545
        %v4547 = vsel %vm1298, %v738, 0.0
        %v4548 = vrot.slane %v4547, 4
        %v4549 = vadd.f32 %v4547, %v4548
        %v4550 = vrot.slane %v4549, 2
        %v4551 = vadd.f32 %v4549, %v4550
        %v4552 = vrot.slane %v4551, 1
        %v4553 = vadd.f32 %v4551, %v4552
        %v4554 = vsel %vm1298, %v739, 0.0
        %v4555 = vrot.slane %v4554, 4
        %v4556 = vadd.f32 %v4554, %v4555
        %v4557 = vrot.slane %v4556, 2
        %v4558 = vadd.f32 %v4556, %v4557
        %v4559 = vrot.slane %v4558, 1
        %v4560 = vadd.f32 %v4558, %v4559
        %v4561 = vsel %vm1298, %v740, 0.0
        %v4562 = vrot.slane %v4561, 4
        %v4563 = vadd.f32 %v4561, %v4562
        %v4564 = vrot.slane %v4563, 2
        %v4565 = vadd.f32 %v4563, %v4564
        %v4566 = vrot.slane %v4565, 1
        %v4567 = vadd.f32 %v4565, %v4566
        %v4568 = vsel %vm1298, %v741, 0.0
        %v4569 = vrot.slane %v4568, 4
        %v4570 = vadd.f32 %v4568, %v4569
        %v4571 = vrot.slane %v4570, 2
        %v4572 = vadd.f32 %v4570, %v4571
        %v4573 = vrot.slane %v4572, 1
        %v4574 = vadd.f32 %v4572, %v4573
        %v4575 = vsel %vm1298, %v742, 0.0
        %v4576 = vrot.slane %v4575, 4
        %v4577 = vadd.f32 %v4575, %v4576
        %v4578 = vrot.slane %v4577, 2
        %v4579 = vadd.f32 %v4577, %v4578
        %v4580 = vrot.slane %v4579, 1
        %v4581 = vadd.f32 %v4579, %v4580
        %v4582 = vsel %vm1298, %v743, 0.0
        %v4583 = vrot.slane %v4582, 4
        %v4584 = vadd.f32 %v4582, %v4583
        %v4585 = vrot.slane %v4584, 2
        %v4586 = vadd.f32 %v4584, %v4585
        %v4587 = vrot.slane %v4586, 1
        %v4588 = vadd.f32 %v4586, %v4587
        %v4589 = vsel %vm1298, %v744, 0.0
        %v4590 = vrot.slane %v4589, 4
        %v4591 = vadd.f32 %v4589, %v4590
        %v4592 = vrot.slane %v4591, 2
        %v4593 = vadd.f32 %v4591, %v4592
        %v4594 = vrot.slane %v4593, 1
        %v4595 = vadd.f32 %v4593, %v4594
        %v4596 = vsel %vm1298, %v745, 0.0
        %v4597 = vrot.slane %v4596, 4
        %v4598 = vadd.f32 %v4596, %v4597
        %v4599 = vrot.slane %v4598, 2
        %v4600 = vadd.f32 %v4598, %v4599
        %v4601 = vrot.slane %v4600, 1
        %v4602 = vadd.f32 %v4600, %v4601
        %v4603 = vsel %vm1298, %v746, 0.0
        %v4604 = vrot.slane %v4603, 4
        %v4605 = vadd.f32 %v4603, %v4604
        %v4606 = vrot.slane %v4605, 2
        %v4607 = vadd.f32 %v4605, %v4606
        %v4608 = vrot.slane %v4607, 1
        %v4609 = vadd.f32 %v4607, %v4608
        %v4610 = vsel %vm1298, %v747, 0.0
        %v4611 = vrot.slane %v4610, 4
        %v4612 = vadd.f32 %v4610, %v4611
        %v4613 = vrot.slane %v4612, 2
        %v4614 = vadd.f32 %v4612, %v4613
        %v4615 = vrot.slane %v4614, 1
        %v4616 = vadd.f32 %v4614, %v4615
        %v4617 = vsel %vm1298, %v748, 0.0
        %v4618 = vrot.slane %v4617, 4
        %v4619 = vadd.f32 %v4617, %v4618
        %v4620 = vrot.slane %v4619, 2
        %v4621 = vadd.f32 %v4619, %v4620
        %v4622 = vrot.slane %v4621, 1
        %v4623 = vadd.f32 %v4621, %v4622
        %v4624 = vsel %vm1298, %v749, 0.0
        %v4625 = vrot.slane %v4624, 4
        %v4626 = vadd.f32 %v4624, %v4625
        %v4627 = vrot.slane %v4626, 2
        %v4628 = vadd.f32 %v4626, %v4627
        %v4629 = vrot.slane %v4628, 1
        %v4630 = vadd.f32 %v4628, %v4629
        %v4631 = vsel %vm1298, %v750, 0.0
        %v4632 = vrot.slane %v4631, 4
        %v4633 = vadd.f32 %v4631, %v4632
        %v4634 = vrot.slane %v4633, 2
        %v4635 = vadd.f32 %v4633, %v4634
        %v4636 = vrot.slane %v4635, 1
        %v4637 = vadd.f32 %v4635, %v4636
        %v4638 = vsel %vm1298, %v751, 0.0
        %v4639 = vrot.slane %v4638, 4
        %v4640 = vadd.f32 %v4638, %v4639
        %v4641 = vrot.slane %v4640, 2
        %v4642 = vadd.f32 %v4640, %v4641
        %v4643 = vrot.slane %v4642, 1
        %v4644 = vadd.f32 %v4642, %v4643
        %v4645 = vsel %vm1298, %v752, 0.0
        %v4646 = vrot.slane %v4645, 4
        %v4647 = vadd.f32 %v4645, %v4646
        %v4648 = vrot.slane %v4647, 2
        %v4649 = vadd.f32 %v4647, %v4648
        %v4650 = vrot.slane %v4649, 1
        %v4651 = vadd.f32 %v4649, %v4650
        %v4652 = vsel %vm1298, %v753, 0.0
        %v4653 = vrot.slane %v4652, 4
        %v4654 = vadd.f32 %v4652, %v4653
        %v4655 = vrot.slane %v4654, 2
        %v4656 = vadd.f32 %v4654, %v4655
        %v4657 = vrot.slane %v4656, 1
        %v4658 = vadd.f32 %v4656, %v4657
        %v4659 = vsel %vm1298, %v754, 0.0
        %v4660 = vrot.slane %v4659, 4
        %v4661 = vadd.f32 %v4659, %v4660
        %v4662 = vrot.slane %v4661, 2
        %v4663 = vadd.f32 %v4661, %v4662
        %v4664 = vrot.slane %v4663, 1
        %v4665 = vadd.f32 %v4663, %v4664
        %v4666 = vsel %vm1298, %v755, 0.0
        %v4667 = vrot.slane %v4666, 4
        %v4668 = vadd.f32 %v4666, %v4667
        %v4669 = vrot.slane %v4668, 2
        %v4670 = vadd.f32 %v4668, %v4669
        %v4671 = vrot.slane %v4670, 1
        %v4672 = vadd.f32 %v4670, %v4671
        %v4673 = vsel %vm1298, %v756, 0.0
        %v4674 = vrot.slane %v4673, 4
        %v4675 = vadd.f32 %v4673, %v4674
        %v4676 = vrot.slane %v4675, 2
        %v4677 = vadd.f32 %v4675, %v4676
        %v4678 = vrot.slane %v4677, 1
        %v4679 = vadd.f32 %v4677, %v4678
        %v4680 = vsel %vm1298, %v757, 0.0
        %v4681 = vrot.slane %v4680, 4
        %v4682 = vadd.f32 %v4680, %v4681
        %v4683 = vrot.slane %v4682, 2
        %v4684 = vadd.f32 %v4682, %v4683
        %v4685 = vrot.slane %v4684, 1
        %v4686 = vadd.f32 %v4684, %v4685
        %v4687 = vsel %vm1298, %v758, 0.0
        %v4688 = vrot.slane %v4687, 4
        %v4689 = vadd.f32 %v4687, %v4688
        %v4690 = vrot.slane %v4689, 2
        %v4691 = vadd.f32 %v4689, %v4690
        %v4692 = vrot.slane %v4691, 1
        %v4693 = vadd.f32 %v4691, %v4692
        %v4694 = vsel %vm1298, %v759, 0.0
        %v4695 = vrot.slane %v4694, 4
        %v4696 = vadd.f32 %v4694, %v4695
        %v4697 = vrot.slane %v4696, 2
        %v4698 = vadd.f32 %v4696, %v4697
        %v4699 = vrot.slane %v4698, 1
        %v4700 = vadd.f32 %v4698, %v4699
        %v4701 = vsel %vm1298, %v760, 0.0
        %v4702 = vrot.slane %v4701, 4
        %v4703 = vadd.f32 %v4701, %v4702
        %v4704 = vrot.slane %v4703, 2
        %v4705 = vadd.f32 %v4703, %v4704
        %v4706 = vrot.slane %v4705, 1
        %v4707 = vadd.f32 %v4705, %v4706
        %v4708 = vsel %vm1298, %v761, 0.0
        %v4709 = vrot.slane %v4708, 4
        %v4710 = vadd.f32 %v4708, %v4709
        %v4711 = vrot.slane %v4710, 2
        %v4712 = vadd.f32 %v4710, %v4711
        %v4713 = vrot.slane %v4712, 1
        %v4714 = vadd.f32 %v4712, %v4713
        %v4715 = vsel %vm1298, %v762, 0.0
        %v4716 = vrot.slane %v4715, 4
        %v4717 = vadd.f32 %v4715, %v4716
        %v4718 = vrot.slane %v4717, 2
        %v4719 = vadd.f32 %v4717, %v4718
        %v4720 = vrot.slane %v4719, 1
        %v4721 = vadd.f32 %v4719, %v4720
        %v4722 = vsel %vm1298, %v763, 0.0
        %v4723 = vrot.slane %v4722, 4
        %v4724 = vadd.f32 %v4722, %v4723
        %v4725 = vrot.slane %v4724, 2
        %v4726 = vadd.f32 %v4724, %v4725
        %v4727 = vrot.slane %v4726, 1
        %v4728 = vadd.f32 %v4726, %v4727
        %v4729 = vsel %vm1298, %v764, 0.0
        %v4730 = vrot.slane %v4729, 4
        %v4731 = vadd.f32 %v4729, %v4730
        %v4732 = vrot.slane %v4731, 2
        %v4733 = vadd.f32 %v4731, %v4732
        %v4734 = vrot.slane %v4733, 1
        %v4735 = vadd.f32 %v4733, %v4734
        %v4736 = vsel %vm1298, %v765, 0.0
        %v4737 = vrot.slane %v4736, 4
        %v4738 = vadd.f32 %v4736, %v4737
        %v4739 = vrot.slane %v4738, 2
        %v4740 = vadd.f32 %v4738, %v4739
        %v4741 = vrot.slane %v4740, 1
        %v4742 = vadd.f32 %v4740, %v4741
        %v4743 = vsel %vm1298, %v766, 0.0
        %v4744 = vrot.slane %v4743, 4
        %v4745 = vadd.f32 %v4743, %v4744
        %v4746 = vrot.slane %v4745, 2
        %v4747 = vadd.f32 %v4745, %v4746
        %v4748 = vrot.slane %v4747, 1
        %v4749 = vadd.f32 %v4747, %v4748
        %v4750 = vsel %vm1298, %v767, 0.0
        %v4751 = vrot.slane %v4750, 4
        %v4752 = vadd.f32 %v4750, %v4751
        %v4753 = vrot.slane %v4752, 2
        %v4754 = vadd.f32 %v4752, %v4753
        %v4755 = vrot.slane %v4754, 1
        %v4756 = vadd.f32 %v4754, %v4755
        %v4757 = vsel %vm1298, %v768, 0.0
        %v4758 = vrot.slane %v4757, 4
        %v4759 = vadd.f32 %v4757, %v4758
        %v4760 = vrot.slane %v4759, 2
        %v4761 = vadd.f32 %v4759, %v4760
        %v4762 = vrot.slane %v4761, 1
        %v4763 = vadd.f32 %v4761, %v4762
        %v4764 = vsel %vm1298, %v769, 0.0
        %v4765 = vrot.slane %v4764, 4
        %v4766 = vadd.f32 %v4764, %v4765
        %v4767 = vrot.slane %v4766, 2
        %v4768 = vadd.f32 %v4766, %v4767
        %v4769 = vrot.slane %v4768, 1
        %v4770 = vadd.f32 %v4768, %v4769
        %v4771 = vsel %vm1298, %v770, 0.0
        %v4772 = vrot.slane %v4771, 4
        %v4773 = vadd.f32 %v4771, %v4772
        %v4774 = vrot.slane %v4773, 2
        %v4775 = vadd.f32 %v4773, %v4774
        %v4776 = vrot.slane %v4775, 1
        %v4777 = vadd.f32 %v4775, %v4776
        %v4778 = vsel %vm1298, %v771, 0.0
        %v4779 = vrot.slane %v4778, 4
        %v4780 = vadd.f32 %v4778, %v4779
        %v4781 = vrot.slane %v4780, 2
        %v4782 = vadd.f32 %v4780, %v4781
        %v4783 = vrot.slane %v4782, 1
        %v4784 = vadd.f32 %v4782, %v4783
        %v4785 = vsel %vm1298, %v772, 0.0
        %v4786 = vrot.slane %v4785, 4
        %v4787 = vadd.f32 %v4785, %v4786
        %v4788 = vrot.slane %v4787, 2
        %v4789 = vadd.f32 %v4787, %v4788
        %v4790 = vrot.slane %v4789, 1
        %v4791 = vadd.f32 %v4789, %v4790
        %v4792 = vsel %vm1298, %v773, 0.0
        %v4793 = vrot.slane %v4792, 4
        %v4794 = vadd.f32 %v4792, %v4793
        %v4795 = vrot.slane %v4794, 2
        %v4796 = vadd.f32 %v4794, %v4795
        %v4797 = vrot.slane %v4796, 1
        %v4798 = vadd.f32 %v4796, %v4797
        %v4799 = vsel %vm1298, %v774, 0.0
        %v4800 = vrot.slane %v4799, 4
        %v4801 = vadd.f32 %v4799, %v4800
        %v4802 = vrot.slane %v4801, 2
        %v4803 = vadd.f32 %v4801, %v4802
        %v4804 = vrot.slane %v4803, 1
        %v4805 = vadd.f32 %v4803, %v4804
        %v4806 = vsel %vm1298, %v775, 0.0
        %v4807 = vrot.slane %v4806, 4
        %v4808 = vadd.f32 %v4806, %v4807
        %v4809 = vrot.slane %v4808, 2
        %v4810 = vadd.f32 %v4808, %v4809
        %v4811 = vrot.slane %v4810, 1
        %v4812 = vadd.f32 %v4810, %v4811
        %v4813 = vsel %vm1298, %v776, 0.0
        %v4814 = vrot.slane %v4813, 4
        %v4815 = vadd.f32 %v4813, %v4814
        %v4816 = vrot.slane %v4815, 2
        %v4817 = vadd.f32 %v4815, %v4816
        %v4818 = vrot.slane %v4817, 1
        %v4819 = vadd.f32 %v4817, %v4818
        %v4820 = vsel %vm1298, %v777, 0.0
        %v4821 = vrot.slane %v4820, 4
        %v4822 = vadd.f32 %v4820, %v4821
        %v4823 = vrot.slane %v4822, 2
        %v4824 = vadd.f32 %v4822, %v4823
        %v4825 = vrot.slane %v4824, 1
        %v4826 = vadd.f32 %v4824, %v4825
        %v4827 = vsel %vm1298, %v778, 0.0
        %v4828 = vrot.slane %v4827, 4
        %v4829 = vadd.f32 %v4827, %v4828
        %v4830 = vrot.slane %v4829, 2
        %v4831 = vadd.f32 %v4829, %v4830
        %v4832 = vrot.slane %v4831, 1
        %v4833 = vadd.f32 %v4831, %v4832
        %v4834 = vsel %vm1298, %v779, 0.0
        %v4835 = vrot.slane %v4834, 4
        %v4836 = vadd.f32 %v4834, %v4835
        %v4837 = vrot.slane %v4836, 2
        %v4838 = vadd.f32 %v4836, %v4837
        %v4839 = vrot.slane %v4838, 1
        %v4840 = vadd.f32 %v4838, %v4839
        %v4841 = vsel %vm1298, %v780, 0.0
        %v4842 = vrot.slane %v4841, 4
        %v4843 = vadd.f32 %v4841, %v4842
        %v4844 = vrot.slane %v4843, 2
        %v4845 = vadd.f32 %v4843, %v4844
        %v4846 = vrot.slane %v4845, 1
        %v4847 = vadd.f32 %v4845, %v4846
        %v4848 = vsel %vm1298, %v781, 0.0
        %v4849 = vrot.slane %v4848, 4
        %v4850 = vadd.f32 %v4848, %v4849
        %v4851 = vrot.slane %v4850, 2
        %v4852 = vadd.f32 %v4850, %v4851
        %v4853 = vrot.slane %v4852, 1
        %v4854 = vadd.f32 %v4852, %v4853
        %v4855 = vsel %vm1298, %v782, 0.0
        %v4856 = vrot.slane %v4855, 4
        %v4857 = vadd.f32 %v4855, %v4856
        %v4858 = vrot.slane %v4857, 2
        %v4859 = vadd.f32 %v4857, %v4858
        %v4860 = vrot.slane %v4859, 1
        %v4861 = vadd.f32 %v4859, %v4860
        %v4862 = vsel %vm1298, %v783, 0.0
        %v4863 = vrot.slane %v4862, 4
        %v4864 = vadd.f32 %v4862, %v4863
        %v4865 = vrot.slane %v4864, 2
        %v4866 = vadd.f32 %v4864, %v4865
        %v4867 = vrot.slane %v4866, 1
        %v4868 = vadd.f32 %v4866, %v4867
        %v4869 = vsel %vm1298, %v784, 0.0
        %v4870 = vrot.slane %v4869, 4
        %v4871 = vadd.f32 %v4869, %v4870
        %v4872 = vrot.slane %v4871, 2
        %v4873 = vadd.f32 %v4871, %v4872
        %v4874 = vrot.slane %v4873, 1
        %v4875 = vadd.f32 %v4873, %v4874
        %v4876 = vsel %vm1298, %v785, 0.0
        %v4877 = vrot.slane %v4876, 4
        %v4878 = vadd.f32 %v4876, %v4877
        %v4879 = vrot.slane %v4878, 2
        %v4880 = vadd.f32 %v4878, %v4879
        %v4881 = vrot.slane %v4880, 1
        %v4882 = vadd.f32 %v4880, %v4881
        %v4883 = vsel %vm1298, %v786, 0.0
        %v4884 = vrot.slane %v4883, 4
        %v4885 = vadd.f32 %v4883, %v4884
        %v4886 = vrot.slane %v4885, 2
        %v4887 = vadd.f32 %v4885, %v4886
        %v4888 = vrot.slane %v4887, 1
        %v4889 = vadd.f32 %v4887, %v4888
        %v4890 = vsel %vm1298, %v787, 0.0
        %v4891 = vrot.slane %v4890, 4
        %v4892 = vadd.f32 %v4890, %v4891
        %v4893 = vrot.slane %v4892, 2
        %v4894 = vadd.f32 %v4892, %v4893
        %v4895 = vrot.slane %v4894, 1
        %v4896 = vadd.f32 %v4894, %v4895
        %v4897 = vsel %vm1298, %v788, 0.0
        %v4898 = vrot.slane %v4897, 4
        %v4899 = vadd.f32 %v4897, %v4898
        %v4900 = vrot.slane %v4899, 2
        %v4901 = vadd.f32 %v4899, %v4900
        %v4902 = vrot.slane %v4901, 1
        %v4903 = vadd.f32 %v4901, %v4902
        %v4904 = vsel %vm1298, %v789, 0.0
        %v4905 = vrot.slane %v4904, 4
        %v4906 = vadd.f32 %v4904, %v4905
        %v4907 = vrot.slane %v4906, 2
        %v4908 = vadd.f32 %v4906, %v4907
        %v4909 = vrot.slane %v4908, 1
        %v4910 = vadd.f32 %v4908, %v4909
        %v4911 = vsel %vm1298, %v790, 0.0
        %v4912 = vrot.slane %v4911, 4
        %v4913 = vadd.f32 %v4911, %v4912
        %v4914 = vrot.slane %v4913, 2
        %v4915 = vadd.f32 %v4913, %v4914
        %v4916 = vrot.slane %v4915, 1
        %v4917 = vadd.f32 %v4915, %v4916
        %v4918 = vsel %vm1298, %v791, 0.0
        %v4919 = vrot.slane %v4918, 4
        %v4920 = vadd.f32 %v4918, %v4919
        %v4921 = vrot.slane %v4920, 2
        %v4922 = vadd.f32 %v4920, %v4921
        %v4923 = vrot.slane %v4922, 1
        %v4924 = vadd.f32 %v4922, %v4923
        %v4925 = vsel %vm1298, %v792, 0.0
        %v4926 = vrot.slane %v4925, 4
        %v4927 = vadd.f32 %v4925, %v4926
        %v4928 = vrot.slane %v4927, 2
        %v4929 = vadd.f32 %v4927, %v4928
        %v4930 = vrot.slane %v4929, 1
        %v4931 = vadd.f32 %v4929, %v4930
        %v4932 = vsel %vm1298, %v793, 0.0
        %v4933 = vrot.slane %v4932, 4
        %v4934 = vadd.f32 %v4932, %v4933
        %v4935 = vrot.slane %v4934, 2
        %v4936 = vadd.f32 %v4934, %v4935
        %v4937 = vrot.slane %v4936, 1
        %v4938 = vadd.f32 %v4936, %v4937
        %v4939 = vsel %vm1298, %v794, 0.0
        %v4940 = vrot.slane %v4939, 4
        %v4941 = vadd.f32 %v4939, %v4940
        %v4942 = vrot.slane %v4941, 2
        %v4943 = vadd.f32 %v4941, %v4942
        %v4944 = vrot.slane %v4943, 1
        %v4945 = vadd.f32 %v4943, %v4944
        %v4946 = vsel %vm1298, %v795, 0.0
        %v4947 = vrot.slane %v4946, 4
        %v4948 = vadd.f32 %v4946, %v4947
        %v4949 = vrot.slane %v4948, 2
        %v4950 = vadd.f32 %v4948, %v4949
        %v4951 = vrot.slane %v4950, 1
        %v4952 = vadd.f32 %v4950, %v4951
        %v4953 = vsel %vm1298, %v796, 0.0
        %v4954 = vrot.slane %v4953, 4
        %v4955 = vadd.f32 %v4953, %v4954
        %v4956 = vrot.slane %v4955, 2
        %v4957 = vadd.f32 %v4955, %v4956
        %v4958 = vrot.slane %v4957, 1
        %v4959 = vadd.f32 %v4957, %v4958
        %v4960 = vsel %vm1298, %v797, 0.0
        %v4961 = vrot.slane %v4960, 4
        %v4962 = vadd.f32 %v4960, %v4961
        %v4963 = vrot.slane %v4962, 2
        %v4964 = vadd.f32 %v4962, %v4963
        %v4965 = vrot.slane %v4964, 1
        %v4966 = vadd.f32 %v4964, %v4965
        %v4967 = vsel %vm1298, %v798, 0.0
        %v4968 = vrot.slane %v4967, 4
        %v4969 = vadd.f32 %v4967, %v4968
        %v4970 = vrot.slane %v4969, 2
        %v4971 = vadd.f32 %v4969, %v4970
        %v4972 = vrot.slane %v4971, 1
        %v4973 = vadd.f32 %v4971, %v4972
        %v4974 = vsel %vm1298, %v799, 0.0
        %v4975 = vrot.slane %v4974, 4
        %v4976 = vadd.f32 %v4974, %v4975
        %v4977 = vrot.slane %v4976, 2
        %v4978 = vadd.f32 %v4976, %v4977
        %v4979 = vrot.slane %v4978, 1
        %v4980 = vadd.f32 %v4978, %v4979
        %v4981 = vsel %vm1298, %v800, 0.0
        %v4982 = vrot.slane %v4981, 4
        %v4983 = vadd.f32 %v4981, %v4982
        %v4984 = vrot.slane %v4983, 2
        %v4985 = vadd.f32 %v4983, %v4984
        %v4986 = vrot.slane %v4985, 1
        %v4987 = vadd.f32 %v4985, %v4986
        %v4988 = vsel %vm1298, %v801, 0.0
        %v4989 = vrot.slane %v4988, 4
        %v4990 = vadd.f32 %v4988, %v4989
        %v4991 = vrot.slane %v4990, 2
        %v4992 = vadd.f32 %v4990, %v4991
        %v4993 = vrot.slane %v4992, 1
        %v4994 = vadd.f32 %v4992, %v4993
        %v4995 = vsel %vm1298, %v802, 0.0
        %v4996 = vrot.slane %v4995, 4
        %v4997 = vadd.f32 %v4995, %v4996
        %v4998 = vrot.slane %v4997, 2
        %v4999 = vadd.f32 %v4997, %v4998
        %v5000 = vrot.slane %v4999, 1
        %v5001 = vadd.f32 %v4999, %v5000
        %v5002 = vsel %vm1298, %v803, 0.0
        %v5003 = vrot.slane %v5002, 4
        %v5004 = vadd.f32 %v5002, %v5003
        %v5005 = vrot.slane %v5004, 2
        %v5006 = vadd.f32 %v5004, %v5005
        %v5007 = vrot.slane %v5006, 1
        %v5008 = vadd.f32 %v5006, %v5007
        %v5009 = vsel %vm1298, %v804, 0.0
        %v5010 = vrot.slane %v5009, 4
        %v5011 = vadd.f32 %v5009, %v5010
        %v5012 = vrot.slane %v5011, 2
        %v5013 = vadd.f32 %v5011, %v5012
        %v5014 = vrot.slane %v5013, 1
        %v5015 = vadd.f32 %v5013, %v5014
        %v5016 = vsel %vm1298, %v805, 0.0
        %v5017 = vrot.slane %v5016, 4
        %v5018 = vadd.f32 %v5016, %v5017
        %v5019 = vrot.slane %v5018, 2
        %v5020 = vadd.f32 %v5018, %v5019
        %v5021 = vrot.slane %v5020, 1
        %v5022 = vadd.f32 %v5020, %v5021
        %v5023 = vsel %vm1298, %v806, 0.0
        %v5024 = vrot.slane %v5023, 4
        %v5025 = vadd.f32 %v5023, %v5024
        %v5026 = vrot.slane %v5025, 2
        %v5027 = vadd.f32 %v5025, %v5026
        %v5028 = vrot.slane %v5027, 1
        %v5029 = vadd.f32 %v5027, %v5028
        %v5030 = vsel %vm1298, %v807, 0.0
        %v5031 = vrot.slane %v5030, 4
        %v5032 = vadd.f32 %v5030, %v5031
        %v5033 = vrot.slane %v5032, 2
        %v5034 = vadd.f32 %v5032, %v5033
        %v5035 = vrot.slane %v5034, 1
        %v5036 = vadd.f32 %v5034, %v5035
        %v5037 = vsel %vm1298, %v808, 0.0
        %v5038 = vrot.slane %v5037, 4
        %v5039 = vadd.f32 %v5037, %v5038
        %v5040 = vrot.slane %v5039, 2
        %v5041 = vadd.f32 %v5039, %v5040
        %v5042 = vrot.slane %v5041, 1
        %v5043 = vadd.f32 %v5041, %v5042
        %v5044 = vsel %vm1298, %v809, 0.0
        %v5045 = vrot.slane %v5044, 4
        %v5046 = vadd.f32 %v5044, %v5045
        %v5047 = vrot.slane %v5046, 2
        %v5048 = vadd.f32 %v5046, %v5047
        %v5049 = vrot.slane %v5048, 1
        %v5050 = vadd.f32 %v5048, %v5049
        %v5051 = vsel %vm1298, %v810, 0.0
        %v5052 = vrot.slane %v5051, 4
        %v5053 = vadd.f32 %v5051, %v5052
        %v5054 = vrot.slane %v5053, 2
        %v5055 = vadd.f32 %v5053, %v5054
        %v5056 = vrot.slane %v5055, 1
        %v5057 = vadd.f32 %v5055, %v5056
        %v5058 = vsel %vm1298, %v811, 0.0
        %v5059 = vrot.slane %v5058, 4
        %v5060 = vadd.f32 %v5058, %v5059
        %v5061 = vrot.slane %v5060, 2
        %v5062 = vadd.f32 %v5060, %v5061
        %v5063 = vrot.slane %v5062, 1
        %v5064 = vadd.f32 %v5062, %v5063
        %v5065 = vsel %vm1298, %v812, 0.0
        %v5066 = vrot.slane %v5065, 4
        %v5067 = vadd.f32 %v5065, %v5066
        %v5068 = vrot.slane %v5067, 2
        %v5069 = vadd.f32 %v5067, %v5068
        %v5070 = vrot.slane %v5069, 1
        %v5071 = vadd.f32 %v5069, %v5070
        %v5072 = vsel %vm1298, %v813, 0.0
        %v5073 = vrot.slane %v5072, 4
        %v5074 = vadd.f32 %v5072, %v5073
        %v5075 = vrot.slane %v5074, 2
        %v5076 = vadd.f32 %v5074, %v5075
        %v5077 = vrot.slane %v5076, 1
        %v5078 = vadd.f32 %v5076, %v5077
        %v5079 = vsel %vm1298, %v814, 0.0
        %v5080 = vrot.slane %v5079, 4
        %v5081 = vadd.f32 %v5079, %v5080
        %v5082 = vrot.slane %v5081, 2
        %v5083 = vadd.f32 %v5081, %v5082
        %v5084 = vrot.slane %v5083, 1
        %v5085 = vadd.f32 %v5083, %v5084
        %v5086 = vsel %vm1298, %v815, 0.0
        %v5087 = vrot.slane %v5086, 4
        %v5088 = vadd.f32 %v5086, %v5087
        %v5089 = vrot.slane %v5088, 2
        %v5090 = vadd.f32 %v5088, %v5089
        %v5091 = vrot.slane %v5090, 1
        %v5092 = vadd.f32 %v5090, %v5091
        %v5093 = vsel %vm1298, %v816, 0.0
        %v5094 = vrot.slane %v5093, 4
        %v5095 = vadd.f32 %v5093, %v5094
        %v5096 = vrot.slane %v5095, 2
        %v5097 = vadd.f32 %v5095, %v5096
        %v5098 = vrot.slane %v5097, 1
        %v5099 = vadd.f32 %v5097, %v5098
        %v5100 = vsel %vm1298, %v817, 0.0
        %v5101 = vrot.slane %v5100, 4
        %v5102 = vadd.f32 %v5100, %v5101
        %v5103 = vrot.slane %v5102, 2
        %v5104 = vadd.f32 %v5102, %v5103
        %v5105 = vrot.slane %v5104, 1
        %v5106 = vadd.f32 %v5104, %v5105
        %v5107 = vsel %vm1298, %v818, 0.0
        %v5108 = vrot.slane %v5107, 4
        %v5109 = vadd.f32 %v5107, %v5108
        %v5110 = vrot.slane %v5109, 2
        %v5111 = vadd.f32 %v5109, %v5110
        %v5112 = vrot.slane %v5111, 1
        %v5113 = vadd.f32 %v5111, %v5112
        %v5114 = vsel %vm1298, %v819, 0.0
        %v5115 = vrot.slane %v5114, 4
        %v5116 = vadd.f32 %v5114, %v5115
        %v5117 = vrot.slane %v5116, 2
        %v5118 = vadd.f32 %v5116, %v5117
        %v5119 = vrot.slane %v5118, 1
        %v5120 = vadd.f32 %v5118, %v5119
        %v5121 = vsel %vm1298, %v820, 0.0
        %v5122 = vrot.slane %v5121, 4
        %v5123 = vadd.f32 %v5121, %v5122
        %v5124 = vrot.slane %v5123, 2
        %v5125 = vadd.f32 %v5123, %v5124
        %v5126 = vrot.slane %v5125, 1
        %v5127 = vadd.f32 %v5125, %v5126
        %v5128 = vsel %vm1298, %v821, 0.0
        %v5129 = vrot.slane %v5128, 4
        %v5130 = vadd.f32 %v5128, %v5129
        %v5131 = vrot.slane %v5130, 2
        %v5132 = vadd.f32 %v5130, %v5131
        %v5133 = vrot.slane %v5132, 1
        %v5134 = vadd.f32 %v5132, %v5133
        %v5135 = vsel %vm1298, %v822, 0.0
        %v5136 = vrot.slane %v5135, 4
        %v5137 = vadd.f32 %v5135, %v5136
        %v5138 = vrot.slane %v5137, 2
        %v5139 = vadd.f32 %v5137, %v5138
        %v5140 = vrot.slane %v5139, 1
        %v5141 = vadd.f32 %v5139, %v5140
        %v5142 = vsel %vm1298, %v823, 0.0
        %v5143 = vrot.slane %v5142, 4
        %v5144 = vadd.f32 %v5142, %v5143
        %v5145 = vrot.slane %v5144, 2
        %v5146 = vadd.f32 %v5144, %v5145
        %v5147 = vrot.slane %v5146, 1
        %v5148 = vadd.f32 %v5146, %v5147
        %v5149 = vsel %vm1298, %v824, 0.0
        %v5150 = vrot.slane %v5149, 4
        %v5151 = vadd.f32 %v5149, %v5150
        %v5152 = vrot.slane %v5151, 2
        %v5153 = vadd.f32 %v5151, %v5152
        %v5154 = vrot.slane %v5153, 1
        %v5155 = vadd.f32 %v5153, %v5154
        %v5156 = vsel %vm1298, %v825, 0.0
        %v5157 = vrot.slane %v5156, 4
        %v5158 = vadd.f32 %v5156, %v5157
        %v5159 = vrot.slane %v5158, 2
        %v5160 = vadd.f32 %v5158, %v5159
        %v5161 = vrot.slane %v5160, 1
        %v5162 = vadd.f32 %v5160, %v5161
        %v5163 = vsel %vm1298, %v826, 0.0
        %v5164 = vrot.slane %v5163, 4
        %v5165 = vadd.f32 %v5163, %v5164
        %v5166 = vrot.slane %v5165, 2
        %v5167 = vadd.f32 %v5165, %v5166
        %v5168 = vrot.slane %v5167, 1
        %v5169 = vadd.f32 %v5167, %v5168
        %v5170 = vsel %vm1298, %v827, 0.0
        %v5171 = vrot.slane %v5170, 4
        %v5172 = vadd.f32 %v5170, %v5171
        %v5173 = vrot.slane %v5172, 2
        %v5174 = vadd.f32 %v5172, %v5173
        %v5175 = vrot.slane %v5174, 1
        %v5176 = vadd.f32 %v5174, %v5175
        %v5177 = vsel %vm1298, %v828, 0.0
        %v5178 = vrot.slane %v5177, 4
        %v5179 = vadd.f32 %v5177, %v5178
        %v5180 = vrot.slane %v5179, 2
        %v5181 = vadd.f32 %v5179, %v5180
        %v5182 = vrot.slane %v5181, 1
        %v5183 = vadd.f32 %v5181, %v5182
        %v5184 = vsel %vm1298, %v829, 0.0
        %v5185 = vrot.slane %v5184, 4
        %v5186 = vadd.f32 %v5184, %v5185
        %v5187 = vrot.slane %v5186, 2
        %v5188 = vadd.f32 %v5186, %v5187
        %v5189 = vrot.slane %v5188, 1
        %v5190 = vadd.f32 %v5188, %v5189
        %v5191 = vsel %vm1298, %v830, 0.0
        %v5192 = vrot.slane %v5191, 4
        %v5193 = vadd.f32 %v5191, %v5192
        %v5194 = vrot.slane %v5193, 2
        %v5195 = vadd.f32 %v5193, %v5194
        %v5196 = vrot.slane %v5195, 1
        %v5197 = vadd.f32 %v5195, %v5196
        %v5198 = vsel %vm1298, %v831, 0.0
        %v5199 = vrot.slane %v5198, 4
        %v5200 = vadd.f32 %v5198, %v5199
        %v5201 = vrot.slane %v5200, 2
        %v5202 = vadd.f32 %v5200, %v5201
        %v5203 = vrot.slane %v5202, 1
        %v5204 = vadd.f32 %v5202, %v5203
        %v5205 = vsel %vm1298, %v832, 0.0
        %v5206 = vrot.slane %v5205, 4
        %v5207 = vadd.f32 %v5205, %v5206
        %v5208 = vrot.slane %v5207, 2
        %v5209 = vadd.f32 %v5207, %v5208
        %v5210 = vrot.slane %v5209, 1
        %v5211 = vadd.f32 %v5209, %v5210
        %v5212 = vsel %vm1298, %v833, 0.0
        %v5213 = vrot.slane %v5212, 4
        %v5214 = vadd.f32 %v5212, %v5213
        %v5215 = vrot.slane %v5214, 2
        %v5216 = vadd.f32 %v5214, %v5215
        %v5217 = vrot.slane %v5216, 1
        %v5218 = vadd.f32 %v5216, %v5217
        %v5219 = vsel %vm1298, %v834, 0.0
        %v5220 = vrot.slane %v5219, 4
        %v5221 = vadd.f32 %v5219, %v5220
        %v5222 = vrot.slane %v5221, 2
        %v5223 = vadd.f32 %v5221, %v5222
        %v5224 = vrot.slane %v5223, 1
        %v5225 = vadd.f32 %v5223, %v5224
        %v5226 = vsel %vm1298, %v835, 0.0
        %v5227 = vrot.slane %v5226, 4
        %v5228 = vadd.f32 %v5226, %v5227
        %v5229 = vrot.slane %v5228, 2
        %v5230 = vadd.f32 %v5228, %v5229
        %v5231 = vrot.slane %v5230, 1
        %v5232 = vadd.f32 %v5230, %v5231
        %v5233 = vsel %vm1298, %v836, 0.0
        %v5234 = vrot.slane %v5233, 4
        %v5235 = vadd.f32 %v5233, %v5234
        %v5236 = vrot.slane %v5235, 2
        %v5237 = vadd.f32 %v5235, %v5236
        %v5238 = vrot.slane %v5237, 1
        %v5239 = vadd.f32 %v5237, %v5238
        %v5240 = vsel %vm1298, %v837, 0.0
        %v5241 = vrot.slane %v5240, 4
        %v5242 = vadd.f32 %v5240, %v5241
        %v5243 = vrot.slane %v5242, 2
        %v5244 = vadd.f32 %v5242, %v5243
        %v5245 = vrot.slane %v5244, 1
        %v5246 = vadd.f32 %v5244, %v5245
        %v5247 = vsel %vm1298, %v838, 0.0
        %v5248 = vrot.slane %v5247, 4
        %v5249 = vadd.f32 %v5247, %v5248
        %v5250 = vrot.slane %v5249, 2
        %v5251 = vadd.f32 %v5249, %v5250
        %v5252 = vrot.slane %v5251, 1
        %v5253 = vadd.f32 %v5251, %v5252
        %v5254 = vsel %vm1298, %v839, 0.0
        %v5255 = vrot.slane %v5254, 4
        %v5256 = vadd.f32 %v5254, %v5255
        %v5257 = vrot.slane %v5256, 2
        %v5258 = vadd.f32 %v5256, %v5257
        %v5259 = vrot.slane %v5258, 1
        %v5260 = vadd.f32 %v5258, %v5259
        %v5261 = vsel %vm1298, %v840, 0.0
        %v5262 = vrot.slane %v5261, 4
        %v5263 = vadd.f32 %v5261, %v5262
        %v5264 = vrot.slane %v5263, 2
        %v5265 = vadd.f32 %v5263, %v5264
        %v5266 = vrot.slane %v5265, 1
        %v5267 = vadd.f32 %v5265, %v5266
        %v5268 = vsel %vm1298, %v841, 0.0
        %v5269 = vrot.slane %v5268, 4
        %v5270 = vadd.f32 %v5268, %v5269
        %v5271 = vrot.slane %v5270, 2
        %v5272 = vadd.f32 %v5270, %v5271
        %v5273 = vrot.slane %v5272, 1
        %v5274 = vadd.f32 %v5272, %v5273
        %v5275 = vsel %vm1298, %v842, 0.0
        %v5276 = vrot.slane %v5275, 4
        %v5277 = vadd.f32 %v5275, %v5276
        %v5278 = vrot.slane %v5277, 2
        %v5279 = vadd.f32 %v5277, %v5278
        %v5280 = vrot.slane %v5279, 1
        %v5281 = vadd.f32 %v5279, %v5280
        %v5282 = vsel %vm1298, %v843, 0.0
        %v5283 = vrot.slane %v5282, 4
        %v5284 = vadd.f32 %v5282, %v5283
        %v5285 = vrot.slane %v5284, 2
        %v5286 = vadd.f32 %v5284, %v5285
        %v5287 = vrot.slane %v5286, 1
        %v5288 = vadd.f32 %v5286, %v5287
        %v5289 = vsel %vm1298, %v844, 0.0
        %v5290 = vrot.slane %v5289, 4
        %v5291 = vadd.f32 %v5289, %v5290
        %v5292 = vrot.slane %v5291, 2
        %v5293 = vadd.f32 %v5291, %v5292
        %v5294 = vrot.slane %v5293, 1
        %v5295 = vadd.f32 %v5293, %v5294
        %v5296 = vsel %vm1298, %v845, 0.0
        %v5297 = vrot.slane %v5296, 4
        %v5298 = vadd.f32 %v5296, %v5297
        %v5299 = vrot.slane %v5298, 2
        %v5300 = vadd.f32 %v5298, %v5299
        %v5301 = vrot.slane %v5300, 1
        %v5302 = vadd.f32 %v5300, %v5301
        %v5303 = vsel %vm1298, %v846, 0.0
        %v5304 = vrot.slane %v5303, 4
        %v5305 = vadd.f32 %v5303, %v5304
        %v5306 = vrot.slane %v5305, 2
        %v5307 = vadd.f32 %v5305, %v5306
        %v5308 = vrot.slane %v5307, 1
        %v5309 = vadd.f32 %v5307, %v5308
        %v5310 = vsel %vm1298, %v847, 0.0
        %v5311 = vrot.slane %v5310, 4
        %v5312 = vadd.f32 %v5310, %v5311
        %v5313 = vrot.slane %v5312, 2
        %v5314 = vadd.f32 %v5312, %v5313
        %v5315 = vrot.slane %v5314, 1
        %v5316 = vadd.f32 %v5314, %v5315
        %v5317 = vsel %vm1298, %v848, 0.0
        %v5318 = vrot.slane %v5317, 4
        %v5319 = vadd.f32 %v5317, %v5318
        %v5320 = vrot.slane %v5319, 2
        %v5321 = vadd.f32 %v5319, %v5320
        %v5322 = vrot.slane %v5321, 1
        %v5323 = vadd.f32 %v5321, %v5322
        %v5324 = vsel %vm1298, %v849, 0.0
        %v5325 = vrot.slane %v5324, 4
        %v5326 = vadd.f32 %v5324, %v5325
        %v5327 = vrot.slane %v5326, 2
        %v5328 = vadd.f32 %v5326, %v5327
        %v5329 = vrot.slane %v5328, 1
        %v5330 = vadd.f32 %v5328, %v5329
        %v5331 = vsel %vm1298, %v850, 0.0
        %v5332 = vrot.slane %v5331, 4
        %v5333 = vadd.f32 %v5331, %v5332
        %v5334 = vrot.slane %v5333, 2
        %v5335 = vadd.f32 %v5333, %v5334
        %v5336 = vrot.slane %v5335, 1
        %v5337 = vadd.f32 %v5335, %v5336
        %v5338 = vsel %vm1298, %v851, 0.0
        %v5339 = vrot.slane %v5338, 4
        %v5340 = vadd.f32 %v5338, %v5339
        %v5341 = vrot.slane %v5340, 2
        %v5342 = vadd.f32 %v5340, %v5341
        %v5343 = vrot.slane %v5342, 1
        %v5344 = vadd.f32 %v5342, %v5343
        %v5345 = vsel %vm1298, %v852, 0.0
        %v5346 = vrot.slane %v5345, 4
        %v5347 = vadd.f32 %v5345, %v5346
        %v5348 = vrot.slane %v5347, 2
        %v5349 = vadd.f32 %v5347, %v5348
        %v5350 = vrot.slane %v5349, 1
        %v5351 = vadd.f32 %v5349, %v5350
        %v5352 = vsel %vm1298, %v853, 0.0
        %v5353 = vrot.slane %v5352, 4
        %v5354 = vadd.f32 %v5352, %v5353
        %v5355 = vrot.slane %v5354, 2
        %v5356 = vadd.f32 %v5354, %v5355
        %v5357 = vrot.slane %v5356, 1
        %v5358 = vadd.f32 %v5356, %v5357
        %v5359 = vsel %vm1298, %v854, 0.0
        %v5360 = vrot.slane %v5359, 4
        %v5361 = vadd.f32 %v5359, %v5360
        %v5362 = vrot.slane %v5361, 2
        %v5363 = vadd.f32 %v5361, %v5362
        %v5364 = vrot.slane %v5363, 1
        %v5365 = vadd.f32 %v5363, %v5364
        %v5366 = vsel %vm1298, %v855, 0.0
        %v5367 = vrot.slane %v5366, 4
        %v5368 = vadd.f32 %v5366, %v5367
        %v5369 = vrot.slane %v5368, 2
        %v5370 = vadd.f32 %v5368, %v5369
        %v5371 = vrot.slane %v5370, 1
        %v5372 = vadd.f32 %v5370, %v5371
        %v5373 = vsel %vm1298, %v856, 0.0
        %v5374 = vrot.slane %v5373, 4
        %v5375 = vadd.f32 %v5373, %v5374
        %v5376 = vrot.slane %v5375, 2
        %v5377 = vadd.f32 %v5375, %v5376
        %v5378 = vrot.slane %v5377, 1
        %v5379 = vadd.f32 %v5377, %v5378
        %v5380 = vsel %vm1298, %v857, 0.0
        %v5381 = vrot.slane %v5380, 4
        %v5382 = vadd.f32 %v5380, %v5381
        %v5383 = vrot.slane %v5382, 2
        %v5384 = vadd.f32 %v5382, %v5383
        %v5385 = vrot.slane %v5384, 1
        %v5386 = vadd.f32 %v5384, %v5385
        %v5387 = vsel %vm1298, %v858, 0.0
        %v5388 = vrot.slane %v5387, 4
        %v5389 = vadd.f32 %v5387, %v5388
        %v5390 = vrot.slane %v5389, 2
        %v5391 = vadd.f32 %v5389, %v5390
        %v5392 = vrot.slane %v5391, 1
        %v5393 = vadd.f32 %v5391, %v5392
        %v5394 = vsel %vm1298, %v859, 0.0
        %v5395 = vrot.slane %v5394, 4
        %v5396 = vadd.f32 %v5394, %v5395
        %v5397 = vrot.slane %v5396, 2
        %v5398 = vadd.f32 %v5396, %v5397
        %v5399 = vrot.slane %v5398, 1
        %v5400 = vadd.f32 %v5398, %v5399
        %v5401 = vsel %vm1298, %v860, 0.0
        %v5402 = vrot.slane %v5401, 4
        %v5403 = vadd.f32 %v5401, %v5402
        %v5404 = vrot.slane %v5403, 2
        %v5405 = vadd.f32 %v5403, %v5404
        %v5406 = vrot.slane %v5405, 1
        %v5407 = vadd.f32 %v5405, %v5406
        %v5408 = vsel %vm1298, %v861, 0.0
        %v5409 = vrot.slane %v5408, 4
        %v5410 = vadd.f32 %v5408, %v5409
        %v5411 = vrot.slane %v5410, 2
        %v5412 = vadd.f32 %v5410, %v5411
        %v5413 = vrot.slane %v5412, 1
        %v5414 = vadd.f32 %v5412, %v5413
        %v5415 = vsel %vm1298, %v862, 0.0
        %v5416 = vrot.slane %v5415, 4
        %v5417 = vadd.f32 %v5415, %v5416
        %v5418 = vrot.slane %v5417, 2
        %v5419 = vadd.f32 %v5417, %v5418
        %v5420 = vrot.slane %v5419, 1
        %v5421 = vadd.f32 %v5419, %v5420
        %v5422 = vsel %vm1298, %v863, 0.0
        %v5423 = vrot.slane %v5422, 4
        %v5424 = vadd.f32 %v5422, %v5423
        %v5425 = vrot.slane %v5424, 2
        %v5426 = vadd.f32 %v5424, %v5425
        %v5427 = vrot.slane %v5426, 1
        %v5428 = vadd.f32 %v5426, %v5427
        %v5429 = vsel %vm1298, %v864, 0.0
        %v5430 = vrot.slane %v5429, 4
        %v5431 = vadd.f32 %v5429, %v5430
        %v5432 = vrot.slane %v5431, 2
        %v5433 = vadd.f32 %v5431, %v5432
        %v5434 = vrot.slane %v5433, 1
        %v5435 = vadd.f32 %v5433, %v5434
        %v5436 = vsel %vm1298, %v865, 0.0
        %v5437 = vrot.slane %v5436, 4
        %v5438 = vadd.f32 %v5436, %v5437
        %v5439 = vrot.slane %v5438, 2
        %v5440 = vadd.f32 %v5438, %v5439
        %v5441 = vrot.slane %v5440, 1
        %v5442 = vadd.f32 %v5440, %v5441
        %v5443 = vsel %vm1298, %v866, 0.0
        %v5444 = vrot.slane %v5443, 4
        %v5445 = vadd.f32 %v5443, %v5444
        %v5446 = vrot.slane %v5445, 2
        %v5447 = vadd.f32 %v5445, %v5446
        %v5448 = vrot.slane %v5447, 1
        %v5449 = vadd.f32 %v5447, %v5448
        %v5450 = vsel %vm1298, %v867, 0.0
        %v5451 = vrot.slane %v5450, 4
        %v5452 = vadd.f32 %v5450, %v5451
        %v5453 = vrot.slane %v5452, 2
        %v5454 = vadd.f32 %v5452, %v5453
        %v5455 = vrot.slane %v5454, 1
        %v5456 = vadd.f32 %v5454, %v5455
        %v5457 = vsel %vm1298, %v868, 0.0
        %v5458 = vrot.slane %v5457, 4
        %v5459 = vadd.f32 %v5457, %v5458
        %v5460 = vrot.slane %v5459, 2
        %v5461 = vadd.f32 %v5459, %v5460
        %v5462 = vrot.slane %v5461, 1
        %v5463 = vadd.f32 %v5461, %v5462
        %v5464 = vsel %vm1298, %v869, 0.0
        %v5465 = vrot.slane %v5464, 4
        %v5466 = vadd.f32 %v5464, %v5465
        %v5467 = vrot.slane %v5466, 2
        %v5468 = vadd.f32 %v5466, %v5467
        %v5469 = vrot.slane %v5468, 1
        %v5470 = vadd.f32 %v5468, %v5469
        %v5471 = vsel %vm1298, %v870, 0.0
        %v5472 = vrot.slane %v5471, 4
        %v5473 = vadd.f32 %v5471, %v5472
        %v5474 = vrot.slane %v5473, 2
        %v5475 = vadd.f32 %v5473, %v5474
        %v5476 = vrot.slane %v5475, 1
        %v5477 = vadd.f32 %v5475, %v5476
        %v5478 = vsel %vm1298, %v871, 0.0
        %v5479 = vrot.slane %v5478, 4
        %v5480 = vadd.f32 %v5478, %v5479
        %v5481 = vrot.slane %v5480, 2
        %v5482 = vadd.f32 %v5480, %v5481
        %v5483 = vrot.slane %v5482, 1
        %v5484 = vadd.f32 %v5482, %v5483
        %v5485 = vsel %vm1298, %v872, 0.0
        %v5486 = vrot.slane %v5485, 4
        %v5487 = vadd.f32 %v5485, %v5486
        %v5488 = vrot.slane %v5487, 2
        %v5489 = vadd.f32 %v5487, %v5488
        %v5490 = vrot.slane %v5489, 1
        %v5491 = vadd.f32 %v5489, %v5490
        %v5492 = vsel %vm1298, %v873, 0.0
        %v5493 = vrot.slane %v5492, 4
        %v5494 = vadd.f32 %v5492, %v5493
        %v5495 = vrot.slane %v5494, 2
        %v5496 = vadd.f32 %v5494, %v5495
        %v5497 = vrot.slane %v5496, 1
        %v5498 = vadd.f32 %v5496, %v5497
        %v5499 = vsel %vm1298, %v874, 0.0
        %v5500 = vrot.slane %v5499, 4
        %v5501 = vadd.f32 %v5499, %v5500
        %v5502 = vrot.slane %v5501, 2
        %v5503 = vadd.f32 %v5501, %v5502
        %v5504 = vrot.slane %v5503, 1
        %v5505 = vadd.f32 %v5503, %v5504
        %v5506 = vsel %vm1298, %v875, 0.0
        %v5507 = vrot.slane %v5506, 4
        %v5508 = vadd.f32 %v5506, %v5507
        %v5509 = vrot.slane %v5508, 2
        %v5510 = vadd.f32 %v5508, %v5509
        %v5511 = vrot.slane %v5510, 1
        %v5512 = vadd.f32 %v5510, %v5511
        %v5513 = vsel %vm1298, %v876, 0.0
        %v5514 = vrot.slane %v5513, 4
        %v5515 = vadd.f32 %v5513, %v5514
        %v5516 = vrot.slane %v5515, 2
        %v5517 = vadd.f32 %v5515, %v5516
        %v5518 = vrot.slane %v5517, 1
        %v5519 = vadd.f32 %v5517, %v5518
        %v5520 = vsel %vm1298, %v877, 0.0
        %v5521 = vrot.slane %v5520, 4
        %v5522 = vadd.f32 %v5520, %v5521
        %v5523 = vrot.slane %v5522, 2
        %v5524 = vadd.f32 %v5522, %v5523
        %v5525 = vrot.slane %v5524, 1
        %v5526 = vadd.f32 %v5524, %v5525
        %v5527 = vsel %vm1298, %v878, 0.0
        %v5528 = vrot.slane %v5527, 4
        %v5529 = vadd.f32 %v5527, %v5528
        %v5530 = vrot.slane %v5529, 2
        %v5531 = vadd.f32 %v5529, %v5530
        %v5532 = vrot.slane %v5531, 1
        %v5533 = vadd.f32 %v5531, %v5532
        %v5534 = vsel %vm1298, %v879, 0.0
        %v5535 = vrot.slane %v5534, 4
        %v5536 = vadd.f32 %v5534, %v5535
        %v5537 = vrot.slane %v5536, 2
        %v5538 = vadd.f32 %v5536, %v5537
        %v5539 = vrot.slane %v5538, 1
        %v5540 = vadd.f32 %v5538, %v5539
        %v5541 = vsel %vm1298, %v880, 0.0
        %v5542 = vrot.slane %v5541, 4
        %v5543 = vadd.f32 %v5541, %v5542
        %v5544 = vrot.slane %v5543, 2
        %v5545 = vadd.f32 %v5543, %v5544
        %v5546 = vrot.slane %v5545, 1
        %v5547 = vadd.f32 %v5545, %v5546
        %v5548 = vsel %vm1298, %v881, 0.0
        %v5549 = vrot.slane %v5548, 4
        %v5550 = vadd.f32 %v5548, %v5549
        %v5551 = vrot.slane %v5550, 2
        %v5552 = vadd.f32 %v5550, %v5551
        %v5553 = vrot.slane %v5552, 1
        %v5554 = vadd.f32 %v5552, %v5553
        %v5555 = vsel %vm1298, %v882, 0.0
        %v5556 = vrot.slane %v5555, 4
        %v5557 = vadd.f32 %v5555, %v5556
        %v5558 = vrot.slane %v5557, 2
        %v5559 = vadd.f32 %v5557, %v5558
        %v5560 = vrot.slane %v5559, 1
        %v5561 = vadd.f32 %v5559, %v5560
        %v5562 = vsel %vm1298, %v883, 0.0
        %v5563 = vrot.slane %v5562, 4
        %v5564 = vadd.f32 %v5562, %v5563
        %v5565 = vrot.slane %v5564, 2
        %v5566 = vadd.f32 %v5564, %v5565
        %v5567 = vrot.slane %v5566, 1
        %v5568 = vadd.f32 %v5566, %v5567
        %v5569 = vsel %vm1298, %v884, 0.0
        %v5570 = vrot.slane %v5569, 4
        %v5571 = vadd.f32 %v5569, %v5570
        %v5572 = vrot.slane %v5571, 2
        %v5573 = vadd.f32 %v5571, %v5572
        %v5574 = vrot.slane %v5573, 1
        %v5575 = vadd.f32 %v5573, %v5574
        %v5576 = vsel %vm1298, %v885, 0.0
        %v5577 = vrot.slane %v5576, 4
        %v5578 = vadd.f32 %v5576, %v5577
        %v5579 = vrot.slane %v5578, 2
        %v5580 = vadd.f32 %v5578, %v5579
        %v5581 = vrot.slane %v5580, 1
        %v5582 = vadd.f32 %v5580, %v5581
        %v5583 = vsel %vm1298, %v886, 0.0
        %v5584 = vrot.slane %v5583, 4
        %v5585 = vadd.f32 %v5583, %v5584
        %v5586 = vrot.slane %v5585, 2
        %v5587 = vadd.f32 %v5585, %v5586
        %v5588 = vrot.slane %v5587, 1
        %v5589 = vadd.f32 %v5587, %v5588
        %v5590 = vsel %vm1298, %v887, 0.0
        %v5591 = vrot.slane %v5590, 4
        %v5592 = vadd.f32 %v5590, %v5591
        %v5593 = vrot.slane %v5592, 2
        %v5594 = vadd.f32 %v5592, %v5593
        %v5595 = vrot.slane %v5594, 1
        %v5596 = vadd.f32 %v5594, %v5595
        %v5597 = vsel %vm1298, %v888, 0.0
        %v5598 = vrot.slane %v5597, 4
        %v5599 = vadd.f32 %v5597, %v5598
        %v5600 = vrot.slane %v5599, 2
        %v5601 = vadd.f32 %v5599, %v5600
        %v5602 = vrot.slane %v5601, 1
        %v5603 = vadd.f32 %v5601, %v5602
        %v5604 = vsel %vm1298, %v889, 0.0
        %v5605 = vrot.slane %v5604, 4
        %v5606 = vadd.f32 %v5604, %v5605
        %v5607 = vrot.slane %v5606, 2
        %v5608 = vadd.f32 %v5606, %v5607
        %v5609 = vrot.slane %v5608, 1
        %v5610 = vadd.f32 %v5608, %v5609
        %v5611 = vsel %vm1298, %v890, 0.0
        %v5612 = vrot.slane %v5611, 4
        %v5613 = vadd.f32 %v5611, %v5612
        %v5614 = vrot.slane %v5613, 2
        %v5615 = vadd.f32 %v5613, %v5614
        %v5616 = vrot.slane %v5615, 1
        %v5617 = vadd.f32 %v5615, %v5616
        %v5618 = vsel %vm1298, %v891, 0.0
        %v5619 = vrot.slane %v5618, 4
        %v5620 = vadd.f32 %v5618, %v5619
        %v5621 = vrot.slane %v5620, 2
        %v5622 = vadd.f32 %v5620, %v5621
        %v5623 = vrot.slane %v5622, 1
        %v5624 = vadd.f32 %v5622, %v5623
        %v5625 = vsel %vm1298, %v892, 0.0
        %v5626 = vrot.slane %v5625, 4
        %v5627 = vadd.f32 %v5625, %v5626
        %v5628 = vrot.slane %v5627, 2
        %v5629 = vadd.f32 %v5627, %v5628
        %v5630 = vrot.slane %v5629, 1
        %v5631 = vadd.f32 %v5629, %v5630
        %v5632 = vsel %vm1298, %v893, 0.0
        %v5633 = vrot.slane %v5632, 4
        %v5634 = vadd.f32 %v5632, %v5633
        %v5635 = vrot.slane %v5634, 2
        %v5636 = vadd.f32 %v5634, %v5635
        %v5637 = vrot.slane %v5636, 1
        %v5638 = vadd.f32 %v5636, %v5637
        %v5639 = vsel %vm1298, %v894, 0.0
        %v5640 = vrot.slane %v5639, 4
        %v5641 = vadd.f32 %v5639, %v5640
        %v5642 = vrot.slane %v5641, 2
        %v5643 = vadd.f32 %v5641, %v5642
        %v5644 = vrot.slane %v5643, 1
        %v5645 = vadd.f32 %v5643, %v5644
        %v5646 = vsel %vm1298, %v895, 0.0
        %v5647 = vrot.slane %v5646, 4
        %v5648 = vadd.f32 %v5646, %v5647
        %v5649 = vrot.slane %v5648, 2
        %v5650 = vadd.f32 %v5648, %v5649
        %v5651 = vrot.slane %v5650, 1
        %v5652 = vadd.f32 %v5650, %v5651
        %v5653 = vsel %vm1298, %v896, 0.0
        %v5654 = vrot.slane %v5653, 4
        %v5655 = vadd.f32 %v5653, %v5654
        %v5656 = vrot.slane %v5655, 2
        %v5657 = vadd.f32 %v5655, %v5656
        %v5658 = vrot.slane %v5657, 1
        %v5659 = vadd.f32 %v5657, %v5658
        %v5660 = vsel %vm1298, %v897, 0.0
        %v5661 = vrot.slane %v5660, 4
        %v5662 = vadd.f32 %v5660, %v5661
        %v5663 = vrot.slane %v5662, 2
        %v5664 = vadd.f32 %v5662, %v5663
        %v5665 = vrot.slane %v5664, 1
        %v5666 = vadd.f32 %v5664, %v5665
        %v5667 = vsel %vm1298, %v898, 0.0
        %v5668 = vrot.slane %v5667, 4
        %v5669 = vadd.f32 %v5667, %v5668
        %v5670 = vrot.slane %v5669, 2
        %v5671 = vadd.f32 %v5669, %v5670
        %v5672 = vrot.slane %v5671, 1
        %v5673 = vadd.f32 %v5671, %v5672
        %v5674 = vsel %vm1298, %v899, 0.0
        %v5675 = vrot.slane %v5674, 4
        %v5676 = vadd.f32 %v5674, %v5675
        %v5677 = vrot.slane %v5676, 2
        %v5678 = vadd.f32 %v5676, %v5677
        %v5679 = vrot.slane %v5678, 1
        %v5680 = vadd.f32 %v5678, %v5679
        %v5681 = vsel %vm1298, %v900, 0.0
        %v5682 = vrot.slane %v5681, 4
        %v5683 = vadd.f32 %v5681, %v5682
        %v5684 = vrot.slane %v5683, 2
        %v5685 = vadd.f32 %v5683, %v5684
        %v5686 = vrot.slane %v5685, 1
        %v5687 = vadd.f32 %v5685, %v5686
        %v5688 = vsel %vm1298, %v901, 0.0
        %v5689 = vrot.slane %v5688, 4
        %v5690 = vadd.f32 %v5688, %v5689
        %v5691 = vrot.slane %v5690, 2
        %v5692 = vadd.f32 %v5690, %v5691
        %v5693 = vrot.slane %v5692, 1
        %v5694 = vadd.f32 %v5692, %v5693
        %v5695 = vsel %vm1298, %v902, 0.0
        %v5696 = vrot.slane %v5695, 4
        %v5697 = vadd.f32 %v5695, %v5696
        %v5698 = vrot.slane %v5697, 2
        %v5699 = vadd.f32 %v5697, %v5698
        %v5700 = vrot.slane %v5699, 1
        %v5701 = vadd.f32 %v5699, %v5700
        %v5702 = vsel %vm1298, %v903, 0.0
        %v5703 = vrot.slane %v5702, 4
        %v5704 = vadd.f32 %v5702, %v5703
        %v5705 = vrot.slane %v5704, 2
        %v5706 = vadd.f32 %v5704, %v5705
        %v5707 = vrot.slane %v5706, 1
        %v5708 = vadd.f32 %v5706, %v5707
        %v5709 = vsel %vm1298, %v904, 0.0
        %v5710 = vrot.slane %v5709, 4
        %v5711 = vadd.f32 %v5709, %v5710
        %v5712 = vrot.slane %v5711, 2
        %v5713 = vadd.f32 %v5711, %v5712
        %v5714 = vrot.slane %v5713, 1
        %v5715 = vadd.f32 %v5713, %v5714
        %v5716 = vsel %vm1298, %v905, 0.0
        %v5717 = vrot.slane %v5716, 4
        %v5718 = vadd.f32 %v5716, %v5717
        %v5719 = vrot.slane %v5718, 2
        %v5720 = vadd.f32 %v5718, %v5719
        %v5721 = vrot.slane %v5720, 1
        %v5722 = vadd.f32 %v5720, %v5721
        %v5723 = vsel %vm1298, %v906, 0.0
        %v5724 = vrot.slane %v5723, 4
        %v5725 = vadd.f32 %v5723, %v5724
        %v5726 = vrot.slane %v5725, 2
        %v5727 = vadd.f32 %v5725, %v5726
        %v5728 = vrot.slane %v5727, 1
        %v5729 = vadd.f32 %v5727, %v5728
        %v5730 = vsel %vm1298, %v907, 0.0
        %v5731 = vrot.slane %v5730, 4
        %v5732 = vadd.f32 %v5730, %v5731
        %v5733 = vrot.slane %v5732, 2
        %v5734 = vadd.f32 %v5732, %v5733
        %v5735 = vrot.slane %v5734, 1
        %v5736 = vadd.f32 %v5734, %v5735
        %v5737 = vsel %vm1298, %v908, 0.0
        %v5738 = vrot.slane %v5737, 4
        %v5739 = vadd.f32 %v5737, %v5738
        %v5740 = vrot.slane %v5739, 2
        %v5741 = vadd.f32 %v5739, %v5740
        %v5742 = vrot.slane %v5741, 1
        %v5743 = vadd.f32 %v5741, %v5742
        %v5744 = vsel %vm1298, %v909, 0.0
        %v5745 = vrot.slane %v5744, 4
        %v5746 = vadd.f32 %v5744, %v5745
        %v5747 = vrot.slane %v5746, 2
        %v5748 = vadd.f32 %v5746, %v5747
        %v5749 = vrot.slane %v5748, 1
        %v5750 = vadd.f32 %v5748, %v5749
        %v5751 = vsel %vm1298, %v910, 0.0
        %v5752 = vrot.slane %v5751, 4
        %v5753 = vadd.f32 %v5751, %v5752
        %v5754 = vrot.slane %v5753, 2
        %v5755 = vadd.f32 %v5753, %v5754
        %v5756 = vrot.slane %v5755, 1
        %v5757 = vadd.f32 %v5755, %v5756
        %v5758 = vsel %vm1298, %v911, 0.0
        %v5759 = vrot.slane %v5758, 4
        %v5760 = vadd.f32 %v5758, %v5759
        %v5761 = vrot.slane %v5760, 2
        %v5762 = vadd.f32 %v5760, %v5761
        %v5763 = vrot.slane %v5762, 1
        %v5764 = vadd.f32 %v5762, %v5763
        %v5765 = vsel %vm1298, %v912, 0.0
        %v5766 = vrot.slane %v5765, 4
        %v5767 = vadd.f32 %v5765, %v5766
        %v5768 = vrot.slane %v5767, 2
        %v5769 = vadd.f32 %v5767, %v5768
        %v5770 = vrot.slane %v5769, 1
        %v5771 = vadd.f32 %v5769, %v5770
        %v5772 = vsel %vm1298, %v913, 0.0
        %v5773 = vrot.slane %v5772, 4
        %v5774 = vadd.f32 %v5772, %v5773
        %v5775 = vrot.slane %v5774, 2
        %v5776 = vadd.f32 %v5774, %v5775
        %v5777 = vrot.slane %v5776, 1
        %v5778 = vadd.f32 %v5776, %v5777
        %v5779 = vsel %vm1298, %v914, 0.0
        %v5780 = vrot.slane %v5779, 4
        %v5781 = vadd.f32 %v5779, %v5780
        %v5782 = vrot.slane %v5781, 2
        %v5783 = vadd.f32 %v5781, %v5782
        %v5784 = vrot.slane %v5783, 1
        %v5785 = vadd.f32 %v5783, %v5784
        %v5786 = vsel %vm1298, %v915, 0.0
        %v5787 = vrot.slane %v5786, 4
        %v5788 = vadd.f32 %v5786, %v5787
        %v5789 = vrot.slane %v5788, 2
        %v5790 = vadd.f32 %v5788, %v5789
        %v5791 = vrot.slane %v5790, 1
        %v5792 = vadd.f32 %v5790, %v5791
        %v5793 = vsel %vm1298, %v916, 0.0
        %v5794 = vrot.slane %v5793, 4
        %v5795 = vadd.f32 %v5793, %v5794
        %v5796 = vrot.slane %v5795, 2
        %v5797 = vadd.f32 %v5795, %v5796
        %v5798 = vrot.slane %v5797, 1
        %v5799 = vadd.f32 %v5797, %v5798
        %v5800 = vsel %vm1298, %v917, 0.0
        %v5801 = vrot.slane %v5800, 4
        %v5802 = vadd.f32 %v5800, %v5801
        %v5803 = vrot.slane %v5802, 2
        %v5804 = vadd.f32 %v5802, %v5803
        %v5805 = vrot.slane %v5804, 1
        %v5806 = vadd.f32 %v5804, %v5805
        %v5807 = vsel %vm1298, %v918, 0.0
        %v5808 = vrot.slane %v5807, 4
        %v5809 = vadd.f32 %v5807, %v5808
        %v5810 = vrot.slane %v5809, 2
        %v5811 = vadd.f32 %v5809, %v5810
        %v5812 = vrot.slane %v5811, 1
        %v5813 = vadd.f32 %v5811, %v5812
        %v5814 = vsel %vm1298, %v919, 0.0
        %v5815 = vrot.slane %v5814, 4
        %v5816 = vadd.f32 %v5814, %v5815
        %v5817 = vrot.slane %v5816, 2
        %v5818 = vadd.f32 %v5816, %v5817
        %v5819 = vrot.slane %v5818, 1
        %v5820 = vadd.f32 %v5818, %v5819
        %v5821 = vsel %vm1298, %v920, 0.0
        %v5822 = vrot.slane %v5821, 4
        %v5823 = vadd.f32 %v5821, %v5822
        %v5824 = vrot.slane %v5823, 2
        %v5825 = vadd.f32 %v5823, %v5824
        %v5826 = vrot.slane %v5825, 1
        %v5827 = vadd.f32 %v5825, %v5826
        %v5828 = vsel %vm1298, %v921, 0.0
        %v5829 = vrot.slane %v5828, 4
        %v5830 = vadd.f32 %v5828, %v5829
        %v5831 = vrot.slane %v5830, 2
        %v5832 = vadd.f32 %v5830, %v5831
        %v5833 = vrot.slane %v5832, 1
        %v5834 = vadd.f32 %v5832, %v5833
        %v5835 = vsel %vm1298, %v922, 0.0
        %v5836 = vrot.slane %v5835, 4
        %v5837 = vadd.f32 %v5835, %v5836
        %v5838 = vrot.slane %v5837, 2
        %v5839 = vadd.f32 %v5837, %v5838
        %v5840 = vrot.slane %v5839, 1
        %v5841 = vadd.f32 %v5839, %v5840
        %v5842 = vsel %vm1298, %v923, 0.0
        %v5843 = vrot.slane %v5842, 4
        %v5844 = vadd.f32 %v5842, %v5843
        %v5845 = vrot.slane %v5844, 2
        %v5846 = vadd.f32 %v5844, %v5845
        %v5847 = vrot.slane %v5846, 1
        %v5848 = vadd.f32 %v5846, %v5847
        %v5849 = vsel %vm1298, %v924, 0.0
        %v5850 = vrot.slane %v5849, 4
        %v5851 = vadd.f32 %v5849, %v5850
        %v5852 = vrot.slane %v5851, 2
        %v5853 = vadd.f32 %v5851, %v5852
        %v5854 = vrot.slane %v5853, 1
        %v5855 = vadd.f32 %v5853, %v5854
        %v5856 = vsel %vm1298, %v925, 0.0
        %v5857 = vrot.slane %v5856, 4
        %v5858 = vadd.f32 %v5856, %v5857
        %v5859 = vrot.slane %v5858, 2
        %v5860 = vadd.f32 %v5858, %v5859
        %v5861 = vrot.slane %v5860, 1
        %v5862 = vadd.f32 %v5860, %v5861
        %v5863 = vsel %vm1298, %v926, 0.0
        %v5864 = vrot.slane %v5863, 4
        %v5865 = vadd.f32 %v5863, %v5864
        %v5866 = vrot.slane %v5865, 2
        %v5867 = vadd.f32 %v5865, %v5866
        %v5868 = vrot.slane %v5867, 1
        %v5869 = vadd.f32 %v5867, %v5868
        %v5870 = vsel %vm1298, %v927, 0.0
        %v5871 = vrot.slane %v5870, 4
        %v5872 = vadd.f32 %v5870, %v5871
        %v5873 = vrot.slane %v5872, 2
        %v5874 = vadd.f32 %v5872, %v5873
        %v5875 = vrot.slane %v5874, 1
        %v5876 = vadd.f32 %v5874, %v5875
        %v5877 = vsel %vm1298, %v928, 0.0
        %v5878 = vrot.slane %v5877, 4
        %v5879 = vadd.f32 %v5877, %v5878
        %v5880 = vrot.slane %v5879, 2
        %v5881 = vadd.f32 %v5879, %v5880
        %v5882 = vrot.slane %v5881, 1
        %v5883 = vadd.f32 %v5881, %v5882
        %v5884 = vsel %vm1298, %v929, 0.0
        %v5885 = vrot.slane %v5884, 4
        %v5886 = vadd.f32 %v5884, %v5885
        %v5887 = vrot.slane %v5886, 2
        %v5888 = vadd.f32 %v5886, %v5887
        %v5889 = vrot.slane %v5888, 1
        %v5890 = vadd.f32 %v5888, %v5889
        %v5891 = vsel %vm1298, %v930, 0.0
        %v5892 = vrot.slane %v5891, 4
        %v5893 = vadd.f32 %v5891, %v5892
        %v5894 = vrot.slane %v5893, 2
        %v5895 = vadd.f32 %v5893, %v5894
        %v5896 = vrot.slane %v5895, 1
        %v5897 = vadd.f32 %v5895, %v5896
        %v5898 = vsel %vm1298, %v931, 0.0
        %v5899 = vrot.slane %v5898, 4
        %v5900 = vadd.f32 %v5898, %v5899
        %v5901 = vrot.slane %v5900, 2
        %v5902 = vadd.f32 %v5900, %v5901
        %v5903 = vrot.slane %v5902, 1
        %v5904 = vadd.f32 %v5902, %v5903
        %v5905 = vsel %vm1298, %v932, 0.0
        %v5906 = vrot.slane %v5905, 4
        %v5907 = vadd.f32 %v5905, %v5906
        %v5908 = vrot.slane %v5907, 2
        %v5909 = vadd.f32 %v5907, %v5908
        %v5910 = vrot.slane %v5909, 1
        %v5911 = vadd.f32 %v5909, %v5910
        %v5912 = vsel %vm1298, %v933, 0.0
        %v5913 = vrot.slane %v5912, 4
        %v5914 = vadd.f32 %v5912, %v5913
        %v5915 = vrot.slane %v5914, 2
        %v5916 = vadd.f32 %v5914, %v5915
        %v5917 = vrot.slane %v5916, 1
        %v5918 = vadd.f32 %v5916, %v5917
        %v5919 = vsel %vm1298, %v934, 0.0
        %v5920 = vrot.slane %v5919, 4
        %v5921 = vadd.f32 %v5919, %v5920
        %v5922 = vrot.slane %v5921, 2
        %v5923 = vadd.f32 %v5921, %v5922
        %v5924 = vrot.slane %v5923, 1
        %v5925 = vadd.f32 %v5923, %v5924
        %v5926 = vsel %vm1298, %v935, 0.0
        %v5927 = vrot.slane %v5926, 4
        %v5928 = vadd.f32 %v5926, %v5927
        %v5929 = vrot.slane %v5928, 2
        %v5930 = vadd.f32 %v5928, %v5929
        %v5931 = vrot.slane %v5930, 1
        %v5932 = vadd.f32 %v5930, %v5931
        %v5933 = vsel %vm1298, %v936, 0.0
        %v5934 = vrot.slane %v5933, 4
        %v5935 = vadd.f32 %v5933, %v5934
        %v5936 = vrot.slane %v5935, 2
        %v5937 = vadd.f32 %v5935, %v5936
        %v5938 = vrot.slane %v5937, 1
        %v5939 = vadd.f32 %v5937, %v5938
        %v5940 = vsel %vm1298, %v937, 0.0
        %v5941 = vrot.slane %v5940, 4
        %v5942 = vadd.f32 %v5940, %v5941
        %v5943 = vrot.slane %v5942, 2
        %v5944 = vadd.f32 %v5942, %v5943
        %v5945 = vrot.slane %v5944, 1
        %v5946 = vadd.f32 %v5944, %v5945
        %v5947 = vsel %vm1298, %v938, 0.0
        %v5948 = vrot.slane %v5947, 4
        %v5949 = vadd.f32 %v5947, %v5948
        %v5950 = vrot.slane %v5949, 2
        %v5951 = vadd.f32 %v5949, %v5950
        %v5952 = vrot.slane %v5951, 1
        %v5953 = vadd.f32 %v5951, %v5952
        %v5954 = vsel %vm1298, %v939, 0.0
        %v5955 = vrot.slane %v5954, 4
        %v5956 = vadd.f32 %v5954, %v5955
        %v5957 = vrot.slane %v5956, 2
        %v5958 = vadd.f32 %v5956, %v5957
        %v5959 = vrot.slane %v5958, 1
        %v5960 = vadd.f32 %v5958, %v5959
        %v5961 = vsel %vm1298, %v940, 0.0
        %v5962 = vrot.slane %v5961, 4
        %v5963 = vadd.f32 %v5961, %v5962
        %v5964 = vrot.slane %v5963, 2
        %v5965 = vadd.f32 %v5963, %v5964
        %v5966 = vrot.slane %v5965, 1
        %v5967 = vadd.f32 %v5965, %v5966
        %v5968 = vsel %vm1298, %v941, 0.0
        %v5969 = vrot.slane %v5968, 4
        %v5970 = vadd.f32 %v5968, %v5969
        %v5971 = vrot.slane %v5970, 2
        %v5972 = vadd.f32 %v5970, %v5971
        %v5973 = vrot.slane %v5972, 1
        %v5974 = vadd.f32 %v5972, %v5973
        %v5975 = vsel %vm1298, %v942, 0.0
        %v5976 = vrot.slane %v5975, 4
        %v5977 = vadd.f32 %v5975, %v5976
        %v5978 = vrot.slane %v5977, 2
        %v5979 = vadd.f32 %v5977, %v5978
        %v5980 = vrot.slane %v5979, 1
        %v5981 = vadd.f32 %v5979, %v5980
        %v5982 = vsel %vm1298, %v943, 0.0
        %v5983 = vrot.slane %v5982, 4
        %v5984 = vadd.f32 %v5982, %v5983
        %v5985 = vrot.slane %v5984, 2
        %v5986 = vadd.f32 %v5984, %v5985
        %v5987 = vrot.slane %v5986, 1
        %v5988 = vadd.f32 %v5986, %v5987
        %v5989 = vsel %vm1298, %v944, 0.0
        %v5990 = vrot.slane %v5989, 4
        %v5991 = vadd.f32 %v5989, %v5990
        %v5992 = vrot.slane %v5991, 2
        %v5993 = vadd.f32 %v5991, %v5992
        %v5994 = vrot.slane %v5993, 1
        %v5995 = vadd.f32 %v5993, %v5994
        %v5996 = vsel %vm1298, %v945, 0.0
        %v5997 = vrot.slane %v5996, 4
        %v5998 = vadd.f32 %v5996, %v5997
        %v5999 = vrot.slane %v5998, 2
        %v6000 = vadd.f32 %v5998, %v5999
        %v6001 = vrot.slane %v6000, 1
        %v6002 = vadd.f32 %v6000, %v6001
        %v6003 = vsel %vm1298, %v946, 0.0
        %v6004 = vrot.slane %v6003, 4
        %v6005 = vadd.f32 %v6003, %v6004
        %v6006 = vrot.slane %v6005, 2
        %v6007 = vadd.f32 %v6005, %v6006
        %v6008 = vrot.slane %v6007, 1
        %v6009 = vadd.f32 %v6007, %v6008
        %v6010 = vsel %vm1298, %v947, 0.0
        %v6011 = vrot.slane %v6010, 4
        %v6012 = vadd.f32 %v6010, %v6011
        %v6013 = vrot.slane %v6012, 2
        %v6014 = vadd.f32 %v6012, %v6013
        %v6015 = vrot.slane %v6014, 1
        %v6016 = vadd.f32 %v6014, %v6015
        %v6017 = vsel %vm1298, %v948, 0.0
        %v6018 = vrot.slane %v6017, 4
        %v6019 = vadd.f32 %v6017, %v6018
        %v6020 = vrot.slane %v6019, 2
        %v6021 = vadd.f32 %v6019, %v6020
        %v6022 = vrot.slane %v6021, 1
        %v6023 = vadd.f32 %v6021, %v6022
        %v6024 = vsel %vm1298, %v949, 0.0
        %v6025 = vrot.slane %v6024, 4
        %v6026 = vadd.f32 %v6024, %v6025
        %v6027 = vrot.slane %v6026, 2
        %v6028 = vadd.f32 %v6026, %v6027
        %v6029 = vrot.slane %v6028, 1
        %v6030 = vadd.f32 %v6028, %v6029
        %v6031 = vsel %vm1298, %v950, 0.0
        %v6032 = vrot.slane %v6031, 4
        %v6033 = vadd.f32 %v6031, %v6032
        %v6034 = vrot.slane %v6033, 2
        %v6035 = vadd.f32 %v6033, %v6034
        %v6036 = vrot.slane %v6035, 1
        %v6037 = vadd.f32 %v6035, %v6036
        %v6038 = vsel %vm1298, %v951, 0.0
        %v6039 = vrot.slane %v6038, 4
        %v6040 = vadd.f32 %v6038, %v6039
        %v6041 = vrot.slane %v6040, 2
        %v6042 = vadd.f32 %v6040, %v6041
        %v6043 = vrot.slane %v6042, 1
        %v6044 = vadd.f32 %v6042, %v6043
        %v6045 = vsel %vm1298, %v952, 0.0
        %v6046 = vrot.slane %v6045, 4
        %v6047 = vadd.f32 %v6045, %v6046
        %v6048 = vrot.slane %v6047, 2
        %v6049 = vadd.f32 %v6047, %v6048
        %v6050 = vrot.slane %v6049, 1
        %v6051 = vadd.f32 %v6049, %v6050
        %v6052 = vsel %vm1298, %v953, 0.0
        %v6053 = vrot.slane %v6052, 4
        %v6054 = vadd.f32 %v6052, %v6053
        %v6055 = vrot.slane %v6054, 2
        %v6056 = vadd.f32 %v6054, %v6055
        %v6057 = vrot.slane %v6056, 1
        %v6058 = vadd.f32 %v6056, %v6057
        %v6059 = vsel %vm1298, %v954, 0.0
        %v6060 = vrot.slane %v6059, 4
        %v6061 = vadd.f32 %v6059, %v6060
        %v6062 = vrot.slane %v6061, 2
        %v6063 = vadd.f32 %v6061, %v6062
        %v6064 = vrot.slane %v6063, 1
        %v6065 = vadd.f32 %v6063, %v6064
        %v6066 = vsel %vm1298, %v955, 0.0
        %v6067 = vrot.slane %v6066, 4
        %v6068 = vadd.f32 %v6066, %v6067
        %v6069 = vrot.slane %v6068, 2
        %v6070 = vadd.f32 %v6068, %v6069
        %v6071 = vrot.slane %v6070, 1
        %v6072 = vadd.f32 %v6070, %v6071
        %v6073 = vsel %vm1298, %v956, 0.0
        %v6074 = vrot.slane %v6073, 4
        %v6075 = vadd.f32 %v6073, %v6074
        %v6076 = vrot.slane %v6075, 2
        %v6077 = vadd.f32 %v6075, %v6076
        %v6078 = vrot.slane %v6077, 1
        %v6079 = vadd.f32 %v6077, %v6078
        %v6080 = vsel %vm1298, %v957, 0.0
        %v6081 = vrot.slane %v6080, 4
        %v6082 = vadd.f32 %v6080, %v6081
        %v6083 = vrot.slane %v6082, 2
        %v6084 = vadd.f32 %v6082, %v6083
        %v6085 = vrot.slane %v6084, 1
        %v6086 = vadd.f32 %v6084, %v6085
        %v6087 = vsel %vm1298, %v958, 0.0
        %v6088 = vrot.slane %v6087, 4
        %v6089 = vadd.f32 %v6087, %v6088
        %v6090 = vrot.slane %v6089, 2
        %v6091 = vadd.f32 %v6089, %v6090
        %v6092 = vrot.slane %v6091, 1
        %v6093 = vadd.f32 %v6091, %v6092
        %v6094 = vsel %vm1298, %v959, 0.0
        %v6095 = vrot.slane %v6094, 4
        %v6096 = vadd.f32 %v6094, %v6095
        %v6097 = vrot.slane %v6096, 2
        %v6098 = vadd.f32 %v6096, %v6097
        %v6099 = vrot.slane %v6098, 1
        %v6100 = vadd.f32 %v6098, %v6099
        %v6101 = vsel %vm1298, %v960, 0.0
        %v6102 = vrot.slane %v6101, 4
        %v6103 = vadd.f32 %v6101, %v6102
        %v6104 = vrot.slane %v6103, 2
        %v6105 = vadd.f32 %v6103, %v6104
        %v6106 = vrot.slane %v6105, 1
        %v6107 = vadd.f32 %v6105, %v6106
        %v6108 = vsel %vm1298, %v961, 0.0
        %v6109 = vrot.slane %v6108, 4
        %v6110 = vadd.f32 %v6108, %v6109
        %v6111 = vrot.slane %v6110, 2
        %v6112 = vadd.f32 %v6110, %v6111
        %v6113 = vrot.slane %v6112, 1
        %v6114 = vadd.f32 %v6112, %v6113
        %v6115 = vsel %vm1298, %v962, 0.0
        %v6116 = vrot.slane %v6115, 4
        %v6117 = vadd.f32 %v6115, %v6116
        %v6118 = vrot.slane %v6117, 2
        %v6119 = vadd.f32 %v6117, %v6118
        %v6120 = vrot.slane %v6119, 1
        %v6121 = vadd.f32 %v6119, %v6120
        %v6122 = vsel %vm1298, %v963, 0.0
        %v6123 = vrot.slane %v6122, 4
        %v6124 = vadd.f32 %v6122, %v6123
        %v6125 = vrot.slane %v6124, 2
        %v6126 = vadd.f32 %v6124, %v6125
        %v6127 = vrot.slane %v6126, 1
        %v6128 = vadd.f32 %v6126, %v6127
        %v6129 = vsel %vm1298, %v964, 0.0
        %v6130 = vrot.slane %v6129, 4
        %v6131 = vadd.f32 %v6129, %v6130
        %v6132 = vrot.slane %v6131, 2
        %v6133 = vadd.f32 %v6131, %v6132
        %v6134 = vrot.slane %v6133, 1
        %v6135 = vadd.f32 %v6133, %v6134
        %v6136 = vsel %vm1298, %v965, 0.0
        %v6137 = vrot.slane %v6136, 4
        %v6138 = vadd.f32 %v6136, %v6137
        %v6139 = vrot.slane %v6138, 2
        %v6140 = vadd.f32 %v6138, %v6139
        %v6141 = vrot.slane %v6140, 1
        %v6142 = vadd.f32 %v6140, %v6141
        %v6143 = vsel %vm1298, %v966, 0.0
        %v6144 = vrot.slane %v6143, 4
        %v6145 = vadd.f32 %v6143, %v6144
        %v6146 = vrot.slane %v6145, 2
        %v6147 = vadd.f32 %v6145, %v6146
        %v6148 = vrot.slane %v6147, 1
        %v6149 = vadd.f32 %v6147, %v6148
        %v6150 = vsel %vm1298, %v967, 0.0
        %v6151 = vrot.slane %v6150, 4
        %v6152 = vadd.f32 %v6150, %v6151
        %v6153 = vrot.slane %v6152, 2
        %v6154 = vadd.f32 %v6152, %v6153
        %v6155 = vrot.slane %v6154, 1
        %v6156 = vadd.f32 %v6154, %v6155
        %v6157 = vsel %vm1298, %v968, 0.0
        %v6158 = vrot.slane %v6157, 4
        %v6159 = vadd.f32 %v6157, %v6158
        %v6160 = vrot.slane %v6159, 2
        %v6161 = vadd.f32 %v6159, %v6160
        %v6162 = vrot.slane %v6161, 1
        %v6163 = vadd.f32 %v6161, %v6162
        %v6164 = vsel %vm1298, %v969, 0.0
        %v6165 = vrot.slane %v6164, 4
        %v6166 = vadd.f32 %v6164, %v6165
        %v6167 = vrot.slane %v6166, 2
        %v6168 = vadd.f32 %v6166, %v6167
        %v6169 = vrot.slane %v6168, 1
        %v6170 = vadd.f32 %v6168, %v6169
        %v6171 = vsel %vm1298, %v970, 0.0
        %v6172 = vrot.slane %v6171, 4
        %v6173 = vadd.f32 %v6171, %v6172
        %v6174 = vrot.slane %v6173, 2
        %v6175 = vadd.f32 %v6173, %v6174
        %v6176 = vrot.slane %v6175, 1
        %v6177 = vadd.f32 %v6175, %v6176
        %v6178 = vsel %vm1298, %v971, 0.0
        %v6179 = vrot.slane %v6178, 4
        %v6180 = vadd.f32 %v6178, %v6179
        %v6181 = vrot.slane %v6180, 2
        %v6182 = vadd.f32 %v6180, %v6181
        %v6183 = vrot.slane %v6182, 1
        %v6184 = vadd.f32 %v6182, %v6183
        %v6185 = vsel %vm1298, %v972, 0.0
        %v6186 = vrot.slane %v6185, 4
        %v6187 = vadd.f32 %v6185, %v6186
        %v6188 = vrot.slane %v6187, 2
        %v6189 = vadd.f32 %v6187, %v6188
        %v6190 = vrot.slane %v6189, 1
        %v6191 = vadd.f32 %v6189, %v6190
        %v6192 = vsel %vm1298, %v973, 0.0
        %v6193 = vrot.slane %v6192, 4
        %v6194 = vadd.f32 %v6192, %v6193
        %v6195 = vrot.slane %v6194, 2
        %v6196 = vadd.f32 %v6194, %v6195
        %v6197 = vrot.slane %v6196, 1
        %v6198 = vadd.f32 %v6196, %v6197
        %v6199 = vsel %vm1298, %v974, 0.0
        %v6200 = vrot.slane %v6199, 4
        %v6201 = vadd.f32 %v6199, %v6200
        %v6202 = vrot.slane %v6201, 2
        %v6203 = vadd.f32 %v6201, %v6202
        %v6204 = vrot.slane %v6203, 1
        %v6205 = vadd.f32 %v6203, %v6204
        %v6206 = vsel %vm1298, %v975, 0.0
        %v6207 = vrot.slane %v6206, 4
        %v6208 = vadd.f32 %v6206, %v6207
        %v6209 = vrot.slane %v6208, 2
        %v6210 = vadd.f32 %v6208, %v6209
        %v6211 = vrot.slane %v6210, 1
        %v6212 = vadd.f32 %v6210, %v6211
        %v6213 = vsel %vm1298, %v976, 0.0
        %v6214 = vrot.slane %v6213, 4
        %v6215 = vadd.f32 %v6213, %v6214
        %v6216 = vrot.slane %v6215, 2
        %v6217 = vadd.f32 %v6215, %v6216
        %v6218 = vrot.slane %v6217, 1
        %v6219 = vadd.f32 %v6217, %v6218
        %v6220 = vsel %vm1298, %v977, 0.0
        %v6221 = vrot.slane %v6220, 4
        %v6222 = vadd.f32 %v6220, %v6221
        %v6223 = vrot.slane %v6222, 2
        %v6224 = vadd.f32 %v6222, %v6223
        %v6225 = vrot.slane %v6224, 1
        %v6226 = vadd.f32 %v6224, %v6225
        %v6227 = vsel %vm1298, %v978, 0.0
        %v6228 = vrot.slane %v6227, 4
        %v6229 = vadd.f32 %v6227, %v6228
        %v6230 = vrot.slane %v6229, 2
        %v6231 = vadd.f32 %v6229, %v6230
        %v6232 = vrot.slane %v6231, 1
        %v6233 = vadd.f32 %v6231, %v6232
        %v6234 = vsel %vm1298, %v979, 0.0
        %v6235 = vrot.slane %v6234, 4
        %v6236 = vadd.f32 %v6234, %v6235
        %v6237 = vrot.slane %v6236, 2
        %v6238 = vadd.f32 %v6236, %v6237
        %v6239 = vrot.slane %v6238, 1
        %v6240 = vadd.f32 %v6238, %v6239
        %v6241 = vsel %vm1298, %v980, 0.0
        %v6242 = vrot.slane %v6241, 4
        %v6243 = vadd.f32 %v6241, %v6242
        %v6244 = vrot.slane %v6243, 2
        %v6245 = vadd.f32 %v6243, %v6244
        %v6246 = vrot.slane %v6245, 1
        %v6247 = vadd.f32 %v6245, %v6246
        %v6248 = vsel %vm1298, %v981, 0.0
        %v6249 = vrot.slane %v6248, 4
        %v6250 = vadd.f32 %v6248, %v6249
        %v6251 = vrot.slane %v6250, 2
        %v6252 = vadd.f32 %v6250, %v6251
        %v6253 = vrot.slane %v6252, 1
        %v6254 = vadd.f32 %v6252, %v6253
        %v6255 = vsel %vm1298, %v982, 0.0
        %v6256 = vrot.slane %v6255, 4
        %v6257 = vadd.f32 %v6255, %v6256
        %v6258 = vrot.slane %v6257, 2
        %v6259 = vadd.f32 %v6257, %v6258
        %v6260 = vrot.slane %v6259, 1
        %v6261 = vadd.f32 %v6259, %v6260
        %v6262 = vsel %vm1298, %v983, 0.0
        %v6263 = vrot.slane %v6262, 4
        %v6264 = vadd.f32 %v6262, %v6263
        %v6265 = vrot.slane %v6264, 2
        %v6266 = vadd.f32 %v6264, %v6265
        %v6267 = vrot.slane %v6266, 1
        %v6268 = vadd.f32 %v6266, %v6267
        %v6269 = vsel %vm1298, %v984, 0.0
        %v6270 = vrot.slane %v6269, 4
        %v6271 = vadd.f32 %v6269, %v6270
        %v6272 = vrot.slane %v6271, 2
        %v6273 = vadd.f32 %v6271, %v6272
        %v6274 = vrot.slane %v6273, 1
        %v6275 = vadd.f32 %v6273, %v6274
        %v6276 = vsel %vm1298, %v985, 0.0
        %v6277 = vrot.slane %v6276, 4
        %v6278 = vadd.f32 %v6276, %v6277
        %v6279 = vrot.slane %v6278, 2
        %v6280 = vadd.f32 %v6278, %v6279
        %v6281 = vrot.slane %v6280, 1
        %v6282 = vadd.f32 %v6280, %v6281
        %v6283 = vsel %vm1298, %v986, 0.0
        %v6284 = vrot.slane %v6283, 4
        %v6285 = vadd.f32 %v6283, %v6284
        %v6286 = vrot.slane %v6285, 2
        %v6287 = vadd.f32 %v6285, %v6286
        %v6288 = vrot.slane %v6287, 1
        %v6289 = vadd.f32 %v6287, %v6288
        %v6290 = vsel %vm1298, %v987, 0.0
        %v6291 = vrot.slane %v6290, 4
        %v6292 = vadd.f32 %v6290, %v6291
        %v6293 = vrot.slane %v6292, 2
        %v6294 = vadd.f32 %v6292, %v6293
        %v6295 = vrot.slane %v6294, 1
        %v6296 = vadd.f32 %v6294, %v6295
        %v6297 = vsel %vm1298, %v988, 0.0
        %v6298 = vrot.slane %v6297, 4
        %v6299 = vadd.f32 %v6297, %v6298
        %v6300 = vrot.slane %v6299, 2
        %v6301 = vadd.f32 %v6299, %v6300
        %v6302 = vrot.slane %v6301, 1
        %v6303 = vadd.f32 %v6301, %v6302
        %v6304 = vsel %vm1298, %v989, 0.0
        %v6305 = vrot.slane %v6304, 4
        %v6306 = vadd.f32 %v6304, %v6305
        %v6307 = vrot.slane %v6306, 2
        %v6308 = vadd.f32 %v6306, %v6307
        %v6309 = vrot.slane %v6308, 1
        %v6310 = vadd.f32 %v6308, %v6309
        %v6311 = vsel %vm1298, %v990, 0.0
        %v6312 = vrot.slane %v6311, 4
        %v6313 = vadd.f32 %v6311, %v6312
        %v6314 = vrot.slane %v6313, 2
        %v6315 = vadd.f32 %v6313, %v6314
        %v6316 = vrot.slane %v6315, 1
        %v6317 = vadd.f32 %v6315, %v6316
        %v6318 = vsel %vm1298, %v991, 0.0
        %v6319 = vrot.slane %v6318, 4
        %v6320 = vadd.f32 %v6318, %v6319
        %v6321 = vrot.slane %v6320, 2
        %v6322 = vadd.f32 %v6320, %v6321
        %v6323 = vrot.slane %v6322, 1
        %v6324 = vadd.f32 %v6322, %v6323
        %v6325 = vsel %vm1298, %v992, 0.0
        %v6326 = vrot.slane %v6325, 4
        %v6327 = vadd.f32 %v6325, %v6326
        %v6328 = vrot.slane %v6327, 2
        %v6329 = vadd.f32 %v6327, %v6328
        %v6330 = vrot.slane %v6329, 1
        %v6331 = vadd.f32 %v6329, %v6330
        %v6332 = vsel %vm1298, %v993, 0.0
        %v6333 = vrot.slane %v6332, 4
        %v6334 = vadd.f32 %v6332, %v6333
        %v6335 = vrot.slane %v6334, 2
        %v6336 = vadd.f32 %v6334, %v6335
        %v6337 = vrot.slane %v6336, 1
        %v6338 = vadd.f32 %v6336, %v6337
        %v6339 = vsel %vm1298, %v994, 0.0
        %v6340 = vrot.slane %v6339, 4
        %v6341 = vadd.f32 %v6339, %v6340
        %v6342 = vrot.slane %v6341, 2
        %v6343 = vadd.f32 %v6341, %v6342
        %v6344 = vrot.slane %v6343, 1
        %v6345 = vadd.f32 %v6343, %v6344
        %v6346 = vsel %vm1298, %v995, 0.0
        %v6347 = vrot.slane %v6346, 4
        %v6348 = vadd.f32 %v6346, %v6347
        %v6349 = vrot.slane %v6348, 2
        %v6350 = vadd.f32 %v6348, %v6349
        %v6351 = vrot.slane %v6350, 1
        %v6352 = vadd.f32 %v6350, %v6351
        %v6353 = vsel %vm1298, %v996, 0.0
        %v6354 = vrot.slane %v6353, 4
        %v6355 = vadd.f32 %v6353, %v6354
        %v6356 = vrot.slane %v6355, 2
        %v6357 = vadd.f32 %v6355, %v6356
        %v6358 = vrot.slane %v6357, 1
        %v6359 = vadd.f32 %v6357, %v6358
        %v6360 = vsel %vm1298, %v997, 0.0
        %v6361 = vrot.slane %v6360, 4
        %v6362 = vadd.f32 %v6360, %v6361
        %v6363 = vrot.slane %v6362, 2
        %v6364 = vadd.f32 %v6362, %v6363
        %v6365 = vrot.slane %v6364, 1
        %v6366 = vadd.f32 %v6364, %v6365
        %v6367 = vsel %vm1298, %v998, 0.0
        %v6368 = vrot.slane %v6367, 4
        %v6369 = vadd.f32 %v6367, %v6368
        %v6370 = vrot.slane %v6369, 2
        %v6371 = vadd.f32 %v6369, %v6370
        %v6372 = vrot.slane %v6371, 1
        %v6373 = vadd.f32 %v6371, %v6372
        %v6374 = vsel %vm1298, %v999, 0.0
        %v6375 = vrot.slane %v6374, 4
        %v6376 = vadd.f32 %v6374, %v6375
        %v6377 = vrot.slane %v6376, 2
        %v6378 = vadd.f32 %v6376, %v6377
        %v6379 = vrot.slane %v6378, 1
        %v6380 = vadd.f32 %v6378, %v6379
        %v6381 = vsel %vm1298, %v1000, 0.0
        %v6382 = vrot.slane %v6381, 4
        %v6383 = vadd.f32 %v6381, %v6382
        %v6384 = vrot.slane %v6383, 2
        %v6385 = vadd.f32 %v6383, %v6384
        %v6386 = vrot.slane %v6385, 1
        %v6387 = vadd.f32 %v6385, %v6386
        %v6388 = vsel %vm1298, %v1001, 0.0
        %v6389 = vrot.slane %v6388, 4
        %v6390 = vadd.f32 %v6388, %v6389
        %v6391 = vrot.slane %v6390, 2
        %v6392 = vadd.f32 %v6390, %v6391
        %v6393 = vrot.slane %v6392, 1
        %v6394 = vadd.f32 %v6392, %v6393
        %v6395 = vsel %vm1298, %v1002, 0.0
        %v6396 = vrot.slane %v6395, 4
        %v6397 = vadd.f32 %v6395, %v6396
        %v6398 = vrot.slane %v6397, 2
        %v6399 = vadd.f32 %v6397, %v6398
        %v6400 = vrot.slane %v6399, 1
        %v6401 = vadd.f32 %v6399, %v6400
        %v6402 = vsel %vm1298, %v1003, 0.0
        %v6403 = vrot.slane %v6402, 4
        %v6404 = vadd.f32 %v6402, %v6403
        %v6405 = vrot.slane %v6404, 2
        %v6406 = vadd.f32 %v6404, %v6405
        %v6407 = vrot.slane %v6406, 1
        %v6408 = vadd.f32 %v6406, %v6407
        %v6409 = vsel %vm1298, %v1004, 0.0
        %v6410 = vrot.slane %v6409, 4
        %v6411 = vadd.f32 %v6409, %v6410
        %v6412 = vrot.slane %v6411, 2
        %v6413 = vadd.f32 %v6411, %v6412
        %v6414 = vrot.slane %v6413, 1
        %v6415 = vadd.f32 %v6413, %v6414
        %v6416 = vsel %vm1298, %v1005, 0.0
        %v6417 = vrot.slane %v6416, 4
        %v6418 = vadd.f32 %v6416, %v6417
        %v6419 = vrot.slane %v6418, 2
        %v6420 = vadd.f32 %v6418, %v6419
        %v6421 = vrot.slane %v6420, 1
        %v6422 = vadd.f32 %v6420, %v6421
        %v6423 = vsel %vm1298, %v1006, 0.0
        %v6424 = vrot.slane %v6423, 4
        %v6425 = vadd.f32 %v6423, %v6424
        %v6426 = vrot.slane %v6425, 2
        %v6427 = vadd.f32 %v6425, %v6426
        %v6428 = vrot.slane %v6427, 1
        %v6429 = vadd.f32 %v6427, %v6428
        %v6430 = vsel %vm1298, %v1007, 0.0
        %v6431 = vrot.slane %v6430, 4
        %v6432 = vadd.f32 %v6430, %v6431
        %v6433 = vrot.slane %v6432, 2
        %v6434 = vadd.f32 %v6432, %v6433
        %v6435 = vrot.slane %v6434, 1
        %v6436 = vadd.f32 %v6434, %v6435
        %v6437 = vsel %vm1298, %v1008, 0.0
        %v6438 = vrot.slane %v6437, 4
        %v6439 = vadd.f32 %v6437, %v6438
        %v6440 = vrot.slane %v6439, 2
        %v6441 = vadd.f32 %v6439, %v6440
        %v6442 = vrot.slane %v6441, 1
        %v6443 = vadd.f32 %v6441, %v6442
        %v6444 = vsel %vm1298, %v1009, 0.0
        %v6445 = vrot.slane %v6444, 4
        %v6446 = vadd.f32 %v6444, %v6445
        %v6447 = vrot.slane %v6446, 2
        %v6448 = vadd.f32 %v6446, %v6447
        %v6449 = vrot.slane %v6448, 1
        %v6450 = vadd.f32 %v6448, %v6449
        %v6451 = vsel %vm1298, %v1010, 0.0
        %v6452 = vrot.slane %v6451, 4
        %v6453 = vadd.f32 %v6451, %v6452
        %v6454 = vrot.slane %v6453, 2
        %v6455 = vadd.f32 %v6453, %v6454
        %v6456 = vrot.slane %v6455, 1
        %v6457 = vadd.f32 %v6455, %v6456
        %v6458 = vsel %vm1298, %v1011, 0.0
        %v6459 = vrot.slane %v6458, 4
        %v6460 = vadd.f32 %v6458, %v6459
        %v6461 = vrot.slane %v6460, 2
        %v6462 = vadd.f32 %v6460, %v6461
        %v6463 = vrot.slane %v6462, 1
        %v6464 = vadd.f32 %v6462, %v6463
        %v6465 = vsel %vm1298, %v1012, 0.0
        %v6466 = vrot.slane %v6465, 4
        %v6467 = vadd.f32 %v6465, %v6466
        %v6468 = vrot.slane %v6467, 2
        %v6469 = vadd.f32 %v6467, %v6468
        %v6470 = vrot.slane %v6469, 1
        %v6471 = vadd.f32 %v6469, %v6470
        %v6472 = vsel %vm1298, %v1013, 0.0
        %v6473 = vrot.slane %v6472, 4
        %v6474 = vadd.f32 %v6472, %v6473
        %v6475 = vrot.slane %v6474, 2
        %v6476 = vadd.f32 %v6474, %v6475
        %v6477 = vrot.slane %v6476, 1
        %v6478 = vadd.f32 %v6476, %v6477
        %v6479 = vsel %vm1298, %v1014, 0.0
        %v6480 = vrot.slane %v6479, 4
        %v6481 = vadd.f32 %v6479, %v6480
        %v6482 = vrot.slane %v6481, 2
        %v6483 = vadd.f32 %v6481, %v6482
        %v6484 = vrot.slane %v6483, 1
        %v6485 = vadd.f32 %v6483, %v6484
        %v6486 = vsel %vm1298, %v1015, 0.0
        %v6487 = vrot.slane %v6486, 4
        %v6488 = vadd.f32 %v6486, %v6487
        %v6489 = vrot.slane %v6488, 2
        %v6490 = vadd.f32 %v6488, %v6489
        %v6491 = vrot.slane %v6490, 1
        %v6492 = vadd.f32 %v6490, %v6491
        %v6493 = vsel %vm1298, %v1016, 0.0
        %v6494 = vrot.slane %v6493, 4
        %v6495 = vadd.f32 %v6493, %v6494
        %v6496 = vrot.slane %v6495, 2
        %v6497 = vadd.f32 %v6495, %v6496
        %v6498 = vrot.slane %v6497, 1
        %v6499 = vadd.f32 %v6497, %v6498
        %v6500 = vsel %vm1298, %v1017, 0.0
        %v6501 = vrot.slane %v6500, 4
        %v6502 = vadd.f32 %v6500, %v6501
        %v6503 = vrot.slane %v6502, 2
        %v6504 = vadd.f32 %v6502, %v6503
        %v6505 = vrot.slane %v6504, 1
        %v6506 = vadd.f32 %v6504, %v6505
        %v6507 = vsel %vm1298, %v1018, 0.0
        %v6508 = vrot.slane %v6507, 4
        %v6509 = vadd.f32 %v6507, %v6508
        %v6510 = vrot.slane %v6509, 2
        %v6511 = vadd.f32 %v6509, %v6510
        %v6512 = vrot.slane %v6511, 1
        %v6513 = vadd.f32 %v6511, %v6512
        %v6514 = vsel %vm1298, %v1019, 0.0
        %v6515 = vrot.slane %v6514, 4
        %v6516 = vadd.f32 %v6514, %v6515
        %v6517 = vrot.slane %v6516, 2
        %v6518 = vadd.f32 %v6516, %v6517
        %v6519 = vrot.slane %v6518, 1
        %v6520 = vadd.f32 %v6518, %v6519
        %v6521 = vsel %vm1298, %v1020, 0.0
        %v6522 = vrot.slane %v6521, 4
        %v6523 = vadd.f32 %v6521, %v6522
        %v6524 = vrot.slane %v6523, 2
        %v6525 = vadd.f32 %v6523, %v6524
        %v6526 = vrot.slane %v6525, 1
        %v6527 = vadd.f32 %v6525, %v6526
        %v6528 = vsel %vm1298, %v1021, 0.0
        %v6529 = vrot.slane %v6528, 4
        %v6530 = vadd.f32 %v6528, %v6529
        %v6531 = vrot.slane %v6530, 2
        %v6532 = vadd.f32 %v6530, %v6531
        %v6533 = vrot.slane %v6532, 1
        %v6534 = vadd.f32 %v6532, %v6533
        %v6535 = vsel %vm1298, %v1022, 0.0
        %v6536 = vrot.slane %v6535, 4
        %v6537 = vadd.f32 %v6535, %v6536
        %v6538 = vrot.slane %v6537, 2
        %v6539 = vadd.f32 %v6537, %v6538
        %v6540 = vrot.slane %v6539, 1
        %v6541 = vadd.f32 %v6539, %v6540
        %v6542 = vsel %vm1298, %v1023, 0.0
        %v6543 = vrot.slane %v6542, 4
        %v6544 = vadd.f32 %v6542, %v6543
        %v6545 = vrot.slane %v6544, 2
        %v6546 = vadd.f32 %v6544, %v6545
        %v6547 = vrot.slane %v6546, 1
        %v6548 = vadd.f32 %v6546, %v6547
        %v6549 = vsel %vm1298, %v1024, 0.0
        %v6550 = vrot.slane %v6549, 4
        %v6551 = vadd.f32 %v6549, %v6550
        %v6552 = vrot.slane %v6551, 2
        %v6553 = vadd.f32 %v6551, %v6552
        %v6554 = vrot.slane %v6553, 1
        %v6555 = vadd.f32 %v6553, %v6554
        %v6556 = vsel %vm1298, %v1025, 0.0
        %v6557 = vrot.slane %v6556, 4
        %v6558 = vadd.f32 %v6556, %v6557
        %v6559 = vrot.slane %v6558, 2
        %v6560 = vadd.f32 %v6558, %v6559
        %v6561 = vrot.slane %v6560, 1
        %v6562 = vadd.f32 %v6560, %v6561
        %v6563 = vsel %vm1298, %v1026, 0.0
        %v6564 = vrot.slane %v6563, 4
        %v6565 = vadd.f32 %v6563, %v6564
        %v6566 = vrot.slane %v6565, 2
        %v6567 = vadd.f32 %v6565, %v6566
        %v6568 = vrot.slane %v6567, 1
        %v6569 = vadd.f32 %v6567, %v6568
        %v6570 = vsel %vm1298, %v1027, 0.0
        %v6571 = vrot.slane %v6570, 4
        %v6572 = vadd.f32 %v6570, %v6571
        %v6573 = vrot.slane %v6572, 2
        %v6574 = vadd.f32 %v6572, %v6573
        %v6575 = vrot.slane %v6574, 1
        %v6576 = vadd.f32 %v6574, %v6575
        %v6577 = vsel %vm1298, %v1028, 0.0
        %v6578 = vrot.slane %v6577, 4
        %v6579 = vadd.f32 %v6577, %v6578
        %v6580 = vrot.slane %v6579, 2
        %v6581 = vadd.f32 %v6579, %v6580
        %v6582 = vrot.slane %v6581, 1
        %v6583 = vadd.f32 %v6581, %v6582
        %v6584 = vsel %vm1298, %v1029, 0.0
        %v6585 = vrot.slane %v6584, 4
        %v6586 = vadd.f32 %v6584, %v6585
        %v6587 = vrot.slane %v6586, 2
        %v6588 = vadd.f32 %v6586, %v6587
        %v6589 = vrot.slane %v6588, 1
        %v6590 = vadd.f32 %v6588, %v6589
        %v6591 = vsel %vm1298, %v1030, 0.0
        %v6592 = vrot.slane %v6591, 4
        %v6593 = vadd.f32 %v6591, %v6592
        %v6594 = vrot.slane %v6593, 2
        %v6595 = vadd.f32 %v6593, %v6594
        %v6596 = vrot.slane %v6595, 1
        %v6597 = vadd.f32 %v6595, %v6596
        %v6598 = vsel %vm1298, %v1031, 0.0
        %v6599 = vrot.slane %v6598, 4
        %v6600 = vadd.f32 %v6598, %v6599
        %v6601 = vrot.slane %v6600, 2
        %v6602 = vadd.f32 %v6600, %v6601
        %v6603 = vrot.slane %v6602, 1
        %v6604 = vadd.f32 %v6602, %v6603
        %v6605 = vsel %vm1298, %v1032, 0.0
        %v6606 = vrot.slane %v6605, 4
        %v6607 = vadd.f32 %v6605, %v6606
        %v6608 = vrot.slane %v6607, 2
        %v6609 = vadd.f32 %v6607, %v6608
        %v6610 = vrot.slane %v6609, 1
        %v6611 = vadd.f32 %v6609, %v6610
        %v6612 = vsel %vm1298, %v1033, 0.0
        %v6613 = vrot.slane %v6612, 4
        %v6614 = vadd.f32 %v6612, %v6613
        %v6615 = vrot.slane %v6614, 2
        %v6616 = vadd.f32 %v6614, %v6615
        %v6617 = vrot.slane %v6616, 1
        %v6618 = vadd.f32 %v6616, %v6617
        %v6619 = vsel %vm1298, %v1034, 0.0
        %v6620 = vrot.slane %v6619, 4
        %v6621 = vadd.f32 %v6619, %v6620
        %v6622 = vrot.slane %v6621, 2
        %v6623 = vadd.f32 %v6621, %v6622
        %v6624 = vrot.slane %v6623, 1
        %v6625 = vadd.f32 %v6623, %v6624
        %v6626 = vsel %vm1298, %v1035, 0.0
        %v6627 = vrot.slane %v6626, 4
        %v6628 = vadd.f32 %v6626, %v6627
        %v6629 = vrot.slane %v6628, 2
        %v6630 = vadd.f32 %v6628, %v6629
        %v6631 = vrot.slane %v6630, 1
        %v6632 = vadd.f32 %v6630, %v6631
        %v6633 = vsel %vm1298, %v1036, 0.0
        %v6634 = vrot.slane %v6633, 4
        %v6635 = vadd.f32 %v6633, %v6634
        %v6636 = vrot.slane %v6635, 2
        %v6637 = vadd.f32 %v6635, %v6636
        %v6638 = vrot.slane %v6637, 1
        %v6639 = vadd.f32 %v6637, %v6638
        %v6640 = vsel %vm1298, %v1037, 0.0
        %v6641 = vrot.slane %v6640, 4
        %v6642 = vadd.f32 %v6640, %v6641
        %v6643 = vrot.slane %v6642, 2
        %v6644 = vadd.f32 %v6642, %v6643
        %v6645 = vrot.slane %v6644, 1
        %v6646 = vadd.f32 %v6644, %v6645
        %v6647 = vsel %vm1298, %v1038, 0.0
        %v6648 = vrot.slane %v6647, 4
        %v6649 = vadd.f32 %v6647, %v6648
        %v6650 = vrot.slane %v6649, 2
        %v6651 = vadd.f32 %v6649, %v6650
        %v6652 = vrot.slane %v6651, 1
        %v6653 = vadd.f32 %v6651, %v6652
        %v6654 = vsel %vm1298, %v1039, 0.0
        %v6655 = vrot.slane %v6654, 4
        %v6656 = vadd.f32 %v6654, %v6655
        %v6657 = vrot.slane %v6656, 2
        %v6658 = vadd.f32 %v6656, %v6657
        %v6659 = vrot.slane %v6658, 1
        %v6660 = vadd.f32 %v6658, %v6659
        %v6661 = vsel %vm1298, %v1040, 0.0
        %v6662 = vrot.slane %v6661, 4
        %v6663 = vadd.f32 %v6661, %v6662
        %v6664 = vrot.slane %v6663, 2
        %v6665 = vadd.f32 %v6663, %v6664
        %v6666 = vrot.slane %v6665, 1
        %v6667 = vadd.f32 %v6665, %v6666
        %v6668 = vsel %vm1298, %v1041, 0.0
        %v6669 = vrot.slane %v6668, 4
        %v6670 = vadd.f32 %v6668, %v6669
        %v6671 = vrot.slane %v6670, 2
        %v6672 = vadd.f32 %v6670, %v6671
        %v6673 = vrot.slane %v6672, 1
        %v6674 = vadd.f32 %v6672, %v6673
        %v6675 = vsel %vm1298, %v1042, 0.0
        %v6676 = vrot.slane %v6675, 4
        %v6677 = vadd.f32 %v6675, %v6676
        %v6678 = vrot.slane %v6677, 2
        %v6679 = vadd.f32 %v6677, %v6678
        %v6680 = vrot.slane %v6679, 1
        %v6681 = vadd.f32 %v6679, %v6680
        %v6682 = vsel %vm1298, %v1043, 0.0
        %v6683 = vrot.slane %v6682, 4
        %v6684 = vadd.f32 %v6682, %v6683
        %v6685 = vrot.slane %v6684, 2
        %v6686 = vadd.f32 %v6684, %v6685
        %v6687 = vrot.slane %v6686, 1
        %v6688 = vadd.f32 %v6686, %v6687
        %v6689 = vsel %vm1298, %v1044, 0.0
        %v6690 = vrot.slane %v6689, 4
        %v6691 = vadd.f32 %v6689, %v6690
        %v6692 = vrot.slane %v6691, 2
        %v6693 = vadd.f32 %v6691, %v6692
        %v6694 = vrot.slane %v6693, 1
        %v6695 = vadd.f32 %v6693, %v6694
        %v6696 = vsel %vm1298, %v1045, 0.0
        %v6697 = vrot.slane %v6696, 4
        %v6698 = vadd.f32 %v6696, %v6697
        %v6699 = vrot.slane %v6698, 2
        %v6700 = vadd.f32 %v6698, %v6699
        %v6701 = vrot.slane %v6700, 1
        %v6702 = vadd.f32 %v6700, %v6701
        %v6703 = vsel %vm1298, %v1046, 0.0
        %v6704 = vrot.slane %v6703, 4
        %v6705 = vadd.f32 %v6703, %v6704
        %v6706 = vrot.slane %v6705, 2
        %v6707 = vadd.f32 %v6705, %v6706
        %v6708 = vrot.slane %v6707, 1
        %v6709 = vadd.f32 %v6707, %v6708
        %v6710 = vsel %vm1298, %v1047, 0.0
        %v6711 = vrot.slane %v6710, 4
        %v6712 = vadd.f32 %v6710, %v6711
        %v6713 = vrot.slane %v6712, 2
        %v6714 = vadd.f32 %v6712, %v6713
        %v6715 = vrot.slane %v6714, 1
        %v6716 = vadd.f32 %v6714, %v6715
        %v6717 = vsel %vm1298, %v1048, 0.0
        %v6718 = vrot.slane %v6717, 4
        %v6719 = vadd.f32 %v6717, %v6718
        %v6720 = vrot.slane %v6719, 2
        %v6721 = vadd.f32 %v6719, %v6720
        %v6722 = vrot.slane %v6721, 1
        %v6723 = vadd.f32 %v6721, %v6722
        %v6724 = vsel %vm1298, %v1049, 0.0
        %v6725 = vrot.slane %v6724, 4
        %v6726 = vadd.f32 %v6724, %v6725
        %v6727 = vrot.slane %v6726, 2
        %v6728 = vadd.f32 %v6726, %v6727
        %v6729 = vrot.slane %v6728, 1
        %v6730 = vadd.f32 %v6728, %v6729
        %v6731 = vsel %vm1298, %v1050, 0.0
        %v6732 = vrot.slane %v6731, 4
        %v6733 = vadd.f32 %v6731, %v6732
        %v6734 = vrot.slane %v6733, 2
        %v6735 = vadd.f32 %v6733, %v6734
        %v6736 = vrot.slane %v6735, 1
        %v6737 = vadd.f32 %v6735, %v6736
        %v6738 = vsel %vm1298, %v1051, 0.0
        %v6739 = vrot.slane %v6738, 4
        %v6740 = vadd.f32 %v6738, %v6739
        %v6741 = vrot.slane %v6740, 2
        %v6742 = vadd.f32 %v6740, %v6741
        %v6743 = vrot.slane %v6742, 1
        %v6744 = vadd.f32 %v6742, %v6743
        %v6745 = vsel %vm1298, %v1052, 0.0
        %v6746 = vrot.slane %v6745, 4
        %v6747 = vadd.f32 %v6745, %v6746
        %v6748 = vrot.slane %v6747, 2
        %v6749 = vadd.f32 %v6747, %v6748
        %v6750 = vrot.slane %v6749, 1
        %v6751 = vadd.f32 %v6749, %v6750
        %v6752 = vsel %vm1298, %v1053, 0.0
        %v6753 = vrot.slane %v6752, 4
        %v6754 = vadd.f32 %v6752, %v6753
        %v6755 = vrot.slane %v6754, 2
        %v6756 = vadd.f32 %v6754, %v6755
        %v6757 = vrot.slane %v6756, 1
        %v6758 = vadd.f32 %v6756, %v6757
        %v6759 = vsel %vm1298, %v1054, 0.0
        %v6760 = vrot.slane %v6759, 4
        %v6761 = vadd.f32 %v6759, %v6760
        %v6762 = vrot.slane %v6761, 2
        %v6763 = vadd.f32 %v6761, %v6762
        %v6764 = vrot.slane %v6763, 1
        %v6765 = vadd.f32 %v6763, %v6764
        %v6766 = vsel %vm1298, %v1055, 0.0
        %v6767 = vrot.slane %v6766, 4
        %v6768 = vadd.f32 %v6766, %v6767
        %v6769 = vrot.slane %v6768, 2
        %v6770 = vadd.f32 %v6768, %v6769
        %v6771 = vrot.slane %v6770, 1
        %v6772 = vadd.f32 %v6770, %v6771
        %v6773 = vsel %vm1298, %v1056, 0.0
        %v6774 = vrot.slane %v6773, 4
        %v6775 = vadd.f32 %v6773, %v6774
        %v6776 = vrot.slane %v6775, 2
        %v6777 = vadd.f32 %v6775, %v6776
        %v6778 = vrot.slane %v6777, 1
        %v6779 = vadd.f32 %v6777, %v6778
        %v6780 = vsel %vm1298, %v1057, 0.0
        %v6781 = vrot.slane %v6780, 4
        %v6782 = vadd.f32 %v6780, %v6781
        %v6783 = vrot.slane %v6782, 2
        %v6784 = vadd.f32 %v6782, %v6783
        %v6785 = vrot.slane %v6784, 1
        %v6786 = vadd.f32 %v6784, %v6785
        %v6787 = vsel %vm1298, %v1058, 0.0
        %v6788 = vrot.slane %v6787, 4
        %v6789 = vadd.f32 %v6787, %v6788
        %v6790 = vrot.slane %v6789, 2
        %v6791 = vadd.f32 %v6789, %v6790
        %v6792 = vrot.slane %v6791, 1
        %v6793 = vadd.f32 %v6791, %v6792
        %v6794 = vsel %vm1298, %v1059, 0.0
        %v6795 = vrot.slane %v6794, 4
        %v6796 = vadd.f32 %v6794, %v6795
        %v6797 = vrot.slane %v6796, 2
        %v6798 = vadd.f32 %v6796, %v6797
        %v6799 = vrot.slane %v6798, 1
        %v6800 = vadd.f32 %v6798, %v6799
        %v6801 = vsel %vm1298, %v1060, 0.0
        %v6802 = vrot.slane %v6801, 4
        %v6803 = vadd.f32 %v6801, %v6802
        %v6804 = vrot.slane %v6803, 2
        %v6805 = vadd.f32 %v6803, %v6804
        %v6806 = vrot.slane %v6805, 1
        %v6807 = vadd.f32 %v6805, %v6806
        %v6808 = vsel %vm1298, %v1061, 0.0
        %v6809 = vrot.slane %v6808, 4
        %v6810 = vadd.f32 %v6808, %v6809
        %v6811 = vrot.slane %v6810, 2
        %v6812 = vadd.f32 %v6810, %v6811
        %v6813 = vrot.slane %v6812, 1
        %v6814 = vadd.f32 %v6812, %v6813
        %v6815 = vsel %vm1298, %v1062, 0.0
        %v6816 = vrot.slane %v6815, 4
        %v6817 = vadd.f32 %v6815, %v6816
        %v6818 = vrot.slane %v6817, 2
        %v6819 = vadd.f32 %v6817, %v6818
        %v6820 = vrot.slane %v6819, 1
        %v6821 = vadd.f32 %v6819, %v6820
        %v6822 = vsel %vm1298, %v1063, 0.0
        %v6823 = vrot.slane %v6822, 4
        %v6824 = vadd.f32 %v6822, %v6823
        %v6825 = vrot.slane %v6824, 2
        %v6826 = vadd.f32 %v6824, %v6825
        %v6827 = vrot.slane %v6826, 1
        %v6828 = vadd.f32 %v6826, %v6827
        %v6829 = vsel %vm1298, %v1064, 0.0
        %v6830 = vrot.slane %v6829, 4
        %v6831 = vadd.f32 %v6829, %v6830
        %v6832 = vrot.slane %v6831, 2
        %v6833 = vadd.f32 %v6831, %v6832
        %v6834 = vrot.slane %v6833, 1
        %v6835 = vadd.f32 %v6833, %v6834
        %v6836 = vsel %vm1298, %v1065, 0.0
        %v6837 = vrot.slane %v6836, 4
        %v6838 = vadd.f32 %v6836, %v6837
        %v6839 = vrot.slane %v6838, 2
        %v6840 = vadd.f32 %v6838, %v6839
        %v6841 = vrot.slane %v6840, 1
        %v6842 = vadd.f32 %v6840, %v6841
        %v6843 = vsel %vm1298, %v1066, 0.0
        %v6844 = vrot.slane %v6843, 4
        %v6845 = vadd.f32 %v6843, %v6844
        %v6846 = vrot.slane %v6845, 2
        %v6847 = vadd.f32 %v6845, %v6846
        %v6848 = vrot.slane %v6847, 1
        %v6849 = vadd.f32 %v6847, %v6848
        %v6850 = vsel %vm1298, %v1067, 0.0
        %v6851 = vrot.slane %v6850, 4
        %v6852 = vadd.f32 %v6850, %v6851
        %v6853 = vrot.slane %v6852, 2
        %v6854 = vadd.f32 %v6852, %v6853
        %v6855 = vrot.slane %v6854, 1
        %v6856 = vadd.f32 %v6854, %v6855
        %v6857 = vsel %vm1298, %v1068, 0.0
        %v6858 = vrot.slane %v6857, 4
        %v6859 = vadd.f32 %v6857, %v6858
        %v6860 = vrot.slane %v6859, 2
        %v6861 = vadd.f32 %v6859, %v6860
        %v6862 = vrot.slane %v6861, 1
        %v6863 = vadd.f32 %v6861, %v6862
        %v6864 = vsel %vm1298, %v1069, 0.0
        %v6865 = vrot.slane %v6864, 4
        %v6866 = vadd.f32 %v6864, %v6865
        %v6867 = vrot.slane %v6866, 2
        %v6868 = vadd.f32 %v6866, %v6867
        %v6869 = vrot.slane %v6868, 1
        %v6870 = vadd.f32 %v6868, %v6869
        %v6871 = vsel %vm1298, %v1070, 0.0
        %v6872 = vrot.slane %v6871, 4
        %v6873 = vadd.f32 %v6871, %v6872
        %v6874 = vrot.slane %v6873, 2
        %v6875 = vadd.f32 %v6873, %v6874
        %v6876 = vrot.slane %v6875, 1
        %v6877 = vadd.f32 %v6875, %v6876
        %v6878 = vsel %vm1298, %v1071, 0.0
        %v6879 = vrot.slane %v6878, 4
        %v6880 = vadd.f32 %v6878, %v6879
        %v6881 = vrot.slane %v6880, 2
        %v6882 = vadd.f32 %v6880, %v6881
        %v6883 = vrot.slane %v6882, 1
        %v6884 = vadd.f32 %v6882, %v6883
        %v6885 = vsel %vm1298, %v1072, 0.0
        %v6886 = vrot.slane %v6885, 4
        %v6887 = vadd.f32 %v6885, %v6886
        %v6888 = vrot.slane %v6887, 2
        %v6889 = vadd.f32 %v6887, %v6888
        %v6890 = vrot.slane %v6889, 1
        %v6891 = vadd.f32 %v6889, %v6890
        %v6892 = vsel %vm1298, %v1073, 0.0
        %v6893 = vrot.slane %v6892, 4
        %v6894 = vadd.f32 %v6892, %v6893
        %v6895 = vrot.slane %v6894, 2
        %v6896 = vadd.f32 %v6894, %v6895
        %v6897 = vrot.slane %v6896, 1
        %v6898 = vadd.f32 %v6896, %v6897
        %v6899 = vsel %vm1298, %v1074, 0.0
        %v6900 = vrot.slane %v6899, 4
        %v6901 = vadd.f32 %v6899, %v6900
        %v6902 = vrot.slane %v6901, 2
        %v6903 = vadd.f32 %v6901, %v6902
        %v6904 = vrot.slane %v6903, 1
        %v6905 = vadd.f32 %v6903, %v6904
        %v6906 = vsel %vm1298, %v1075, 0.0
        %v6907 = vrot.slane %v6906, 4
        %v6908 = vadd.f32 %v6906, %v6907
        %v6909 = vrot.slane %v6908, 2
        %v6910 = vadd.f32 %v6908, %v6909
        %v6911 = vrot.slane %v6910, 1
        %v6912 = vadd.f32 %v6910, %v6911
        %v6913 = vsel %vm1298, %v1076, 0.0
        %v6914 = vrot.slane %v6913, 4
        %v6915 = vadd.f32 %v6913, %v6914
        %v6916 = vrot.slane %v6915, 2
        %v6917 = vadd.f32 %v6915, %v6916
        %v6918 = vrot.slane %v6917, 1
        %v6919 = vadd.f32 %v6917, %v6918
        %v6920 = vsel %vm1298, %v1077, 0.0
        %v6921 = vrot.slane %v6920, 4
        %v6922 = vadd.f32 %v6920, %v6921
        %v6923 = vrot.slane %v6922, 2
        %v6924 = vadd.f32 %v6922, %v6923
        %v6925 = vrot.slane %v6924, 1
        %v6926 = vadd.f32 %v6924, %v6925
        %v6927 = vsel %vm1298, %v1078, 0.0
        %v6928 = vrot.slane %v6927, 4
        %v6929 = vadd.f32 %v6927, %v6928
        %v6930 = vrot.slane %v6929, 2
        %v6931 = vadd.f32 %v6929, %v6930
        %v6932 = vrot.slane %v6931, 1
        %v6933 = vadd.f32 %v6931, %v6932
        %v6934 = vsel %vm1298, %v1079, 0.0
        %v6935 = vrot.slane %v6934, 4
        %v6936 = vadd.f32 %v6934, %v6935
        %v6937 = vrot.slane %v6936, 2
        %v6938 = vadd.f32 %v6936, %v6937
        %v6939 = vrot.slane %v6938, 1
        %v6940 = vadd.f32 %v6938, %v6939
        %v6941 = vsel %vm1298, %v1080, 0.0
        %v6942 = vrot.slane %v6941, 4
        %v6943 = vadd.f32 %v6941, %v6942
        %v6944 = vrot.slane %v6943, 2
        %v6945 = vadd.f32 %v6943, %v6944
        %v6946 = vrot.slane %v6945, 1
        %v6947 = vadd.f32 %v6945, %v6946
        %v6948 = vsel %vm1298, %v1081, 0.0
        %v6949 = vrot.slane %v6948, 4
        %v6950 = vadd.f32 %v6948, %v6949
        %v6951 = vrot.slane %v6950, 2
        %v6952 = vadd.f32 %v6950, %v6951
        %v6953 = vrot.slane %v6952, 1
        %v6954 = vadd.f32 %v6952, %v6953
        %v6955 = vsel %vm1298, %v1082, 0.0
        %v6956 = vrot.slane %v6955, 4
        %v6957 = vadd.f32 %v6955, %v6956
        %v6958 = vrot.slane %v6957, 2
        %v6959 = vadd.f32 %v6957, %v6958
        %v6960 = vrot.slane %v6959, 1
        %v6961 = vadd.f32 %v6959, %v6960
        %v6962 = vsel %vm1298, %v1083, 0.0
        %v6963 = vrot.slane %v6962, 4
        %v6964 = vadd.f32 %v6962, %v6963
        %v6965 = vrot.slane %v6964, 2
        %v6966 = vadd.f32 %v6964, %v6965
        %v6967 = vrot.slane %v6966, 1
        %v6968 = vadd.f32 %v6966, %v6967
        %v6969 = vsel %vm1298, %v1084, 0.0
        %v6970 = vrot.slane %v6969, 4
        %v6971 = vadd.f32 %v6969, %v6970
        %v6972 = vrot.slane %v6971, 2
        %v6973 = vadd.f32 %v6971, %v6972
        %v6974 = vrot.slane %v6973, 1
        %v6975 = vadd.f32 %v6973, %v6974
        %v6976 = vsel %vm1298, %v1085, 0.0
        %v6977 = vrot.slane %v6976, 4
        %v6978 = vadd.f32 %v6976, %v6977
        %v6979 = vrot.slane %v6978, 2
        %v6980 = vadd.f32 %v6978, %v6979
        %v6981 = vrot.slane %v6980, 1
        %v6982 = vadd.f32 %v6980, %v6981
        %v6983 = vsel %vm1298, %v1086, 0.0
        %v6984 = vrot.slane %v6983, 4
        %v6985 = vadd.f32 %v6983, %v6984
        %v6986 = vrot.slane %v6985, 2
        %v6987 = vadd.f32 %v6985, %v6986
        %v6988 = vrot.slane %v6987, 1
        %v6989 = vadd.f32 %v6987, %v6988
        %v6990 = vsel %vm1298, %v1087, 0.0
        %v6991 = vrot.slane %v6990, 4
        %v6992 = vadd.f32 %v6990, %v6991
        %v6993 = vrot.slane %v6992, 2
        %v6994 = vadd.f32 %v6992, %v6993
        %v6995 = vrot.slane %v6994, 1
        %v6996 = vadd.f32 %v6994, %v6995
        %v6997 = vsel %vm1298, %v1088, 0.0
        %v6998 = vrot.slane %v6997, 4
        %v6999 = vadd.f32 %v6997, %v6998
        %v7000 = vrot.slane %v6999, 2
        %v7001 = vadd.f32 %v6999, %v7000
        %v7002 = vrot.slane %v7001, 1
        %v7003 = vadd.f32 %v7001, %v7002
        %v7004 = vsel %vm1298, %v1089, 0.0
        %v7005 = vrot.slane %v7004, 4
        %v7006 = vadd.f32 %v7004, %v7005
        %v7007 = vrot.slane %v7006, 2
        %v7008 = vadd.f32 %v7006, %v7007
        %v7009 = vrot.slane %v7008, 1
        %v7010 = vadd.f32 %v7008, %v7009
        %v7011 = vsel %vm1298, %v1090, 0.0
        %v7012 = vrot.slane %v7011, 4
        %v7013 = vadd.f32 %v7011, %v7012
        %v7014 = vrot.slane %v7013, 2
        %v7015 = vadd.f32 %v7013, %v7014
        %v7016 = vrot.slane %v7015, 1
        %v7017 = vadd.f32 %v7015, %v7016
        %v7018 = vsel %vm1298, %v1091, 0.0
        %v7019 = vrot.slane %v7018, 4
        %v7020 = vadd.f32 %v7018, %v7019
        %v7021 = vrot.slane %v7020, 2
        %v7022 = vadd.f32 %v7020, %v7021
        %v7023 = vrot.slane %v7022, 1
        %v7024 = vadd.f32 %v7022, %v7023
        %v7025 = vsel %vm1298, %v1092, 0.0
        %v7026 = vrot.slane %v7025, 4
        %v7027 = vadd.f32 %v7025, %v7026
        %v7028 = vrot.slane %v7027, 2
        %v7029 = vadd.f32 %v7027, %v7028
        %v7030 = vrot.slane %v7029, 1
        %v7031 = vadd.f32 %v7029, %v7030
        %v7032 = vsel %vm1298, %v1093, 0.0
        %v7033 = vrot.slane %v7032, 4
        %v7034 = vadd.f32 %v7032, %v7033
        %v7035 = vrot.slane %v7034, 2
        %v7036 = vadd.f32 %v7034, %v7035
        %v7037 = vrot.slane %v7036, 1
        %v7038 = vadd.f32 %v7036, %v7037
        %v7039 = vsel %vm1298, %v1094, 0.0
        %v7040 = vrot.slane %v7039, 4
        %v7041 = vadd.f32 %v7039, %v7040
        %v7042 = vrot.slane %v7041, 2
        %v7043 = vadd.f32 %v7041, %v7042
        %v7044 = vrot.slane %v7043, 1
        %v7045 = vadd.f32 %v7043, %v7044
        %v7046 = vsel %vm1298, %v1095, 0.0
        %v7047 = vrot.slane %v7046, 4
        %v7048 = vadd.f32 %v7046, %v7047
        %v7049 = vrot.slane %v7048, 2
        %v7050 = vadd.f32 %v7048, %v7049
        %v7051 = vrot.slane %v7050, 1
        %v7052 = vadd.f32 %v7050, %v7051
        %v7053 = vsel %vm1298, %v1096, 0.0
        %v7054 = vrot.slane %v7053, 4
        %v7055 = vadd.f32 %v7053, %v7054
        %v7056 = vrot.slane %v7055, 2
        %v7057 = vadd.f32 %v7055, %v7056
        %v7058 = vrot.slane %v7057, 1
        %v7059 = vadd.f32 %v7057, %v7058
        %v7060 = vsel %vm1298, %v1097, 0.0
        %v7061 = vrot.slane %v7060, 4
        %v7062 = vadd.f32 %v7060, %v7061
        %v7063 = vrot.slane %v7062, 2
        %v7064 = vadd.f32 %v7062, %v7063
        %v7065 = vrot.slane %v7064, 1
        %v7066 = vadd.f32 %v7064, %v7065
        %v7067 = vsel %vm1298, %v1098, 0.0
        %v7068 = vrot.slane %v7067, 4
        %v7069 = vadd.f32 %v7067, %v7068
        %v7070 = vrot.slane %v7069, 2
        %v7071 = vadd.f32 %v7069, %v7070
        %v7072 = vrot.slane %v7071, 1
        %v7073 = vadd.f32 %v7071, %v7072
        %v7074 = vsel %vm1298, %v1099, 0.0
        %v7075 = vrot.slane %v7074, 4
        %v7076 = vadd.f32 %v7074, %v7075
        %v7077 = vrot.slane %v7076, 2
        %v7078 = vadd.f32 %v7076, %v7077
        %v7079 = vrot.slane %v7078, 1
        %v7080 = vadd.f32 %v7078, %v7079
        %v7081 = vsel %vm1298, %v1100, 0.0
        %v7082 = vrot.slane %v7081, 4
        %v7083 = vadd.f32 %v7081, %v7082
        %v7084 = vrot.slane %v7083, 2
        %v7085 = vadd.f32 %v7083, %v7084
        %v7086 = vrot.slane %v7085, 1
        %v7087 = vadd.f32 %v7085, %v7086
        %v7088 = vsel %vm1298, %v1101, 0.0
        %v7089 = vrot.slane %v7088, 4
        %v7090 = vadd.f32 %v7088, %v7089
        %v7091 = vrot.slane %v7090, 2
        %v7092 = vadd.f32 %v7090, %v7091
        %v7093 = vrot.slane %v7092, 1
        %v7094 = vadd.f32 %v7092, %v7093
        %v7095 = vsel %vm1298, %v1102, 0.0
        %v7096 = vrot.slane %v7095, 4
        %v7097 = vadd.f32 %v7095, %v7096
        %v7098 = vrot.slane %v7097, 2
        %v7099 = vadd.f32 %v7097, %v7098
        %v7100 = vrot.slane %v7099, 1
        %v7101 = vadd.f32 %v7099, %v7100
        %v7102 = vsel %vm1298, %v1103, 0.0
        %v7103 = vrot.slane %v7102, 4
        %v7104 = vadd.f32 %v7102, %v7103
        %v7105 = vrot.slane %v7104, 2
        %v7106 = vadd.f32 %v7104, %v7105
        %v7107 = vrot.slane %v7106, 1
        %v7108 = vadd.f32 %v7106, %v7107
        %v7109 = vsel %vm1298, %v1104, 0.0
        %v7110 = vrot.slane %v7109, 4
        %v7111 = vadd.f32 %v7109, %v7110
        %v7112 = vrot.slane %v7111, 2
        %v7113 = vadd.f32 %v7111, %v7112
        %v7114 = vrot.slane %v7113, 1
        %v7115 = vadd.f32 %v7113, %v7114
        %v7116 = vsel %vm1298, %v1105, 0.0
        %v7117 = vrot.slane %v7116, 4
        %v7118 = vadd.f32 %v7116, %v7117
        %v7119 = vrot.slane %v7118, 2
        %v7120 = vadd.f32 %v7118, %v7119
        %v7121 = vrot.slane %v7120, 1
        %v7122 = vadd.f32 %v7120, %v7121
        %v7123 = vsel %vm1298, %v1106, 0.0
        %v7124 = vrot.slane %v7123, 4
        %v7125 = vadd.f32 %v7123, %v7124
        %v7126 = vrot.slane %v7125, 2
        %v7127 = vadd.f32 %v7125, %v7126
        %v7128 = vrot.slane %v7127, 1
        %v7129 = vadd.f32 %v7127, %v7128
        %v7130 = vsel %vm1298, %v1107, 0.0
        %v7131 = vrot.slane %v7130, 4
        %v7132 = vadd.f32 %v7130, %v7131
        %v7133 = vrot.slane %v7132, 2
        %v7134 = vadd.f32 %v7132, %v7133
        %v7135 = vrot.slane %v7134, 1
        %v7136 = vadd.f32 %v7134, %v7135
        %v7137 = vsel %vm1298, %v1108, 0.0
        %v7138 = vrot.slane %v7137, 4
        %v7139 = vadd.f32 %v7137, %v7138
        %v7140 = vrot.slane %v7139, 2
        %v7141 = vadd.f32 %v7139, %v7140
        %v7142 = vrot.slane %v7141, 1
        %v7143 = vadd.f32 %v7141, %v7142
        %v7144 = vsel %vm1298, %v1109, 0.0
        %v7145 = vrot.slane %v7144, 4
        %v7146 = vadd.f32 %v7144, %v7145
        %v7147 = vrot.slane %v7146, 2
        %v7148 = vadd.f32 %v7146, %v7147
        %v7149 = vrot.slane %v7148, 1
        %v7150 = vadd.f32 %v7148, %v7149
        %v7151 = vsel %vm1298, %v1110, 0.0
        %v7152 = vrot.slane %v7151, 4
        %v7153 = vadd.f32 %v7151, %v7152
        %v7154 = vrot.slane %v7153, 2
        %v7155 = vadd.f32 %v7153, %v7154
        %v7156 = vrot.slane %v7155, 1
        %v7157 = vadd.f32 %v7155, %v7156
        %v7158 = vsel %vm1298, %v1111, 0.0
        %v7159 = vrot.slane %v7158, 4
        %v7160 = vadd.f32 %v7158, %v7159
        %v7161 = vrot.slane %v7160, 2
        %v7162 = vadd.f32 %v7160, %v7161
        %v7163 = vrot.slane %v7162, 1
        %v7164 = vadd.f32 %v7162, %v7163
        %v7165 = vsel %vm1298, %v1112, 0.0
        %v7166 = vrot.slane %v7165, 4
        %v7167 = vadd.f32 %v7165, %v7166
        %v7168 = vrot.slane %v7167, 2
        %v7169 = vadd.f32 %v7167, %v7168
        %v7170 = vrot.slane %v7169, 1
        %v7171 = vadd.f32 %v7169, %v7170
        %v7172 = vsel %vm1298, %v1113, 0.0
        %v7173 = vrot.slane %v7172, 4
        %v7174 = vadd.f32 %v7172, %v7173
        %v7175 = vrot.slane %v7174, 2
        %v7176 = vadd.f32 %v7174, %v7175
        %v7177 = vrot.slane %v7176, 1
        %v7178 = vadd.f32 %v7176, %v7177
        %v7179 = vsel %vm1298, %v1114, 0.0
        %v7180 = vrot.slane %v7179, 4
        %v7181 = vadd.f32 %v7179, %v7180
        %v7182 = vrot.slane %v7181, 2
        %v7183 = vadd.f32 %v7181, %v7182
        %v7184 = vrot.slane %v7183, 1
        %v7185 = vadd.f32 %v7183, %v7184
        %v7186 = vsel %vm1298, %v1115, 0.0
        %v7187 = vrot.slane %v7186, 4
        %v7188 = vadd.f32 %v7186, %v7187
        %v7189 = vrot.slane %v7188, 2
        %v7190 = vadd.f32 %v7188, %v7189
        %v7191 = vrot.slane %v7190, 1
        %v7192 = vadd.f32 %v7190, %v7191
        %v7193 = vsel %vm1298, %v1116, 0.0
        %v7194 = vrot.slane %v7193, 4
        %v7195 = vadd.f32 %v7193, %v7194
        %v7196 = vrot.slane %v7195, 2
        %v7197 = vadd.f32 %v7195, %v7196
        %v7198 = vrot.slane %v7197, 1
        %v7199 = vadd.f32 %v7197, %v7198
        %v7200 = vsel %vm1298, %v1117, 0.0
        %v7201 = vrot.slane %v7200, 4
        %v7202 = vadd.f32 %v7200, %v7201
        %v7203 = vrot.slane %v7202, 2
        %v7204 = vadd.f32 %v7202, %v7203
        %v7205 = vrot.slane %v7204, 1
        %v7206 = vadd.f32 %v7204, %v7205
        %v7207 = vsel %vm1298, %v1118, 0.0
        %v7208 = vrot.slane %v7207, 4
        %v7209 = vadd.f32 %v7207, %v7208
        %v7210 = vrot.slane %v7209, 2
        %v7211 = vadd.f32 %v7209, %v7210
        %v7212 = vrot.slane %v7211, 1
        %v7213 = vadd.f32 %v7211, %v7212
        %v7214 = vsel %vm1298, %v1119, 0.0
        %v7215 = vrot.slane %v7214, 4
        %v7216 = vadd.f32 %v7214, %v7215
        %v7217 = vrot.slane %v7216, 2
        %v7218 = vadd.f32 %v7216, %v7217
        %v7219 = vrot.slane %v7218, 1
        %v7220 = vadd.f32 %v7218, %v7219
        %v7221 = vsel %vm1298, %v1120, 0.0
        %v7222 = vrot.slane %v7221, 4
        %v7223 = vadd.f32 %v7221, %v7222
        %v7224 = vrot.slane %v7223, 2
        %v7225 = vadd.f32 %v7223, %v7224
        %v7226 = vrot.slane %v7225, 1
        %v7227 = vadd.f32 %v7225, %v7226
        %v7228 = vsel %vm1298, %v1121, 0.0
        %v7229 = vrot.slane %v7228, 4
        %v7230 = vadd.f32 %v7228, %v7229
        %v7231 = vrot.slane %v7230, 2
        %v7232 = vadd.f32 %v7230, %v7231
        %v7233 = vrot.slane %v7232, 1
        %v7234 = vadd.f32 %v7232, %v7233
        %v7235 = vsel %vm1298, %v1122, 0.0
        %v7236 = vrot.slane %v7235, 4
        %v7237 = vadd.f32 %v7235, %v7236
        %v7238 = vrot.slane %v7237, 2
        %v7239 = vadd.f32 %v7237, %v7238
        %v7240 = vrot.slane %v7239, 1
        %v7241 = vadd.f32 %v7239, %v7240
        %v7242 = vsel %vm1298, %v1123, 0.0
        %v7243 = vrot.slane %v7242, 4
        %v7244 = vadd.f32 %v7242, %v7243
        %v7245 = vrot.slane %v7244, 2
        %v7246 = vadd.f32 %v7244, %v7245
        %v7247 = vrot.slane %v7246, 1
        %v7248 = vadd.f32 %v7246, %v7247
        %v7249 = vsel %vm1298, %v1124, 0.0
        %v7250 = vrot.slane %v7249, 4
        %v7251 = vadd.f32 %v7249, %v7250
        %v7252 = vrot.slane %v7251, 2
        %v7253 = vadd.f32 %v7251, %v7252
        %v7254 = vrot.slane %v7253, 1
        %v7255 = vadd.f32 %v7253, %v7254
        %v7256 = vsel %vm1298, %v1125, 0.0
        %v7257 = vrot.slane %v7256, 4
        %v7258 = vadd.f32 %v7256, %v7257
        %v7259 = vrot.slane %v7258, 2
        %v7260 = vadd.f32 %v7258, %v7259
        %v7261 = vrot.slane %v7260, 1
        %v7262 = vadd.f32 %v7260, %v7261
        %v7263 = vsel %vm1298, %v1126, 0.0
        %v7264 = vrot.slane %v7263, 4
        %v7265 = vadd.f32 %v7263, %v7264
        %v7266 = vrot.slane %v7265, 2
        %v7267 = vadd.f32 %v7265, %v7266
        %v7268 = vrot.slane %v7267, 1
        %v7269 = vadd.f32 %v7267, %v7268
        %v7270 = vsel %vm1298, %v1127, 0.0
        %v7271 = vrot.slane %v7270, 4
        %v7272 = vadd.f32 %v7270, %v7271
        %v7273 = vrot.slane %v7272, 2
        %v7274 = vadd.f32 %v7272, %v7273
        %v7275 = vrot.slane %v7274, 1
        %v7276 = vadd.f32 %v7274, %v7275
        %v7277 = vsel %vm1298, %v1128, 0.0
        %v7278 = vrot.slane %v7277, 4
        %v7279 = vadd.f32 %v7277, %v7278
        %v7280 = vrot.slane %v7279, 2
        %v7281 = vadd.f32 %v7279, %v7280
        %v7282 = vrot.slane %v7281, 1
        %v7283 = vadd.f32 %v7281, %v7282
        %v7284 = vsel %vm1298, %v1129, 0.0
        %v7285 = vrot.slane %v7284, 4
        %v7286 = vadd.f32 %v7284, %v7285
        %v7287 = vrot.slane %v7286, 2
        %v7288 = vadd.f32 %v7286, %v7287
        %v7289 = vrot.slane %v7288, 1
        %v7290 = vadd.f32 %v7288, %v7289
        %v7291 = vsel %vm1298, %v1130, 0.0
        %v7292 = vrot.slane %v7291, 4
        %v7293 = vadd.f32 %v7291, %v7292
        %v7294 = vrot.slane %v7293, 2
        %v7295 = vadd.f32 %v7293, %v7294
        %v7296 = vrot.slane %v7295, 1
        %v7297 = vadd.f32 %v7295, %v7296
        %v7298 = vsel %vm1298, %v1131, 0.0
        %v7299 = vrot.slane %v7298, 4
        %v7300 = vadd.f32 %v7298, %v7299
        %v7301 = vrot.slane %v7300, 2
        %v7302 = vadd.f32 %v7300, %v7301
        %v7303 = vrot.slane %v7302, 1
        %v7304 = vadd.f32 %v7302, %v7303
        %v7305 = vsel %vm1298, %v1132, 0.0
        %v7306 = vrot.slane %v7305, 4
        %v7307 = vadd.f32 %v7305, %v7306
        %v7308 = vrot.slane %v7307, 2
        %v7309 = vadd.f32 %v7307, %v7308
        %v7310 = vrot.slane %v7309, 1
        %v7311 = vadd.f32 %v7309, %v7310
        %v7312 = vsel %vm1298, %v1133, 0.0
        %v7313 = vrot.slane %v7312, 4
        %v7314 = vadd.f32 %v7312, %v7313
        %v7315 = vrot.slane %v7314, 2
        %v7316 = vadd.f32 %v7314, %v7315
        %v7317 = vrot.slane %v7316, 1
        %v7318 = vadd.f32 %v7316, %v7317
        %v7319 = vsel %vm1298, %v1134, 0.0
        %v7320 = vrot.slane %v7319, 4
        %v7321 = vadd.f32 %v7319, %v7320
        %v7322 = vrot.slane %v7321, 2
        %v7323 = vadd.f32 %v7321, %v7322
        %v7324 = vrot.slane %v7323, 1
        %v7325 = vadd.f32 %v7323, %v7324
        %v7326 = vsel %vm1298, %v1135, 0.0
        %v7327 = vrot.slane %v7326, 4
        %v7328 = vadd.f32 %v7326, %v7327
        %v7329 = vrot.slane %v7328, 2
        %v7330 = vadd.f32 %v7328, %v7329
        %v7331 = vrot.slane %v7330, 1
        %v7332 = vadd.f32 %v7330, %v7331
        %v7333 = vsel %vm1298, %v1136, 0.0
        %v7334 = vrot.slane %v7333, 4
        %v7335 = vadd.f32 %v7333, %v7334
        %v7336 = vrot.slane %v7335, 2
        %v7337 = vadd.f32 %v7335, %v7336
        %v7338 = vrot.slane %v7337, 1
        %v7339 = vadd.f32 %v7337, %v7338
        %v7340 = vsel %vm1298, %v1137, 0.0
        %v7341 = vrot.slane %v7340, 4
        %v7342 = vadd.f32 %v7340, %v7341
        %v7343 = vrot.slane %v7342, 2
        %v7344 = vadd.f32 %v7342, %v7343
        %v7345 = vrot.slane %v7344, 1
        %v7346 = vadd.f32 %v7344, %v7345
        %v7347 = vsel %vm1298, %v1138, 0.0
        %v7348 = vrot.slane %v7347, 4
        %v7349 = vadd.f32 %v7347, %v7348
        %v7350 = vrot.slane %v7349, 2
        %v7351 = vadd.f32 %v7349, %v7350
        %v7352 = vrot.slane %v7351, 1
        %v7353 = vadd.f32 %v7351, %v7352
        %v7354 = vsel %vm1298, %v1139, 0.0
        %v7355 = vrot.slane %v7354, 4
        %v7356 = vadd.f32 %v7354, %v7355
        %v7357 = vrot.slane %v7356, 2
        %v7358 = vadd.f32 %v7356, %v7357
        %v7359 = vrot.slane %v7358, 1
        %v7360 = vadd.f32 %v7358, %v7359
        %v7361 = vsel %vm1298, %v1140, 0.0
        %v7362 = vrot.slane %v7361, 4
        %v7363 = vadd.f32 %v7361, %v7362
        %v7364 = vrot.slane %v7363, 2
        %v7365 = vadd.f32 %v7363, %v7364
        %v7366 = vrot.slane %v7365, 1
        %v7367 = vadd.f32 %v7365, %v7366
        %v7368 = vsel %vm1298, %v1141, 0.0
        %v7369 = vrot.slane %v7368, 4
        %v7370 = vadd.f32 %v7368, %v7369
        %v7371 = vrot.slane %v7370, 2
        %v7372 = vadd.f32 %v7370, %v7371
        %v7373 = vrot.slane %v7372, 1
        %v7374 = vadd.f32 %v7372, %v7373
        %v7375 = vsel %vm1298, %v1142, 0.0
        %v7376 = vrot.slane %v7375, 4
        %v7377 = vadd.f32 %v7375, %v7376
        %v7378 = vrot.slane %v7377, 2
        %v7379 = vadd.f32 %v7377, %v7378
        %v7380 = vrot.slane %v7379, 1
        %v7381 = vadd.f32 %v7379, %v7380
        %v7382 = vsel %vm1298, %v1143, 0.0
        %v7383 = vrot.slane %v7382, 4
        %v7384 = vadd.f32 %v7382, %v7383
        %v7385 = vrot.slane %v7384, 2
        %v7386 = vadd.f32 %v7384, %v7385
        %v7387 = vrot.slane %v7386, 1
        %v7388 = vadd.f32 %v7386, %v7387
        %v7389 = vsel %vm1298, %v1144, 0.0
        %v7390 = vrot.slane %v7389, 4
        %v7391 = vadd.f32 %v7389, %v7390
        %v7392 = vrot.slane %v7391, 2
        %v7393 = vadd.f32 %v7391, %v7392
        %v7394 = vrot.slane %v7393, 1
        %v7395 = vadd.f32 %v7393, %v7394
        %v7396 = vsel %vm1298, %v1145, 0.0
        %v7397 = vrot.slane %v7396, 4
        %v7398 = vadd.f32 %v7396, %v7397
        %v7399 = vrot.slane %v7398, 2
        %v7400 = vadd.f32 %v7398, %v7399
        %v7401 = vrot.slane %v7400, 1
        %v7402 = vadd.f32 %v7400, %v7401
        %v7403 = vsel %vm1298, %v1146, 0.0
        %v7404 = vrot.slane %v7403, 4
        %v7405 = vadd.f32 %v7403, %v7404
        %v7406 = vrot.slane %v7405, 2
        %v7407 = vadd.f32 %v7405, %v7406
        %v7408 = vrot.slane %v7407, 1
        %v7409 = vadd.f32 %v7407, %v7408
        %v7410 = vsel %vm1298, %v1147, 0.0
        %v7411 = vrot.slane %v7410, 4
        %v7412 = vadd.f32 %v7410, %v7411
        %v7413 = vrot.slane %v7412, 2
        %v7414 = vadd.f32 %v7412, %v7413
        %v7415 = vrot.slane %v7414, 1
        %v7416 = vadd.f32 %v7414, %v7415
        %v7417 = vsel %vm1298, %v1148, 0.0
        %v7418 = vrot.slane %v7417, 4
        %v7419 = vadd.f32 %v7417, %v7418
        %v7420 = vrot.slane %v7419, 2
        %v7421 = vadd.f32 %v7419, %v7420
        %v7422 = vrot.slane %v7421, 1
        %v7423 = vadd.f32 %v7421, %v7422
        %v7424 = vsel %vm1298, %v1149, 0.0
        %v7425 = vrot.slane %v7424, 4
        %v7426 = vadd.f32 %v7424, %v7425
        %v7427 = vrot.slane %v7426, 2
        %v7428 = vadd.f32 %v7426, %v7427
        %v7429 = vrot.slane %v7428, 1
        %v7430 = vadd.f32 %v7428, %v7429
        %v7431 = vsel %vm1298, %v1150, 0.0
        %v7432 = vrot.slane %v7431, 4
        %v7433 = vadd.f32 %v7431, %v7432
        %v7434 = vrot.slane %v7433, 2
        %v7435 = vadd.f32 %v7433, %v7434
        %v7436 = vrot.slane %v7435, 1
        %v7437 = vadd.f32 %v7435, %v7436
        %v7438 = vsel %vm1298, %v1151, 0.0
        %v7439 = vrot.slane %v7438, 4
        %v7440 = vadd.f32 %v7438, %v7439
        %v7441 = vrot.slane %v7440, 2
        %v7442 = vadd.f32 %v7440, %v7441
        %v7443 = vrot.slane %v7442, 1
        %v7444 = vadd.f32 %v7442, %v7443
        %v7445 = vsel %vm1298, %v1152, 0.0
        %v7446 = vrot.slane %v7445, 4
        %v7447 = vadd.f32 %v7445, %v7446
        %v7448 = vrot.slane %v7447, 2
        %v7449 = vadd.f32 %v7447, %v7448
        %v7450 = vrot.slane %v7449, 1
        %v7451 = vadd.f32 %v7449, %v7450
        %v7452 = vsel %vm1298, %v1153, 0.0
        %v7453 = vrot.slane %v7452, 4
        %v7454 = vadd.f32 %v7452, %v7453
        %v7455 = vrot.slane %v7454, 2
        %v7456 = vadd.f32 %v7454, %v7455
        %v7457 = vrot.slane %v7456, 1
        %v7458 = vadd.f32 %v7456, %v7457
        %v7459 = vsel %vm1298, %v1154, 0.0
        %v7460 = vrot.slane %v7459, 4
        %v7461 = vadd.f32 %v7459, %v7460
        %v7462 = vrot.slane %v7461, 2
        %v7463 = vadd.f32 %v7461, %v7462
        %v7464 = vrot.slane %v7463, 1
        %v7465 = vadd.f32 %v7463, %v7464
        %v7466 = vsel %vm1298, %v1155, 0.0
        %v7467 = vrot.slane %v7466, 4
        %v7468 = vadd.f32 %v7466, %v7467
        %v7469 = vrot.slane %v7468, 2
        %v7470 = vadd.f32 %v7468, %v7469
        %v7471 = vrot.slane %v7470, 1
        %v7472 = vadd.f32 %v7470, %v7471
        %v7473 = vsel %vm1298, %v1156, 0.0
        %v7474 = vrot.slane %v7473, 4
        %v7475 = vadd.f32 %v7473, %v7474
        %v7476 = vrot.slane %v7475, 2
        %v7477 = vadd.f32 %v7475, %v7476
        %v7478 = vrot.slane %v7477, 1
        %v7479 = vadd.f32 %v7477, %v7478
        %v7480 = vsel %vm1298, %v1157, 0.0
        %v7481 = vrot.slane %v7480, 4
        %v7482 = vadd.f32 %v7480, %v7481
        %v7483 = vrot.slane %v7482, 2
        %v7484 = vadd.f32 %v7482, %v7483
        %v7485 = vrot.slane %v7484, 1
        %v7486 = vadd.f32 %v7484, %v7485
        %v7487 = vsel %vm1298, %v1158, 0.0
        %v7488 = vrot.slane %v7487, 4
        %v7489 = vadd.f32 %v7487, %v7488
        %v7490 = vrot.slane %v7489, 2
        %v7491 = vadd.f32 %v7489, %v7490
        %v7492 = vrot.slane %v7491, 1
        %v7493 = vadd.f32 %v7491, %v7492
        %v7494 = vsel %vm1298, %v1159, 0.0
        %v7495 = vrot.slane %v7494, 4
        %v7496 = vadd.f32 %v7494, %v7495
        %v7497 = vrot.slane %v7496, 2
        %v7498 = vadd.f32 %v7496, %v7497
        %v7499 = vrot.slane %v7498, 1
        %v7500 = vadd.f32 %v7498, %v7499
        %v7501 = vsel %vm1298, %v1160, 0.0
        %v7502 = vrot.slane %v7501, 4
        %v7503 = vadd.f32 %v7501, %v7502
        %v7504 = vrot.slane %v7503, 2
        %v7505 = vadd.f32 %v7503, %v7504
        %v7506 = vrot.slane %v7505, 1
        %v7507 = vadd.f32 %v7505, %v7506
        %v7508 = vsel %vm1298, %v1161, 0.0
        %v7509 = vrot.slane %v7508, 4
        %v7510 = vadd.f32 %v7508, %v7509
        %v7511 = vrot.slane %v7510, 2
        %v7512 = vadd.f32 %v7510, %v7511
        %v7513 = vrot.slane %v7512, 1
        %v7514 = vadd.f32 %v7512, %v7513
        %v7515 = vsel %vm1298, %v1162, 0.0
        %v7516 = vrot.slane %v7515, 4
        %v7517 = vadd.f32 %v7515, %v7516
        %v7518 = vrot.slane %v7517, 2
        %v7519 = vadd.f32 %v7517, %v7518
        %v7520 = vrot.slane %v7519, 1
        %v7521 = vadd.f32 %v7519, %v7520
        %v7522 = vsel %vm1298, %v1163, 0.0
        %v7523 = vrot.slane %v7522, 4
        %v7524 = vadd.f32 %v7522, %v7523
        %v7525 = vrot.slane %v7524, 2
        %v7526 = vadd.f32 %v7524, %v7525
        %v7527 = vrot.slane %v7526, 1
        %v7528 = vadd.f32 %v7526, %v7527
        %v7529 = vsel %vm1298, %v1164, 0.0
        %v7530 = vrot.slane %v7529, 4
        %v7531 = vadd.f32 %v7529, %v7530
        %v7532 = vrot.slane %v7531, 2
        %v7533 = vadd.f32 %v7531, %v7532
        %v7534 = vrot.slane %v7533, 1
        %v7535 = vadd.f32 %v7533, %v7534
        %v7536 = vsel %vm1298, %v1165, 0.0
        %v7537 = vrot.slane %v7536, 4
        %v7538 = vadd.f32 %v7536, %v7537
        %v7539 = vrot.slane %v7538, 2
        %v7540 = vadd.f32 %v7538, %v7539
        %v7541 = vrot.slane %v7540, 1
        %v7542 = vadd.f32 %v7540, %v7541
        %v7543 = vsel %vm1298, %v1166, 0.0
        %v7544 = vrot.slane %v7543, 4
        %v7545 = vadd.f32 %v7543, %v7544
        %v7546 = vrot.slane %v7545, 2
        %v7547 = vadd.f32 %v7545, %v7546
        %v7548 = vrot.slane %v7547, 1
        %v7549 = vadd.f32 %v7547, %v7548
        %v7550 = vsel %vm1298, %v1167, 0.0
        %v7551 = vrot.slane %v7550, 4
        %v7552 = vadd.f32 %v7550, %v7551
        %v7553 = vrot.slane %v7552, 2
        %v7554 = vadd.f32 %v7552, %v7553
        %v7555 = vrot.slane %v7554, 1
        %v7556 = vadd.f32 %v7554, %v7555
        %v7557 = vsel %vm1298, %v1168, 0.0
        %v7558 = vrot.slane %v7557, 4
        %v7559 = vadd.f32 %v7557, %v7558
        %v7560 = vrot.slane %v7559, 2
        %v7561 = vadd.f32 %v7559, %v7560
        %v7562 = vrot.slane %v7561, 1
        %v7563 = vadd.f32 %v7561, %v7562
        %v7564 = vsel %vm1298, %v1169, 0.0
        %v7565 = vrot.slane %v7564, 4
        %v7566 = vadd.f32 %v7564, %v7565
        %v7567 = vrot.slane %v7566, 2
        %v7568 = vadd.f32 %v7566, %v7567
        %v7569 = vrot.slane %v7568, 1
        %v7570 = vadd.f32 %v7568, %v7569
        %v7571 = vsel %vm1298, %v1170, 0.0
        %v7572 = vrot.slane %v7571, 4
        %v7573 = vadd.f32 %v7571, %v7572
        %v7574 = vrot.slane %v7573, 2
        %v7575 = vadd.f32 %v7573, %v7574
        %v7576 = vrot.slane %v7575, 1
        %v7577 = vadd.f32 %v7575, %v7576
        %v7578 = vsel %vm1298, %v1171, 0.0
        %v7579 = vrot.slane %v7578, 4
        %v7580 = vadd.f32 %v7578, %v7579
        %v7581 = vrot.slane %v7580, 2
        %v7582 = vadd.f32 %v7580, %v7581
        %v7583 = vrot.slane %v7582, 1
        %v7584 = vadd.f32 %v7582, %v7583
        %v7585 = vsel %vm1298, %v1172, 0.0
        %v7586 = vrot.slane %v7585, 4
        %v7587 = vadd.f32 %v7585, %v7586
        %v7588 = vrot.slane %v7587, 2
        %v7589 = vadd.f32 %v7587, %v7588
        %v7590 = vrot.slane %v7589, 1
        %v7591 = vadd.f32 %v7589, %v7590
        %v7592 = vsel %vm1298, %v1173, 0.0
        %v7593 = vrot.slane %v7592, 4
        %v7594 = vadd.f32 %v7592, %v7593
        %v7595 = vrot.slane %v7594, 2
        %v7596 = vadd.f32 %v7594, %v7595
        %v7597 = vrot.slane %v7596, 1
        %v7598 = vadd.f32 %v7596, %v7597
        %v7599 = vsel %vm1298, %v1174, 0.0
        %v7600 = vrot.slane %v7599, 4
        %v7601 = vadd.f32 %v7599, %v7600
        %v7602 = vrot.slane %v7601, 2
        %v7603 = vadd.f32 %v7601, %v7602
        %v7604 = vrot.slane %v7603, 1
        %v7605 = vadd.f32 %v7603, %v7604
        %v7606 = vsel %vm1298, %v1175, 0.0
        %v7607 = vrot.slane %v7606, 4
        %v7608 = vadd.f32 %v7606, %v7607
        %v7609 = vrot.slane %v7608, 2
        %v7610 = vadd.f32 %v7608, %v7609
        %v7611 = vrot.slane %v7610, 1
        %v7612 = vadd.f32 %v7610, %v7611
        %v7613 = vsel %vm1298, %v1176, 0.0
        %v7614 = vrot.slane %v7613, 4
        %v7615 = vadd.f32 %v7613, %v7614
        %v7616 = vrot.slane %v7615, 2
        %v7617 = vadd.f32 %v7615, %v7616
        %v7618 = vrot.slane %v7617, 1
        %v7619 = vadd.f32 %v7617, %v7618
        %v7620 = vsel %vm1298, %v1177, 0.0
        %v7621 = vrot.slane %v7620, 4
        %v7622 = vadd.f32 %v7620, %v7621
        %v7623 = vrot.slane %v7622, 2
        %v7624 = vadd.f32 %v7622, %v7623
        %v7625 = vrot.slane %v7624, 1
        %v7626 = vadd.f32 %v7624, %v7625
        %v7627 = vsel %vm1298, %v1178, 0.0
        %v7628 = vrot.slane %v7627, 4
        %v7629 = vadd.f32 %v7627, %v7628
        %v7630 = vrot.slane %v7629, 2
        %v7631 = vadd.f32 %v7629, %v7630
        %v7632 = vrot.slane %v7631, 1
        %v7633 = vadd.f32 %v7631, %v7632
        %v7634 = vsel %vm1298, %v1179, 0.0
        %v7635 = vrot.slane %v7634, 4
        %v7636 = vadd.f32 %v7634, %v7635
        %v7637 = vrot.slane %v7636, 2
        %v7638 = vadd.f32 %v7636, %v7637
        %v7639 = vrot.slane %v7638, 1
        %v7640 = vadd.f32 %v7638, %v7639
        %v7641 = vsel %vm1298, %v1180, 0.0
        %v7642 = vrot.slane %v7641, 4
        %v7643 = vadd.f32 %v7641, %v7642
        %v7644 = vrot.slane %v7643, 2
        %v7645 = vadd.f32 %v7643, %v7644
        %v7646 = vrot.slane %v7645, 1
        %v7647 = vadd.f32 %v7645, %v7646
        %v7648 = vsel %vm1298, %v1181, 0.0
        %v7649 = vrot.slane %v7648, 4
        %v7650 = vadd.f32 %v7648, %v7649
        %v7651 = vrot.slane %v7650, 2
        %v7652 = vadd.f32 %v7650, %v7651
        %v7653 = vrot.slane %v7652, 1
        %v7654 = vadd.f32 %v7652, %v7653
        %v7655 = vsel %vm1298, %v1182, 0.0
        %v7656 = vrot.slane %v7655, 4
        %v7657 = vadd.f32 %v7655, %v7656
        %v7658 = vrot.slane %v7657, 2
        %v7659 = vadd.f32 %v7657, %v7658
        %v7660 = vrot.slane %v7659, 1
        %v7661 = vadd.f32 %v7659, %v7660
        %v7662 = vsel %vm1298, %v1183, 0.0
        %v7663 = vrot.slane %v7662, 4
        %v7664 = vadd.f32 %v7662, %v7663
        %v7665 = vrot.slane %v7664, 2
        %v7666 = vadd.f32 %v7664, %v7665
        %v7667 = vrot.slane %v7666, 1
        %v7668 = vadd.f32 %v7666, %v7667
        %v7669 = vsel %vm1298, %v1184, 0.0
        %v7670 = vrot.slane %v7669, 4
        %v7671 = vadd.f32 %v7669, %v7670
        %v7672 = vrot.slane %v7671, 2
        %v7673 = vadd.f32 %v7671, %v7672
        %v7674 = vrot.slane %v7673, 1
        %v7675 = vadd.f32 %v7673, %v7674
        %v7676 = vsel %vm1298, %v1185, 0.0
        %v7677 = vrot.slane %v7676, 4
        %v7678 = vadd.f32 %v7676, %v7677
        %v7679 = vrot.slane %v7678, 2
        %v7680 = vadd.f32 %v7678, %v7679
        %v7681 = vrot.slane %v7680, 1
        %v7682 = vadd.f32 %v7680, %v7681
        %v7683 = vsel %vm1298, %v1186, 0.0
        %v7684 = vrot.slane %v7683, 4
        %v7685 = vadd.f32 %v7683, %v7684
        %v7686 = vrot.slane %v7685, 2
        %v7687 = vadd.f32 %v7685, %v7686
        %v7688 = vrot.slane %v7687, 1
        %v7689 = vadd.f32 %v7687, %v7688
        %v7690 = vsel %vm1298, %v1187, 0.0
        %v7691 = vrot.slane %v7690, 4
        %v7692 = vadd.f32 %v7690, %v7691
        %v7693 = vrot.slane %v7692, 2
        %v7694 = vadd.f32 %v7692, %v7693
        %v7695 = vrot.slane %v7694, 1
        %v7696 = vadd.f32 %v7694, %v7695
        %v7697 = vsel %vm1298, %v1188, 0.0
        %v7698 = vrot.slane %v7697, 4
        %v7699 = vadd.f32 %v7697, %v7698
        %v7700 = vrot.slane %v7699, 2
        %v7701 = vadd.f32 %v7699, %v7700
        %v7702 = vrot.slane %v7701, 1
        %v7703 = vadd.f32 %v7701, %v7702
        %v7704 = vsel %vm1298, %v1189, 0.0
        %v7705 = vrot.slane %v7704, 4
        %v7706 = vadd.f32 %v7704, %v7705
        %v7707 = vrot.slane %v7706, 2
        %v7708 = vadd.f32 %v7706, %v7707
        %v7709 = vrot.slane %v7708, 1
        %v7710 = vadd.f32 %v7708, %v7709
        %v7711 = vsel %vm1298, %v1190, 0.0
        %v7712 = vrot.slane %v7711, 4
        %v7713 = vadd.f32 %v7711, %v7712
        %v7714 = vrot.slane %v7713, 2
        %v7715 = vadd.f32 %v7713, %v7714
        %v7716 = vrot.slane %v7715, 1
        %v7717 = vadd.f32 %v7715, %v7716
        %v7718 = vsel %vm1298, %v1191, 0.0
        %v7719 = vrot.slane %v7718, 4
        %v7720 = vadd.f32 %v7718, %v7719
        %v7721 = vrot.slane %v7720, 2
        %v7722 = vadd.f32 %v7720, %v7721
        %v7723 = vrot.slane %v7722, 1
        %v7724 = vadd.f32 %v7722, %v7723
        %v7725 = vsel %vm1298, %v1192, 0.0
        %v7726 = vrot.slane %v7725, 4
        %v7727 = vadd.f32 %v7725, %v7726
        %v7728 = vrot.slane %v7727, 2
        %v7729 = vadd.f32 %v7727, %v7728
        %v7730 = vrot.slane %v7729, 1
        %v7731 = vadd.f32 %v7729, %v7730
        %v7732 = vsel %vm1298, %v1193, 0.0
        %v7733 = vrot.slane %v7732, 4
        %v7734 = vadd.f32 %v7732, %v7733
        %v7735 = vrot.slane %v7734, 2
        %v7736 = vadd.f32 %v7734, %v7735
        %v7737 = vrot.slane %v7736, 1
        %v7738 = vadd.f32 %v7736, %v7737
        %v7739 = vsel %vm1298, %v1194, 0.0
        %v7740 = vrot.slane %v7739, 4
        %v7741 = vadd.f32 %v7739, %v7740
        %v7742 = vrot.slane %v7741, 2
        %v7743 = vadd.f32 %v7741, %v7742
        %v7744 = vrot.slane %v7743, 1
        %v7745 = vadd.f32 %v7743, %v7744
        %v7746 = vsel %vm1298, %v1195, 0.0
        %v7747 = vrot.slane %v7746, 4
        %v7748 = vadd.f32 %v7746, %v7747
        %v7749 = vrot.slane %v7748, 2
        %v7750 = vadd.f32 %v7748, %v7749
        %v7751 = vrot.slane %v7750, 1
        %v7752 = vadd.f32 %v7750, %v7751
        %v7753 = vsel %vm1298, %v1196, 0.0
        %v7754 = vrot.slane %v7753, 4
        %v7755 = vadd.f32 %v7753, %v7754
        %v7756 = vrot.slane %v7755, 2
        %v7757 = vadd.f32 %v7755, %v7756
        %v7758 = vrot.slane %v7757, 1
        %v7759 = vadd.f32 %v7757, %v7758
        %v7760 = vsel %vm1298, %v1197, 0.0
        %v7761 = vrot.slane %v7760, 4
        %v7762 = vadd.f32 %v7760, %v7761
        %v7763 = vrot.slane %v7762, 2
        %v7764 = vadd.f32 %v7762, %v7763
        %v7765 = vrot.slane %v7764, 1
        %v7766 = vadd.f32 %v7764, %v7765
        %v7767 = vsel %vm1298, %v1198, 0.0
        %v7768 = vrot.slane %v7767, 4
        %v7769 = vadd.f32 %v7767, %v7768
        %v7770 = vrot.slane %v7769, 2
        %v7771 = vadd.f32 %v7769, %v7770
        %v7772 = vrot.slane %v7771, 1
        %v7773 = vadd.f32 %v7771, %v7772
        %v7774 = vsel %vm1298, %v1199, 0.0
        %v7775 = vrot.slane %v7774, 4
        %v7776 = vadd.f32 %v7774, %v7775
        %v7777 = vrot.slane %v7776, 2
        %v7778 = vadd.f32 %v7776, %v7777
        %v7779 = vrot.slane %v7778, 1
        %v7780 = vadd.f32 %v7778, %v7779
        %v7781 = vsel %vm1298, %v1200, 0.0
        %v7782 = vrot.slane %v7781, 4
        %v7783 = vadd.f32 %v7781, %v7782
        %v7784 = vrot.slane %v7783, 2
        %v7785 = vadd.f32 %v7783, %v7784
        %v7786 = vrot.slane %v7785, 1
        %v7787 = vadd.f32 %v7785, %v7786
        %v7788 = vsel %vm1298, %v1201, 0.0
        %v7789 = vrot.slane %v7788, 4
        %v7790 = vadd.f32 %v7788, %v7789
        %v7791 = vrot.slane %v7790, 2
        %v7792 = vadd.f32 %v7790, %v7791
        %v7793 = vrot.slane %v7792, 1
        %v7794 = vadd.f32 %v7792, %v7793
        %v7795 = vsel %vm1298, %v1202, 0.0
        %v7796 = vrot.slane %v7795, 4
        %v7797 = vadd.f32 %v7795, %v7796
        %v7798 = vrot.slane %v7797, 2
        %v7799 = vadd.f32 %v7797, %v7798
        %v7800 = vrot.slane %v7799, 1
        %v7801 = vadd.f32 %v7799, %v7800
        %v7802 = vsel %vm1298, %v1203, 0.0
        %v7803 = vrot.slane %v7802, 4
        %v7804 = vadd.f32 %v7802, %v7803
        %v7805 = vrot.slane %v7804, 2
        %v7806 = vadd.f32 %v7804, %v7805
        %v7807 = vrot.slane %v7806, 1
        %v7808 = vadd.f32 %v7806, %v7807
        %v7809 = vsel %vm1298, %v1204, 0.0
        %v7810 = vrot.slane %v7809, 4
        %v7811 = vadd.f32 %v7809, %v7810
        %v7812 = vrot.slane %v7811, 2
        %v7813 = vadd.f32 %v7811, %v7812
        %v7814 = vrot.slane %v7813, 1
        %v7815 = vadd.f32 %v7813, %v7814
        %v7816 = vsel %vm1298, %v1205, 0.0
        %v7817 = vrot.slane %v7816, 4
        %v7818 = vadd.f32 %v7816, %v7817
        %v7819 = vrot.slane %v7818, 2
        %v7820 = vadd.f32 %v7818, %v7819
        %v7821 = vrot.slane %v7820, 1
        %v7822 = vadd.f32 %v7820, %v7821
        %v7823 = vsel %vm1298, %v1206, 0.0
        %v7824 = vrot.slane %v7823, 4
        %v7825 = vadd.f32 %v7823, %v7824
        %v7826 = vrot.slane %v7825, 2
        %v7827 = vadd.f32 %v7825, %v7826
        %v7828 = vrot.slane %v7827, 1
        %v7829 = vadd.f32 %v7827, %v7828
        %v7830 = vsel %vm1298, %v1207, 0.0
        %v7831 = vrot.slane %v7830, 4
        %v7832 = vadd.f32 %v7830, %v7831
        %v7833 = vrot.slane %v7832, 2
        %v7834 = vadd.f32 %v7832, %v7833
        %v7835 = vrot.slane %v7834, 1
        %v7836 = vadd.f32 %v7834, %v7835
        %v7837 = vsel %vm1298, %v1208, 0.0
        %v7838 = vrot.slane %v7837, 4
        %v7839 = vadd.f32 %v7837, %v7838
        %v7840 = vrot.slane %v7839, 2
        %v7841 = vadd.f32 %v7839, %v7840
        %v7842 = vrot.slane %v7841, 1
        %v7843 = vadd.f32 %v7841, %v7842
        %v7844 = vsel %vm1298, %v1209, 0.0
        %v7845 = vrot.slane %v7844, 4
        %v7846 = vadd.f32 %v7844, %v7845
        %v7847 = vrot.slane %v7846, 2
        %v7848 = vadd.f32 %v7846, %v7847
        %v7849 = vrot.slane %v7848, 1
        %v7850 = vadd.f32 %v7848, %v7849
        %v7851 = vsel %vm1298, %v1210, 0.0
        %v7852 = vrot.slane %v7851, 4
        %v7853 = vadd.f32 %v7851, %v7852
        %v7854 = vrot.slane %v7853, 2
        %v7855 = vadd.f32 %v7853, %v7854
        %v7856 = vrot.slane %v7855, 1
        %v7857 = vadd.f32 %v7855, %v7856
        %v7858 = vsel %vm1298, %v1211, 0.0
        %v7859 = vrot.slane %v7858, 4
        %v7860 = vadd.f32 %v7858, %v7859
        %v7861 = vrot.slane %v7860, 2
        %v7862 = vadd.f32 %v7860, %v7861
        %v7863 = vrot.slane %v7862, 1
        %v7864 = vadd.f32 %v7862, %v7863
        %v7865 = vsel %vm1298, %v1212, 0.0
        %v7866 = vrot.slane %v7865, 4
        %v7867 = vadd.f32 %v7865, %v7866
        %v7868 = vrot.slane %v7867, 2
        %v7869 = vadd.f32 %v7867, %v7868
        %v7870 = vrot.slane %v7869, 1
        %v7871 = vadd.f32 %v7869, %v7870
        %v7872 = vsel %vm1298, %v1213, 0.0
        %v7873 = vrot.slane %v7872, 4
        %v7874 = vadd.f32 %v7872, %v7873
        %v7875 = vrot.slane %v7874, 2
        %v7876 = vadd.f32 %v7874, %v7875
        %v7877 = vrot.slane %v7876, 1
        %v7878 = vadd.f32 %v7876, %v7877
        %v7879 = vsel %vm1298, %v1214, 0.0
        %v7880 = vrot.slane %v7879, 4
        %v7881 = vadd.f32 %v7879, %v7880
        %v7882 = vrot.slane %v7881, 2
        %v7883 = vadd.f32 %v7881, %v7882
        %v7884 = vrot.slane %v7883, 1
        %v7885 = vadd.f32 %v7883, %v7884
        %v7886 = vsel %vm1298, %v1215, 0.0
        %v7887 = vrot.slane %v7886, 4
        %v7888 = vadd.f32 %v7886, %v7887
        %v7889 = vrot.slane %v7888, 2
        %v7890 = vadd.f32 %v7888, %v7889
        %v7891 = vrot.slane %v7890, 1
        %v7892 = vadd.f32 %v7890, %v7891
        %v7893 = vsel %vm1298, %v1216, 0.0
        %v7894 = vrot.slane %v7893, 4
        %v7895 = vadd.f32 %v7893, %v7894
        %v7896 = vrot.slane %v7895, 2
        %v7897 = vadd.f32 %v7895, %v7896
        %v7898 = vrot.slane %v7897, 1
        %v7899 = vadd.f32 %v7897, %v7898
        %v7900 = vsel %vm1298, %v1217, 0.0
        %v7901 = vrot.slane %v7900, 4
        %v7902 = vadd.f32 %v7900, %v7901
        %v7903 = vrot.slane %v7902, 2
        %v7904 = vadd.f32 %v7902, %v7903
        %v7905 = vrot.slane %v7904, 1
        %v7906 = vadd.f32 %v7904, %v7905
        %v7907 = vsel %vm1298, %v1218, 0.0
        %v7908 = vrot.slane %v7907, 4
        %v7909 = vadd.f32 %v7907, %v7908
        %v7910 = vrot.slane %v7909, 2
        %v7911 = vadd.f32 %v7909, %v7910
        %v7912 = vrot.slane %v7911, 1
        %v7913 = vadd.f32 %v7911, %v7912
        %v7914 = vsel %vm1298, %v1219, 0.0
        %v7915 = vrot.slane %v7914, 4
        %v7916 = vadd.f32 %v7914, %v7915
        %v7917 = vrot.slane %v7916, 2
        %v7918 = vadd.f32 %v7916, %v7917
        %v7919 = vrot.slane %v7918, 1
        %v7920 = vadd.f32 %v7918, %v7919
        %v7921 = vsel %vm1298, %v1220, 0.0
        %v7922 = vrot.slane %v7921, 4
        %v7923 = vadd.f32 %v7921, %v7922
        %v7924 = vrot.slane %v7923, 2
        %v7925 = vadd.f32 %v7923, %v7924
        %v7926 = vrot.slane %v7925, 1
        %v7927 = vadd.f32 %v7925, %v7926
        %v7928 = vsel %vm1298, %v1221, 0.0
        %v7929 = vrot.slane %v7928, 4
        %v7930 = vadd.f32 %v7928, %v7929
        %v7931 = vrot.slane %v7930, 2
        %v7932 = vadd.f32 %v7930, %v7931
        %v7933 = vrot.slane %v7932, 1
        %v7934 = vadd.f32 %v7932, %v7933
        %v7935 = vsel %vm1298, %v1222, 0.0
        %v7936 = vrot.slane %v7935, 4
        %v7937 = vadd.f32 %v7935, %v7936
        %v7938 = vrot.slane %v7937, 2
        %v7939 = vadd.f32 %v7937, %v7938
        %v7940 = vrot.slane %v7939, 1
        %v7941 = vadd.f32 %v7939, %v7940
        %v7942 = vsel %vm1298, %v1223, 0.0
        %v7943 = vrot.slane %v7942, 4
        %v7944 = vadd.f32 %v7942, %v7943
        %v7945 = vrot.slane %v7944, 2
        %v7946 = vadd.f32 %v7944, %v7945
        %v7947 = vrot.slane %v7946, 1
        %v7948 = vadd.f32 %v7946, %v7947
        %v7949 = vsel %vm1298, %v1224, 0.0
        %v7950 = vrot.slane %v7949, 4
        %v7951 = vadd.f32 %v7949, %v7950
        %v7952 = vrot.slane %v7951, 2
        %v7953 = vadd.f32 %v7951, %v7952
        %v7954 = vrot.slane %v7953, 1
        %v7955 = vadd.f32 %v7953, %v7954
        %v7956 = vsel %vm1298, %v1225, 0.0
        %v7957 = vrot.slane %v7956, 4
        %v7958 = vadd.f32 %v7956, %v7957
        %v7959 = vrot.slane %v7958, 2
        %v7960 = vadd.f32 %v7958, %v7959
        %v7961 = vrot.slane %v7960, 1
        %v7962 = vadd.f32 %v7960, %v7961
        %v7963 = vsel %vm1298, %v1226, 0.0
        %v7964 = vrot.slane %v7963, 4
        %v7965 = vadd.f32 %v7963, %v7964
        %v7966 = vrot.slane %v7965, 2
        %v7967 = vadd.f32 %v7965, %v7966
        %v7968 = vrot.slane %v7967, 1
        %v7969 = vadd.f32 %v7967, %v7968
        %v7970 = vsel %vm1298, %v1227, 0.0
        %v7971 = vrot.slane %v7970, 4
        %v7972 = vadd.f32 %v7970, %v7971
        %v7973 = vrot.slane %v7972, 2
        %v7974 = vadd.f32 %v7972, %v7973
        %v7975 = vrot.slane %v7974, 1
        %v7976 = vadd.f32 %v7974, %v7975
        %v7977 = vsel %vm1298, %v1228, 0.0
        %v7978 = vrot.slane %v7977, 4
        %v7979 = vadd.f32 %v7977, %v7978
        %v7980 = vrot.slane %v7979, 2
        %v7981 = vadd.f32 %v7979, %v7980
        %v7982 = vrot.slane %v7981, 1
        %v7983 = vadd.f32 %v7981, %v7982
        %v7984 = vsel %vm1298, %v1229, 0.0
        %v7985 = vrot.slane %v7984, 4
        %v7986 = vadd.f32 %v7984, %v7985
        %v7987 = vrot.slane %v7986, 2
        %v7988 = vadd.f32 %v7986, %v7987
        %v7989 = vrot.slane %v7988, 1
        %v7990 = vadd.f32 %v7988, %v7989
        %v7991 = vsel %vm1298, %v1230, 0.0
        %v7992 = vrot.slane %v7991, 4
        %v7993 = vadd.f32 %v7991, %v7992
        %v7994 = vrot.slane %v7993, 2
        %v7995 = vadd.f32 %v7993, %v7994
        %v7996 = vrot.slane %v7995, 1
        %v7997 = vadd.f32 %v7995, %v7996
        %v7998 = vsel %vm1298, %v1231, 0.0
        %v7999 = vrot.slane %v7998, 4
        %v8000 = vadd.f32 %v7998, %v7999
        %v8001 = vrot.slane %v8000, 2
        %v8002 = vadd.f32 %v8000, %v8001
        %v8003 = vrot.slane %v8002, 1
        %v8004 = vadd.f32 %v8002, %v8003
        %v8005 = vsel %vm1298, %v1232, 0.0
        %v8006 = vrot.slane %v8005, 4
        %v8007 = vadd.f32 %v8005, %v8006
        %v8008 = vrot.slane %v8007, 2
        %v8009 = vadd.f32 %v8007, %v8008
        %v8010 = vrot.slane %v8009, 1
        %v8011 = vadd.f32 %v8009, %v8010
        %v8012 = vsel %vm1298, %v1233, 0.0
        %v8013 = vrot.slane %v8012, 4
        %v8014 = vadd.f32 %v8012, %v8013
        %v8015 = vrot.slane %v8014, 2
        %v8016 = vadd.f32 %v8014, %v8015
        %v8017 = vrot.slane %v8016, 1
        %v8018 = vadd.f32 %v8016, %v8017
        %v8019 = vsel %vm1298, %v1234, 0.0
        %v8020 = vrot.slane %v8019, 4
        %v8021 = vadd.f32 %v8019, %v8020
        %v8022 = vrot.slane %v8021, 2
        %v8023 = vadd.f32 %v8021, %v8022
        %v8024 = vrot.slane %v8023, 1
        %v8025 = vadd.f32 %v8023, %v8024
        %v8026 = vsel %vm1298, %v1235, 0.0
        %v8027 = vrot.slane %v8026, 4
        %v8028 = vadd.f32 %v8026, %v8027
        %v8029 = vrot.slane %v8028, 2
        %v8030 = vadd.f32 %v8028, %v8029
        %v8031 = vrot.slane %v8030, 1
        %v8032 = vadd.f32 %v8030, %v8031
        %v8033 = vsel %vm1298, %v1236, 0.0
        %v8034 = vrot.slane %v8033, 4
        %v8035 = vadd.f32 %v8033, %v8034
        %v8036 = vrot.slane %v8035, 2
        %v8037 = vadd.f32 %v8035, %v8036
        %v8038 = vrot.slane %v8037, 1
        %v8039 = vadd.f32 %v8037, %v8038
        %v8040 = vsel %vm1298, %v1237, 0.0
        %v8041 = vrot.slane %v8040, 4
        %v8042 = vadd.f32 %v8040, %v8041
        %v8043 = vrot.slane %v8042, 2
        %v8044 = vadd.f32 %v8042, %v8043
        %v8045 = vrot.slane %v8044, 1
        %v8046 = vadd.f32 %v8044, %v8045
        %v8047 = vsel %vm1298, %v1238, 0.0
        %v8048 = vrot.slane %v8047, 4
        %v8049 = vadd.f32 %v8047, %v8048
        %v8050 = vrot.slane %v8049, 2
        %v8051 = vadd.f32 %v8049, %v8050
        %v8052 = vrot.slane %v8051, 1
        %v8053 = vadd.f32 %v8051, %v8052
        %v8054 = vsel %vm1298, %v1239, 0.0
        %v8055 = vrot.slane %v8054, 4
        %v8056 = vadd.f32 %v8054, %v8055
        %v8057 = vrot.slane %v8056, 2
        %v8058 = vadd.f32 %v8056, %v8057
        %v8059 = vrot.slane %v8058, 1
        %v8060 = vadd.f32 %v8058, %v8059
        %v8061 = vsel %vm1298, %v1240, 0.0
        %v8062 = vrot.slane %v8061, 4
        %v8063 = vadd.f32 %v8061, %v8062
        %v8064 = vrot.slane %v8063, 2
        %v8065 = vadd.f32 %v8063, %v8064
        %v8066 = vrot.slane %v8065, 1
        %v8067 = vadd.f32 %v8065, %v8066
        %v8068 = vsel %vm1298, %v1241, 0.0
        %v8069 = vrot.slane %v8068, 4
        %v8070 = vadd.f32 %v8068, %v8069
        %v8071 = vrot.slane %v8070, 2
        %v8072 = vadd.f32 %v8070, %v8071
        %v8073 = vrot.slane %v8072, 1
        %v8074 = vadd.f32 %v8072, %v8073
        %v8075 = vsel %vm1298, %v1242, 0.0
        %v8076 = vrot.slane %v8075, 4
        %v8077 = vadd.f32 %v8075, %v8076
        %v8078 = vrot.slane %v8077, 2
        %v8079 = vadd.f32 %v8077, %v8078
        %v8080 = vrot.slane %v8079, 1
        %v8081 = vadd.f32 %v8079, %v8080
        %v8082 = vsel %vm1298, %v1243, 0.0
        %v8083 = vrot.slane %v8082, 4
        %v8084 = vadd.f32 %v8082, %v8083
        %v8085 = vrot.slane %v8084, 2
        %v8086 = vadd.f32 %v8084, %v8085
        %v8087 = vrot.slane %v8086, 1
        %v8088 = vadd.f32 %v8086, %v8087
        %v8089 = vsel %vm1298, %v1244, 0.0
        %v8090 = vrot.slane %v8089, 4
        %v8091 = vadd.f32 %v8089, %v8090
        %v8092 = vrot.slane %v8091, 2
        %v8093 = vadd.f32 %v8091, %v8092
        %v8094 = vrot.slane %v8093, 1
        %v8095 = vadd.f32 %v8093, %v8094
        %v8096 = vsel %vm1298, %v1245, 0.0
        %v8097 = vrot.slane %v8096, 4
        %v8098 = vadd.f32 %v8096, %v8097
        %v8099 = vrot.slane %v8098, 2
        %v8100 = vadd.f32 %v8098, %v8099
        %v8101 = vrot.slane %v8100, 1
        %v8102 = vadd.f32 %v8100, %v8101
        %v8103 = vsel %vm1298, %v1246, 0.0
        %v8104 = vrot.slane %v8103, 4
        %v8105 = vadd.f32 %v8103, %v8104
        %v8106 = vrot.slane %v8105, 2
        %v8107 = vadd.f32 %v8105, %v8106
        %v8108 = vrot.slane %v8107, 1
        %v8109 = vadd.f32 %v8107, %v8108
        %v8110 = vsel %vm1298, %v1247, 0.0
        %v8111 = vrot.slane %v8110, 4
        %v8112 = vadd.f32 %v8110, %v8111
        %v8113 = vrot.slane %v8112, 2
        %v8114 = vadd.f32 %v8112, %v8113
        %v8115 = vrot.slane %v8114, 1
        %v8116 = vadd.f32 %v8114, %v8115
        %v8117 = vsel %vm1298, %v1248, 0.0
        %v8118 = vrot.slane %v8117, 4
        %v8119 = vadd.f32 %v8117, %v8118
        %v8120 = vrot.slane %v8119, 2
        %v8121 = vadd.f32 %v8119, %v8120
        %v8122 = vrot.slane %v8121, 1
        %v8123 = vadd.f32 %v8121, %v8122
        %v8124 = vsel %vm1298, %v1249, 0.0
        %v8125 = vrot.slane %v8124, 4
        %v8126 = vadd.f32 %v8124, %v8125
        %v8127 = vrot.slane %v8126, 2
        %v8128 = vadd.f32 %v8126, %v8127
        %v8129 = vrot.slane %v8128, 1
        %v8130 = vadd.f32 %v8128, %v8129
        %v8131 = vsel %vm1298, %v1250, 0.0
        %v8132 = vrot.slane %v8131, 4
        %v8133 = vadd.f32 %v8131, %v8132
        %v8134 = vrot.slane %v8133, 2
        %v8135 = vadd.f32 %v8133, %v8134
        %v8136 = vrot.slane %v8135, 1
        %v8137 = vadd.f32 %v8135, %v8136
        %v8138 = vsel %vm1298, %v1251, 0.0
        %v8139 = vrot.slane %v8138, 4
        %v8140 = vadd.f32 %v8138, %v8139
        %v8141 = vrot.slane %v8140, 2
        %v8142 = vadd.f32 %v8140, %v8141
        %v8143 = vrot.slane %v8142, 1
        %v8144 = vadd.f32 %v8142, %v8143
        %v8145 = vsel %vm1298, %v1252, 0.0
        %v8146 = vrot.slane %v8145, 4
        %v8147 = vadd.f32 %v8145, %v8146
        %v8148 = vrot.slane %v8147, 2
        %v8149 = vadd.f32 %v8147, %v8148
        %v8150 = vrot.slane %v8149, 1
        %v8151 = vadd.f32 %v8149, %v8150
        %v8152 = vsel %vm1298, %v1253, 0.0
        %v8153 = vrot.slane %v8152, 4
        %v8154 = vadd.f32 %v8152, %v8153
        %v8155 = vrot.slane %v8154, 2
        %v8156 = vadd.f32 %v8154, %v8155
        %v8157 = vrot.slane %v8156, 1
        %v8158 = vadd.f32 %v8156, %v8157
        %v8159 = vsel %vm1298, %v1254, 0.0
        %v8160 = vrot.slane %v8159, 4
        %v8161 = vadd.f32 %v8159, %v8160
        %v8162 = vrot.slane %v8161, 2
        %v8163 = vadd.f32 %v8161, %v8162
        %v8164 = vrot.slane %v8163, 1
        %v8165 = vadd.f32 %v8163, %v8164
        %v8166 = vsel %vm1298, %v1255, 0.0
        %v8167 = vrot.slane %v8166, 4
        %v8168 = vadd.f32 %v8166, %v8167
        %v8169 = vrot.slane %v8168, 2
        %v8170 = vadd.f32 %v8168, %v8169
        %v8171 = vrot.slane %v8170, 1
        %v8172 = vadd.f32 %v8170, %v8171
        %v8173 = vsel %vm1298, %v1256, 0.0
        %v8174 = vrot.slane %v8173, 4
        %v8175 = vadd.f32 %v8173, %v8174
        %v8176 = vrot.slane %v8175, 2
        %v8177 = vadd.f32 %v8175, %v8176
        %v8178 = vrot.slane %v8177, 1
        %v8179 = vadd.f32 %v8177, %v8178
        %v8180 = vsel %vm1298, %v1257, 0.0
        %v8181 = vrot.slane %v8180, 4
        %v8182 = vadd.f32 %v8180, %v8181
        %v8183 = vrot.slane %v8182, 2
        %v8184 = vadd.f32 %v8182, %v8183
        %v8185 = vrot.slane %v8184, 1
        %v8186 = vadd.f32 %v8184, %v8185
        %v8187 = vsel %vm1298, %v1258, 0.0
        %v8188 = vrot.slane %v8187, 4
        %v8189 = vadd.f32 %v8187, %v8188
        %v8190 = vrot.slane %v8189, 2
        %v8191 = vadd.f32 %v8189, %v8190
        %v8192 = vrot.slane %v8191, 1
        %v8193 = vadd.f32 %v8191, %v8192
        %v8194 = vsel %vm1298, %v1259, 0.0
        %v8195 = vrot.slane %v8194, 4
        %v8196 = vadd.f32 %v8194, %v8195
        %v8197 = vrot.slane %v8196, 2
        %v8198 = vadd.f32 %v8196, %v8197
        %v8199 = vrot.slane %v8198, 1
        %v8200 = vadd.f32 %v8198, %v8199
        %v8201 = vsel %vm1298, %v1260, 0.0
        %v8202 = vrot.slane %v8201, 4
        %v8203 = vadd.f32 %v8201, %v8202
        %v8204 = vrot.slane %v8203, 2
        %v8205 = vadd.f32 %v8203, %v8204
        %v8206 = vrot.slane %v8205, 1
        %v8207 = vadd.f32 %v8205, %v8206
        %v8208 = vsel %vm1298, %v1261, 0.0
        %v8209 = vrot.slane %v8208, 4
        %v8210 = vadd.f32 %v8208, %v8209
        %v8211 = vrot.slane %v8210, 2
        %v8212 = vadd.f32 %v8210, %v8211
        %v8213 = vrot.slane %v8212, 1
        %v8214 = vadd.f32 %v8212, %v8213
        %v8215 = vsel %vm1298, %v1262, 0.0
        %v8216 = vrot.slane %v8215, 4
        %v8217 = vadd.f32 %v8215, %v8216
        %v8218 = vrot.slane %v8217, 2
        %v8219 = vadd.f32 %v8217, %v8218
        %v8220 = vrot.slane %v8219, 1
        %v8221 = vadd.f32 %v8219, %v8220
        %v8222 = vsel %vm1298, %v1263, 0.0
        %v8223 = vrot.slane %v8222, 4
        %v8224 = vadd.f32 %v8222, %v8223
        %v8225 = vrot.slane %v8224, 2
        %v8226 = vadd.f32 %v8224, %v8225
        %v8227 = vrot.slane %v8226, 1
        %v8228 = vadd.f32 %v8226, %v8227
        %v8229 = vsel %vm1298, %v1264, 0.0
        %v8230 = vrot.slane %v8229, 4
        %v8231 = vadd.f32 %v8229, %v8230
        %v8232 = vrot.slane %v8231, 2
        %v8233 = vadd.f32 %v8231, %v8232
        %v8234 = vrot.slane %v8233, 1
        %v8235 = vadd.f32 %v8233, %v8234
        %v8236 = vsel %vm1298, %v1265, 0.0
        %v8237 = vrot.slane %v8236, 4
        %v8238 = vadd.f32 %v8236, %v8237
        %v8239 = vrot.slane %v8238, 2
        %v8240 = vadd.f32 %v8238, %v8239
        %v8241 = vrot.slane %v8240, 1
        %v8242 = vadd.f32 %v8240, %v8241
        %v8243 = vsel %vm1298, %v1266, 0.0
        %v8244 = vrot.slane %v8243, 4
        %v8245 = vadd.f32 %v8243, %v8244
        %v8246 = vrot.slane %v8245, 2
        %v8247 = vadd.f32 %v8245, %v8246
        %v8248 = vrot.slane %v8247, 1
        %v8249 = vadd.f32 %v8247, %v8248
        %v8250 = vsel %vm1298, %v1267, 0.0
        %v8251 = vrot.slane %v8250, 4
        %v8252 = vadd.f32 %v8250, %v8251
        %v8253 = vrot.slane %v8252, 2
        %v8254 = vadd.f32 %v8252, %v8253
        %v8255 = vrot.slane %v8254, 1
        %v8256 = vadd.f32 %v8254, %v8255
        %v8257 = vsel %vm1298, %v1268, 0.0
        %v8258 = vrot.slane %v8257, 4
        %v8259 = vadd.f32 %v8257, %v8258
        %v8260 = vrot.slane %v8259, 2
        %v8261 = vadd.f32 %v8259, %v8260
        %v8262 = vrot.slane %v8261, 1
        %v8263 = vadd.f32 %v8261, %v8262
        %v8264 = vsel %vm1298, %v1269, 0.0
        %v8265 = vrot.slane %v8264, 4
        %v8266 = vadd.f32 %v8264, %v8265
        %v8267 = vrot.slane %v8266, 2
        %v8268 = vadd.f32 %v8266, %v8267
        %v8269 = vrot.slane %v8268, 1
        %v8270 = vadd.f32 %v8268, %v8269
        %v8271 = vsel %vm1298, %v1270, 0.0
        %v8272 = vrot.slane %v8271, 4
        %v8273 = vadd.f32 %v8271, %v8272
        %v8274 = vrot.slane %v8273, 2
        %v8275 = vadd.f32 %v8273, %v8274
        %v8276 = vrot.slane %v8275, 1
        %v8277 = vadd.f32 %v8275, %v8276
        %v8278 = vsel %vm1298, %v1271, 0.0
        %v8279 = vrot.slane %v8278, 4
        %v8280 = vadd.f32 %v8278, %v8279
        %v8281 = vrot.slane %v8280, 2
        %v8282 = vadd.f32 %v8280, %v8281
        %v8283 = vrot.slane %v8282, 1
        %v8284 = vadd.f32 %v8282, %v8283
        %v8285 = vsel %vm1298, %v1272, 0.0
        %v8286 = vrot.slane %v8285, 4
        %v8287 = vadd.f32 %v8285, %v8286
        %v8288 = vrot.slane %v8287, 2
        %v8289 = vadd.f32 %v8287, %v8288
        %v8290 = vrot.slane %v8289, 1
        %v8291 = vadd.f32 %v8289, %v8290
        %v8292 = vsel %vm1298, %v1273, 0.0
        %v8293 = vrot.slane %v8292, 4
        %v8294 = vadd.f32 %v8292, %v8293
        %v8295 = vrot.slane %v8294, 2
        %v8296 = vadd.f32 %v8294, %v8295
        %v8297 = vrot.slane %v8296, 1
        %v8298 = vadd.f32 %v8296, %v8297
        %v8299 = vsel %vm1298, %v1274, 0.0
        %v8300 = vrot.slane %v8299, 4
        %v8301 = vadd.f32 %v8299, %v8300
        %v8302 = vrot.slane %v8301, 2
        %v8303 = vadd.f32 %v8301, %v8302
        %v8304 = vrot.slane %v8303, 1
        %v8305 = vadd.f32 %v8303, %v8304
        %v8306 = vsel %vm1298, %v1275, 0.0
        %v8307 = vrot.slane %v8306, 4
        %v8308 = vadd.f32 %v8306, %v8307
        %v8309 = vrot.slane %v8308, 2
        %v8310 = vadd.f32 %v8308, %v8309
        %v8311 = vrot.slane %v8310, 1
        %v8312 = vadd.f32 %v8310, %v8311
        %v8313 = vsel %vm1298, %v1276, 0.0
        %v8314 = vrot.slane %v8313, 4
        %v8315 = vadd.f32 %v8313, %v8314
        %v8316 = vrot.slane %v8315, 2
        %v8317 = vadd.f32 %v8315, %v8316
        %v8318 = vrot.slane %v8317, 1
        %v8319 = vadd.f32 %v8317, %v8318
        %v8320 = vsel %vm1298, %v1277, 0.0
        %v8321 = vrot.slane %v8320, 4
        %v8322 = vadd.f32 %v8320, %v8321
        %v8323 = vrot.slane %v8322, 2
        %v8324 = vadd.f32 %v8322, %v8323
        %v8325 = vrot.slane %v8324, 1
        %v8326 = vadd.f32 %v8324, %v8325
        %v8327 = vsel %vm1298, %v1278, 0.0
        %v8328 = vrot.slane %v8327, 4
        %v8329 = vadd.f32 %v8327, %v8328
        %v8330 = vrot.slane %v8329, 2
        %v8331 = vadd.f32 %v8329, %v8330
        %v8332 = vrot.slane %v8331, 1
        %v8333 = vadd.f32 %v8331, %v8332
        %v8334 = vsel %vm1298, %v1279, 0.0
        %v8335 = vrot.slane %v8334, 4
        %v8336 = vadd.f32 %v8334, %v8335
        %v8337 = vrot.slane %v8336, 2
        %v8338 = vadd.f32 %v8336, %v8337
        %v8339 = vrot.slane %v8338, 1
        %v8340 = vadd.f32 %v8338, %v8339
        %v8341 = vsel %vm1298, %v1280, 0.0
        %v8342 = vrot.slane %v8341, 4
        %v8343 = vadd.f32 %v8341, %v8342
        %v8344 = vrot.slane %v8343, 2
        %v8345 = vadd.f32 %v8343, %v8344
        %v8346 = vrot.slane %v8345, 1
        %v8347 = vadd.f32 %v8345, %v8346
        %v8348 = vsel %vm1298, %v1281, 0.0
        %v8349 = vrot.slane %v8348, 4
        %v8350 = vadd.f32 %v8348, %v8349
        %v8351 = vrot.slane %v8350, 2
        %v8352 = vadd.f32 %v8350, %v8351
        %v8353 = vrot.slane %v8352, 1
        %v8354 = vadd.f32 %v8352, %v8353
        %v8355 = vsel %vm1298, %v1282, 0.0
        %v8356 = vrot.slane %v8355, 4
        %v8357 = vadd.f32 %v8355, %v8356
        %v8358 = vrot.slane %v8357, 2
        %v8359 = vadd.f32 %v8357, %v8358
        %v8360 = vrot.slane %v8359, 1
        %v8361 = vadd.f32 %v8359, %v8360
        %v8362 = vsel %vm1298, %v1283, 0.0
        %v8363 = vrot.slane %v8362, 4
        %v8364 = vadd.f32 %v8362, %v8363
        %v8365 = vrot.slane %v8364, 2
        %v8366 = vadd.f32 %v8364, %v8365
        %v8367 = vrot.slane %v8366, 1
        %v8368 = vadd.f32 %v8366, %v8367
        %v8369 = vsel %vm1298, %v1284, 0.0
        %v8370 = vrot.slane %v8369, 4
        %v8371 = vadd.f32 %v8369, %v8370
        %v8372 = vrot.slane %v8371, 2
        %v8373 = vadd.f32 %v8371, %v8372
        %v8374 = vrot.slane %v8373, 1
        %v8375 = vadd.f32 %v8373, %v8374
        %v8376 = vsel %vm1298, %v1285, 0.0
        %v8377 = vrot.slane %v8376, 4
        %v8378 = vadd.f32 %v8376, %v8377
        %v8379 = vrot.slane %v8378, 2
        %v8380 = vadd.f32 %v8378, %v8379
        %v8381 = vrot.slane %v8380, 1
        %v8382 = vadd.f32 %v8380, %v8381
        %v8383 = vsel %vm1298, %v1286, 0.0
        %v8384 = vrot.slane %v8383, 4
        %v8385 = vadd.f32 %v8383, %v8384
        %v8386 = vrot.slane %v8385, 2
        %v8387 = vadd.f32 %v8385, %v8386
        %v8388 = vrot.slane %v8387, 1
        %v8389 = vadd.f32 %v8387, %v8388
        %v8390 = vsel %vm1298, %v1287, 0.0
        %v8391 = vrot.slane %v8390, 4
        %v8392 = vadd.f32 %v8390, %v8391
        %v8393 = vrot.slane %v8392, 2
        %v8394 = vadd.f32 %v8392, %v8393
        %v8395 = vrot.slane %v8394, 1
        %v8396 = vadd.f32 %v8394, %v8395
        %v8397 = vsel %vm1298, %v1288, 0.0
        %v8398 = vrot.slane %v8397, 4
        %v8399 = vadd.f32 %v8397, %v8398
        %v8400 = vrot.slane %v8399, 2
        %v8401 = vadd.f32 %v8399, %v8400
        %v8402 = vrot.slane %v8401, 1
        %v8403 = vadd.f32 %v8401, %v8402
        %v8404 = vsel %vm1298, %v1289, 0.0
        %v8405 = vrot.slane %v8404, 4
        %v8406 = vadd.f32 %v8404, %v8405
        %v8407 = vrot.slane %v8406, 2
        %v8408 = vadd.f32 %v8406, %v8407
        %v8409 = vrot.slane %v8408, 1
        %v8410 = vadd.f32 %v8408, %v8409
        %v8411 = vsel %vm1298, %v1290, 0.0
        %v8412 = vrot.slane %v8411, 4
        %v8413 = vadd.f32 %v8411, %v8412
        %v8414 = vrot.slane %v8413, 2
        %v8415 = vadd.f32 %v8413, %v8414
        %v8416 = vrot.slane %v8415, 1
        %v8417 = vadd.f32 %v8415, %v8416
        %v8418 = vsel %vm1298, %v1291, 0.0
        %v8419 = vrot.slane %v8418, 4
        %v8420 = vadd.f32 %v8418, %v8419
        %v8421 = vrot.slane %v8420, 2
        %v8422 = vadd.f32 %v8420, %v8421
        %v8423 = vrot.slane %v8422, 1
        %v8424 = vadd.f32 %v8422, %v8423
        %v8425 = vsel %vm1298, %v1292, 0.0
        %v8426 = vrot.slane %v8425, 4
        %v8427 = vadd.f32 %v8425, %v8426
        %v8428 = vrot.slane %v8427, 2
        %v8429 = vadd.f32 %v8427, %v8428
        %v8430 = vrot.slane %v8429, 1
        %v8431 = vadd.f32 %v8429, %v8430
        %v8432 = vsel %vm1298, %v1293, 0.0
        %v8433 = vrot.slane %v8432, 4
        %v8434 = vadd.f32 %v8432, %v8433
        %v8435 = vrot.slane %v8434, 2
        %v8436 = vadd.f32 %v8434, %v8435
        %v8437 = vrot.slane %v8436, 1
        %v8438 = vadd.f32 %v8436, %v8437
        %v8439 = vsel %vm1298, %v1294, 0.0
        %v8440 = vrot.slane %v8439, 4
        %v8441 = vadd.f32 %v8439, %v8440
        %v8442 = vrot.slane %v8441, 2
        %v8443 = vadd.f32 %v8441, %v8442
        %v8444 = vrot.slane %v8443, 1
        %v8445 = vadd.f32 %v8443, %v8444
        %v8446 = vsel %vm1298, %v1295, 0.0
        %v8447 = vrot.slane %v8446, 4
        %v8448 = vadd.f32 %v8446, %v8447
        %v8449 = vrot.slane %v8448, 2
        %v8450 = vadd.f32 %v8448, %v8449
        %v8451 = vrot.slane %v8450, 1
        %v8452 = vadd.f32 %v8450, %v8451
        %v8453 = vsel %vm1298, %v1296, 0.0
        %v8454 = vrot.slane %v8453, 4
        %v8455 = vadd.f32 %v8453, %v8454
        %v8456 = vrot.slane %v8455, 2
        %v8457 = vadd.f32 %v8455, %v8456
        %v8458 = vrot.slane %v8457, 1
        %v8459 = vadd.f32 %v8457, %v8458
        %v8460 = vsel %vm1298, %v1297, 0.0
        %v8461 = vrot.slane %v8460, 4
        %v8462 = vadd.f32 %v8460, %v8461
        %v8463 = vrot.slane %v8462, 2
        %v8464 = vadd.f32 %v8462, %v8463
        %v8465 = vrot.slane %v8464, 1
        %v8466 = vadd.f32 %v8464, %v8465
        %vm9491 = vcmask 1041409
        %v9492 = vsel %vm9491, %v1312, %v1305
        %vm9493 = vcmask 1042434
        %v9494 = vsel %vm9493, %v1319, %v9492
        %vm9495 = vcmask 1043459
        %v9496 = vsel %vm9495, %v1326, %v9494
        %vm9497 = vcmask 1044484
        %v9498 = vsel %vm9497, %v1333, %v9496
        %vm9499 = vcmask 1045509
        %v9500 = vsel %vm9499, %v1340, %v9498
        %vm9501 = vcmask 1046534
        %v9502 = vsel %vm9501, %v1347, %v9500
        %vm9503 = vcmask 1047559
        %v9504 = vsel %vm9503, %v1354, %v9502
        %v9505 = vsel %vm9491, %v1368, %v1361
        %v9506 = vsel %vm9493, %v1375, %v9505
        %v9507 = vsel %vm9495, %v1382, %v9506
        %v9508 = vsel %vm9497, %v1389, %v9507
        %v9509 = vsel %vm9499, %v1396, %v9508
        %v9510 = vsel %vm9501, %v1403, %v9509
        %v9511 = vsel %vm9503, %v1410, %v9510
        %v9512 = vsel %vm9491, %v1424, %v1417
        %v9513 = vsel %vm9493, %v1431, %v9512
        %v9514 = vsel %vm9495, %v1438, %v9513
        %v9515 = vsel %vm9497, %v1445, %v9514
        %v9516 = vsel %vm9499, %v1452, %v9515
        %v9517 = vsel %vm9501, %v1459, %v9516
        %v9518 = vsel %vm9503, %v1466, %v9517
        %v9519 = vsel %vm9491, %v1480, %v1473
        %v9520 = vsel %vm9493, %v1487, %v9519
        %v9521 = vsel %vm9495, %v1494, %v9520
        %v9522 = vsel %vm9497, %v1501, %v9521
        %v9523 = vsel %vm9499, %v1508, %v9522
        %v9524 = vsel %vm9501, %v1515, %v9523
        %v9525 = vsel %vm9503, %v1522, %v9524
        %v9526 = vsel %vm9491, %v1536, %v1529
        %v9527 = vsel %vm9493, %v1543, %v9526
        %v9528 = vsel %vm9495, %v1550, %v9527
        %v9529 = vsel %vm9497, %v1557, %v9528
        %v9530 = vsel %vm9499, %v1564, %v9529
        %v9531 = vsel %vm9501, %v1571, %v9530
        %v9532 = vsel %vm9503, %v1578, %v9531
        %v9533 = vsel %vm9491, %v1592, %v1585
        %v9534 = vsel %vm9493, %v1599, %v9533
        %v9535 = vsel %vm9495, %v1606, %v9534
        %v9536 = vsel %vm9497, %v1613, %v9535
        %v9537 = vsel %vm9499, %v1620, %v9536
        %v9538 = vsel %vm9501, %v1627, %v9537
        %v9539 = vsel %vm9503, %v1634, %v9538
        %v9540 = vsel %vm9491, %v1648, %v1641
        %v9541 = vsel %vm9493, %v1655, %v9540
        %v9542 = vsel %vm9495, %v1662, %v9541
        %v9543 = vsel %vm9497, %v1669, %v9542
        %v9544 = vsel %vm9499, %v1676, %v9543
        %v9545 = vsel %vm9501, %v1683, %v9544
        %v9546 = vsel %vm9503, %v1690, %v9545
        %v9547 = vsel %vm9491, %v1704, %v1697
        %v9548 = vsel %vm9493, %v1711, %v9547
        %v9549 = vsel %vm9495, %v1718, %v9548
        %v9550 = vsel %vm9497, %v1725, %v9549
        %v9551 = vsel %vm9499, %v1732, %v9550
        %v9552 = vsel %vm9501, %v1739, %v9551
        %v9553 = vsel %vm9503, %v1746, %v9552
        %v9554 = vsel %vm9491, %v1760, %v1753
        %v9555 = vsel %vm9493, %v1767, %v9554
        %v9556 = vsel %vm9495, %v1774, %v9555
        %v9557 = vsel %vm9497, %v1781, %v9556
        %v9558 = vsel %vm9499, %v1788, %v9557
        %v9559 = vsel %vm9501, %v1795, %v9558
        %v9560 = vsel %vm9503, %v1802, %v9559
        %v9561 = vsel %vm9491, %v1816, %v1809
        %v9562 = vsel %vm9493, %v1823, %v9561
        %v9563 = vsel %vm9495, %v1830, %v9562
        %v9564 = vsel %vm9497, %v1837, %v9563
        %v9565 = vsel %vm9499, %v1844, %v9564
        %v9566 = vsel %vm9501, %v1851, %v9565
        %v9567 = vsel %vm9503, %v1858, %v9566
        %v9568 = vsel %vm9491, %v1872, %v1865
        %v9569 = vsel %vm9493, %v1879, %v9568
        %v9570 = vsel %vm9495, %v1886, %v9569
        %v9571 = vsel %vm9497, %v1893, %v9570
        %v9572 = vsel %vm9499, %v1900, %v9571
        %v9573 = vsel %vm9501, %v1907, %v9572
        %v9574 = vsel %vm9503, %v1914, %v9573
        %v9575 = vsel %vm9491, %v1928, %v1921
        %v9576 = vsel %vm9493, %v1935, %v9575
        %v9577 = vsel %vm9495, %v1942, %v9576
        %v9578 = vsel %vm9497, %v1949, %v9577
        %v9579 = vsel %vm9499, %v1956, %v9578
        %v9580 = vsel %vm9501, %v1963, %v9579
        %v9581 = vsel %vm9503, %v1970, %v9580
        %v9582 = vsel %vm9491, %v1984, %v1977
        %v9583 = vsel %vm9493, %v1991, %v9582
        %v9584 = vsel %vm9495, %v1998, %v9583
        %v9585 = vsel %vm9497, %v2005, %v9584
        %v9586 = vsel %vm9499, %v2012, %v9585
        %v9587 = vsel %vm9501, %v2019, %v9586
        %v9588 = vsel %vm9503, %v2026, %v9587
        %v9589 = vsel %vm9491, %v2040, %v2033
        %v9590 = vsel %vm9493, %v2047, %v9589
        %v9591 = vsel %vm9495, %v2054, %v9590
        %v9592 = vsel %vm9497, %v2061, %v9591
        %v9593 = vsel %vm9499, %v2068, %v9592
        %v9594 = vsel %vm9501, %v2075, %v9593
        %v9595 = vsel %vm9503, %v2082, %v9594
        %v9596 = vsel %vm9491, %v2096, %v2089
        %v9597 = vsel %vm9493, %v2103, %v9596
        %v9598 = vsel %vm9495, %v2110, %v9597
        %v9599 = vsel %vm9497, %v2117, %v9598
        %v9600 = vsel %vm9499, %v2124, %v9599
        %v9601 = vsel %vm9501, %v2131, %v9600
        %v9602 = vsel %vm9503, %v2138, %v9601
        %v9603 = vsel %vm9491, %v2152, %v2145
        %v9604 = vsel %vm9493, %v2159, %v9603
        %v9605 = vsel %vm9495, %v2166, %v9604
        %v9606 = vsel %vm9497, %v2173, %v9605
        %v9607 = vsel %vm9499, %v2180, %v9606
        %v9608 = vsel %vm9501, %v2187, %v9607
        %v9609 = vsel %vm9503, %v2194, %v9608
        %v9610 = vsel %vm9491, %v2208, %v2201
        %v9611 = vsel %vm9493, %v2215, %v9610
        %v9612 = vsel %vm9495, %v2222, %v9611
        %v9613 = vsel %vm9497, %v2229, %v9612
        %v9614 = vsel %vm9499, %v2236, %v9613
        %v9615 = vsel %vm9501, %v2243, %v9614
        %v9616 = vsel %vm9503, %v2250, %v9615
        %v9617 = vsel %vm9491, %v2264, %v2257
        %v9618 = vsel %vm9493, %v2271, %v9617
        %v9619 = vsel %vm9495, %v2278, %v9618
        %v9620 = vsel %vm9497, %v2285, %v9619
        %v9621 = vsel %vm9499, %v2292, %v9620
        %v9622 = vsel %vm9501, %v2299, %v9621
        %v9623 = vsel %vm9503, %v2306, %v9622
        %v9624 = vsel %vm9491, %v2320, %v2313
        %v9625 = vsel %vm9493, %v2327, %v9624
        %v9626 = vsel %vm9495, %v2334, %v9625
        %v9627 = vsel %vm9497, %v2341, %v9626
        %v9628 = vsel %vm9499, %v2348, %v9627
        %v9629 = vsel %vm9501, %v2355, %v9628
        %v9630 = vsel %vm9503, %v2362, %v9629
        %v9631 = vsel %vm9491, %v2376, %v2369
        %v9632 = vsel %vm9493, %v2383, %v9631
        %v9633 = vsel %vm9495, %v2390, %v9632
        %v9634 = vsel %vm9497, %v2397, %v9633
        %v9635 = vsel %vm9499, %v2404, %v9634
        %v9636 = vsel %vm9501, %v2411, %v9635
        %v9637 = vsel %vm9503, %v2418, %v9636
        %v9638 = vsel %vm9491, %v2432, %v2425
        %v9639 = vsel %vm9493, %v2439, %v9638
        %v9640 = vsel %vm9495, %v2446, %v9639
        %v9641 = vsel %vm9497, %v2453, %v9640
        %v9642 = vsel %vm9499, %v2460, %v9641
        %v9643 = vsel %vm9501, %v2467, %v9642
        %v9644 = vsel %vm9503, %v2474, %v9643
        %v9645 = vsel %vm9491, %v2488, %v2481
        %v9646 = vsel %vm9493, %v2495, %v9645
        %v9647 = vsel %vm9495, %v2502, %v9646
        %v9648 = vsel %vm9497, %v2509, %v9647
        %v9649 = vsel %vm9499, %v2516, %v9648
        %v9650 = vsel %vm9501, %v2523, %v9649
        %v9651 = vsel %vm9503, %v2530, %v9650
        %v9652 = vsel %vm9491, %v2544, %v2537
        %v9653 = vsel %vm9493, %v2551, %v9652
        %v9654 = vsel %vm9495, %v2558, %v9653
        %v9655 = vsel %vm9497, %v2565, %v9654
        %v9656 = vsel %vm9499, %v2572, %v9655
        %v9657 = vsel %vm9501, %v2579, %v9656
        %v9658 = vsel %vm9503, %v2586, %v9657
        %v9659 = vsel %vm9491, %v2600, %v2593
        %v9660 = vsel %vm9493, %v2607, %v9659
        %v9661 = vsel %vm9495, %v2614, %v9660
        %v9662 = vsel %vm9497, %v2621, %v9661
        %v9663 = vsel %vm9499, %v2628, %v9662
        %v9664 = vsel %vm9501, %v2635, %v9663
        %v9665 = vsel %vm9503, %v2642, %v9664
        %v9666 = vsel %vm9491, %v2656, %v2649
        %v9667 = vsel %vm9493, %v2663, %v9666
        %v9668 = vsel %vm9495, %v2670, %v9667
        %v9669 = vsel %vm9497, %v2677, %v9668
        %v9670 = vsel %vm9499, %v2684, %v9669
        %v9671 = vsel %vm9501, %v2691, %v9670
        %v9672 = vsel %vm9503, %v2698, %v9671
        %v9673 = vsel %vm9491, %v2712, %v2705
        %v9674 = vsel %vm9493, %v2719, %v9673
        %v9675 = vsel %vm9495, %v2726, %v9674
        %v9676 = vsel %vm9497, %v2733, %v9675
        %v9677 = vsel %vm9499, %v2740, %v9676
        %v9678 = vsel %vm9501, %v2747, %v9677
        %v9679 = vsel %vm9503, %v2754, %v9678
        %v9680 = vsel %vm9491, %v2768, %v2761
        %v9681 = vsel %vm9493, %v2775, %v9680
        %v9682 = vsel %vm9495, %v2782, %v9681
        %v9683 = vsel %vm9497, %v2789, %v9682
        %v9684 = vsel %vm9499, %v2796, %v9683
        %v9685 = vsel %vm9501, %v2803, %v9684
        %v9686 = vsel %vm9503, %v2810, %v9685
        %v9687 = vsel %vm9491, %v2824, %v2817
        %v9688 = vsel %vm9493, %v2831, %v9687
        %v9689 = vsel %vm9495, %v2838, %v9688
        %v9690 = vsel %vm9497, %v2845, %v9689
        %v9691 = vsel %vm9499, %v2852, %v9690
        %v9692 = vsel %vm9501, %v2859, %v9691
        %v9693 = vsel %vm9503, %v2866, %v9692
        %v9694 = vsel %vm9491, %v2880, %v2873
        %v9695 = vsel %vm9493, %v2887, %v9694
        %v9696 = vsel %vm9495, %v2894, %v9695
        %v9697 = vsel %vm9497, %v2901, %v9696
        %v9698 = vsel %vm9499, %v2908, %v9697
        %v9699 = vsel %vm9501, %v2915, %v9698
        %v9700 = vsel %vm9503, %v2922, %v9699
        %v9701 = vsel %vm9491, %v2936, %v2929
        %v9702 = vsel %vm9493, %v2943, %v9701
        %v9703 = vsel %vm9495, %v2950, %v9702
        %v9704 = vsel %vm9497, %v2957, %v9703
        %v9705 = vsel %vm9499, %v2964, %v9704
        %v9706 = vsel %vm9501, %v2971, %v9705
        %v9707 = vsel %vm9503, %v2978, %v9706
        %v9708 = vsel %vm9491, %v2992, %v2985
        %v9709 = vsel %vm9493, %v2999, %v9708
        %v9710 = vsel %vm9495, %v3006, %v9709
        %v9711 = vsel %vm9497, %v3013, %v9710
        %v9712 = vsel %vm9499, %v3020, %v9711
        %v9713 = vsel %vm9501, %v3027, %v9712
        %v9714 = vsel %vm9503, %v3034, %v9713
        %v9715 = vsel %vm9491, %v3048, %v3041
        %v9716 = vsel %vm9493, %v3055, %v9715
        %v9717 = vsel %vm9495, %v3062, %v9716
        %v9718 = vsel %vm9497, %v3069, %v9717
        %v9719 = vsel %vm9499, %v3076, %v9718
        %v9720 = vsel %vm9501, %v3083, %v9719
        %v9721 = vsel %vm9503, %v3090, %v9720
        %v9722 = vsel %vm9491, %v3104, %v3097
        %v9723 = vsel %vm9493, %v3111, %v9722
        %v9724 = vsel %vm9495, %v3118, %v9723
        %v9725 = vsel %vm9497, %v3125, %v9724
        %v9726 = vsel %vm9499, %v3132, %v9725
        %v9727 = vsel %vm9501, %v3139, %v9726
        %v9728 = vsel %vm9503, %v3146, %v9727
        %v9729 = vsel %vm9491, %v3160, %v3153
        %v9730 = vsel %vm9493, %v3167, %v9729
        %v9731 = vsel %vm9495, %v3174, %v9730
        %v9732 = vsel %vm9497, %v3181, %v9731
        %v9733 = vsel %vm9499, %v3188, %v9732
        %v9734 = vsel %vm9501, %v3195, %v9733
        %v9735 = vsel %vm9503, %v3202, %v9734
        %v9736 = vsel %vm9491, %v3216, %v3209
        %v9737 = vsel %vm9493, %v3223, %v9736
        %v9738 = vsel %vm9495, %v3230, %v9737
        %v9739 = vsel %vm9497, %v3237, %v9738
        %v9740 = vsel %vm9499, %v3244, %v9739
        %v9741 = vsel %vm9501, %v3251, %v9740
        %v9742 = vsel %vm9503, %v3258, %v9741
        %v9743 = vsel %vm9491, %v3272, %v3265
        %v9744 = vsel %vm9493, %v3279, %v9743
        %v9745 = vsel %vm9495, %v3286, %v9744
        %v9746 = vsel %vm9497, %v3293, %v9745
        %v9747 = vsel %vm9499, %v3300, %v9746
        %v9748 = vsel %vm9501, %v3307, %v9747
        %v9749 = vsel %vm9503, %v3314, %v9748
        %v9750 = vsel %vm9491, %v3328, %v3321
        %v9751 = vsel %vm9493, %v3335, %v9750
        %v9752 = vsel %vm9495, %v3342, %v9751
        %v9753 = vsel %vm9497, %v3349, %v9752
        %v9754 = vsel %vm9499, %v3356, %v9753
        %v9755 = vsel %vm9501, %v3363, %v9754
        %v9756 = vsel %vm9503, %v3370, %v9755
        %v9757 = vsel %vm9491, %v3384, %v3377
        %v9758 = vsel %vm9493, %v3391, %v9757
        %v9759 = vsel %vm9495, %v3398, %v9758
        %v9760 = vsel %vm9497, %v3405, %v9759
        %v9761 = vsel %vm9499, %v3412, %v9760
        %v9762 = vsel %vm9501, %v3419, %v9761
        %v9763 = vsel %vm9503, %v3426, %v9762
        %v9764 = vsel %vm9491, %v3440, %v3433
        %v9765 = vsel %vm9493, %v3447, %v9764
        %v9766 = vsel %vm9495, %v3454, %v9765
        %v9767 = vsel %vm9497, %v3461, %v9766
        %v9768 = vsel %vm9499, %v3468, %v9767
        %v9769 = vsel %vm9501, %v3475, %v9768
        %v9770 = vsel %vm9503, %v3482, %v9769
        %v9771 = vsel %vm9491, %v3496, %v3489
        %v9772 = vsel %vm9493, %v3503, %v9771
        %v9773 = vsel %vm9495, %v3510, %v9772
        %v9774 = vsel %vm9497, %v3517, %v9773
        %v9775 = vsel %vm9499, %v3524, %v9774
        %v9776 = vsel %vm9501, %v3531, %v9775
        %v9777 = vsel %vm9503, %v3538, %v9776
        %v9778 = vsel %vm9491, %v3552, %v3545
        %v9779 = vsel %vm9493, %v3559, %v9778
        %v9780 = vsel %vm9495, %v3566, %v9779
        %v9781 = vsel %vm9497, %v3573, %v9780
        %v9782 = vsel %vm9499, %v3580, %v9781
        %v9783 = vsel %vm9501, %v3587, %v9782
        %v9784 = vsel %vm9503, %v3594, %v9783
        %v9785 = vsel %vm9491, %v3608, %v3601
        %v9786 = vsel %vm9493, %v3615, %v9785
        %v9787 = vsel %vm9495, %v3622, %v9786
        %v9788 = vsel %vm9497, %v3629, %v9787
        %v9789 = vsel %vm9499, %v3636, %v9788
        %v9790 = vsel %vm9501, %v3643, %v9789
        %v9791 = vsel %vm9503, %v3650, %v9790
        %v9792 = vsel %vm9491, %v3664, %v3657
        %v9793 = vsel %vm9493, %v3671, %v9792
        %v9794 = vsel %vm9495, %v3678, %v9793
        %v9795 = vsel %vm9497, %v3685, %v9794
        %v9796 = vsel %vm9499, %v3692, %v9795
        %v9797 = vsel %vm9501, %v3699, %v9796
        %v9798 = vsel %vm9503, %v3706, %v9797
        %v9799 = vsel %vm9491, %v3720, %v3713
        %v9800 = vsel %vm9493, %v3727, %v9799
        %v9801 = vsel %vm9495, %v3734, %v9800
        %v9802 = vsel %vm9497, %v3741, %v9801
        %v9803 = vsel %vm9499, %v3748, %v9802
        %v9804 = vsel %vm9501, %v3755, %v9803
        %v9805 = vsel %vm9503, %v3762, %v9804
        %v9806 = vsel %vm9491, %v3776, %v3769
        %v9807 = vsel %vm9493, %v3783, %v9806
        %v9808 = vsel %vm9495, %v3790, %v9807
        %v9809 = vsel %vm9497, %v3797, %v9808
        %v9810 = vsel %vm9499, %v3804, %v9809
        %v9811 = vsel %vm9501, %v3811, %v9810
        %v9812 = vsel %vm9503, %v3818, %v9811
        %v9813 = vsel %vm9491, %v3832, %v3825
        %v9814 = vsel %vm9493, %v3839, %v9813
        %v9815 = vsel %vm9495, %v3846, %v9814
        %v9816 = vsel %vm9497, %v3853, %v9815
        %v9817 = vsel %vm9499, %v3860, %v9816
        %v9818 = vsel %vm9501, %v3867, %v9817
        %v9819 = vsel %vm9503, %v3874, %v9818
        %v9820 = vsel %vm9491, %v3888, %v3881
        %v9821 = vsel %vm9493, %v3895, %v9820
        %v9822 = vsel %vm9495, %v3902, %v9821
        %v9823 = vsel %vm9497, %v3909, %v9822
        %v9824 = vsel %vm9499, %v3916, %v9823
        %v9825 = vsel %vm9501, %v3923, %v9824
        %v9826 = vsel %vm9503, %v3930, %v9825
        %v9827 = vsel %vm9491, %v3944, %v3937
        %v9828 = vsel %vm9493, %v3951, %v9827
        %v9829 = vsel %vm9495, %v3958, %v9828
        %v9830 = vsel %vm9497, %v3965, %v9829
        %v9831 = vsel %vm9499, %v3972, %v9830
        %v9832 = vsel %vm9501, %v3979, %v9831
        %v9833 = vsel %vm9503, %v3986, %v9832
        %v9834 = vsel %vm9491, %v4000, %v3993
        %v9835 = vsel %vm9493, %v4007, %v9834
        %v9836 = vsel %vm9495, %v4014, %v9835
        %v9837 = vsel %vm9497, %v4021, %v9836
        %v9838 = vsel %vm9499, %v4028, %v9837
        %v9839 = vsel %vm9501, %v4035, %v9838
        %v9840 = vsel %vm9503, %v4042, %v9839
        %v9841 = vsel %vm9491, %v4056, %v4049
        %v9842 = vsel %vm9493, %v4063, %v9841
        %v9843 = vsel %vm9495, %v4070, %v9842
        %v9844 = vsel %vm9497, %v4077, %v9843
        %v9845 = vsel %vm9499, %v4084, %v9844
        %v9846 = vsel %vm9501, %v4091, %v9845
        %v9847 = vsel %vm9503, %v4098, %v9846
        %v9848 = vsel %vm9491, %v4112, %v4105
        %v9849 = vsel %vm9493, %v4119, %v9848
        %v9850 = vsel %vm9495, %v4126, %v9849
        %v9851 = vsel %vm9497, %v4133, %v9850
        %v9852 = vsel %vm9499, %v4140, %v9851
        %v9853 = vsel %vm9501, %v4147, %v9852
        %v9854 = vsel %vm9503, %v4154, %v9853
        %v9855 = vsel %vm9491, %v4168, %v4161
        %v9856 = vsel %vm9493, %v4175, %v9855
        %v9857 = vsel %vm9495, %v4182, %v9856
        %v9858 = vsel %vm9497, %v4189, %v9857
        %v9859 = vsel %vm9499, %v4196, %v9858
        %v9860 = vsel %vm9501, %v4203, %v9859
        %v9861 = vsel %vm9503, %v4210, %v9860
        %v9862 = vsel %vm9491, %v4224, %v4217
        %v9863 = vsel %vm9493, %v4231, %v9862
        %v9864 = vsel %vm9495, %v4238, %v9863
        %v9865 = vsel %vm9497, %v4245, %v9864
        %v9866 = vsel %vm9499, %v4252, %v9865
        %v9867 = vsel %vm9501, %v4259, %v9866
        %v9868 = vsel %vm9503, %v4266, %v9867
        %v9869 = vsel %vm9491, %v4280, %v4273
        %v9870 = vsel %vm9493, %v4287, %v9869
        %v9871 = vsel %vm9495, %v4294, %v9870
        %v9872 = vsel %vm9497, %v4301, %v9871
        %v9873 = vsel %vm9499, %v4308, %v9872
        %v9874 = vsel %vm9501, %v4315, %v9873
        %v9875 = vsel %vm9503, %v4322, %v9874
        %v9876 = vsel %vm9491, %v4336, %v4329
        %v9877 = vsel %vm9493, %v4343, %v9876
        %v9878 = vsel %vm9495, %v4350, %v9877
        %v9879 = vsel %vm9497, %v4357, %v9878
        %v9880 = vsel %vm9499, %v4364, %v9879
        %v9881 = vsel %vm9501, %v4371, %v9880
        %v9882 = vsel %vm9503, %v4378, %v9881
        %v9883 = vsel %vm9491, %v4392, %v4385
        %v9884 = vsel %vm9493, %v4399, %v9883
        %v9885 = vsel %vm9495, %v4406, %v9884
        %v9886 = vsel %vm9497, %v4413, %v9885
        %v9887 = vsel %vm9499, %v4420, %v9886
        %v9888 = vsel %vm9501, %v4427, %v9887
        %v9889 = vsel %vm9503, %v4434, %v9888
        %v9890 = vsel %vm9491, %v4448, %v4441
        %v9891 = vsel %vm9493, %v4455, %v9890
        %v9892 = vsel %vm9495, %v4462, %v9891
        %v9893 = vsel %vm9497, %v4469, %v9892
        %v9894 = vsel %vm9499, %v4476, %v9893
        %v9895 = vsel %vm9501, %v4483, %v9894
        %v9896 = vsel %vm9503, %v4490, %v9895
        %v9897 = vsel %vm9491, %v4504, %v4497
        %v9898 = vsel %vm9493, %v4511, %v9897
        %v9899 = vsel %vm9495, %v4518, %v9898
        %v9900 = vsel %vm9497, %v4525, %v9899
        %v9901 = vsel %vm9499, %v4532, %v9900
        %v9902 = vsel %vm9501, %v4539, %v9901
        %v9903 = vsel %vm9503, %v4546, %v9902
        %v9904 = vsel %vm9491, %v4560, %v4553
        %v9905 = vsel %vm9493, %v4567, %v9904
        %v9906 = vsel %vm9495, %v4574, %v9905
        %v9907 = vsel %vm9497, %v4581, %v9906
        %v9908 = vsel %vm9499, %v4588, %v9907
        %v9909 = vsel %vm9501, %v4595, %v9908
        %v9910 = vsel %vm9503, %v4602, %v9909
        %v9911 = vsel %vm9491, %v4616, %v4609
        %v9912 = vsel %vm9493, %v4623, %v9911
        %v9913 = vsel %vm9495, %v4630, %v9912
        %v9914 = vsel %vm9497, %v4637, %v9913
        %v9915 = vsel %vm9499, %v4644, %v9914
        %v9916 = vsel %vm9501, %v4651, %v9915
        %v9917 = vsel %vm9503, %v4658, %v9916
        %v9918 = vsel %vm9491, %v4672, %v4665
        %v9919 = vsel %vm9493, %v4679, %v9918
        %v9920 = vsel %vm9495, %v4686, %v9919
        %v9921 = vsel %vm9497, %v4693, %v9920
        %v9922 = vsel %vm9499, %v4700, %v9921
        %v9923 = vsel %vm9501, %v4707, %v9922
        %v9924 = vsel %vm9503, %v4714, %v9923
        %v9925 = vsel %vm9491, %v4728, %v4721
        %v9926 = vsel %vm9493, %v4735, %v9925
        %v9927 = vsel %vm9495, %v4742, %v9926
        %v9928 = vsel %vm9497, %v4749, %v9927
        %v9929 = vsel %vm9499, %v4756, %v9928
        %v9930 = vsel %vm9501, %v4763, %v9929
        %v9931 = vsel %vm9503, %v4770, %v9930
        %v9932 = vsel %vm9491, %v4784, %v4777
        %v9933 = vsel %vm9493, %v4791, %v9932
        %v9934 = vsel %vm9495, %v4798, %v9933
        %v9935 = vsel %vm9497, %v4805, %v9934
        %v9936 = vsel %vm9499, %v4812, %v9935
        %v9937 = vsel %vm9501, %v4819, %v9936
        %v9938 = vsel %vm9503, %v4826, %v9937
        %v9939 = vsel %vm9491, %v4840, %v4833
        %v9940 = vsel %vm9493, %v4847, %v9939
        %v9941 = vsel %vm9495, %v4854, %v9940
        %v9942 = vsel %vm9497, %v4861, %v9941
        %v9943 = vsel %vm9499, %v4868, %v9942
        %v9944 = vsel %vm9501, %v4875, %v9943
        %v9945 = vsel %vm9503, %v4882, %v9944
        %v9946 = vsel %vm9491, %v4896, %v4889
        %v9947 = vsel %vm9493, %v4903, %v9946
        %v9948 = vsel %vm9495, %v4910, %v9947
        %v9949 = vsel %vm9497, %v4917, %v9948
        %v9950 = vsel %vm9499, %v4924, %v9949
        %v9951 = vsel %vm9501, %v4931, %v9950
        %v9952 = vsel %vm9503, %v4938, %v9951
        %v9953 = vsel %vm9491, %v4952, %v4945
        %v9954 = vsel %vm9493, %v4959, %v9953
        %v9955 = vsel %vm9495, %v4966, %v9954
        %v9956 = vsel %vm9497, %v4973, %v9955
        %v9957 = vsel %vm9499, %v4980, %v9956
        %v9958 = vsel %vm9501, %v4987, %v9957
        %v9959 = vsel %vm9503, %v4994, %v9958
        %v9960 = vsel %vm9491, %v5008, %v5001
        %v9961 = vsel %vm9493, %v5015, %v9960
        %v9962 = vsel %vm9495, %v5022, %v9961
        %v9963 = vsel %vm9497, %v5029, %v9962
        %v9964 = vsel %vm9499, %v5036, %v9963
        %v9965 = vsel %vm9501, %v5043, %v9964
        %v9966 = vsel %vm9503, %v5050, %v9965
        %v9967 = vsel %vm9491, %v5064, %v5057
        %v9968 = vsel %vm9493, %v5071, %v9967
        %v9969 = vsel %vm9495, %v5078, %v9968
        %v9970 = vsel %vm9497, %v5085, %v9969
        %v9971 = vsel %vm9499, %v5092, %v9970
        %v9972 = vsel %vm9501, %v5099, %v9971
        %v9973 = vsel %vm9503, %v5106, %v9972
        %v9974 = vsel %vm9491, %v5120, %v5113
        %v9975 = vsel %vm9493, %v5127, %v9974
        %v9976 = vsel %vm9495, %v5134, %v9975
        %v9977 = vsel %vm9497, %v5141, %v9976
        %v9978 = vsel %vm9499, %v5148, %v9977
        %v9979 = vsel %vm9501, %v5155, %v9978
        %v9980 = vsel %vm9503, %v5162, %v9979
        %v9981 = vsel %vm9491, %v5176, %v5169
        %v9982 = vsel %vm9493, %v5183, %v9981
        %v9983 = vsel %vm9495, %v5190, %v9982
        %v9984 = vsel %vm9497, %v5197, %v9983
        %v9985 = vsel %vm9499, %v5204, %v9984
        %v9986 = vsel %vm9501, %v5211, %v9985
        %v9987 = vsel %vm9503, %v5218, %v9986
        %v9988 = vsel %vm9491, %v5232, %v5225
        %v9989 = vsel %vm9493, %v5239, %v9988
        %v9990 = vsel %vm9495, %v5246, %v9989
        %v9991 = vsel %vm9497, %v5253, %v9990
        %v9992 = vsel %vm9499, %v5260, %v9991
        %v9993 = vsel %vm9501, %v5267, %v9992
        %v9994 = vsel %vm9503, %v5274, %v9993
        %v9995 = vsel %vm9491, %v5288, %v5281
        %v9996 = vsel %vm9493, %v5295, %v9995
        %v9997 = vsel %vm9495, %v5302, %v9996
        %v9998 = vsel %vm9497, %v5309, %v9997
        %v9999 = vsel %vm9499, %v5316, %v9998
        %v10000 = vsel %vm9501, %v5323, %v9999
        %v10001 = vsel %vm9503, %v5330, %v10000
        %v10002 = vsel %vm9491, %v5344, %v5337
        %v10003 = vsel %vm9493, %v5351, %v10002
        %v10004 = vsel %vm9495, %v5358, %v10003
        %v10005 = vsel %vm9497, %v5365, %v10004
        %v10006 = vsel %vm9499, %v5372, %v10005
        %v10007 = vsel %vm9501, %v5379, %v10006
        %v10008 = vsel %vm9503, %v5386, %v10007
        %v10009 = vsel %vm9491, %v5400, %v5393
        %v10010 = vsel %vm9493, %v5407, %v10009
        %v10011 = vsel %vm9495, %v5414, %v10010
        %v10012 = vsel %vm9497, %v5421, %v10011
        %v10013 = vsel %vm9499, %v5428, %v10012
        %v10014 = vsel %vm9501, %v5435, %v10013
        %v10015 = vsel %vm9503, %v5442, %v10014
        %v10016 = vsel %vm9491, %v5456, %v5449
        %v10017 = vsel %vm9493, %v5463, %v10016
        %v10018 = vsel %vm9495, %v5470, %v10017
        %v10019 = vsel %vm9497, %v5477, %v10018
        %v10020 = vsel %vm9499, %v5484, %v10019
        %v10021 = vsel %vm9501, %v5491, %v10020
        %v10022 = vsel %vm9503, %v5498, %v10021
        %v10023 = vsel %vm9491, %v5512, %v5505
        %v10024 = vsel %vm9493, %v5519, %v10023
        %v10025 = vsel %vm9495, %v5526, %v10024
        %v10026 = vsel %vm9497, %v5533, %v10025
        %v10027 = vsel %vm9499, %v5540, %v10026
        %v10028 = vsel %vm9501, %v5547, %v10027
        %v10029 = vsel %vm9503, %v5554, %v10028
        %v10030 = vsel %vm9491, %v5568, %v5561
        %v10031 = vsel %vm9493, %v5575, %v10030
        %v10032 = vsel %vm9495, %v5582, %v10031
        %v10033 = vsel %vm9497, %v5589, %v10032
        %v10034 = vsel %vm9499, %v5596, %v10033
        %v10035 = vsel %vm9501, %v5603, %v10034
        %v10036 = vsel %vm9503, %v5610, %v10035
        %v10037 = vsel %vm9491, %v5624, %v5617
        %v10038 = vsel %vm9493, %v5631, %v10037
        %v10039 = vsel %vm9495, %v5638, %v10038
        %v10040 = vsel %vm9497, %v5645, %v10039
        %v10041 = vsel %vm9499, %v5652, %v10040
        %v10042 = vsel %vm9501, %v5659, %v10041
        %v10043 = vsel %vm9503, %v5666, %v10042
        %v10044 = vsel %vm9491, %v5680, %v5673
        %v10045 = vsel %vm9493, %v5687, %v10044
        %v10046 = vsel %vm9495, %v5694, %v10045
        %v10047 = vsel %vm9497, %v5701, %v10046
        %v10048 = vsel %vm9499, %v5708, %v10047
        %v10049 = vsel %vm9501, %v5715, %v10048
        %v10050 = vsel %vm9503, %v5722, %v10049
        %v10051 = vsel %vm9491, %v5736, %v5729
        %v10052 = vsel %vm9493, %v5743, %v10051
        %v10053 = vsel %vm9495, %v5750, %v10052
        %v10054 = vsel %vm9497, %v5757, %v10053
        %v10055 = vsel %vm9499, %v5764, %v10054
        %v10056 = vsel %vm9501, %v5771, %v10055
        %v10057 = vsel %vm9503, %v5778, %v10056
        %v10058 = vsel %vm9491, %v5792, %v5785
        %v10059 = vsel %vm9493, %v5799, %v10058
        %v10060 = vsel %vm9495, %v5806, %v10059
        %v10061 = vsel %vm9497, %v5813, %v10060
        %v10062 = vsel %vm9499, %v5820, %v10061
        %v10063 = vsel %vm9501, %v5827, %v10062
        %v10064 = vsel %vm9503, %v5834, %v10063
        %v10065 = vsel %vm9491, %v5848, %v5841
        %v10066 = vsel %vm9493, %v5855, %v10065
        %v10067 = vsel %vm9495, %v5862, %v10066
        %v10068 = vsel %vm9497, %v5869, %v10067
        %v10069 = vsel %vm9499, %v5876, %v10068
        %v10070 = vsel %vm9501, %v5883, %v10069
        %v10071 = vsel %vm9503, %v5890, %v10070
        %v10072 = vsel %vm9491, %v5904, %v5897
        %v10073 = vsel %vm9493, %v5911, %v10072
        %v10074 = vsel %vm9495, %v5918, %v10073
        %v10075 = vsel %vm9497, %v5925, %v10074
        %v10076 = vsel %vm9499, %v5932, %v10075
        %v10077 = vsel %vm9501, %v5939, %v10076
        %v10078 = vsel %vm9503, %v5946, %v10077
        %v10079 = vsel %vm9491, %v5960, %v5953
        %v10080 = vsel %vm9493, %v5967, %v10079
        %v10081 = vsel %vm9495, %v5974, %v10080
        %v10082 = vsel %vm9497, %v5981, %v10081
        %v10083 = vsel %vm9499, %v5988, %v10082
        %v10084 = vsel %vm9501, %v5995, %v10083
        %v10085 = vsel %vm9503, %v6002, %v10084
        %v10086 = vsel %vm9491, %v6016, %v6009
        %v10087 = vsel %vm9493, %v6023, %v10086
        %v10088 = vsel %vm9495, %v6030, %v10087
        %v10089 = vsel %vm9497, %v6037, %v10088
        %v10090 = vsel %vm9499, %v6044, %v10089
        %v10091 = vsel %vm9501, %v6051, %v10090
        %v10092 = vsel %vm9503, %v6058, %v10091
        %v10093 = vsel %vm9491, %v6072, %v6065
        %v10094 = vsel %vm9493, %v6079, %v10093
        %v10095 = vsel %vm9495, %v6086, %v10094
        %v10096 = vsel %vm9497, %v6093, %v10095
        %v10097 = vsel %vm9499, %v6100, %v10096
        %v10098 = vsel %vm9501, %v6107, %v10097
        %v10099 = vsel %vm9503, %v6114, %v10098
        %v10100 = vsel %vm9491, %v6128, %v6121
        %v10101 = vsel %vm9493, %v6135, %v10100
        %v10102 = vsel %vm9495, %v6142, %v10101
        %v10103 = vsel %vm9497, %v6149, %v10102
        %v10104 = vsel %vm9499, %v6156, %v10103
        %v10105 = vsel %vm9501, %v6163, %v10104
        %v10106 = vsel %vm9503, %v6170, %v10105
        %v10107 = vsel %vm9491, %v6184, %v6177
        %v10108 = vsel %vm9493, %v6191, %v10107
        %v10109 = vsel %vm9495, %v6198, %v10108
        %v10110 = vsel %vm9497, %v6205, %v10109
        %v10111 = vsel %vm9499, %v6212, %v10110
        %v10112 = vsel %vm9501, %v6219, %v10111
        %v10113 = vsel %vm9503, %v6226, %v10112
        %v10114 = vsel %vm9491, %v6240, %v6233
        %v10115 = vsel %vm9493, %v6247, %v10114
        %v10116 = vsel %vm9495, %v6254, %v10115
        %v10117 = vsel %vm9497, %v6261, %v10116
        %v10118 = vsel %vm9499, %v6268, %v10117
        %v10119 = vsel %vm9501, %v6275, %v10118
        %v10120 = vsel %vm9503, %v6282, %v10119
        %v10121 = vsel %vm9491, %v6296, %v6289
        %v10122 = vsel %vm9493, %v6303, %v10121
        %v10123 = vsel %vm9495, %v6310, %v10122
        %v10124 = vsel %vm9497, %v6317, %v10123
        %v10125 = vsel %vm9499, %v6324, %v10124
        %v10126 = vsel %vm9501, %v6331, %v10125
        %v10127 = vsel %vm9503, %v6338, %v10126
        %v10128 = vsel %vm9491, %v6352, %v6345
        %v10129 = vsel %vm9493, %v6359, %v10128
        %v10130 = vsel %vm9495, %v6366, %v10129
        %v10131 = vsel %vm9497, %v6373, %v10130
        %v10132 = vsel %vm9499, %v6380, %v10131
        %v10133 = vsel %vm9501, %v6387, %v10132
        %v10134 = vsel %vm9503, %v6394, %v10133
        %v10135 = vsel %vm9491, %v6408, %v6401
        %v10136 = vsel %vm9493, %v6415, %v10135
        %v10137 = vsel %vm9495, %v6422, %v10136
        %v10138 = vsel %vm9497, %v6429, %v10137
        %v10139 = vsel %vm9499, %v6436, %v10138
        %v10140 = vsel %vm9501, %v6443, %v10139
        %v10141 = vsel %vm9503, %v6450, %v10140
        %v10142 = vsel %vm9491, %v6464, %v6457
        %v10143 = vsel %vm9493, %v6471, %v10142
        %v10144 = vsel %vm9495, %v6478, %v10143
        %v10145 = vsel %vm9497, %v6485, %v10144
        %v10146 = vsel %vm9499, %v6492, %v10145
        %v10147 = vsel %vm9501, %v6499, %v10146
        %v10148 = vsel %vm9503, %v6506, %v10147
        %v10149 = vsel %vm9491, %v6520, %v6513
        %v10150 = vsel %vm9493, %v6527, %v10149
        %v10151 = vsel %vm9495, %v6534, %v10150
        %v10152 = vsel %vm9497, %v6541, %v10151
        %v10153 = vsel %vm9499, %v6548, %v10152
        %v10154 = vsel %vm9501, %v6555, %v10153
        %v10155 = vsel %vm9503, %v6562, %v10154
        %v10156 = vsel %vm9491, %v6576, %v6569
        %v10157 = vsel %vm9493, %v6583, %v10156
        %v10158 = vsel %vm9495, %v6590, %v10157
        %v10159 = vsel %vm9497, %v6597, %v10158
        %v10160 = vsel %vm9499, %v6604, %v10159
        %v10161 = vsel %vm9501, %v6611, %v10160
        %v10162 = vsel %vm9503, %v6618, %v10161
        %v10163 = vsel %vm9491, %v6632, %v6625
        %v10164 = vsel %vm9493, %v6639, %v10163
        %v10165 = vsel %vm9495, %v6646, %v10164
        %v10166 = vsel %vm9497, %v6653, %v10165
        %v10167 = vsel %vm9499, %v6660, %v10166
        %v10168 = vsel %vm9501, %v6667, %v10167
        %v10169 = vsel %vm9503, %v6674, %v10168
        %v10170 = vsel %vm9491, %v6688, %v6681
        %v10171 = vsel %vm9493, %v6695, %v10170
        %v10172 = vsel %vm9495, %v6702, %v10171
        %v10173 = vsel %vm9497, %v6709, %v10172
        %v10174 = vsel %vm9499, %v6716, %v10173
        %v10175 = vsel %vm9501, %v6723, %v10174
        %v10176 = vsel %vm9503, %v6730, %v10175
        %v10177 = vsel %vm9491, %v6744, %v6737
        %v10178 = vsel %vm9493, %v6751, %v10177
        %v10179 = vsel %vm9495, %v6758, %v10178
        %v10180 = vsel %vm9497, %v6765, %v10179
        %v10181 = vsel %vm9499, %v6772, %v10180
        %v10182 = vsel %vm9501, %v6779, %v10181
        %v10183 = vsel %vm9503, %v6786, %v10182
        %v10184 = vsel %vm9491, %v6800, %v6793
        %v10185 = vsel %vm9493, %v6807, %v10184
        %v10186 = vsel %vm9495, %v6814, %v10185
        %v10187 = vsel %vm9497, %v6821, %v10186
        %v10188 = vsel %vm9499, %v6828, %v10187
        %v10189 = vsel %vm9501, %v6835, %v10188
        %v10190 = vsel %vm9503, %v6842, %v10189
        %v10191 = vsel %vm9491, %v6856, %v6849
        %v10192 = vsel %vm9493, %v6863, %v10191
        %v10193 = vsel %vm9495, %v6870, %v10192
        %v10194 = vsel %vm9497, %v6877, %v10193
        %v10195 = vsel %vm9499, %v6884, %v10194
        %v10196 = vsel %vm9501, %v6891, %v10195
        %v10197 = vsel %vm9503, %v6898, %v10196
        %v10198 = vsel %vm9491, %v6912, %v6905
        %v10199 = vsel %vm9493, %v6919, %v10198
        %v10200 = vsel %vm9495, %v6926, %v10199
        %v10201 = vsel %vm9497, %v6933, %v10200
        %v10202 = vsel %vm9499, %v6940, %v10201
        %v10203 = vsel %vm9501, %v6947, %v10202
        %v10204 = vsel %vm9503, %v6954, %v10203
        %v10205 = vsel %vm9491, %v6968, %v6961
        %v10206 = vsel %vm9493, %v6975, %v10205
        %v10207 = vsel %vm9495, %v6982, %v10206
        %v10208 = vsel %vm9497, %v6989, %v10207
        %v10209 = vsel %vm9499, %v6996, %v10208
        %v10210 = vsel %vm9501, %v7003, %v10209
        %v10211 = vsel %vm9503, %v7010, %v10210
        %v10212 = vsel %vm9491, %v7024, %v7017
        %v10213 = vsel %vm9493, %v7031, %v10212
        %v10214 = vsel %vm9495, %v7038, %v10213
        %v10215 = vsel %vm9497, %v7045, %v10214
        %v10216 = vsel %vm9499, %v7052, %v10215
        %v10217 = vsel %vm9501, %v7059, %v10216
        %v10218 = vsel %vm9503, %v7066, %v10217
        %v10219 = vsel %vm9491, %v7080, %v7073
        %v10220 = vsel %vm9493, %v7087, %v10219
        %v10221 = vsel %vm9495, %v7094, %v10220
        %v10222 = vsel %vm9497, %v7101, %v10221
        %v10223 = vsel %vm9499, %v7108, %v10222
        %v10224 = vsel %vm9501, %v7115, %v10223
        %v10225 = vsel %vm9503, %v7122, %v10224
        %v10226 = vsel %vm9491, %v7136, %v7129
        %v10227 = vsel %vm9493, %v7143, %v10226
        %v10228 = vsel %vm9495, %v7150, %v10227
        %v10229 = vsel %vm9497, %v7157, %v10228
        %v10230 = vsel %vm9499, %v7164, %v10229
        %v10231 = vsel %vm9501, %v7171, %v10230
        %v10232 = vsel %vm9503, %v7178, %v10231
        %v10233 = vsel %vm9491, %v7192, %v7185
        %v10234 = vsel %vm9493, %v7199, %v10233
        %v10235 = vsel %vm9495, %v7206, %v10234
        %v10236 = vsel %vm9497, %v7213, %v10235
        %v10237 = vsel %vm9499, %v7220, %v10236
        %v10238 = vsel %vm9501, %v7227, %v10237
        %v10239 = vsel %vm9503, %v7234, %v10238
        %v10240 = vsel %vm9491, %v7248, %v7241
        %v10241 = vsel %vm9493, %v7255, %v10240
        %v10242 = vsel %vm9495, %v7262, %v10241
        %v10243 = vsel %vm9497, %v7269, %v10242
        %v10244 = vsel %vm9499, %v7276, %v10243
        %v10245 = vsel %vm9501, %v7283, %v10244
        %v10246 = vsel %vm9503, %v7290, %v10245
        %v10247 = vsel %vm9491, %v7304, %v7297
        %v10248 = vsel %vm9493, %v7311, %v10247
        %v10249 = vsel %vm9495, %v7318, %v10248
        %v10250 = vsel %vm9497, %v7325, %v10249
        %v10251 = vsel %vm9499, %v7332, %v10250
        %v10252 = vsel %vm9501, %v7339, %v10251
        %v10253 = vsel %vm9503, %v7346, %v10252
        %v10254 = vsel %vm9491, %v7360, %v7353
        %v10255 = vsel %vm9493, %v7367, %v10254
        %v10256 = vsel %vm9495, %v7374, %v10255
        %v10257 = vsel %vm9497, %v7381, %v10256
        %v10258 = vsel %vm9499, %v7388, %v10257
        %v10259 = vsel %vm9501, %v7395, %v10258
        %v10260 = vsel %vm9503, %v7402, %v10259
        %v10261 = vsel %vm9491, %v7416, %v7409
        %v10262 = vsel %vm9493, %v7423, %v10261
        %v10263 = vsel %vm9495, %v7430, %v10262
        %v10264 = vsel %vm9497, %v7437, %v10263
        %v10265 = vsel %vm9499, %v7444, %v10264
        %v10266 = vsel %vm9501, %v7451, %v10265
        %v10267 = vsel %vm9503, %v7458, %v10266
        %v10268 = vsel %vm9491, %v7472, %v7465
        %v10269 = vsel %vm9493, %v7479, %v10268
        %v10270 = vsel %vm9495, %v7486, %v10269
        %v10271 = vsel %vm9497, %v7493, %v10270
        %v10272 = vsel %vm9499, %v7500, %v10271
        %v10273 = vsel %vm9501, %v7507, %v10272
        %v10274 = vsel %vm9503, %v7514, %v10273
        %v10275 = vsel %vm9491, %v7528, %v7521
        %v10276 = vsel %vm9493, %v7535, %v10275
        %v10277 = vsel %vm9495, %v7542, %v10276
        %v10278 = vsel %vm9497, %v7549, %v10277
        %v10279 = vsel %vm9499, %v7556, %v10278
        %v10280 = vsel %vm9501, %v7563, %v10279
        %v10281 = vsel %vm9503, %v7570, %v10280
        %v10282 = vsel %vm9491, %v7584, %v7577
        %v10283 = vsel %vm9493, %v7591, %v10282
        %v10284 = vsel %vm9495, %v7598, %v10283
        %v10285 = vsel %vm9497, %v7605, %v10284
        %v10286 = vsel %vm9499, %v7612, %v10285
        %v10287 = vsel %vm9501, %v7619, %v10286
        %v10288 = vsel %vm9503, %v7626, %v10287
        %v10289 = vsel %vm9491, %v7640, %v7633
        %v10290 = vsel %vm9493, %v7647, %v10289
        %v10291 = vsel %vm9495, %v7654, %v10290
        %v10292 = vsel %vm9497, %v7661, %v10291
        %v10293 = vsel %vm9499, %v7668, %v10292
        %v10294 = vsel %vm9501, %v7675, %v10293
        %v10295 = vsel %vm9503, %v7682, %v10294
        %v10296 = vsel %vm9491, %v7696, %v7689
        %v10297 = vsel %vm9493, %v7703, %v10296
        %v10298 = vsel %vm9495, %v7710, %v10297
        %v10299 = vsel %vm9497, %v7717, %v10298
        %v10300 = vsel %vm9499, %v7724, %v10299
        %v10301 = vsel %vm9501, %v7731, %v10300
        %v10302 = vsel %vm9503, %v7738, %v10301
        %v10303 = vsel %vm9491, %v7752, %v7745
        %v10304 = vsel %vm9493, %v7759, %v10303
        %v10305 = vsel %vm9495, %v7766, %v10304
        %v10306 = vsel %vm9497, %v7773, %v10305
        %v10307 = vsel %vm9499, %v7780, %v10306
        %v10308 = vsel %vm9501, %v7787, %v10307
        %v10309 = vsel %vm9503, %v7794, %v10308
        %v10310 = vsel %vm9491, %v7808, %v7801
        %v10311 = vsel %vm9493, %v7815, %v10310
        %v10312 = vsel %vm9495, %v7822, %v10311
        %v10313 = vsel %vm9497, %v7829, %v10312
        %v10314 = vsel %vm9499, %v7836, %v10313
        %v10315 = vsel %vm9501, %v7843, %v10314
        %v10316 = vsel %vm9503, %v7850, %v10315
        %v10317 = vsel %vm9491, %v7864, %v7857
        %v10318 = vsel %vm9493, %v7871, %v10317
        %v10319 = vsel %vm9495, %v7878, %v10318
        %v10320 = vsel %vm9497, %v7885, %v10319
        %v10321 = vsel %vm9499, %v7892, %v10320
        %v10322 = vsel %vm9501, %v7899, %v10321
        %v10323 = vsel %vm9503, %v7906, %v10322
        %v10324 = vsel %vm9491, %v7920, %v7913
        %v10325 = vsel %vm9493, %v7927, %v10324
        %v10326 = vsel %vm9495, %v7934, %v10325
        %v10327 = vsel %vm9497, %v7941, %v10326
        %v10328 = vsel %vm9499, %v7948, %v10327
        %v10329 = vsel %vm9501, %v7955, %v10328
        %v10330 = vsel %vm9503, %v7962, %v10329
        %v10331 = vsel %vm9491, %v7976, %v7969
        %v10332 = vsel %vm9493, %v7983, %v10331
        %v10333 = vsel %vm9495, %v7990, %v10332
        %v10334 = vsel %vm9497, %v7997, %v10333
        %v10335 = vsel %vm9499, %v8004, %v10334
        %v10336 = vsel %vm9501, %v8011, %v10335
        %v10337 = vsel %vm9503, %v8018, %v10336
        %v10338 = vsel %vm9491, %v8032, %v8025
        %v10339 = vsel %vm9493, %v8039, %v10338
        %v10340 = vsel %vm9495, %v8046, %v10339
        %v10341 = vsel %vm9497, %v8053, %v10340
        %v10342 = vsel %vm9499, %v8060, %v10341
        %v10343 = vsel %vm9501, %v8067, %v10342
        %v10344 = vsel %vm9503, %v8074, %v10343
        %v10345 = vsel %vm9491, %v8088, %v8081
        %v10346 = vsel %vm9493, %v8095, %v10345
        %v10347 = vsel %vm9495, %v8102, %v10346
        %v10348 = vsel %vm9497, %v8109, %v10347
        %v10349 = vsel %vm9499, %v8116, %v10348
        %v10350 = vsel %vm9501, %v8123, %v10349
        %v10351 = vsel %vm9503, %v8130, %v10350
        %v10352 = vsel %vm9491, %v8144, %v8137
        %v10353 = vsel %vm9493, %v8151, %v10352
        %v10354 = vsel %vm9495, %v8158, %v10353
        %v10355 = vsel %vm9497, %v8165, %v10354
        %v10356 = vsel %vm9499, %v8172, %v10355
        %v10357 = vsel %vm9501, %v8179, %v10356
        %v10358 = vsel %vm9503, %v8186, %v10357
        %v10359 = vsel %vm9491, %v8200, %v8193
        %v10360 = vsel %vm9493, %v8207, %v10359
        %v10361 = vsel %vm9495, %v8214, %v10360
        %v10362 = vsel %vm9497, %v8221, %v10361
        %v10363 = vsel %vm9499, %v8228, %v10362
        %v10364 = vsel %vm9501, %v8235, %v10363
        %v10365 = vsel %vm9503, %v8242, %v10364
        %v10366 = vsel %vm9491, %v8256, %v8249
        %v10367 = vsel %vm9493, %v8263, %v10366
        %v10368 = vsel %vm9495, %v8270, %v10367
        %v10369 = vsel %vm9497, %v8277, %v10368
        %v10370 = vsel %vm9499, %v8284, %v10369
        %v10371 = vsel %vm9501, %v8291, %v10370
        %v10372 = vsel %vm9503, %v8298, %v10371
        %v10373 = vsel %vm9491, %v8312, %v8305
        %v10374 = vsel %vm9493, %v8319, %v10373
        %v10375 = vsel %vm9495, %v8326, %v10374
        %v10376 = vsel %vm9497, %v8333, %v10375
        %v10377 = vsel %vm9499, %v8340, %v10376
        %v10378 = vsel %vm9501, %v8347, %v10377
        %v10379 = vsel %vm9503, %v8354, %v10378
        %v10380 = vsel %vm9491, %v8368, %v8361
        %v10381 = vsel %vm9493, %v8375, %v10380
        %v10382 = vsel %vm9495, %v8382, %v10381
        %v10383 = vsel %vm9497, %v8389, %v10382
        %v10384 = vsel %vm9499, %v8396, %v10383
        %v10385 = vsel %vm9501, %v8403, %v10384
        %v10386 = vsel %vm9503, %v8410, %v10385
        %v10387 = vsel %vm9491, %v8424, %v8417
        %v10388 = vsel %vm9493, %v8431, %v10387
        %v10389 = vsel %vm9495, %v8438, %v10388
        %v10390 = vsel %vm9497, %v8445, %v10389
        %v10391 = vsel %vm9499, %v8452, %v10390
        %v10392 = vsel %vm9501, %v8459, %v10391
        %v10393 = vsel %vm9503, %v8466, %v10392
        %10522 = vmax.xlane.f32.xlu0 %v9504
        %v10523 = vpop.xlane.xlu0 %10522
        %10524 = vmax.xlane.f32.xlu0 %v9511
        %v10525 = vpop.xlane.xlu0 %10524
        %10526 = vmax.xlane.f32.xlu0 %v9518
        %v10527 = vpop.xlane.xlu0 %10526
        %10528 = vmax.xlane.f32.xlu0 %v9525
        %v10529 = vpop.xlane.xlu0 %10528
        %10530 = vmax.xlane.f32.xlu0 %v9532
        %v10531 = vpop.xlane.xlu0 %10530
        %10532 = vmax.xlane.f32.xlu0 %v9539
        %v10533 = vpop.xlane.xlu0 %10532
        %10534 = vmax.xlane.f32.xlu0 %v9546
        %v10535 = vpop.xlane.xlu0 %10534
        %10536 = vmax.xlane.f32.xlu0 %v9553
        %v10537 = vpop.xlane.xlu0 %10536
        %10538 = vmax.xlane.f32.xlu0 %v9560
        %v10539 = vpop.xlane.xlu0 %10538
        %10540 = vmax.xlane.f32.xlu0 %v9567
        %v10541 = vpop.xlane.xlu0 %10540
        %10542 = vmax.xlane.f32.xlu0 %v9574
        %v10543 = vpop.xlane.xlu0 %10542
        %10544 = vmax.xlane.f32.xlu0 %v9581
        %v10545 = vpop.xlane.xlu0 %10544
        %10546 = vmax.xlane.f32.xlu0 %v9588
        %v10547 = vpop.xlane.xlu0 %10546
        %10548 = vmax.xlane.f32.xlu0 %v9595
        %v10549 = vpop.xlane.xlu0 %10548
        %10550 = vmax.xlane.f32.xlu0 %v9602
        %v10551 = vpop.xlane.xlu0 %10550
        %10552 = vmax.xlane.f32.xlu0 %v9609
        %v10553 = vpop.xlane.xlu0 %10552
        %10554 = vmax.xlane.f32.xlu0 %v9616
        %v10555 = vpop.xlane.xlu0 %10554
        %10556 = vmax.xlane.f32.xlu0 %v9623
        %v10557 = vpop.xlane.xlu0 %10556
        %10558 = vmax.xlane.f32.xlu0 %v9630
        %v10559 = vpop.xlane.xlu0 %10558
        %10560 = vmax.xlane.f32.xlu0 %v9637
        %v10561 = vpop.xlane.xlu0 %10560
        %10562 = vmax.xlane.f32.xlu0 %v9644
        %v10563 = vpop.xlane.xlu0 %10562
        %10564 = vmax.xlane.f32.xlu0 %v9651
        %v10565 = vpop.xlane.xlu0 %10564
        %10566 = vmax.xlane.f32.xlu0 %v9658
        %v10567 = vpop.xlane.xlu0 %10566
        %10568 = vmax.xlane.f32.xlu0 %v9665
        %v10569 = vpop.xlane.xlu0 %10568
        %10570 = vmax.xlane.f32.xlu0 %v9672
        %v10571 = vpop.xlane.xlu0 %10570
        %10572 = vmax.xlane.f32.xlu0 %v9679
        %v10573 = vpop.xlane.xlu0 %10572
        %10574 = vmax.xlane.f32.xlu0 %v9686
        %v10575 = vpop.xlane.xlu0 %10574
        %10576 = vmax.xlane.f32.xlu0 %v9693
        %v10577 = vpop.xlane.xlu0 %10576
        %10578 = vmax.xlane.f32.xlu0 %v9700
        %v10579 = vpop.xlane.xlu0 %10578
        %10580 = vmax.xlane.f32.xlu0 %v9707
        %v10581 = vpop.xlane.xlu0 %10580
        %10582 = vmax.xlane.f32.xlu0 %v9714
        %v10583 = vpop.xlane.xlu0 %10582
        %10584 = vmax.xlane.f32.xlu0 %v9721
        %v10585 = vpop.xlane.xlu0 %10584
        %10586 = vmax.xlane.f32.xlu0 %v9728
        %v10587 = vpop.xlane.xlu0 %10586
        %10588 = vmax.xlane.f32.xlu0 %v9735
        %v10589 = vpop.xlane.xlu0 %10588
        %10590 = vmax.xlane.f32.xlu0 %v9742
        %v10591 = vpop.xlane.xlu0 %10590
        %10592 = vmax.xlane.f32.xlu0 %v9749
        %v10593 = vpop.xlane.xlu0 %10592
        %10594 = vmax.xlane.f32.xlu0 %v9756
        %v10595 = vpop.xlane.xlu0 %10594
        %10596 = vmax.xlane.f32.xlu0 %v9763
        %v10597 = vpop.xlane.xlu0 %10596
        %10598 = vmax.xlane.f32.xlu0 %v9770
        %v10599 = vpop.xlane.xlu0 %10598
        %10600 = vmax.xlane.f32.xlu0 %v9777
        %v10601 = vpop.xlane.xlu0 %10600
        %10602 = vmax.xlane.f32.xlu0 %v9784
        %v10603 = vpop.xlane.xlu0 %10602
        %10604 = vmax.xlane.f32.xlu0 %v9791
        %v10605 = vpop.xlane.xlu0 %10604
        %10606 = vmax.xlane.f32.xlu0 %v9798
        %v10607 = vpop.xlane.xlu0 %10606
        %10608 = vmax.xlane.f32.xlu0 %v9805
        %v10609 = vpop.xlane.xlu0 %10608
        %10610 = vmax.xlane.f32.xlu0 %v9812
        %v10611 = vpop.xlane.xlu0 %10610
        %10612 = vmax.xlane.f32.xlu0 %v9819
        %v10613 = vpop.xlane.xlu0 %10612
        %10614 = vmax.xlane.f32.xlu0 %v9826
        %v10615 = vpop.xlane.xlu0 %10614
        %10616 = vmax.xlane.f32.xlu0 %v9833
        %v10617 = vpop.xlane.xlu0 %10616
        %10618 = vmax.xlane.f32.xlu0 %v9840
        %v10619 = vpop.xlane.xlu0 %10618
        %10620 = vmax.xlane.f32.xlu0 %v9847
        %v10621 = vpop.xlane.xlu0 %10620
        %10622 = vmax.xlane.f32.xlu0 %v9854
        %v10623 = vpop.xlane.xlu0 %10622
        %10624 = vmax.xlane.f32.xlu0 %v9861
        %v10625 = vpop.xlane.xlu0 %10624
        %10626 = vmax.xlane.f32.xlu0 %v9868
        %v10627 = vpop.xlane.xlu0 %10626
        %10628 = vmax.xlane.f32.xlu0 %v9875
        %v10629 = vpop.xlane.xlu0 %10628
        %10630 = vmax.xlane.f32.xlu0 %v9882
        %v10631 = vpop.xlane.xlu0 %10630
        %10632 = vmax.xlane.f32.xlu0 %v9889
        %v10633 = vpop.xlane.xlu0 %10632
        %10634 = vmax.xlane.f32.xlu0 %v9896
        %v10635 = vpop.xlane.xlu0 %10634
        %10636 = vmax.xlane.f32.xlu0 %v9903
        %v10637 = vpop.xlane.xlu0 %10636
        %10638 = vmax.xlane.f32.xlu0 %v9910
        %v10639 = vpop.xlane.xlu0 %10638
        %10640 = vmax.xlane.f32.xlu0 %v9917
        %v10641 = vpop.xlane.xlu0 %10640
        %10642 = vmax.xlane.f32.xlu0 %v9924
        %v10643 = vpop.xlane.xlu0 %10642
        %10644 = vmax.xlane.f32.xlu0 %v9931
        %v10645 = vpop.xlane.xlu0 %10644
        %10646 = vmax.xlane.f32.xlu0 %v9938
        %v10647 = vpop.xlane.xlu0 %10646
        %10648 = vmax.xlane.f32.xlu0 %v9945
        %v10649 = vpop.xlane.xlu0 %10648
        %10650 = vmax.xlane.f32.xlu0 %v9952
        %v10651 = vpop.xlane.xlu0 %10650
        %10652 = vmax.xlane.f32.xlu0 %v9959
        %v10653 = vpop.xlane.xlu0 %10652
        %10654 = vmax.xlane.f32.xlu0 %v9966
        %v10655 = vpop.xlane.xlu0 %10654
        %10656 = vmax.xlane.f32.xlu0 %v9973
        %v10657 = vpop.xlane.xlu0 %10656
        %10658 = vmax.xlane.f32.xlu0 %v9980
        %v10659 = vpop.xlane.xlu0 %10658
        %10660 = vmax.xlane.f32.xlu0 %v9987
        %v10661 = vpop.xlane.xlu0 %10660
        %10662 = vmax.xlane.f32.xlu0 %v9994
        %v10663 = vpop.xlane.xlu0 %10662
        %10664 = vmax.xlane.f32.xlu0 %v10001
        %v10665 = vpop.xlane.xlu0 %10664
        %10666 = vmax.xlane.f32.xlu0 %v10008
        %v10667 = vpop.xlane.xlu0 %10666
        %10668 = vmax.xlane.f32.xlu0 %v10015
        %v10669 = vpop.xlane.xlu0 %10668
        %10670 = vmax.xlane.f32.xlu0 %v10022
        %v10671 = vpop.xlane.xlu0 %10670
        %10672 = vmax.xlane.f32.xlu0 %v10029
        %v10673 = vpop.xlane.xlu0 %10672
        %10674 = vmax.xlane.f32.xlu0 %v10036
        %v10675 = vpop.xlane.xlu0 %10674
        %10676 = vmax.xlane.f32.xlu0 %v10043
        %v10677 = vpop.xlane.xlu0 %10676
        %10678 = vmax.xlane.f32.xlu0 %v10050
        %v10679 = vpop.xlane.xlu0 %10678
        %10680 = vmax.xlane.f32.xlu0 %v10057
        %v10681 = vpop.xlane.xlu0 %10680
        %10682 = vmax.xlane.f32.xlu0 %v10064
        %v10683 = vpop.xlane.xlu0 %10682
        %10684 = vmax.xlane.f32.xlu0 %v10071
        %v10685 = vpop.xlane.xlu0 %10684
        %10686 = vmax.xlane.f32.xlu0 %v10078
        %v10687 = vpop.xlane.xlu0 %10686
        %10688 = vmax.xlane.f32.xlu0 %v10085
        %v10689 = vpop.xlane.xlu0 %10688
        %10690 = vmax.xlane.f32.xlu0 %v10092
        %v10691 = vpop.xlane.xlu0 %10690
        %10692 = vmax.xlane.f32.xlu0 %v10099
        %v10693 = vpop.xlane.xlu0 %10692
        %10694 = vmax.xlane.f32.xlu0 %v10106
        %v10695 = vpop.xlane.xlu0 %10694
        %10696 = vmax.xlane.f32.xlu0 %v10113
        %v10697 = vpop.xlane.xlu0 %10696
        %10698 = vmax.xlane.f32.xlu0 %v10120
        %v10699 = vpop.xlane.xlu0 %10698
        %10700 = vmax.xlane.f32.xlu0 %v10127
        %v10701 = vpop.xlane.xlu0 %10700
        %10702 = vmax.xlane.f32.xlu0 %v10134
        %v10703 = vpop.xlane.xlu0 %10702
        %10704 = vmax.xlane.f32.xlu0 %v10141
        %v10705 = vpop.xlane.xlu0 %10704
        %10706 = vmax.xlane.f32.xlu0 %v10148
        %v10707 = vpop.xlane.xlu0 %10706
        %10708 = vmax.xlane.f32.xlu0 %v10155
        %v10709 = vpop.xlane.xlu0 %10708
        %10710 = vmax.xlane.f32.xlu0 %v10162
        %v10711 = vpop.xlane.xlu0 %10710
        %10712 = vmax.xlane.f32.xlu0 %v10169
        %v10713 = vpop.xlane.xlu0 %10712
        %10714 = vmax.xlane.f32.xlu0 %v10176
        %v10715 = vpop.xlane.xlu0 %10714
        %10716 = vmax.xlane.f32.xlu0 %v10183
        %v10717 = vpop.xlane.xlu0 %10716
        %10718 = vmax.xlane.f32.xlu0 %v10190
        %v10719 = vpop.xlane.xlu0 %10718
        %10720 = vmax.xlane.f32.xlu0 %v10197
        %v10721 = vpop.xlane.xlu0 %10720
        %10722 = vmax.xlane.f32.xlu0 %v10204
        %v10723 = vpop.xlane.xlu0 %10722
        %10724 = vmax.xlane.f32.xlu0 %v10211
        %v10725 = vpop.xlane.xlu0 %10724
        %10726 = vmax.xlane.f32.xlu0 %v10218
        %v10727 = vpop.xlane.xlu0 %10726
        %10728 = vmax.xlane.f32.xlu0 %v10225
        %v10729 = vpop.xlane.xlu0 %10728
        %10730 = vmax.xlane.f32.xlu0 %v10232
        %v10731 = vpop.xlane.xlu0 %10730
        %10732 = vmax.xlane.f32.xlu0 %v10239
        %v10733 = vpop.xlane.xlu0 %10732
        %10734 = vmax.xlane.f32.xlu0 %v10246
        %v10735 = vpop.xlane.xlu0 %10734
        %10736 = vmax.xlane.f32.xlu0 %v10253
        %v10737 = vpop.xlane.xlu0 %10736
        %10738 = vmax.xlane.f32.xlu0 %v10260
        %v10739 = vpop.xlane.xlu0 %10738
        %10740 = vmax.xlane.f32.xlu0 %v10267
        %v10741 = vpop.xlane.xlu0 %10740
        %10742 = vmax.xlane.f32.xlu0 %v10274
        %v10743 = vpop.xlane.xlu0 %10742
        %10744 = vmax.xlane.f32.xlu0 %v10281
        %v10745 = vpop.xlane.xlu0 %10744
        %10746 = vmax.xlane.f32.xlu0 %v10288
        %v10747 = vpop.xlane.xlu0 %10746
        %10748 = vmax.xlane.f32.xlu0 %v10295
        %v10749 = vpop.xlane.xlu0 %10748
        %10750 = vmax.xlane.f32.xlu0 %v10302
        %v10751 = vpop.xlane.xlu0 %10750
        %10752 = vmax.xlane.f32.xlu0 %v10309
        %v10753 = vpop.xlane.xlu0 %10752
        %10754 = vmax.xlane.f32.xlu0 %v10316
        %v10755 = vpop.xlane.xlu0 %10754
        %10756 = vmax.xlane.f32.xlu0 %v10323
        %v10757 = vpop.xlane.xlu0 %10756
        %10758 = vmax.xlane.f32.xlu0 %v10330
        %v10759 = vpop.xlane.xlu0 %10758
        %10760 = vmax.xlane.f32.xlu0 %v10337
        %v10761 = vpop.xlane.xlu0 %10760
        %10762 = vmax.xlane.f32.xlu0 %v10344
        %v10763 = vpop.xlane.xlu0 %10762
        %10764 = vmax.xlane.f32.xlu0 %v10351
        %v10765 = vpop.xlane.xlu0 %10764
        %10766 = vmax.xlane.f32.xlu0 %v10358
        %v10767 = vpop.xlane.xlu0 %10766
        %10768 = vmax.xlane.f32.xlu0 %v10365
        %v10769 = vpop.xlane.xlu0 %10768
        %10770 = vmax.xlane.f32.xlu0 %v10372
        %v10771 = vpop.xlane.xlu0 %10770
        %10772 = vmax.xlane.f32.xlu0 %v10379
        %v10773 = vpop.xlane.xlu0 %10772
        %10774 = vmax.xlane.f32.xlu0 %v10386
        %v10775 = vpop.xlane.xlu0 %10774
        %10776 = vmax.xlane.f32.xlu0 %v10393
        %v10777 = vpop.xlane.xlu0 %10776
        %v10778 = vld [vmem:[#allocation2] sm:$0xff]
        %v10779 = vld [vmem:[%s266] sm:$0xff]
        %v10780 = vld [vmem:[%s266 + $0x8] sm:$0xff]
        %v10781 = vld [vmem:[%s266 + $0x10] sm:$0xff]
        %v10782 = vld [vmem:[%s266 + $0x18] sm:$0xff]
        %v10783 = vld [vmem:[%s266 + $0x20] sm:$0xff]
        %v10784 = vld [vmem:[%s266 + $0x28] sm:$0xff]
        %v10785 = vld [vmem:[%s266 + $0x30] sm:$0xff]
        %v10786 = vld [vmem:[%s266 + $0x38] sm:$0xff]
        %v10787 = vld [vmem:[%s266 + $0x40] sm:$0xff]
        %v10788 = vld [vmem:[%s266 + $0x48] sm:$0xff]
        %v10789 = vld [vmem:[%s266 + $0x50] sm:$0xff]
        %v10790 = vld [vmem:[%s266 + $0x58] sm:$0xff]
        %v10791 = vld [vmem:[%s266 + $0x60] sm:$0xff]
        %v10792 = vld [vmem:[%s266 + $0x68] sm:$0xff]
        %v10793 = vld [vmem:[%s266 + $0x70] sm:$0xff]
        %v10794 = vld [vmem:[%s266 + $0x78] sm:$0xff]
        %v10923 = vlaneseq
        %v10924 = vand.u32 %v10923, 127
        %v10925 = vlaneseq
        %v10926 = vshrl.u32 %v10925, 7
        %v10927 = vsub.s32 %v10924, %v10926
        %v10928 = vrot.slane %v10523, %v10927
        %v10929 = vadd.s32 %v10924, 4294967288
        %v10930 = vlaneseq
        %v10931 = vshrl.u32 %v10930, 7
        %v10932 = vsub.s32 %v10929, %v10931
        %v10933 = vrot.slane %v10525, %v10932
        %vm10934 = vcmask 130112
        %v10935 = vsel %vm10934, %v10933, %v10928
        %v10936 = vadd.s32 %v10924, 4294967280
        %v10937 = vlaneseq
        %v10938 = vshrl.u32 %v10937, 7
        %v10939 = vsub.s32 %v10936, %v10938
        %v10940 = vrot.slane %v10527, %v10939
        %vm10941 = vcmask 195712
        %v10942 = vsel %vm10941, %v10940, %v10935
        %v10943 = vadd.s32 %v10924, 4294967272
        %v10944 = vlaneseq
        %v10945 = vshrl.u32 %v10944, 7
        %v10946 = vsub.s32 %v10943, %v10945
        %v10947 = vrot.slane %v10529, %v10946
        %vm10948 = vcmask 261312
        %v10949 = vsel %vm10948, %v10947, %v10942
        %v10950 = vadd.s32 %v10924, 4294967264
        %v10951 = vlaneseq
        %v10952 = vshrl.u32 %v10951, 7
        %v10953 = vsub.s32 %v10950, %v10952
        %v10954 = vrot.slane %v10531, %v10953
        %vm10955 = vcmask 326912
        %v10956 = vsel %vm10955, %v10954, %v10949
        %v10957 = vadd.s32 %v10924, 4294967256
        %v10958 = vlaneseq
        %v10959 = vshrl.u32 %v10958, 7
        %v10960 = vsub.s32 %v10957, %v10959
        %v10961 = vrot.slane %v10533, %v10960
        %vm10962 = vcmask 392512
        %v10963 = vsel %vm10962, %v10961, %v10956
        %v10964 = vadd.s32 %v10924, 4294967248
        %v10965 = vlaneseq
        %v10966 = vshrl.u32 %v10965, 7
        %v10967 = vsub.s32 %v10964, %v10966
        %v10968 = vrot.slane %v10535, %v10967
        %vm10969 = vcmask 458112
        %v10970 = vsel %vm10969, %v10968, %v10963
        %v10971 = vadd.s32 %v10924, 4294967240
        %v10972 = vlaneseq
        %v10973 = vshrl.u32 %v10972, 7
        %v10974 = vsub.s32 %v10971, %v10973
        %v10975 = vrot.slane %v10537, %v10974
        %vm10976 = vcmask 523712
        %v10977 = vsel %vm10976, %v10975, %v10970
        %v10978 = vadd.s32 %v10924, 4294967232
        %v10979 = vlaneseq
        %v10980 = vshrl.u32 %v10979, 7
        %v10981 = vsub.s32 %v10978, %v10980
        %v10982 = vrot.slane %v10539, %v10981
        %vm10983 = vcmask 589312
        %v10984 = vsel %vm10983, %v10982, %v10977
        %v10985 = vadd.s32 %v10924, 4294967224
        %v10986 = vlaneseq
        %v10987 = vshrl.u32 %v10986, 7
        %v10988 = vsub.s32 %v10985, %v10987
        %v10989 = vrot.slane %v10541, %v10988
        %vm10990 = vcmask 654912
        %v10991 = vsel %vm10990, %v10989, %v10984
        %v10992 = vadd.s32 %v10924, 4294967216
        %v10993 = vlaneseq
        %v10994 = vshrl.u32 %v10993, 7
        %v10995 = vsub.s32 %v10992, %v10994
        %v10996 = vrot.slane %v10543, %v10995
        %vm10997 = vcmask 720512
        %v10998 = vsel %vm10997, %v10996, %v10991
        %v10999 = vadd.s32 %v10924, 4294967208
        %v11000 = vlaneseq
        %v11001 = vshrl.u32 %v11000, 7
        %v11002 = vsub.s32 %v10999, %v11001
        %v11003 = vrot.slane %v10545, %v11002
        %vm11004 = vcmask 786112
        %v11005 = vsel %vm11004, %v11003, %v10998
        %v11006 = vadd.s32 %v10924, 4294967200
        %v11007 = vlaneseq
        %v11008 = vshrl.u32 %v11007, 7
        %v11009 = vsub.s32 %v11006, %v11008
        %v11010 = vrot.slane %v10547, %v11009
        %vm11011 = vcmask 851712
        %v11012 = vsel %vm11011, %v11010, %v11005
        %v11013 = vadd.s32 %v10924, 4294967192
        %v11014 = vlaneseq
        %v11015 = vshrl.u32 %v11014, 7
        %v11016 = vsub.s32 %v11013, %v11015
        %v11017 = vrot.slane %v10549, %v11016
        %vm11018 = vcmask 917312
        %v11019 = vsel %vm11018, %v11017, %v11012
        %v11020 = vadd.s32 %v10924, 4294967184
        %v11021 = vlaneseq
        %v11022 = vshrl.u32 %v11021, 7
        %v11023 = vsub.s32 %v11020, %v11022
        %v11024 = vrot.slane %v10551, %v11023
        %vm11025 = vcmask 982912
        %v11026 = vsel %vm11025, %v11024, %v11019
        %v11027 = vadd.s32 %v10924, 4294967176
        %v11028 = vlaneseq
        %v11029 = vshrl.u32 %v11028, 7
        %v11030 = vsub.s32 %v11027, %v11029
        %v11031 = vrot.slane %v10553, %v11030
        %vm11032 = vcmask 1048512
        %v11033 = vsel %vm11032, %v11031, %v11026
        %v11034 = vlaneseq
        %v11035 = vshrl.u32 %v11034, 7
        %v11036 = vsub.s32 %v10924, %v11035
        %v11037 = vrot.slane %v10555, %v11036
        %v11038 = vlaneseq
        %v11039 = vshrl.u32 %v11038, 7
        %v11040 = vsub.s32 %v10929, %v11039
        %v11041 = vrot.slane %v10557, %v11040
        %v11042 = vsel %vm10934, %v11041, %v11037
        %v11043 = vlaneseq
        %v11044 = vshrl.u32 %v11043, 7
        %v11045 = vsub.s32 %v10936, %v11044
        %v11046 = vrot.slane %v10559, %v11045
        %v11047 = vsel %vm10941, %v11046, %v11042
        %v11048 = vlaneseq
        %v11049 = vshrl.u32 %v11048, 7
        %v11050 = vsub.s32 %v10943, %v11049
        %v11051 = vrot.slane %v10561, %v11050
        %v11052 = vsel %vm10948, %v11051, %v11047
        %v11053 = vlaneseq
        %v11054 = vshrl.u32 %v11053, 7
        %v11055 = vsub.s32 %v10950, %v11054
        %v11056 = vrot.slane %v10563, %v11055
        %v11057 = vsel %vm10955, %v11056, %v11052
        %v11058 = vlaneseq
        %v11059 = vshrl.u32 %v11058, 7
        %v11060 = vsub.s32 %v10957, %v11059
        %v11061 = vrot.slane %v10565, %v11060
        %v11062 = vsel %vm10962, %v11061, %v11057
        %v11063 = vlaneseq
        %v11064 = vshrl.u32 %v11063, 7
        %v11065 = vsub.s32 %v10964, %v11064
        %v11066 = vrot.slane %v10567, %v11065
        %v11067 = vsel %vm10969, %v11066, %v11062
        %v11068 = vlaneseq
        %v11069 = vshrl.u32 %v11068, 7
        %v11070 = vsub.s32 %v10971, %v11069
        %v11071 = vrot.slane %v10569, %v11070
        %v11072 = vsel %vm10976, %v11071, %v11067
        %v11073 = vlaneseq
        %v11074 = vshrl.u32 %v11073, 7
        %v11075 = vsub.s32 %v10978, %v11074
        %v11076 = vrot.slane %v10571, %v11075
        %v11077 = vsel %vm10983, %v11076, %v11072
        %v11078 = vlaneseq
        %v11079 = vshrl.u32 %v11078, 7
        %v11080 = vsub.s32 %v10985, %v11079
        %v11081 = vrot.slane %v10573, %v11080
        %v11082 = vsel %vm10990, %v11081, %v11077
        %v11083 = vlaneseq
        %v11084 = vshrl.u32 %v11083, 7
        %v11085 = vsub.s32 %v10992, %v11084
        %v11086 = vrot.slane %v10575, %v11085
        %v11087 = vsel %vm10997, %v11086, %v11082
        %v11088 = vlaneseq
        %v11089 = vshrl.u32 %v11088, 7
        %v11090 = vsub.s32 %v10999, %v11089
        %v11091 = vrot.slane %v10577, %v11090
        %v11092 = vsel %vm11004, %v11091, %v11087
        %v11093 = vlaneseq
        %v11094 = vshrl.u32 %v11093, 7
        %v11095 = vsub.s32 %v11006, %v11094
        %v11096 = vrot.slane %v10579, %v11095
        %v11097 = vsel %vm11011, %v11096, %v11092
        %v11098 = vlaneseq
        %v11099 = vshrl.u32 %v11098, 7
        %v11100 = vsub.s32 %v11013, %v11099
        %v11101 = vrot.slane %v10581, %v11100
        %v11102 = vsel %vm11018, %v11101, %v11097
        %v11103 = vlaneseq
        %v11104 = vshrl.u32 %v11103, 7
        %v11105 = vsub.s32 %v11020, %v11104
        %v11106 = vrot.slane %v10583, %v11105
        %v11107 = vsel %vm11025, %v11106, %v11102
        %v11108 = vlaneseq
        %v11109 = vshrl.u32 %v11108, 7
        %v11110 = vsub.s32 %v11027, %v11109
        %v11111 = vrot.slane %v10585, %v11110
        %v11112 = vsel %vm11032, %v11111, %v11107
        %v11113 = vlaneseq
        %v11114 = vshrl.u32 %v11113, 7
        %v11115 = vsub.s32 %v10924, %v11114
        %v11116 = vrot.slane %v10587, %v11115
        %v11117 = vlaneseq
        %v11118 = vshrl.u32 %v11117, 7
        %v11119 = vsub.s32 %v10929, %v11118
        %v11120 = vrot.slane %v10589, %v11119
        %v11121 = vsel %vm10934, %v11120, %v11116
        %v11122 = vlaneseq
        %v11123 = vshrl.u32 %v11122, 7
        %v11124 = vsub.s32 %v10936, %v11123
        %v11125 = vrot.slane %v10591, %v11124
        %v11126 = vsel %vm10941, %v11125, %v11121
        %v11127 = vlaneseq
        %v11128 = vshrl.u32 %v11127, 7
        %v11129 = vsub.s32 %v10943, %v11128
        %v11130 = vrot.slane %v10593, %v11129
        %v11131 = vsel %vm10948, %v11130, %v11126
        %v11132 = vlaneseq
        %v11133 = vshrl.u32 %v11132, 7
        %v11134 = vsub.s32 %v10950, %v11133
        %v11135 = vrot.slane %v10595, %v11134
        %v11136 = vsel %vm10955, %v11135, %v11131
        %v11137 = vlaneseq
        %v11138 = vshrl.u32 %v11137, 7
        %v11139 = vsub.s32 %v10957, %v11138
        %v11140 = vrot.slane %v10597, %v11139
        %v11141 = vsel %vm10962, %v11140, %v11136
        %v11142 = vlaneseq
        %v11143 = vshrl.u32 %v11142, 7
        %v11144 = vsub.s32 %v10964, %v11143
        %v11145 = vrot.slane %v10599, %v11144
        %v11146 = vsel %vm10969, %v11145, %v11141
        %v11147 = vlaneseq
        %v11148 = vshrl.u32 %v11147, 7
        %v11149 = vsub.s32 %v10971, %v11148
        %v11150 = vrot.slane %v10601, %v11149
        %v11151 = vsel %vm10976, %v11150, %v11146
        %v11152 = vlaneseq
        %v11153 = vshrl.u32 %v11152, 7
        %v11154 = vsub.s32 %v10978, %v11153
        %v11155 = vrot.slane %v10603, %v11154
        %v11156 = vsel %vm10983, %v11155, %v11151
        %v11157 = vlaneseq
        %v11158 = vshrl.u32 %v11157, 7
        %v11159 = vsub.s32 %v10985, %v11158
        %v11160 = vrot.slane %v10605, %v11159
        %v11161 = vsel %vm10990, %v11160, %v11156
        %v11162 = vlaneseq
        %v11163 = vshrl.u32 %v11162, 7
        %v11164 = vsub.s32 %v10992, %v11163
        %v11165 = vrot.slane %v10607, %v11164
        %v11166 = vsel %vm10997, %v11165, %v11161
        %v11167 = vlaneseq
        %v11168 = vshrl.u32 %v11167, 7
        %v11169 = vsub.s32 %v10999, %v11168
        %v11170 = vrot.slane %v10609, %v11169
        %v11171 = vsel %vm11004, %v11170, %v11166
        %v11172 = vlaneseq
        %v11173 = vshrl.u32 %v11172, 7
        %v11174 = vsub.s32 %v11006, %v11173
        %v11175 = vrot.slane %v10611, %v11174
        %v11176 = vsel %vm11011, %v11175, %v11171
        %v11177 = vlaneseq
        %v11178 = vshrl.u32 %v11177, 7
        %v11179 = vsub.s32 %v11013, %v11178
        %v11180 = vrot.slane %v10613, %v11179
        %v11181 = vsel %vm11018, %v11180, %v11176
        %v11182 = vlaneseq
        %v11183 = vshrl.u32 %v11182, 7
        %v11184 = vsub.s32 %v11020, %v11183
        %v11185 = vrot.slane %v10615, %v11184
        %v11186 = vsel %vm11025, %v11185, %v11181
        %v11187 = vlaneseq
        %v11188 = vshrl.u32 %v11187, 7
        %v11189 = vsub.s32 %v11027, %v11188
        %v11190 = vrot.slane %v10617, %v11189
        %v11191 = vsel %vm11032, %v11190, %v11186
        %v11192 = vlaneseq
        %v11193 = vshrl.u32 %v11192, 7
        %v11194 = vsub.s32 %v10924, %v11193
        %v11195 = vrot.slane %v10619, %v11194
        %v11196 = vlaneseq
        %v11197 = vshrl.u32 %v11196, 7
        %v11198 = vsub.s32 %v10929, %v11197
        %v11199 = vrot.slane %v10621, %v11198
        %v11200 = vsel %vm10934, %v11199, %v11195
        %v11201 = vlaneseq
        %v11202 = vshrl.u32 %v11201, 7
        %v11203 = vsub.s32 %v10936, %v11202
        %v11204 = vrot.slane %v10623, %v11203
        %v11205 = vsel %vm10941, %v11204, %v11200
        %v11206 = vlaneseq
        %v11207 = vshrl.u32 %v11206, 7
        %v11208 = vsub.s32 %v10943, %v11207
        %v11209 = vrot.slane %v10625, %v11208
        %v11210 = vsel %vm10948, %v11209, %v11205
        %v11211 = vlaneseq
        %v11212 = vshrl.u32 %v11211, 7
        %v11213 = vsub.s32 %v10950, %v11212
        %v11214 = vrot.slane %v10627, %v11213
        %v11215 = vsel %vm10955, %v11214, %v11210
        %v11216 = vlaneseq
        %v11217 = vshrl.u32 %v11216, 7
        %v11218 = vsub.s32 %v10957, %v11217
        %v11219 = vrot.slane %v10629, %v11218
        %v11220 = vsel %vm10962, %v11219, %v11215
        %v11221 = vlaneseq
        %v11222 = vshrl.u32 %v11221, 7
        %v11223 = vsub.s32 %v10964, %v11222
        %v11224 = vrot.slane %v10631, %v11223
        %v11225 = vsel %vm10969, %v11224, %v11220
        %v11226 = vlaneseq
        %v11227 = vshrl.u32 %v11226, 7
        %v11228 = vsub.s32 %v10971, %v11227
        %v11229 = vrot.slane %v10633, %v11228
        %v11230 = vsel %vm10976, %v11229, %v11225
        %v11231 = vlaneseq
        %v11232 = vshrl.u32 %v11231, 7
        %v11233 = vsub.s32 %v10978, %v11232
        %v11234 = vrot.slane %v10635, %v11233
        %v11235 = vsel %vm10983, %v11234, %v11230
        %v11236 = vlaneseq
        %v11237 = vshrl.u32 %v11236, 7
        %v11238 = vsub.s32 %v10985, %v11237
        %v11239 = vrot.slane %v10637, %v11238
        %v11240 = vsel %vm10990, %v11239, %v11235
        %v11241 = vlaneseq
        %v11242 = vshrl.u32 %v11241, 7
        %v11243 = vsub.s32 %v10992, %v11242
        %v11244 = vrot.slane %v10639, %v11243
        %v11245 = vsel %vm10997, %v11244, %v11240
        %v11246 = vlaneseq
        %v11247 = vshrl.u32 %v11246, 7
        %v11248 = vsub.s32 %v10999, %v11247
        %v11249 = vrot.slane %v10641, %v11248
        %v11250 = vsel %vm11004, %v11249, %v11245
        %v11251 = vlaneseq
        %v11252 = vshrl.u32 %v11251, 7
        %v11253 = vsub.s32 %v11006, %v11252
        %v11254 = vrot.slane %v10643, %v11253
        %v11255 = vsel %vm11011, %v11254, %v11250
        %v11256 = vlaneseq
        %v11257 = vshrl.u32 %v11256, 7
        %v11258 = vsub.s32 %v11013, %v11257
        %v11259 = vrot.slane %v10645, %v11258
        %v11260 = vsel %vm11018, %v11259, %v11255
        %v11261 = vlaneseq
        %v11262 = vshrl.u32 %v11261, 7
        %v11263 = vsub.s32 %v11020, %v11262
        %v11264 = vrot.slane %v10647, %v11263
        %v11265 = vsel %vm11025, %v11264, %v11260
        %v11266 = vlaneseq
        %v11267 = vshrl.u32 %v11266, 7
        %v11268 = vsub.s32 %v11027, %v11267
        %v11269 = vrot.slane %v10649, %v11268
        %v11270 = vsel %vm11032, %v11269, %v11265
        %v11271 = vlaneseq
        %v11272 = vshrl.u32 %v11271, 7
        %v11273 = vsub.s32 %v10924, %v11272
        %v11274 = vrot.slane %v10651, %v11273
        %v11275 = vlaneseq
        %v11276 = vshrl.u32 %v11275, 7
        %v11277 = vsub.s32 %v10929, %v11276
        %v11278 = vrot.slane %v10653, %v11277
        %v11279 = vsel %vm10934, %v11278, %v11274
        %v11280 = vlaneseq
        %v11281 = vshrl.u32 %v11280, 7
        %v11282 = vsub.s32 %v10936, %v11281
        %v11283 = vrot.slane %v10655, %v11282
        %v11284 = vsel %vm10941, %v11283, %v11279
        %v11285 = vlaneseq
        %v11286 = vshrl.u32 %v11285, 7
        %v11287 = vsub.s32 %v10943, %v11286
        %v11288 = vrot.slane %v10657, %v11287
        %v11289 = vsel %vm10948, %v11288, %v11284
        %v11290 = vlaneseq
        %v11291 = vshrl.u32 %v11290, 7
        %v11292 = vsub.s32 %v10950, %v11291
        %v11293 = vrot.slane %v10659, %v11292
        %v11294 = vsel %vm10955, %v11293, %v11289
        %v11295 = vlaneseq
        %v11296 = vshrl.u32 %v11295, 7
        %v11297 = vsub.s32 %v10957, %v11296
        %v11298 = vrot.slane %v10661, %v11297
        %v11299 = vsel %vm10962, %v11298, %v11294
        %v11300 = vlaneseq
        %v11301 = vshrl.u32 %v11300, 7
        %v11302 = vsub.s32 %v10964, %v11301
        %v11303 = vrot.slane %v10663, %v11302
        %v11304 = vsel %vm10969, %v11303, %v11299
        %v11305 = vlaneseq
        %v11306 = vshrl.u32 %v11305, 7
        %v11307 = vsub.s32 %v10971, %v11306
        %v11308 = vrot.slane %v10665, %v11307
        %v11309 = vsel %vm10976, %v11308, %v11304
        %v11310 = vlaneseq
        %v11311 = vshrl.u32 %v11310, 7
        %v11312 = vsub.s32 %v10978, %v11311
        %v11313 = vrot.slane %v10667, %v11312
        %v11314 = vsel %vm10983, %v11313, %v11309
        %v11315 = vlaneseq
        %v11316 = vshrl.u32 %v11315, 7
        %v11317 = vsub.s32 %v10985, %v11316
        %v11318 = vrot.slane %v10669, %v11317
        %v11319 = vsel %vm10990, %v11318, %v11314
        %v11320 = vlaneseq
        %v11321 = vshrl.u32 %v11320, 7
        %v11322 = vsub.s32 %v10992, %v11321
        %v11323 = vrot.slane %v10671, %v11322
        %v11324 = vsel %vm10997, %v11323, %v11319
        %v11325 = vlaneseq
        %v11326 = vshrl.u32 %v11325, 7
        %v11327 = vsub.s32 %v10999, %v11326
        %v11328 = vrot.slane %v10673, %v11327
        %v11329 = vsel %vm11004, %v11328, %v11324
        %v11330 = vlaneseq
        %v11331 = vshrl.u32 %v11330, 7
        %v11332 = vsub.s32 %v11006, %v11331
        %v11333 = vrot.slane %v10675, %v11332
        %v11334 = vsel %vm11011, %v11333, %v11329
        %v11335 = vlaneseq
        %v11336 = vshrl.u32 %v11335, 7
        %v11337 = vsub.s32 %v11013, %v11336
        %v11338 = vrot.slane %v10677, %v11337
        %v11339 = vsel %vm11018, %v11338, %v11334
        %v11340 = vlaneseq
        %v11341 = vshrl.u32 %v11340, 7
        %v11342 = vsub.s32 %v11020, %v11341
        %v11343 = vrot.slane %v10679, %v11342
        %v11344 = vsel %vm11025, %v11343, %v11339
        %v11345 = vlaneseq
        %v11346 = vshrl.u32 %v11345, 7
        %v11347 = vsub.s32 %v11027, %v11346
        %v11348 = vrot.slane %v10681, %v11347
        %v11349 = vsel %vm11032, %v11348, %v11344
        %v11350 = vlaneseq
        %v11351 = vshrl.u32 %v11350, 7
        %v11352 = vsub.s32 %v10924, %v11351
        %v11353 = vrot.slane %v10683, %v11352
        %v11354 = vlaneseq
        %v11355 = vshrl.u32 %v11354, 7
        %v11356 = vsub.s32 %v10929, %v11355
        %v11357 = vrot.slane %v10685, %v11356
        %v11358 = vsel %vm10934, %v11357, %v11353
        %v11359 = vlaneseq
        %v11360 = vshrl.u32 %v11359, 7
        %v11361 = vsub.s32 %v10936, %v11360
        %v11362 = vrot.slane %v10687, %v11361
        %v11363 = vsel %vm10941, %v11362, %v11358
        %v11364 = vlaneseq
        %v11365 = vshrl.u32 %v11364, 7
        %v11366 = vsub.s32 %v10943, %v11365
        %v11367 = vrot.slane %v10689, %v11366
        %v11368 = vsel %vm10948, %v11367, %v11363
        %v11369 = vlaneseq
        %v11370 = vshrl.u32 %v11369, 7
        %v11371 = vsub.s32 %v10950, %v11370
        %v11372 = vrot.slane %v10691, %v11371
        %v11373 = vsel %vm10955, %v11372, %v11368
        %v11374 = vlaneseq
        %v11375 = vshrl.u32 %v11374, 7
        %v11376 = vsub.s32 %v10957, %v11375
        %v11377 = vrot.slane %v10693, %v11376
        %v11378 = vsel %vm10962, %v11377, %v11373
        %v11379 = vlaneseq
        %v11380 = vshrl.u32 %v11379, 7
        %v11381 = vsub.s32 %v10964, %v11380
        %v11382 = vrot.slane %v10695, %v11381
        %v11383 = vsel %vm10969, %v11382, %v11378
        %v11384 = vlaneseq
        %v11385 = vshrl.u32 %v11384, 7
        %v11386 = vsub.s32 %v10971, %v11385
        %v11387 = vrot.slane %v10697, %v11386
        %v11388 = vsel %vm10976, %v11387, %v11383
        %v11389 = vlaneseq
        %v11390 = vshrl.u32 %v11389, 7
        %v11391 = vsub.s32 %v10978, %v11390
        %v11392 = vrot.slane %v10699, %v11391
        %v11393 = vsel %vm10983, %v11392, %v11388
        %v11394 = vlaneseq
        %v11395 = vshrl.u32 %v11394, 7
        %v11396 = vsub.s32 %v10985, %v11395
        %v11397 = vrot.slane %v10701, %v11396
        %v11398 = vsel %vm10990, %v11397, %v11393
        %v11399 = vlaneseq
        %v11400 = vshrl.u32 %v11399, 7
        %v11401 = vsub.s32 %v10992, %v11400
        %v11402 = vrot.slane %v10703, %v11401
        %v11403 = vsel %vm10997, %v11402, %v11398
        %v11404 = vlaneseq
        %v11405 = vshrl.u32 %v11404, 7
        %v11406 = vsub.s32 %v10999, %v11405
        %v11407 = vrot.slane %v10705, %v11406
        %v11408 = vsel %vm11004, %v11407, %v11403
        %v11409 = vlaneseq
        %v11410 = vshrl.u32 %v11409, 7
        %v11411 = vsub.s32 %v11006, %v11410
        %v11412 = vrot.slane %v10707, %v11411
        %v11413 = vsel %vm11011, %v11412, %v11408
        %v11414 = vlaneseq
        %v11415 = vshrl.u32 %v11414, 7
        %v11416 = vsub.s32 %v11013, %v11415
        %v11417 = vrot.slane %v10709, %v11416
        %v11418 = vsel %vm11018, %v11417, %v11413
        %v11419 = vlaneseq
        %v11420 = vshrl.u32 %v11419, 7
        %v11421 = vsub.s32 %v11020, %v11420
        %v11422 = vrot.slane %v10711, %v11421
        %v11423 = vsel %vm11025, %v11422, %v11418
        %v11424 = vlaneseq
        %v11425 = vshrl.u32 %v11424, 7
        %v11426 = vsub.s32 %v11027, %v11425
        %v11427 = vrot.slane %v10713, %v11426
        %v11428 = vsel %vm11032, %v11427, %v11423
        %v11429 = vlaneseq
        %v11430 = vshrl.u32 %v11429, 7
        %v11431 = vsub.s32 %v10924, %v11430
        %v11432 = vrot.slane %v10715, %v11431
        %v11433 = vlaneseq
        %v11434 = vshrl.u32 %v11433, 7
        %v11435 = vsub.s32 %v10929, %v11434
        %v11436 = vrot.slane %v10717, %v11435
        %v11437 = vsel %vm10934, %v11436, %v11432
        %v11438 = vlaneseq
        %v11439 = vshrl.u32 %v11438, 7
        %v11440 = vsub.s32 %v10936, %v11439
        %v11441 = vrot.slane %v10719, %v11440
        %v11442 = vsel %vm10941, %v11441, %v11437
        %v11443 = vlaneseq
        %v11444 = vshrl.u32 %v11443, 7
        %v11445 = vsub.s32 %v10943, %v11444
        %v11446 = vrot.slane %v10721, %v11445
        %v11447 = vsel %vm10948, %v11446, %v11442
        %v11448 = vlaneseq
        %v11449 = vshrl.u32 %v11448, 7
        %v11450 = vsub.s32 %v10950, %v11449
        %v11451 = vrot.slane %v10723, %v11450
        %v11452 = vsel %vm10955, %v11451, %v11447
        %v11453 = vlaneseq
        %v11454 = vshrl.u32 %v11453, 7
        %v11455 = vsub.s32 %v10957, %v11454
        %v11456 = vrot.slane %v10725, %v11455
        %v11457 = vsel %vm10962, %v11456, %v11452
        %v11458 = vlaneseq
        %v11459 = vshrl.u32 %v11458, 7
        %v11460 = vsub.s32 %v10964, %v11459
        %v11461 = vrot.slane %v10727, %v11460
        %v11462 = vsel %vm10969, %v11461, %v11457
        %v11463 = vlaneseq
        %v11464 = vshrl.u32 %v11463, 7
        %v11465 = vsub.s32 %v10971, %v11464
        %v11466 = vrot.slane %v10729, %v11465
        %v11467 = vsel %vm10976, %v11466, %v11462
        %v11468 = vlaneseq
        %v11469 = vshrl.u32 %v11468, 7
        %v11470 = vsub.s32 %v10978, %v11469
        %v11471 = vrot.slane %v10731, %v11470
        %v11472 = vsel %vm10983, %v11471, %v11467
        %v11473 = vlaneseq
        %v11474 = vshrl.u32 %v11473, 7
        %v11475 = vsub.s32 %v10985, %v11474
        %v11476 = vrot.slane %v10733, %v11475
        %v11477 = vsel %vm10990, %v11476, %v11472
        %v11478 = vlaneseq
        %v11479 = vshrl.u32 %v11478, 7
        %v11480 = vsub.s32 %v10992, %v11479
        %v11481 = vrot.slane %v10735, %v11480
        %v11482 = vsel %vm10997, %v11481, %v11477
        %v11483 = vlaneseq
        %v11484 = vshrl.u32 %v11483, 7
        %v11485 = vsub.s32 %v10999, %v11484
        %v11486 = vrot.slane %v10737, %v11485
        %v11487 = vsel %vm11004, %v11486, %v11482
        %v11488 = vlaneseq
        %v11489 = vshrl.u32 %v11488, 7
        %v11490 = vsub.s32 %v11006, %v11489
        %v11491 = vrot.slane %v10739, %v11490
        %v11492 = vsel %vm11011, %v11491, %v11487
        %v11493 = vlaneseq
        %v11494 = vshrl.u32 %v11493, 7
        %v11495 = vsub.s32 %v11013, %v11494
        %v11496 = vrot.slane %v10741, %v11495
        %v11497 = vsel %vm11018, %v11496, %v11492
        %v11498 = vlaneseq
        %v11499 = vshrl.u32 %v11498, 7
        %v11500 = vsub.s32 %v11020, %v11499
        %v11501 = vrot.slane %v10743, %v11500
        %v11502 = vsel %vm11025, %v11501, %v11497
        %v11503 = vlaneseq
        %v11504 = vshrl.u32 %v11503, 7
        %v11505 = vsub.s32 %v11027, %v11504
        %v11506 = vrot.slane %v10745, %v11505
        %v11507 = vsel %vm11032, %v11506, %v11502
        %v11508 = vlaneseq
        %v11509 = vshrl.u32 %v11508, 7
        %v11510 = vsub.s32 %v10924, %v11509
        %v11511 = vrot.slane %v10747, %v11510
        %v11512 = vlaneseq
        %v11513 = vshrl.u32 %v11512, 7
        %v11514 = vsub.s32 %v10929, %v11513
        %v11515 = vrot.slane %v10749, %v11514
        %v11516 = vsel %vm10934, %v11515, %v11511
        %v11517 = vlaneseq
        %v11518 = vshrl.u32 %v11517, 7
        %v11519 = vsub.s32 %v10936, %v11518
        %v11520 = vrot.slane %v10751, %v11519
        %v11521 = vsel %vm10941, %v11520, %v11516
        %v11522 = vlaneseq
        %v11523 = vshrl.u32 %v11522, 7
        %v11524 = vsub.s32 %v10943, %v11523
        %v11525 = vrot.slane %v10753, %v11524
        %v11526 = vsel %vm10948, %v11525, %v11521
        %v11527 = vlaneseq
        %v11528 = vshrl.u32 %v11527, 7
        %v11529 = vsub.s32 %v10950, %v11528
        %v11530 = vrot.slane %v10755, %v11529
        %v11531 = vsel %vm10955, %v11530, %v11526
        %v11532 = vlaneseq
        %v11533 = vshrl.u32 %v11532, 7
        %v11534 = vsub.s32 %v10957, %v11533
        %v11535 = vrot.slane %v10757, %v11534
        %v11536 = vsel %vm10962, %v11535, %v11531
        %v11537 = vlaneseq
        %v11538 = vshrl.u32 %v11537, 7
        %v11539 = vsub.s32 %v10964, %v11538
        %v11540 = vrot.slane %v10759, %v11539
        %v11541 = vsel %vm10969, %v11540, %v11536
        %v11542 = vlaneseq
        %v11543 = vshrl.u32 %v11542, 7
        %v11544 = vsub.s32 %v10971, %v11543
        %v11545 = vrot.slane %v10761, %v11544
        %v11546 = vsel %vm10976, %v11545, %v11541
        %v11547 = vlaneseq
        %v11548 = vshrl.u32 %v11547, 7
        %v11549 = vsub.s32 %v10978, %v11548
        %v11550 = vrot.slane %v10763, %v11549
        %v11551 = vsel %vm10983, %v11550, %v11546
        %v11552 = vlaneseq
        %v11553 = vshrl.u32 %v11552, 7
        %v11554 = vsub.s32 %v10985, %v11553
        %v11555 = vrot.slane %v10765, %v11554
        %v11556 = vsel %vm10990, %v11555, %v11551
        %v11557 = vlaneseq
        %v11558 = vshrl.u32 %v11557, 7
        %v11559 = vsub.s32 %v10992, %v11558
        %v11560 = vrot.slane %v10767, %v11559
        %v11561 = vsel %vm10997, %v11560, %v11556
        %v11562 = vlaneseq
        %v11563 = vshrl.u32 %v11562, 7
        %v11564 = vsub.s32 %v10999, %v11563
        %v11565 = vrot.slane %v10769, %v11564
        %v11566 = vsel %vm11004, %v11565, %v11561
        %v11567 = vlaneseq
        %v11568 = vshrl.u32 %v11567, 7
        %v11569 = vsub.s32 %v11006, %v11568
        %v11570 = vrot.slane %v10771, %v11569
        %v11571 = vsel %vm11011, %v11570, %v11566
        %v11572 = vlaneseq
        %v11573 = vshrl.u32 %v11572, 7
        %v11574 = vsub.s32 %v11013, %v11573
        %v11575 = vrot.slane %v10773, %v11574
        %v11576 = vsel %vm11018, %v11575, %v11571
        %v11577 = vlaneseq
        %v11578 = vshrl.u32 %v11577, 7
        %v11579 = vsub.s32 %v11020, %v11578
        %v11580 = vrot.slane %v10775, %v11579
        %v11581 = vsel %vm11025, %v11580, %v11576
        %v11582 = vlaneseq
        %v11583 = vshrl.u32 %v11582, 7
        %v11584 = vsub.s32 %v11027, %v11583
        %v11585 = vrot.slane %v10777, %v11584
        %v11586 = vsel %vm11032, %v11585, %v11581
        %v11587 = vsel %vm9491, %v11112, %v11033
        %v11588 = vsel %vm9493, %v11191, %v11587
        %v11589 = vsel %vm9495, %v11270, %v11588
        %v11590 = vsel %vm9497, %v11349, %v11589
        %v11591 = vsel %vm9499, %v11428, %v11590
        %v11592 = vsel %vm9501, %v11507, %v11591
        %v11593 = vsel %vm9503, %v11586, %v11592
        %11595 = vmatprep.subr.mxu0 0.0
        %11596 = vmatpush1.msra.mxu0 %v10779
        %11597 = vmatprep.subr.mxu0 0.0
        %11598 = vmatpush1.msra.mxu0 %v10780
        %11599 = vmatprep.subr.mxu0 0.0
        %11600 = vmatpush1.msra.mxu0 %v10781
        %11601 = vmatprep.subr.mxu0 0.0
        %11602 = vmatpush1.msra.mxu0 %v10782
        %11603 = vmatprep.subr.mxu0 0.0
        %11604 = vmatpush1.msra.mxu0 %v10783
        %11605 = vmatprep.subr.mxu0 0.0
        %11606 = vmatpush1.msra.mxu0 %v10784
        %11607 = vmatprep.subr.mxu0 0.0
        %11608 = vmatpush1.msra.mxu0 %v10785
        %11609 = vmatprep.subr.mxu0 0.0
        %11610 = vmatpush1.msra.mxu0 %v10786
        %11611 = vmatprep.subr.mxu0 0.0
        %11612 = vmatpush1.msra.mxu0 %v10787
        %11613 = vmatprep.subr.mxu0 0.0
        %11614 = vmatpush1.msra.mxu0 %v10788
        %11615 = vmatprep.subr.mxu0 0.0
        %11616 = vmatpush1.msra.mxu0 %v10789
        %11617 = vmatprep.subr.mxu0 0.0
        %11618 = vmatpush1.msra.mxu0 %v10790
        %11619 = vmatprep.subr.mxu0 0.0
        %11620 = vmatpush1.msra.mxu0 %v10791
        %11621 = vmatprep.subr.mxu0 0.0
        %11622 = vmatpush1.msra.mxu0 %v10792
        %11623 = vmatprep.subr.mxu0 0.0
        %11624 = vmatpush1.msra.mxu0 %v10793
        %11625 = vmatprep.subr.mxu0 0.0
        %11626 = vmatpush1.msra.mxu0 %v10794
        %11627 = vmatprep.subr.mxu0 0.0
        %11628 = vmatpush1.msra.mxu0 0.0
        %11629 = vmatprep.subr.mxu0 0.0
        %11630 = vmatpush1.msra.mxu0 0.0
        %11631 = vmatprep.subr.mxu0 0.0
        %11632 = vmatpush1.msra.mxu0 0.0
        %11633 = vmatprep.subr.mxu0 0.0
        %11634 = vmatpush1.msra.mxu0 0.0
        %11635 = vmatprep.subr.mxu0 0.0
        %11636 = vmatpush1.msra.mxu0 0.0
        %11637 = vmatprep.subr.mxu0 0.0
        %11638 = vmatpush1.msra.mxu0 0.0
        %11639 = vmatprep.subr.mxu0 0.0
        %11640 = vmatpush1.msra.mxu0 0.0
        %11641 = vmatprep.subr.mxu0 0.0
        %11642 = vmatpush1.msra.mxu0 0.0
        %11643 = vmatprep.subr.mxu0 0.0
        %11644 = vmatpush1.msra.mxu0 0.0
        %11645 = vmatprep.subr.mxu0 0.0
        %11646 = vmatpush1.msra.mxu0 0.0
        %11647 = vmatprep.subr.mxu0 0.0
        %11648 = vmatpush1.msra.mxu0 0.0
        %11649 = vmatprep.subr.mxu0 0.0
        %11650 = vmatpush1.msra.mxu0 0.0
        %11651 = vmatprep.subr.mxu0 0.0
        %11652 = vmatpush1.msra.mxu0 0.0
        %11653 = vmatprep.subr.mxu0 0.0
        %11654 = vmatpush1.msra.mxu0 0.0
        %11655 = vmatprep.subr.mxu0 0.0
        %11656 = vmatpush1.msra.mxu0 0.0
        %11657 = vmatprep.subr.mxu0 0.0
        %11658 = vmatpush1.msra.mxu0 0.0
        %11659 = vmatprep.mubr.f32.mxu0 0.0
        %11660 = vmatmul.mubr.f32.gmra.mrb[0].mxu0 %v11593
        %v11661 = vpop.f32.mrb[0].mxu0
        %v11662 = vadd.f32 0.0, %v11661
        %v11663 = vpop.f32.mrb[0].mxu0
        %11664 = vdwg.mxu0
        %v11665 = vadd.f32 %v10778, %v11662
        %vm11666 = vcmask 130048
        %11667 = vst.msk [vmem:[#allocation2] sm:$0xff] %vm11666, %v11665
        %p11668 = scmp.eq.s32.totalorder %s26, 1
        // Predicated region
        $region45: #{tpu_custom_call.1} parent=31 // pred_check
          %p11669 = pneg %p11668
        $region46: #{tpu_custom_call.1} parent=31 // pred_check_branch
          %11671 = sbr.rel (%p11669) target = $region48
        $region47: #{tpu_custom_call.1} parent=31 // pred_region
          %v11672 = vld [vmem:[#allocation2] sm:$0xff]
          %v11673 = vld [vmem:[#allocation6] sm:$0x1]
          %v11675 = vlaneseq
          %v11676 = vshrl.u32 %v11675, 7
          %v11677 = vsub.s32 0, %v11676
          %v11678 = vrot.slane %v11673, %v11677
          %v11680 = vadd.f32 %v11672, %v11678
          %11681 = vst.msk [vmem:[%s259] sm:$0xff] %vm11666, %v11680
        $region48: #{tpu_custom_call.1} parent=31 // pred_fallthru
          _
        %s11682 = sand.u32 %s116, 1
        %s11683 = scalar_lea.sflag [#allocation5], %s11682
        %s11684 = sand.u32 %s116, 1
        %s11685 = smul.addr %s11684, 8
        %s11686 = scalar_lea.vmem [#allocation8], %s11685
        // Predicated region
        $region49: #{tpu_custom_call.1} parent=31 // pred_check
          %p11687 = pneg %p126
        $region50: #{tpu_custom_call.1} parent=31 // pred_check_branch
          %11689 = sbr.rel (%p11687) target = $region52
        $region51: #{tpu_custom_call.1} parent=31 // pred_region
          %s11691 = ssub.s32 128, 128
          %11692 = vsyncadd %s11683, %s11691
          %s11693 = smul.addr %s25, 128
          %s11694 = scalar_lea.hbm %s3, %s11693
          %s11696 = sshll.u32 %s11686, 4
          %s11697 = int_to_ptr.vmem [resolvable:$true] %s11696
          %11699 = dma.vmem_to_hbm [thread:$0]  %s11697, 128, %s11694, %s11683
        $region52: #{tpu_custom_call.1} parent=31 // pred_fallthru
          _
      $region32: #{tpu_custom_call.1} parent=5 // pred_fallthru
        _
      %p11700 = scmp.le.s32.totalorder 2, %s16
      // Predicated region
      $region53: #{tpu_custom_call.1} parent=5 // pred_check
        %p11701 = pneg %p11700
      $region54: #{tpu_custom_call.1} parent=5 // pred_check_branch
        %11703 = sbr.rel (%p11701) target = $region56
      $region55: #{tpu_custom_call.1} parent=5 // pred_region
        %s11704 = ssub.s32 %s16, 2
        // Predicated region
        $region57: #{tpu_custom_call.1} parent=55 // pred_check
          %p11705 = pneg %p132
        $region58: #{tpu_custom_call.1} parent=55 // pred_check_branch
          %11707 = sbr.rel (%p11705) target = $region60
        $region59: #{tpu_custom_call.1} parent=55 // pred_region
          %s11708 = sand.u32 %s117, 1
          %s11709 = scalar_lea.sflag [#allocation5], %s11708
          %s11710 = sand.u32 %s117, 1
          %s11711 = smul.addr %s11710, 8
          %s11712 = scalar_lea.vmem [#allocation8], %s11711
          %11713 = dma.done %s11709, 128
        $region60: #{tpu_custom_call.1} parent=55 // pred_fallthru
          _
      $region56: #{tpu_custom_call.1} parent=5 // pred_fallthru
        _
    $region6: #{tpu_custom_call.1} parent=1 // loop_footer
      %s20 = sadd.s32 1, %s16
    $region7: #{tpu_custom_call.1} parent=1 // loop_footer_branch
      %15 = sbr.rel target = $region3
    $region8: #{tpu_custom_call.1} parent=1 // loop_exit
      _
    %11714 = vsyncpa [#allocation4], 1
    %s11715 = scalar_lea.sflag [#allocation4], 1
    %11716 = vsyncpa %s11715, 1
    %11717 = vsyncpa [#allocation7], 1
    %11718 = vsyncpa [#allocation5], 1
    %s11719 = scalar_lea.sflag [#allocation5], 1
    %11720 = vsyncpa %s11719, 1

</llo_original>
